<compile_context>
chip_gen: v5e
topology: v5e:2x2
jax: 0.10.0
libtpu: 0.0.40
codegen_flags: <defaults>
</compile_context>

<pallas_src>
import functools
import numpy as np
import jax
import jax.numpy as jnp
from jax import lax
from jax.experimental import pallas as pl
from jax.experimental.pallas import tpu as pltpu

# ----------------------------- configuration --------------------------------
VOXEL_SIZE = 10          # voxel_size
INITIAL_DIM = 10         # initial_dim (input channels of `ins`)
LOW_DIM_SIZE = 4
IM_CHANNELS = 8          # im_channels
LATENT_DIM = 32
NUM_LATENTS = 16
CROSS_HEADS = 1
LATENT_HEADS = 2
CROSS_DIM_HEAD = 16
LATENT_DIM_HEAD = 16
DEPTH = 1
ITERATIONS = 1
PATCH = 5                # voxel_patch_size == voxel_patch_stride
SPATIAL = VOXEL_SIZE // PATCH      # 2
FINAL_DIM = 8
LANG_EMB_DIM = 512
LANG_SEQ = 77
INPUT_DIM_BEFORE_SEQ = IM_CHANNELS * 2   # 16
NUM_ROT = 72
NUM_GRIP = 2
NUM_COLL = 2

LN_EPS = 1e-5
SSM_INV_TEMP = 100.0     # temperature = 0.01 (reconstructed)
NSP = VOXEL_SIZE ** 3    # 1000 voxels


# --------------------------- in-kernel value helpers --------------------------
def _ln_val(x, g, b):
    """LayerNorm over the last dim. x: (M, D), g/b: (1, D)."""
    mu = jnp.mean(x, axis=-1, keepdims=True)
    xc = x - mu
    var = jnp.mean(xc * xc, axis=-1, keepdims=True)
    return xc * lax.rsqrt(var + LN_EPS) * g + b


def _gelu_exact(x):
    """Exact (erf) GELU via A&S 7.1.26 rational approximation (|err| < 1.6e-7)."""
    z = x * 0.7071067811865476
    az = jnp.abs(z)
    t = 1.0 / (1.0 + 0.3275911 * az)
    poly = t * (0.254829592 + t * (-0.284496736 + t * (1.421413741 +
             t * (-1.453152027 + t * 1.061405429))))
    erf_az = 1.0 - poly * jnp.exp(-az * az)
    erf_z = jnp.where(z < 0.0, -erf_az, erf_az)
    return 0.5 * x * (1.0 + erf_z)


def _attn_core(x, c, gq, bq, gc, bc, wq, wkv, wo, bo, *, heads, dim_head, residual):
    """PreNorm multi-head attention on values. x: (n, dq), c: (m, dc)."""
    inner = heads * dim_head
    scale = dim_head ** -0.5
    xn = _ln_val(x, gq, bq)
    cn = _ln_val(c, gc, bc)
    # Q and K/V projected once for ALL heads (single MXU op each, bf16 operands).
    q = jnp.dot(xn.astype(jnp.bfloat16), wq.astype(jnp.bfloat16),
                preferred_element_type=jnp.float32)            # (n, inner)
    kv = jnp.dot(cn.astype(jnp.bfloat16), wkv.astype(jnp.bfloat16),
                 preferred_element_type=jnp.float32)            # (m, 2*inner)
    k = kv[:, :inner]
    v = kv[:, inner:]
    outs = []
    for h in range(heads):                                      # heads is 1 or 2 — unrolled
        lo = h * dim_head
        qh = q if heads == 1 else q[:, lo:lo + dim_head]
        kh = k if heads == 1 else k[:, lo:lo + dim_head]
        vh = v if heads == 1 else v[:, lo:lo + dim_head]
        # scores without materializing k.T (contract last dims).
        s = lax.dot_general(qh, kh, (((1,), (1,)), ((), ())),
                            preferred_element_type=jnp.float32) * scale
        s = s - jnp.max(s, axis=-1, keepdims=True)
        p = jnp.exp(s)
        p = p * pl.reciprocal(jnp.sum(p, axis=-1, keepdims=True), approx=True)
        outs.append(jnp.dot(p, vh, preferred_element_type=jnp.float32))
    o_cat = outs[0] if heads == 1 else jnp.concatenate(outs, axis=-1)   # (n, inner)
    # one fused output projection for all heads.
    y = jnp.dot(o_cat.astype(jnp.bfloat16), wo.astype(jnp.bfloat16),
                preferred_element_type=jnp.float32) + bo
    if residual:
        y = y + x
    return y


def _ff_core(y, fg, fb, w1, b1, w2, b2):
    """PreNorm GEGLU feed-forward + residual on values. y: (n, d)."""
    dmid = w2.shape[0]
    yn = _ln_val(y, fg, fb).astype(jnp.bfloat16)
    h12 = jnp.dot(yn, w1.astype(jnp.bfloat16), preferred_element_type=jnp.float32) + b1
    a = h12[:, :dmid]
    g = h12[:, dmid:]
    hg = (a * _gelu_exact(g)).astype(jnp.bfloat16)
    return y + jnp.dot(hg, w2.astype(jnp.bfloat16),
                       preferred_element_type=jnp.float32) + b2


# ----------------------------- Pallas kernels --------------------------------
def _conv_gemm_kernel(col_ref, w_ref, b_ref, o_ref, *, act):
    """Channels-first conv-as-GEMM: (N, K) @ (K, nsp) -> lane-dense (N, nsp)."""
    y = jnp.dot(w_ref[...], col_ref[0], preferred_element_type=jnp.float32) + b_ref[...]
    if act == "relu":
        y = jnp.maximum(y, 0.0)
    o_ref[0] = y


def _conv_gemm_ss_kernel(col_ref, w_ref, b_ref, pos_ref, o_ref, coord_ref, max_ref,
                         *, act, inv_temp):
    """Conv GEMM fused with spatial-softmax coords + global max (channels on sublanes)."""
    y = jnp.dot(w_ref[...], col_ref[0], preferred_element_type=jnp.float32) + b_ref[...]
    if act == "relu":
        y = jnp.maximum(y, 0.0)
    o_ref[0] = y                                          # (N, nsp) lane-dense store
    mx = jnp.max(y, axis=1, keepdims=True)                # (N, 1) global max per channel
    e = jnp.exp((y - mx) * inv_temp)
    den = jnp.sum(e, axis=1, keepdims=True)               # (N, 1)
    num = lax.dot_general(e, pos_ref[...], (((1,), (1,)), ((), ())),
                          preferred_element_type=jnp.float32)   # (N, 3) = per-channel [x,y,z]
    coord_ref[0] = num * pl.reciprocal(den, approx=True)
    max_ref[0] = mx


def _linear_kernel(x_ref, w_ref, b_ref, o_ref, *, act):
    y = jnp.dot(x_ref[...], w_ref[...], preferred_element_type=jnp.float32) + b_ref[...]
    if act == "relu":
        y = jnp.maximum(y, 0.0)
    o_ref[...] = y


def _make_attn_ff_kernel(*, heads, dim_head, residual, with_ff):
    """One full PreNorm attention block (+ optional GEGLU FF) per batch element."""
    def kernel(*refs):
        if with_ff:
            (x_ref, c_ref, gq, bq, gc, bc, wq, wkv, wo, bo,
             fg, fb, w1, b1, w2, b2, o_ref) = refs
        else:
            (x_ref, c_ref, gq, bq, gc, bc, wq, wkv, wo, bo, o_ref) = refs
        y = _attn_core(x_ref[0], c_ref[0], gq[...], bq[...], gc[...], bc[...],
                       wq[...], wkv[...], wo[...], bo[...],
                       heads=heads, dim_head=dim_head, residual=residual)
        if with_ff:
            y = _ff_core(y, fg[...], fb[...], w1[...], b1[...], w2[...], b2[...])
        o_ref[0] = y
    return kernel


def _make_dec_attn_ss_kernel(*, heads, dim_head, tail, inv_temp):
    """Decoder cross-attention (no residual) fused with ss1 stats on the tail rows."""
    def kernel(x_ref, c_ref, gq, bq, gc, bc, wq, wkv, wo, bo, pos_ref,
               o_ref, coord_ref, max_ref):
        y = _attn_core(x_ref[0], c_ref[0], gq[...], bq[...], gc[...], bc[...],
                       wq[...], wkv[...], wo[...], bo[...],
                       heads=heads, dim_head=dim_head, residual=False)
        o_ref[0] = y                                      # (n, dq)
        n_tail = y.shape[0] - tail
        t = o_ref[0, pl.ds(tail, n_tail), :]              # (n_tail, dq), read back from VMEM
        mx = jnp.max(t, axis=0, keepdims=True)            # (1, dq)
        e = jnp.exp((t - mx) * inv_temp)
        den = jnp.sum(e, axis=0, keepdims=True)           # (1, dq)
        num = jnp.dot(pos_ref[...], e, preferred_element_type=jnp.float32)   # (3, dq)
        coord_ref[0] = num * pl.reciprocal(den, approx=True)
        max_ref[0] = mx
    return kernel


# ----------------------------- Pallas wrappers --------------------------------
def conv_gemm_cf(col, w_rows, bias, *, act, pos=None):
    """Channels-first conv GEMM, grid over batch (``parallel`` -> both v7x TCs).

    col:    (B, K, nsp) im2col columns (channels-first, lane = spatial).
    w_rows: (N, K) one row per output channel.
    pos:    optional (3, nsp) -> also return spatial-softmax coords (B,N,3), max (B,N,1).
    """
    b, K, nsp = col.shape
    N = w_rows.shape[0]
    col = col.astype(jnp.float32)
    w = w_rows.astype(jnp.float32)
    b2 = bias.reshape(N, 1).astype(jnp.float32)
    cparams = pltpu.CompilerParams(dimension_semantics=("parallel",))
    if pos is None:
        return pl.pallas_call(
            functools.partial(_conv_gemm_kernel, act=act),
            grid=(b,),
            in_specs=[pl.BlockSpec((1, K, nsp), lambda i: (i, 0, 0)),
                      pl.BlockSpec((N, K), lambda i: (0, 0)),
                      pl.BlockSpec((N, 1), lambda i: (0, 0))],
            out_specs=pl.BlockSpec((1, N, nsp), lambda i: (i, 0, 0)),
            out_shape=jax.ShapeDtypeStruct((b, N, nsp), jnp.float32),
            compiler_params=cparams,
        )(col, w, b2)
    return pl.pallas_call(
        functools.partial(_conv_gemm_ss_kernel, act=act, inv_temp=SSM_INV_TEMP),
        grid=(b,),
        in_specs=[pl.BlockSpec((1, K, nsp), lambda i: (i, 0, 0)),
                  pl.BlockSpec((N, K), lambda i: (0, 0)),
                  pl.BlockSpec((N, 1), lambda i: (0, 0)),
                  pl.BlockSpec((3, nsp), lambda i: (0, 0))],
        out_specs=[pl.BlockSpec((1, N, nsp), lambda i: (i, 0, 0)),
                   pl.BlockSpec((1, N, 3), lambda i: (i, 0, 0)),
                   pl.BlockSpec((1, N, 1), lambda i: (i, 0, 0))],
        out_shape=[jax.ShapeDtypeStruct((b, N, nsp), jnp.float32),
                   jax.ShapeDtypeStruct((b, N, 3), jnp.float32),
                   jax.ShapeDtypeStruct((b, N, 1), jnp.float32)],
        compiler_params=cparams,
    )(col, w, b2, pos.astype(jnp.float32))


def pallas_linear(x, w, b=None, act=None):
    """Fused (M,K)@(K,N) + bias + activation, single whole-array block (no M-split:
    the split was pure overhead on single-TC v5e/v6e per the perf review)."""
    shp = x.shape
    x2 = x.reshape(-1, shp[-1]).astype(jnp.float32)
    M, K = x2.shape
    N = w.shape[1]
    if b is None:
        b = jnp.zeros((N,), jnp.float32)
    out = pl.pallas_call(
        functools.partial(_linear_kernel, act=act),
        out_shape=jax.ShapeDtypeStruct((M, N), jnp.float32),
    )(x2, w.astype(jnp.float32), b.reshape(1, N).astype(jnp.float32))
    return out.reshape(shp[:-1] + (N,))


def fused_attn_ff(x, ctx, gq, bq, gc, bc, wq, wkv, wo, bo, *,
                  ff=None, heads, dim_head, residual):
    """Attention (+ optional GEGLU FF) for the whole block, grid over batch."""
    b, n, dq = x.shape
    m, dc = ctx.shape[1], ctx.shape[2]
    inner = heads * dim_head
    with_ff = ff is not None
    kern = _make_attn_ff_kernel(heads=heads, dim_head=dim_head,
                                residual=residual, with_ff=with_ff)
    in_specs = [
        pl.BlockSpec((1, n, dq), lambda i: (i, 0, 0)),
        pl.BlockSpec((1, m, dc), lambda i: (i, 0, 0)),
        pl.BlockSpec((1, dq), lambda i: (0, 0)),
        pl.BlockSpec((1, dq), lambda i: (0, 0)),
        pl.BlockSpec((1, dc), lambda i: (0, 0)),
        pl.BlockSpec((1, dc), lambda i: (0, 0)),
        pl.BlockSpec((dq, inner), lambda i: (0, 0)),
        pl.BlockSpec((dc, 2 * inner), lambda i: (0, 0)),
        pl.BlockSpec((inner, dq), lambda i: (0, 0)),
        pl.BlockSpec((1, dq), lambda i: (0, 0)),
    ]
    args = [x.astype(jnp.float32), ctx.astype(jnp.float32),
            gq.reshape(1, dq), bq.reshape(1, dq),
            gc.reshape(1, dc), bc.reshape(1, dc),
            wq, wkv, wo, bo.reshape(1, dq)]
    if with_ff:
        dh8 = ff["w1"].shape[1]
        dmid = ff["w2"].shape[0]
        in_specs += [pl.BlockSpec((1, dq), lambda i: (0, 0)),
                     pl.BlockSpec((1, dq), lambda i: (0, 0)),
                     pl.BlockSpec((dq, dh8), lambda i: (0, 0)),
                     pl.BlockSpec((1, dh8), lambda i: (0, 0)),
                     pl.BlockSpec((dmid, dq), lambda i: (0, 0)),
                     pl.BlockSpec((1, dq), lambda i: (0, 0))]
        args += [ff["ln_g"].reshape(1, dq), ff["ln_b"].reshape(1, dq),
                 ff["w1"], ff["b1"].reshape(1, dh8), ff["w2"], ff["b2"].reshape(1, dq)]
    return pl.pallas_call(
        kern,
        grid=(b,),
        in_specs=in_specs,
        out_specs=pl.BlockSpec((1, n, dq), lambda i: (i, 0, 0)),
        out_shape=jax.ShapeDtypeStruct((b, n, dq), jnp.float32),
        compiler_params=pltpu.CompilerParams(dimension_semantics=("parallel",)),
    )(*args)


def fused_dec_attn_ss(xq, ctx, dp, pos_patch, *, heads, dim_head, tail):
    """Decoder cross-attention fused with ss1 spatial-softmax + max on the tail rows."""
    b, n, dq = xq.shape
    m, dc = ctx.shape[1], ctx.shape[2]
    inner = heads * dim_head
    n_tail = n - tail
    kern = _make_dec_attn_ss_kernel(heads=heads, dim_head=dim_head,
                                    tail=tail, inv_temp=SSM_INV_TEMP)
    return pl.pallas_call(
        kern,
        grid=(b,),
        in_specs=[pl.BlockSpec((1, n, dq), lambda i: (i, 0, 0)),
                  pl.BlockSpec((1, m, dc), lambda i: (i, 0, 0)),
                  pl.BlockSpec((1, dq), lambda i: (0, 0)),
                  pl.BlockSpec((1, dq), lambda i: (0, 0)),
                  pl.BlockSpec((1, dc), lambda i: (0, 0)),
                  pl.BlockSpec((1, dc), lambda i: (0, 0)),
                  pl.BlockSpec((dq, inner), lambda i: (0, 0)),
                  pl.BlockSpec((dc, 2 * inner), lambda i: (0, 0)),
                  pl.BlockSpec((inner, dq), lambda i: (0, 0)),
                  pl.BlockSpec((1, dq), lambda i: (0, 0)),
                  pl.BlockSpec((3, n_tail), lambda i: (0, 0))],
        out_specs=[pl.BlockSpec((1, n, dq), lambda i: (i, 0, 0)),
                   pl.BlockSpec((1, 3, dq), lambda i: (i, 0, 0)),
                   pl.BlockSpec((1, 1, dq), lambda i: (i, 0, 0))],
        out_shape=[jax.ShapeDtypeStruct((b, n, dq), jnp.float32),
                   jax.ShapeDtypeStruct((b, 3, dq), jnp.float32),
                   jax.ShapeDtypeStruct((b, 1, dq), jnp.float32)],
        compiler_params=pltpu.CompilerParams(dimension_semantics=("parallel",)),
    )(xq.astype(jnp.float32), ctx.astype(jnp.float32),
      dp["ln_q_g"].reshape(1, dq), dp["ln_q_b"].reshape(1, dq),
      dp["ln_c_g"].reshape(1, dc), dp["ln_c_b"].reshape(1, dc),
      dp["wq"], dp["wkv"], dp["wo"], dp["bo"].reshape(1, dq),
      pos_patch.astype(jnp.float32))


# ----------------------------- XLA-side helpers --------------------------------
def im2col_cf_k3(x_cf_vol):
    """(B, C, D, H, W), pad=1 -> (B, 27*C, D*H*W); row order (kd, kh, kw, ci)."""
    b, C, D, H, W = x_cf_vol.shape
    xp = jnp.pad(x_cf_vol, ((0, 0), (0, 0), (1, 1), (1, 1), (1, 1)))
    taps = []
    for kd in range(3):
        for kh in range(3):
            for kw in range(3):
                taps.append(xp[:, :, kd:kd + D, kh:kh + H, kw:kw + W])
    col = jnp.concatenate(taps, axis=1)
    return col.reshape(b, 27 * C, D * H * W)


def k3_weight_rows(w_t):
    """torch (Cout, Cin, 3,3,3) -> (Cout, 27*Cin), column order (kd, kh, kw, ci)."""
    return jnp.transpose(w_t, (0, 2, 3, 4, 1)).reshape(w_t.shape[0], -1)


def patchify_cols_cf(x_cf_vol, k):
    """(B, C, D, H, W) -> (B, n_patches, k^3*C); columns ordered (kd, kh, kw, ci)."""
    b, C, D, H, W = x_cf_vol.shape
    D2, H2, W2 = D // k, H // k, W // k
    x = x_cf_vol.reshape(b, C, D2, k, H2, k, W2, k)
    x = jnp.transpose(x, (0, 2, 4, 6, 3, 5, 7, 1))        # (b, D2, H2, W2, kd, kh, kw, C)
    return x.reshape(b, D2 * H2 * W2, k * k * k * C)


def up0_depatchify_cf(lat_grid, w_t, bias, k):
    """ConvTranspose3d kernel=k stride=k (de-patchify). w_t: (Cin, Cout, k,k,k).
    lat_grid: (b, D2, H2, W2, Cin) -> (b, Cout, D2*k, H2*k, W2*k). Tiny-M: left to XLA."""
    b, D2, H2, W2, Cin = lat_grid.shape
    Cout = w_t.shape[1]
    y = lat_grid @ w_t.reshape(Cin, Cout * k ** 3)          # (b, D2, H2, W2, Cout*k^3)
    y = y.reshape(b, D2, H2, W2, Cout, k, k, k)
    y = y + bias[None, None, None, None, :, None, None, None]
    y = jnp.maximum(y, 0.0)
    y = jnp.transpose(y, (0, 4, 1, 5, 2, 6, 3, 7))
    return y.reshape(b, Cout, D2 * k, H2 * k, W2 * k)


def make_pos_grid_t(D, H, W):
    zz, yy, xx = np.meshgrid(np.linspace(-1.0, 1.0, D),
                             np.linspace(-1.0, 1.0, H),
                             np.linspace(-1.0, 1.0, W), indexing="ij")
    pos_t = np.stack([xx.reshape(-1), yy.reshape(-1), zz.reshape(-1)], axis=0)  # (3, DHW)
    # TODO(synk): SpatialSoftmax3D coordinate ordering is reconstructed ([x, y, z] per channel).
    return jnp.asarray(pos_t, jnp.float32)


# ----------------------------- parameters ------------------------------------
def init_params(key, depth=DEPTH):
    kit = iter(jax.random.split(key, 40))

    def W(shape, scale=0.02):
        return jax.random.normal(next(kit), shape, jnp.float32) * scale

    def Z(shape):
        return jnp.zeros(shape, jnp.float32)

    def ONE(shape):
        return jnp.ones(shape, jnp.float32)

    C, LD, IDBS = IM_CHANNELS, LATENT_DIM, INPUT_DIM_BEFORE_SEQ
    p = {
        "pos_encoding": W((1, LANG_SEQ + SPATIAL ** 3, IDBS), 1.0),
        "latents": W((NUM_LATENTS, LD), 1.0),
        "conv_in_w": W((INITIAL_DIM, C)), "conv_in_b": Z((C,)),
        "proprio_w": W((LOW_DIM_SIZE, C)), "proprio_b": Z((C,)),
        "patchify_w": W((C, C, PATCH, PATCH, PATCH)), "patchify_b": Z((C,)),
        "lang_w": W((LANG_EMB_DIM, IDBS)), "lang_b": Z((IDBS,)),
        "cross_attn": {
            "ln_q_g": ONE((LD,)), "ln_q_b": Z((LD,)),
            "ln_c_g": ONE((IDBS,)), "ln_c_b": Z((IDBS,)),
            "wq": W((LD, CROSS_HEADS * CROSS_DIM_HEAD)),
            "wkv": W((IDBS, 2 * CROSS_HEADS * CROSS_DIM_HEAD)),
            "wo": W((CROSS_HEADS * CROSS_DIM_HEAD, LD)), "bo": Z((LD,)),
        },
        "cross_ff": {
            "ln_g": ONE((LD,)), "ln_b": Z((LD,)),
            "w1": W((LD, LD * 8)), "b1": Z((LD * 8,)),
            "w2": W((LD * 4, LD)), "b2": Z((LD,)),
        },
        "layers": [],
        "dec_attn": {
            "ln_q_g": ONE((IDBS,)), "ln_q_b": Z((IDBS,)),
            "ln_c_g": ONE((LD,)), "ln_c_b": Z((LD,)),
            "wq": W((IDBS, CROSS_HEADS * CROSS_DIM_HEAD)),
            "wkv": W((LD, 2 * CROSS_HEADS * CROSS_DIM_HEAD)),
            "wo": W((CROSS_HEADS * CROSS_DIM_HEAD, IDBS)), "bo": Z((IDBS,)),
        },
        "up0_w": W((IDBS, FINAL_DIM, PATCH, PATCH, PATCH)), "up0_b": Z((FINAL_DIM,)),
        "final_w": W((C, 2 * C, 3, 3, 3)), "final_b": Z((C,)),
        "trans_w": W((1, FINAL_DIM, 3, 3, 3)), "trans_b": Z((1,)),
        "dense0_w": W((C * 4 + IDBS * 4 + C * 4, 256)), "dense0_b": Z((256,)),
        "dense1_w": W((256, FINAL_DIM)), "dense1_b": Z((FINAL_DIM,)),
        "rot_w": W((FINAL_DIM, NUM_ROT * 3 + NUM_GRIP + NUM_COLL)),
        "rot_b": Z((NUM_ROT * 3 + NUM_GRIP + NUM_COLL,)),
    }
    inner = LATENT_HEADS * LATENT_DIM_HEAD
    for _ in range(depth):
        p["layers"].append({
            "attn": {"ln_g": ONE((LD,)), "ln_b": Z((LD,)),
                     "wq": W((LD, inner)), "wkv": W((LD, 2 * inner)),
                     "wo": W((inner, LD)), "bo": Z((LD,))},
            "ff": {"ln_g": ONE((LD,)), "ln_b": Z((LD,)),
                   "w1": W((LD, LD * 8)), "b1": Z((LD * 8,)),
                   "w2": W((LD * 4, LD)), "b2": Z((LD,))},
        })
    return p


# ----------------------------- forward ---------------------------------------
def perceiver_io_forward(params, ins, proprio, lang_goal_embs, bounds=None):
    del bounds  # unused by the reference forward
    b = ins.shape[0]
    pos_vox = make_pos_grid_t(VOXEL_SIZE, VOXEL_SIZE, VOXEL_SIZE)      # (3, 1000)
    pos_patch = make_pos_grid_t(SPATIAL, SPATIAL, SPATIAL)             # (3, 8)

    # `ins` is already NCDHW -> channels-first (C, spatial) with spatial on lanes.
    ins_cf = ins.reshape(b, INITIAL_DIM, NSP).astype(jnp.float32)       # (b, 10, 1000)

    # --- fused: input_preprocess (1x1x1 conv + relu) + ss0 coords + global max ---
    d0_cf, coords0, max0 = conv_gemm_cf(
        ins_cf, params["conv_in_w"].T, params["conv_in_b"], act="relu", pos=pos_vox)
    ss0 = coords0.reshape(b, IM_CHANNELS * 3)                            # (b, 24)
    max0f = max0.reshape(b, IM_CHANNELS)                                 # (b, 8)
    d0_vol = d0_cf.reshape(b, IM_CHANNELS, VOXEL_SIZE, VOXEL_SIZE, VOXEL_SIZE)

    # patchify: 5^3 conv stride 5 + relu.  M = b*8 rows only -> left to XLA (perf review).
    colp = patchify_cols_cf(d0_vol, PATCH)                               # (b, 8, 1000)
    wp = jnp.transpose(params["patchify_w"], (2, 3, 4, 1, 0)).reshape(
        PATCH ** 3 * IM_CHANNELS, IM_CHANNELS)
    ins_p = jnp.maximum(jnp.einsum("bpk,kc->bpc", colp, wp) + params["patchify_b"], 0.0)

    # proprio preprocess (tiny: left to XLA) + broadcast + channel concat.
    p = jnp.maximum(proprio @ params["proprio_w"] + params["proprio_b"], 0.0)   # (b, 8)
    p = jnp.broadcast_to(p[:, None, :], (b, SPATIAL ** 3, IM_CHANNELS))
    ins_seq = jnp.concatenate([ins_p, p], axis=-1)                       # (b, 8, 16)

    # language preprocess (Pallas GEMM) + concat + positional encoding.
    l = pallas_linear(lang_goal_embs, params["lang_w"], params["lang_b"])  # (b, 77, 16)
    seq = jnp.concatenate([l, ins_seq], axis=1) + params["pos_encoding"]   # (b, 85, 16)

    # latents
    x = jnp.broadcast_to(params["latents"][None], (b,) + params["latents"].shape)

    for _ in range(ITERATIONS):
        ca = params["cross_attn"]
        x = fused_attn_ff(x, seq,
                          ca["ln_q_g"], ca["ln_q_b"], ca["ln_c_g"], ca["ln_c_b"],
                          ca["wq"], ca["wkv"], ca["wo"], ca["bo"],
                          ff=params["cross_ff"],
                          heads=CROSS_HEADS, dim_head=CROSS_DIM_HEAD, residual=True)
        for lyr in params["layers"]:
            sa = lyr["attn"]
            x = fused_attn_ff(x, x,
                              sa["ln_g"], sa["ln_b"], sa["ln_g"], sa["ln_b"],
                              sa["wq"], sa["wkv"], sa["wo"], sa["bo"],
                              ff=lyr["ff"],
                              heads=LATENT_HEADS, dim_head=LATENT_DIM_HEAD, residual=True)

    # decoder cross-attention (no residual) fused with ss1/max1 on the tail rows.
    lat_seq, coords1, max1 = fused_dec_attn_ss(
        seq, x, params["dec_attn"], pos_patch,
        heads=CROSS_HEADS, dim_head=CROSS_DIM_HEAD, tail=LANG_SEQ)
    lat = lat_seq[:, LANG_SEQ:]                                          # (b, 8, 16)
    ss1 = jnp.transpose(coords1, (0, 2, 1)).reshape(b, INPUT_DIM_BEFORE_SEQ * 3)  # (b, 48)
    max1f = max1.reshape(b, INPUT_DIM_BEFORE_SEQ)                        # (b, 16)

    # up0: de-patchify transpose conv + relu (tiny M -> XLA per perf review).
    lat_grid = lat.reshape(b, SPATIAL, SPATIAL, SPATIAL, INPUT_DIM_BEFORE_SEQ)
    u0_cf = up0_depatchify_cf(lat_grid, params["up0_w"], params["up0_b"], PATCH)

    # --- fused: final 3x3x3 conv + relu + ss2 coords + global max (grid over batch) ---
    xcat_cf = jnp.concatenate([d0_vol, u0_cf], axis=1)                   # (b, 16, 10,10,10)
    col_f = im2col_cf_k3(xcat_cf)                                        # (b, 432, 1000)
    u_cf, coords2, max2 = conv_gemm_cf(
        col_f, k3_weight_rows(params["final_w"]), params["final_b"], act="relu", pos=pos_vox)
    ss2 = coords2.reshape(b, IM_CHANNELS * 3)
    max2f = max2.reshape(b, IM_CHANNELS)

    # translation decoder (3x3x3 conv, no activation); output is already NCDHW.
    u_vol = u_cf.reshape(b, IM_CHANNELS, VOXEL_SIZE, VOXEL_SIZE, VOXEL_SIZE)
    col_t = im2col_cf_k3(u_vol)                                          # (b, 216, 1000)
    trans_cf = conv_gemm_cf(col_t, k3_weight_rows(params["trans_w"]),
                            params["trans_b"], act=None)                 # (b, 1, 1000)
    trans = trans_cf.reshape(b, 1, VOXEL_SIZE, VOXEL_SIZE, VOXEL_SIZE)

    # rotation / grip / collision head: 2 rows only -> left to XLA per perf review.
    flat = jnp.concatenate([ss0, max0f, ss1, max1f, ss2, max2f], axis=1)  # (b, 128)
    h = jnp.maximum(flat @ params["dense0_w"] + params["dense0_b"], 0.0)
    h = jnp.maximum(h @ params["dense1_w"] + params["dense1_b"], 0.0)
    rgc = h @ params["rot_w"] + params["rot_b"]                           # (b, 220)

    rot_and_grip_out = rgc[:, :-NUM_COLL]
    collision_out = rgc[:, -NUM_COLL:]
    return trans, rot_and_grip_out, collision_out


# ----------------------------- main -------------------------------------------
if __name__ == "__main__":
    key = jax.random.PRNGKey(0)
    kparam, kin, kprop, klang, kbound = jax.random.split(key, 5)
    params = init_params(kparam)

    B = 2
    ins = jax.random.normal(kin, (B, INITIAL_DIM, VOXEL_SIZE, VOXEL_SIZE, VOXEL_SIZE), jnp.float32)
    proprio = jax.random.normal(kprop, (B, LOW_DIM_SIZE), jnp.float32)
    lang_goal_embs = jax.random.normal(klang, (B, LANG_SEQ, LANG_EMB_DIM), jnp.float32)
    bounds = jax.random.normal(kbound, (B, 6), jnp.float32)

    fwd = jax.jit(perceiver_io_forward)
    trans, rot_grip, collision = fwd(params, ins, proprio, lang_goal_embs, bounds)
    jax.block_until_ready((trans, rot_grip, collision))

    assert trans.shape == (B, 1, VOXEL_SIZE, VOXEL_SIZE, VOXEL_SIZE)
    assert rot_grip.shape == (B, NUM_ROT * 3 + NUM_GRIP)
    assert collision.shape == (B, NUM_COLL)
    assert bool(jnp.all(jnp.isfinite(trans)))
    assert bool(jnp.all(jnp.isfinite(rot_grip)))
    print("KERNEL_OK")
</pallas_src>

<mosaic_0001>
module attributes {stable_mosaic.version = 11 : i64} {
  func.func @_linear_kernel(%arg0: memref<154x512xf32, #tpu.memory_space<vmem>>, %arg1: memref<512x16xf32, #tpu.memory_space<vmem>>, %arg2: memref<1x16xf32, #tpu.memory_space<vmem>>, %arg3: memref<154x16xf32, #tpu.memory_space<vmem>>) attributes {dimension_semantics = [], scalar_prefetch = 0 : i64, scratch_operands = 0 : i64, tpu.core_type = #tpu.core_type<tc>} {
    %c0 = arith.constant 0 : index
    %c0_0 = arith.constant 0 : index
    %0 = vector.load %arg0[%c0, %c0_0] : memref<154x512xf32, #tpu.memory_space<vmem>>, vector<154x512xf32>
    %c0_1 = arith.constant 0 : index
    %c0_2 = arith.constant 0 : index
    %1 = vector.load %arg1[%c0_1, %c0_2] : memref<512x16xf32, #tpu.memory_space<vmem>>, vector<512x16xf32>
    %cst = arith.constant dense<0.000000e+00> : vector<154x16xf32>
    %2 = tpu.matmul %0, %1, %cst {dimension_numbers = #tpu.dot_dimension_numbers<[1], [0], [0], [1], [0, 0, 1, 1], [], []>} : vector<154x512xf32>, vector<512x16xf32>, vector<154x16xf32> -> vector<154x16xf32>
    %c0_3 = arith.constant 0 : index
    %c0_4 = arith.constant 0 : index
    %3 = vector.load %arg2[%c0_3, %c0_4] : memref<1x16xf32, #tpu.memory_space<vmem>>, vector<1x16xf32>
    %4 = vector.broadcast %3 : vector<1x16xf32> to vector<154x16xf32>
    %5 = arith.addf %2, %4 : vector<154x16xf32>
    %c0_5 = arith.constant 0 : index
    %c0_6 = arith.constant 0 : index
    %6 = vector.load %arg3[%c0_5, %c0_6] : memref<154x16xf32, #tpu.memory_space<vmem>>, vector<154x16xf32>
    tpu.vector_store %arg3[%c0_5, %c0_6], %5 {strides = array<i32>} : memref<154x16xf32, #tpu.memory_space<vmem>>, vector<154x16xf32>,
    return
  }
}

module attributes {stable_mosaic.version = 11 : i64} {
  func.func @_conv_gemm_ss_kernel(%arg0: i32, %arg1: memref<1x10x1000xf32, #tpu.memory_space<vmem>>, %arg2: memref<8x10xf32, #tpu.memory_space<vmem>>, %arg3: memref<8x1xf32, #tpu.memory_space<vmem>>, %arg4: memref<3x1000xf32, #tpu.memory_space<vmem>>, %arg5: memref<1x8x1000xf32, #tpu.memory_space<vmem>>, %arg6: memref<1x8x3xf32, #tpu.memory_space<vmem>>, %arg7: memref<1x8x1xf32, #tpu.memory_space<vmem>>) attributes {dimension_semantics = [#tpu.dimension_semantics<parallel>], iteration_bounds = array<i64: 2>, scalar_prefetch = 0 : i64, scratch_operands = 0 : i64, tpu.core_type = #tpu.core_type<tc>, window_params = [{transform_indices = @transform_0, window_bounds = array<i64: 1, 10, 1000>}, {pipeline_mode = #tpu.pipeline_mode<synchronous>, transform_indices = @transform_1, window_bounds = array<i64: 8, 10>}, {pipeline_mode = #tpu.pipeline_mode<synchronous>, transform_indices = @transform_2, window_bounds = array<i64: 8, 1>}, {pipeline_mode = #tpu.pipeline_mode<synchronous>, transform_indices = @transform_3, window_bounds = array<i64: 3, 1000>}, {transform_indices = @transform_4, window_bounds = array<i64: 1, 8, 1000>}, {transform_indices = @transform_5, window_bounds = array<i64: 1, 8, 3>}, {transform_indices = @transform_6, window_bounds = array<i64: 1, 8, 1>}]} {
    %c0 = arith.constant 0 : index
    %c0_0 = arith.constant 0 : index
    %0 = vector.load %arg2[%c0, %c0_0] : memref<8x10xf32, #tpu.memory_space<vmem>>, vector<8x10xf32>
    %c0_1 = arith.constant 0 : index
    %c0_2 = arith.constant 0 : index
    %c0_3 = arith.constant 0 : index
    %1 = vector.load %arg1[%c0_1, %c0_2, %c0_3] : memref<1x10x1000xf32, #tpu.memory_space<vmem>>, vector<1x10x1000xf32>
    %2 = vector.shape_cast %1 : vector<1x10x1000xf32> to vector<10x1000xf32>
    %cst = arith.constant dense<0.000000e+00> : vector<8x1000xf32>
    %3 = tpu.matmul %0, %2, %cst {dimension_numbers = #tpu.dot_dimension_numbers<[1], [0], [0], [1], [0, 0, 1, 1], [], []>} : vector<8x10xf32>, vector<10x1000xf32>, vector<8x1000xf32> -> vector<8x1000xf32>
    %c0_4 = arith.constant 0 : index
    %c0_5 = arith.constant 0 : index
    %4 = vector.load %arg3[%c0_4, %c0_5] : memref<8x1xf32, #tpu.memory_space<vmem>>, vector<8x1xf32>
    %5 = vector.broadcast %4 : vector<8x1xf32> to vector<8x1000xf32>
    %6 = arith.addf %3, %5 : vector<8x1000xf32>
    %cst_6 = arith.constant 0.000000e+00 : f32
    %7 = vector.broadcast %cst_6 : f32 to vector<8x1000xf32>
    %8 = arith.maximumf %6, %7 : vector<8x1000xf32>
    %c0_7 = arith.constant 0 : index
    %c0_8 = arith.constant 0 : index
    %c0_9 = arith.constant 0 : index
    %9 = vector.load %arg5[%c0_7, %c0_8, %c0_9] : memref<1x8x1000xf32, #tpu.memory_space<vmem>>, vector<1x8x1000xf32>
    %10 = vector.shape_cast %9 : vector<1x8x1000xf32> to vector<8x1000xf32>
    %11 = vector.shape_cast %8 : vector<8x1000xf32> to vector<1x8x1000xf32>
    tpu.vector_store %arg5[%c0_7, %c0_8, %c0_9], %11 {strides = array<i32>} : memref<1x8x1000xf32, #tpu.memory_space<vmem>>, vector<1x8x1000xf32>,
    %cst_10 = arith.constant dense<0xFF800000> : vector<8xf32>
    %12 = vector.multi_reduction <maximumf>, %8, %cst_10 [1] : vector<8x1000xf32> to vector<8xf32>
    %13 = vector.shape_cast %12 : vector<8xf32> to vector<8x1xf32>
    %14 = vector.broadcast %13 : vector<8x1xf32> to vector<8x1000xf32>
    %15 = arith.subf %8, %14 : vector<8x1000xf32>
    %cst_11 = arith.constant 1.000000e+02 : f32
    %16 = vector.broadcast %cst_11 : f32 to vector<8x1000xf32>
    %17 = arith.mulf %15, %16 : vector<8x1000xf32>
    %18 = math.exp %17 : vector<8x1000xf32>
    %cst_12 = arith.constant dense<0.000000e+00> : vector<8xf32>
    %19 = vector.multi_reduction <add>, %18, %cst_12 [1] : vector<8x1000xf32> to vector<8xf32>
    %20 = vector.shape_cast %19 : vector<8xf32> to vector<8x1xf32>
    %c0_13 = arith.constant 0 : index
    %c0_14 = arith.constant 0 : index
    %21 = vector.load %arg4[%c0_13, %c0_14] : memref<3x1000xf32, #tpu.memory_space<vmem>>, vector<3x1000xf32>
    %cst_15 = arith.constant dense<0.000000e+00> : vector<8x3xf32>
    %22 = tpu.matmul %18, %21, %cst_15 {dimension_numbers = #tpu.dot_dimension_numbers<[1], [1], [0], [0], [0, 0, 1, 0], [], []>} : vector<8x1000xf32>, vector<3x1000xf32>, vector<8x3xf32> -> vector<8x3xf32>
    %23 = tpu.reciprocal %20 {approx = true} : vector<8x1xf32> -> vector<8x1xf32>
    %24 = vector.broadcast %23 : vector<8x1xf32> to vector<8x3xf32>
    %25 = arith.mulf %22, %24 : vector<8x3xf32>
    %c0_16 = arith.constant 0 : index
    %c0_17 = arith.constant 0 : index
    %c0_18 = arith.constant 0 : index
    %26 = vector.load %arg6[%c0_16, %c0_17, %c0_18] : memref<1x8x3xf32, #tpu.memory_space<vmem>>, vector<1x8x3xf32>
    %27 = vector.shape_cast %26 : vector<1x8x3xf32> to vector<8x3xf32>
    %28 = vector.shape_cast %25 : vector<8x3xf32> to vector<1x8x3xf32>
    tpu.vector_store %arg6[%c0_16, %c0_17, %c0_18], %28 {strides = array<i32>} : memref<1x8x3xf32, #tpu.memory_space<vmem>>, vector<1x8x3xf32>,
    %c0_19 = arith.constant 0 : index
    %c0_20 = arith.constant 0 : index
    %c0_21 = arith.constant 0 : index
    %29 = vector.load %arg7[%c0_19, %c0_20, %c0_21] : memref<1x8x1xf32, #tpu.memory_space<vmem>>, vector<1x8x1xf32>
    %30 = vector.shape_cast %29 : vector<1x8x1xf32> to vector<8x1xf32>
    %31 = vector.shape_cast %13 : vector<8x1xf32> to vector<1x8x1xf32>
    tpu.vector_store %arg7[%c0_19, %c0_20, %c0_21], %31 {strides = array<i32>} : memref<1x8x1xf32, #tpu.memory_space<vmem>>, vector<1x8x1xf32>,
    return
  }
  func.func @transform_0(%arg0: i32) -> (i32, i32, i32) {
    %c0_i32 = arith.constant 0 : i32
    %c0_i32_0 = arith.constant 0 : i32
    %c0_i32_1 = arith.constant 0 : i32
    return %arg0, %c0_i32, %c0_i32_0 : i32, i32, i32
  }
  func.func @transform_1(%arg0: i32) -> (i32, i32) {
    %c0_i32 = arith.constant 0 : i32
    %c0_i32_0 = arith.constant 0 : i32
    %c0_i32_1 = arith.constant 0 : i32
    return %c0_i32, %c0_i32_0 : i32, i32
  }
  func.func @transform_2(%arg0: i32) -> (i32, i32) {
    %c0_i32 = arith.constant 0 : i32
    %c0_i32_0 = arith.constant 0 : i32
    %c0_i32_1 = arith.constant 0 : i32
    return %c0_i32, %c0_i32_0 : i32, i32
  }
  func.func @transform_3(%arg0: i32) -> (i32, i32) {
    %c0_i32 = arith.constant 0 : i32
    %c0_i32_0 = arith.constant 0 : i32
    %c0_i32_1 = arith.constant 0 : i32
    return %c0_i32, %c0_i32_0 : i32, i32
  }
  func.func @transform_4(%arg0: i32) -> (i32, i32, i32) {
    %c0_i32 = arith.constant 0 : i32
    %c0_i32_0 = arith.constant 0 : i32
    %c0_i32_1 = arith.constant 0 : i32
    return %arg0, %c0_i32, %c0_i32_0 : i32, i32, i32
  }
  func.func @transform_5(%arg0: i32) -> (i32, i32, i32) {
    %c0_i32 = arith.constant 0 : i32
    %c0_i32_0 = arith.constant 0 : i32
    %c0_i32_1 = arith.constant 0 : i32
    return %arg0, %c0_i32, %c0_i32_0 : i32, i32, i32
  }
  func.func @transform_6(%arg0: i32) -> (i32, i32, i32) {
    %c0_i32 = arith.constant 0 : i32
    %c0_i32_0 = arith.constant 0 : i32
    %c0_i32_1 = arith.constant 0 : i32
    return %arg0, %c0_i32, %c0_i32_0 : i32, i32, i32
  }
}

module attributes {stable_mosaic.version = 11 : i64} {
  func.func @kernel(%arg0: i32, %arg1: memref<1x16x32xf32, #tpu.memory_space<vmem>>, %arg2: memref<1x85x16xf32, #tpu.memory_space<vmem>>, %arg3: memref<1x32xf32, #tpu.memory_space<vmem>>, %arg4: memref<1x32xf32, #tpu.memory_space<vmem>>, %arg5: memref<1x16xf32, #tpu.memory_space<vmem>>, %arg6: memref<1x16xf32, #tpu.memory_space<vmem>>, %arg7: memref<32x16xf32, #tpu.memory_space<vmem>>, %arg8: memref<16x32xf32, #tpu.memory_space<vmem>>, %arg9: memref<16x32xf32, #tpu.memory_space<vmem>>, %arg10: memref<1x32xf32, #tpu.memory_space<vmem>>, %arg11: memref<1x32xf32, #tpu.memory_space<vmem>>, %arg12: memref<1x32xf32, #tpu.memory_space<vmem>>, %arg13: memref<32x256xf32, #tpu.memory_space<vmem>>, %arg14: memref<1x256xf32, #tpu.memory_space<vmem>>, %arg15: memref<128x32xf32, #tpu.memory_space<vmem>>, %arg16: memref<1x32xf32, #tpu.memory_space<vmem>>, %arg17: memref<1x16x32xf32, #tpu.memory_space<vmem>>) attributes {dimension_semantics = [#tpu.dimension_semantics<parallel>], iteration_bounds = array<i64: 2>, scalar_prefetch = 0 : i64, scratch_operands = 0 : i64, tpu.core_type = #tpu.core_type<tc>, window_params = [{transform_indices = @transform_0, window_bounds = array<i64: 1, 16, 32>}, {transform_indices = @transform_1, window_bounds = array<i64: 1, 85, 16>}, {pipeline_mode = #tpu.pipeline_mode<synchronous>, transform_indices = @transform_2, window_bounds = array<i64: 1, 32>}, {pipeline_mode = #tpu.pipeline_mode<synchronous>, transform_indices = @transform_3, window_bounds = array<i64: 1, 32>}, {pipeline_mode = #tpu.pipeline_mode<synchronous>, transform_indices = @transform_4, window_bounds = array<i64: 1, 16>}, {pipeline_mode = #tpu.pipeline_mode<synchronous>, transform_indices = @transform_5, window_bounds = array<i64: 1, 16>}, {pipeline_mode = #tpu.pipeline_mode<synchronous>, transform_indices = @transform_6, window_bounds = array<i64: 32, 16>}, {pipeline_mode = #tpu.pipeline_mode<synchronous>, transform_indices = @transform_7, window_bounds = array<i64: 16, 32>}, {pipeline_mode = #tpu.pipeline_mode<synchronous>, transform_indices = @transform_8, window_bounds = array<i64: 16, 32>}, {pipeline_mode = #tpu.pipeline_mode<synchronous>, transform_indices = @transform_9, window_bounds = array<i64: 1, 32>}, {pipeline_mode = #tpu.pipeline_mode<synchronous>, transform_indices = @transform_10, window_bounds = array<i64: 1, 32>}, {pipeline_mode = #tpu.pipeline_mode<synchronous>, transform_indices = @transform_11, window_bounds = array<i64: 1, 32>}, {pipeline_mode = #tpu.pipeline_mode<synchronous>, transform_indices = @transform_12, window_bounds = array<i64: 32, 256>}, {pipeline_mode = #tpu.pipeline_mode<synchronous>, transform_indices = @transform_13, window_bounds = array<i64: 1, 256>}, {pipeline_mode = #tpu.pipeline_mode<synchronous>, transform_indices = @transform_14, window_bounds = array<i64: 128, 32>}, {pipeline_mode = #tpu.pipeline_mode<synchronous>, transform_indices = @transform_15, window_bounds = array<i64: 1, 32>}, {transform_indices = @transform_16, window_bounds = array<i64: 1, 16, 32>}]} {
    %c0 = arith.constant 0 : index
    %c0_0 = arith.constant 0 : index
    %c0_1 = arith.constant 0 : index
    %0 = vector.load %arg1[%c0, %c0_0, %c0_1] : memref<1x16x32xf32, #tpu.memory_space<vmem>>, vector<1x16x32xf32>
    %1 = vector.shape_cast %0 : vector<1x16x32xf32> to vector<16x32xf32>
    %c0_2 = arith.constant 0 : index
    %c0_3 = arith.constant 0 : index
    %c0_4 = arith.constant 0 : index
    %2 = vector.load %arg2[%c0_2, %c0_3, %c0_4] : memref<1x85x16xf32, #tpu.memory_space<vmem>>, vector<1x85x16xf32>
    %3 = vector.shape_cast %2 : vector<1x85x16xf32> to vector<85x16xf32>
    %c0_5 = arith.constant 0 : index
    %c0_6 = arith.constant 0 : index
    %4 = vector.load %arg3[%c0_5, %c0_6] : memref<1x32xf32, #tpu.memory_space<vmem>>, vector<1x32xf32>
    %c0_7 = arith.constant 0 : index
    %c0_8 = arith.constant 0 : index
    %5 = vector.load %arg4[%c0_7, %c0_8] : memref<1x32xf32, #tpu.memory_space<vmem>>, vector<1x32xf32>
    %c0_9 = arith.constant 0 : index
    %c0_10 = arith.constant 0 : index
    %6 = vector.load %arg5[%c0_9, %c0_10] : memref<1x16xf32, #tpu.memory_space<vmem>>, vector<1x16xf32>
    %c0_11 = arith.constant 0 : index
    %c0_12 = arith.constant 0 : index
    %7 = vector.load %arg6[%c0_11, %c0_12] : memref<1x16xf32, #tpu.memory_space<vmem>>, vector<1x16xf32>
    %c0_13 = arith.constant 0 : index
    %c0_14 = arith.constant 0 : index
    %8 = vector.load %arg7[%c0_13, %c0_14] : memref<32x16xf32, #tpu.memory_space<vmem>>, vector<32x16xf32>
    %c0_15 = arith.constant 0 : index
    %c0_16 = arith.constant 0 : index
    %9 = vector.load %arg8[%c0_15, %c0_16] : memref<16x32xf32, #tpu.memory_space<vmem>>, vector<16x32xf32>
    %c0_17 = arith.constant 0 : index
    %c0_18 = arith.constant 0 : index
    %10 = vector.load %arg9[%c0_17, %c0_18] : memref<16x32xf32, #tpu.memory_space<vmem>>, vector<16x32xf32>
    %c0_19 = arith.constant 0 : index
    %c0_20 = arith.constant 0 : index
    %11 = vector.load %arg10[%c0_19, %c0_20] : memref<1x32xf32, #tpu.memory_space<vmem>>, vector<1x32xf32>
    %cst = arith.constant dense<0.000000e+00> : vector<16xf32>
    %12 = vector.multi_reduction <add>, %1, %cst [1] : vector<16x32xf32> to vector<16xf32>
    %13 = vector.shape_cast %12 : vector<16xf32> to vector<16x1xf32>
    %cst_21 = arith.constant 3.200000e+01 : f32
    %14 = vector.broadcast %cst_21 : f32 to vector<16x1xf32>
    %15 = arith.divf %13, %14 : vector<16x1xf32>
    %16 = vector.broadcast %15 : vector<16x1xf32> to vector<16x32xf32>
    %17 = arith.subf %1, %16 : vector<16x32xf32>
    %18 = arith.mulf %17, %17 : vector<16x32xf32>
    %cst_22 = arith.constant dense<0.000000e+00> : vector<16xf32>
    %19 = vector.multi_reduction <add>, %18, %cst_22 [1] : vector<16x32xf32> to vector<16xf32>
    %20 = vector.shape_cast %19 : vector<16xf32> to vector<16x1xf32>
    %cst_23 = arith.constant 3.200000e+01 : f32
    %21 = vector.broadcast %cst_23 : f32 to vector<16x1xf32>
    %22 = arith.divf %20, %21 : vector<16x1xf32>
    %cst_24 = arith.constant 9.99999974E-6 : f32
    %23 = vector.broadcast %cst_24 : f32 to vector<16x1xf32>
    %24 = arith.addf %22, %23 : vector<16x1xf32>
    %25 = math.rsqrt %24 : vector<16x1xf32>
    %26 = vector.broadcast %25 : vector<16x1xf32> to vector<16x32xf32>
    %27 = arith.mulf %17, %26 : vector<16x32xf32>
    %28 = vector.broadcast %4 : vector<1x32xf32> to vector<16x32xf32>
    %29 = arith.mulf %27, %28 : vector<16x32xf32>
    %30 = vector.broadcast %5 : vector<1x32xf32> to vector<16x32xf32>
    %31 = arith.addf %29, %30 : vector<16x32xf32>
    %cst_25 = arith.constant dense<0.000000e+00> : vector<85xf32>
    %32 = vector.multi_reduction <add>, %3, %cst_25 [1] : vector<85x16xf32> to vector<85xf32>
    %33 = vector.shape_cast %32 : vector<85xf32> to vector<85x1xf32>
    %cst_26 = arith.constant 1.600000e+01 : f32
    %34 = vector.broadcast %cst_26 : f32 to vector<85x1xf32>
    %35 = arith.divf %33, %34 : vector<85x1xf32>
    %36 = vector.broadcast %35 : vector<85x1xf32> to vector<85x16xf32>
    %37 = arith.subf %3, %36 : vector<85x16xf32>
    %38 = arith.mulf %37, %37 : vector<85x16xf32>
    %cst_27 = arith.constant dense<0.000000e+00> : vector<85xf32>
    %39 = vector.multi_reduction <add>, %38, %cst_27 [1] : vector<85x16xf32> to vector<85xf32>
    %40 = vector.shape_cast %39 : vector<85xf32> to vector<85x1xf32>
    %cst_28 = arith.constant 1.600000e+01 : f32
    %41 = vector.broadcast %cst_28 : f32 to vector<85x1xf32>
    %42 = arith.divf %40, %41 : vector<85x1xf32>
    %cst_29 = arith.constant 9.99999974E-6 : f32
    %43 = vector.broadcast %cst_29 : f32 to vector<85x1xf32>
    %44 = arith.addf %42, %43 : vector<85x1xf32>
    %45 = math.rsqrt %44 : vector<85x1xf32>
    %46 = vector.broadcast %45 : vector<85x1xf32> to vector<85x16xf32>
    %47 = arith.mulf %37, %46 : vector<85x16xf32>
    %48 = vector.broadcast %6 : vector<1x16xf32> to vector<85x16xf32>
    %49 = arith.mulf %47, %48 : vector<85x16xf32>
    %50 = vector.broadcast %7 : vector<1x16xf32> to vector<85x16xf32>
    %51 = arith.addf %49, %50 : vector<85x16xf32>
    %52 = arith.truncf %31 : vector<16x32xf32> to vector<16x32xbf16>
    %53 = arith.truncf %8 : vector<32x16xf32> to vector<32x16xbf16>
    %cst_30 = arith.constant dense<0.000000e+00> : vector<16x16xf32>
    %54 = tpu.matmul %52, %53, %cst_30 {dimension_numbers = #tpu.dot_dimension_numbers<[1], [0], [0], [1], [0, 0, 1, 1], [], []>} : vector<16x32xbf16>, vector<32x16xbf16>, vector<16x16xf32> -> vector<16x16xf32>
    %55 = arith.truncf %51 : vector<85x16xf32> to vector<85x16xbf16>
    %56 = arith.truncf %9 : vector<16x32xf32> to vector<16x32xbf16>
    %cst_31 = arith.constant dense<0.000000e+00> : vector<85x32xf32>
    %57 = tpu.matmul %55, %56, %cst_31 {dimension_numbers = #tpu.dot_dimension_numbers<[1], [0], [0], [1], [0, 0, 1, 1], [], []>} : vector<85x16xbf16>, vector<16x32xbf16>, vector<85x32xf32> -> vector<85x32xf32>
    %58 = vector.extract_strided_slice %57 {offsets = [0, 0], sizes = [85, 16], strides = [1, 1]} : vector<85x32xf32> to vector<85x16xf32>
    %59 = vector.extract_strided_slice %57 {offsets = [0, 16], sizes = [85, 16], strides = [1, 1]} : vector<85x32xf32> to vector<85x16xf32>
    %cst_32 = arith.constant dense<0.000000e+00> : vector<16x85xf32>
    %60 = tpu.matmul %54, %58, %cst_32 {dimension_numbers = #tpu.dot_dimension_numbers<[1], [1], [0], [0], [0, 0, 1, 0], [], []>} : vector<16x16xf32>, vector<85x16xf32>, vector<16x85xf32> -> vector<16x85xf32>
    %cst_33 = arith.constant 2.500000e-01 : f32
    %61 = vector.broadcast %cst_33 : f32 to vector<16x85xf32>
    %62 = arith.mulf %60, %61 : vector<16x85xf32>
    %cst_34 = arith.constant dense<0xFF800000> : vector<16xf32>
    %63 = vector.multi_reduction <maximumf>, %62, %cst_34 [1] : vector<16x85xf32> to vector<16xf32>
    %64 = vector.shape_cast %63 : vector<16xf32> to vector<16x1xf32>
    %65 = vector.broadcast %64 : vector<16x1xf32> to vector<16x85xf32>
    %66 = arith.subf %62, %65 : vector<16x85xf32>
    %67 = math.exp %66 : vector<16x85xf32>
    %cst_35 = arith.constant dense<0.000000e+00> : vector<16xf32>
    %68 = vector.multi_reduction <add>, %67, %cst_35 [1] : vector<16x85xf32> to vector<16xf32>
    %69 = vector.shape_cast %68 : vector<16xf32> to vector<16x1xf32>
    %70 = tpu.reciprocal %69 {approx = true} : vector<16x1xf32> -> vector<16x1xf32>
    %71 = vector.broadcast %70 : vector<16x1xf32> to vector<16x85xf32>
    %72 = arith.mulf %67, %71 : vector<16x85xf32>
    %cst_36 = arith.constant dense<0.000000e+00> : vector<16x16xf32>
    %73 = tpu.matmul %72, %59, %cst_36 {dimension_numbers = #tpu.dot_dimension_numbers<[1], [0], [0], [1], [0, 0, 1, 1], [], []>} : vector<16x85xf32>, vector<85x16xf32>, vector<16x16xf32> -> vector<16x16xf32>
    %74 = arith.truncf %73 : vector<16x16xf32> to vector<16x16xbf16>
    %75 = arith.truncf %10 : vector<16x32xf32> to vector<16x32xbf16>
    %cst_37 = arith.constant dense<0.000000e+00> : vector<16x32xf32>
    %76 = tpu.matmul %74, %75, %cst_37 {dimension_numbers = #tpu.dot_dimension_numbers<[1], [0], [0], [1], [0, 0, 1, 1], [], []>} : vector<16x16xbf16>, vector<16x32xbf16>, vector<16x32xf32> -> vector<16x32xf32>
    %77 = vector.broadcast %11 : vector<1x32xf32> to vector<16x32xf32>
    %78 = arith.addf %76, %77 : vector<16x32xf32>
    %79 = arith.addf %78, %1 : vector<16x32xf32>
    %c0_38 = arith.constant 0 : index
    %c0_39 = arith.constant 0 : index
    %80 = vector.load %arg11[%c0_38, %c0_39] : memref<1x32xf32, #tpu.memory_space<vmem>>, vector<1x32xf32>
    %c0_40 = arith.constant 0 : index
    %c0_41 = arith.constant 0 : index
    %81 = vector.load %arg12[%c0_40, %c0_41] : memref<1x32xf32, #tpu.memory_space<vmem>>, vector<1x32xf32>
    %c0_42 = arith.constant 0 : index
    %c0_43 = arith.constant 0 : index
    %82 = vector.load %arg13[%c0_42, %c0_43] : memref<32x256xf32, #tpu.memory_space<vmem>>, vector<32x256xf32>
    %c0_44 = arith.constant 0 : index
    %c0_45 = arith.constant 0 : index
    %83 = vector.load %arg14[%c0_44, %c0_45] : memref<1x256xf32, #tpu.memory_space<vmem>>, vector<1x256xf32>
    %c0_46 = arith.constant 0 : index
    %c0_47 = arith.constant 0 : index
    %84 = vector.load %arg15[%c0_46, %c0_47] : memref<128x32xf32, #tpu.memory_space<vmem>>, vector<128x32xf32>
    %c0_48 = arith.constant 0 : index
    %c0_49 = arith.constant 0 : index
    %85 = vector.load %arg16[%c0_48, %c0_49] : memref<1x32xf32, #tpu.memory_space<vmem>>, vector<1x32xf32>
    %cst_50 = arith.constant dense<0.000000e+00> : vector<16xf32>
    %86 = vector.multi_reduction <add>, %79, %cst_50 [1] : vector<16x32xf32> to vector<16xf32>
    %87 = vector.shape_cast %86 : vector<16xf32> to vector<16x1xf32>
    %cst_51 = arith.constant 3.200000e+01 : f32
    %88 = vector.broadcast %cst_51 : f32 to vector<16x1xf32>
    %89 = arith.divf %87, %88 : vector<16x1xf32>
    %90 = vector.broadcast %89 : vector<16x1xf32> to vector<16x32xf32>
    %91 = arith.subf %79, %90 : vector<16x32xf32>
    %92 = arith.mulf %91, %91 : vector<16x32xf32>
    %cst_52 = arith.constant dense<0.000000e+00> : vector<16xf32>
    %93 = vector.multi_reduction <add>, %92, %cst_52 [1] : vector<16x32xf32> to vector<16xf32>
    %94 = vector.shape_cast %93 : vector<16xf32> to vector<16x1xf32>
    %cst_53 = arith.constant 3.200000e+01 : f32
    %95 = vector.broadcast %cst_53 : f32 to vector<16x1xf32>
    %96 = arith.divf %94, %95 : vector<16x1xf32>
    %cst_54 = arith.constant 9.99999974E-6 : f32
    %97 = vector.broadcast %cst_54 : f32 to vector<16x1xf32>
    %98 = arith.addf %96, %97 : vector<16x1xf32>
    %99 = math.rsqrt %98 : vector<16x1xf32>
    %100 = vector.broadcast %99 : vector<16x1xf32> to vector<16x32xf32>
    %101 = arith.mulf %91, %100 : vector<16x32xf32>
    %102 = vector.broadcast %80 : vector<1x32xf32> to vector<16x32xf32>
    %103 = arith.mulf %101, %102 : vector<16x32xf32>
    %104 = vector.broadcast %81 : vector<1x32xf32> to vector<16x32xf32>
    %105 = arith.addf %103, %104 : vector<16x32xf32>
    %106 = arith.truncf %105 : vector<16x32xf32> to vector<16x32xbf16>
    %107 = arith.truncf %82 : vector<32x256xf32> to vector<32x256xbf16>
    %cst_55 = arith.constant dense<0.000000e+00> : vector<16x256xf32>
    %108 = tpu.matmul %106, %107, %cst_55 {dimension_numbers = #tpu.dot_dimension_numbers<[1], [0], [0], [1], [0, 0, 1, 1], [], []>} : vector<16x32xbf16>, vector<32x256xbf16>, vector<16x256xf32> -> vector<16x256xf32>
    %109 = vector.broadcast %83 : vector<1x256xf32> to vector<16x256xf32>
    %110 = arith.addf %108, %109 : vector<16x256xf32>
    %111 = vector.extract_strided_slice %110 {offsets = [0, 0], sizes = [16, 128], strides = [1, 1]} : vector<16x256xf32> to vector<16x128xf32>
    %112 = vector.extract_strided_slice %110 {offsets = [0, 128], sizes = [16, 128], strides = [1, 1]} : vector<16x256xf32> to vector<16x128xf32>
    %cst_56 = arith.constant 0.707106769 : f32
    %113 = vector.broadcast %cst_56 : f32 to vector<16x128xf32>
    %114 = arith.mulf %112, %113 : vector<16x128xf32>
    %115 = math.absf %114 : vector<16x128xf32>
    %cst_57 = arith.constant 0.327591091 : f32
    %116 = vector.broadcast %cst_57 : f32 to vector<16x128xf32>
    %117 = arith.mulf %116, %115 : vector<16x128xf32>
    %cst_58 = arith.constant 1.000000e+00 : f32
    %118 = vector.broadcast %cst_58 : f32 to vector<16x128xf32>
    %119 = arith.addf %118, %117 : vector<16x128xf32>
    %cst_59 = arith.constant 1.000000e+00 : f32
    %120 = vector.broadcast %cst_59 : f32 to vector<16x128xf32>
    %121 = arith.divf %120, %119 : vector<16x128xf32>
    %cst_60 = arith.constant 1.06140542 : f32
    %122 = vector.broadcast %cst_60 : f32 to vector<16x128xf32>
    %123 = arith.mulf %121, %122 : vector<16x128xf32>
    %cst_61 = arith.constant -1.45315206 : f32
    %124 = vector.broadcast %cst_61 : f32 to vector<16x128xf32>
    %125 = arith.addf %124, %123 : vector<16x128xf32>
    %126 = arith.mulf %121, %125 : vector<16x128xf32>
    %cst_62 = arith.constant 1.42141378 : f32
    %127 = vector.broadcast %cst_62 : f32 to vector<16x128xf32>
    %128 = arith.addf %127, %126 : vector<16x128xf32>
    %129 = arith.mulf %121, %128 : vector<16x128xf32>
    %cst_63 = arith.constant -0.284496725 : f32
    %130 = vector.broadcast %cst_63 : f32 to vector<16x128xf32>
    %131 = arith.addf %130, %129 : vector<16x128xf32>
    %132 = arith.mulf %121, %131 : vector<16x128xf32>
    %cst_64 = arith.constant 0.254829586 : f32
    %133 = vector.broadcast %cst_64 : f32 to vector<16x128xf32>
    %134 = arith.addf %133, %132 : vector<16x128xf32>
    %135 = arith.mulf %121, %134 : vector<16x128xf32>
    %cst_65 = arith.constant 0.000000e+00 : f32
    %136 = vector.broadcast %cst_65 : f32 to vector<16x128xf32>
    %137 = arith.subf %136, %115 : vector<16x128xf32>
    %138 = arith.mulf %137, %115 : vector<16x128xf32>
    %139 = math.exp %138 : vector<16x128xf32>
    %140 = arith.mulf %135, %139 : vector<16x128xf32>
    %cst_66 = arith.constant 1.000000e+00 : f32
    %141 = vector.broadcast %cst_66 : f32 to vector<16x128xf32>
    %142 = arith.subf %141, %140 : vector<16x128xf32>
    %cst_67 = arith.constant 0.000000e+00 : f32
    %143 = vector.broadcast %cst_67 : f32 to vector<16x128xf32>
    %144 = arith.cmpf olt, %114, %143 : vector<16x128xf32>
    %cst_68 = arith.constant 0.000000e+00 : f32
    %145 = vector.broadcast %cst_68 : f32 to vector<16x128xf32>
    %146 = arith.subf %145, %142 : vector<16x128xf32>
    %147 = arith.select %144, %146, %142 : vector<16x128xi1>, vector<16x128xf32>
    %cst_69 = arith.constant 5.000000e-01 : f32
    %148 = vector.broadcast %cst_69 : f32 to vector<16x128xf32>
    %149 = arith.mulf %148, %112 : vector<16x128xf32>
    %cst_70 = arith.constant 1.000000e+00 : f32
    %150 = vector.broadcast %cst_70 : f32 to vector<16x128xf32>
    %151 = arith.addf %150, %147 : vector<16x128xf32>
    %152 = arith.mulf %149, %151 : vector<16x128xf32>
    %153 = arith.mulf %111, %152 : vector<16x128xf32>
    %154 = arith.truncf %153 : vector<16x128xf32> to vector<16x128xbf16>
    %155 = arith.truncf %84 : vector<128x32xf32> to vector<128x32xbf16>
    %cst_71 = arith.constant dense<0.000000e+00> : vector<16x32xf32>
    %156 = tpu.matmul %154, %155, %cst_71 {dimension_numbers = #tpu.dot_dimension_numbers<[1], [0], [0], [1], [0, 0, 1, 1], [], []>} : vector<16x128xbf16>, vector<128x32xbf16>, vector<16x32xf32> -> vector<16x32xf32>
    %157 = arith.addf %79, %156 : vector<16x32xf32>
    %158 = vector.broadcast %85 : vector<1x32xf32> to vector<16x32xf32>
    %159 = arith.addf %157, %158 : vector<16x32xf32>
    %c0_72 = arith.constant 0 : index
    %c0_73 = arith.constant 0 : index
    %c0_74 = arith.constant 0 : index
    %160 = vector.load %arg17[%c0_72, %c0_73, %c0_74] : memref<1x16x32xf32, #tpu.memory_space<vmem>>, vector<1x16x32xf32>
    %161 = vector.shape_cast %160 : vector<1x16x32xf32> to vector<16x32xf32>
    %162 = vector.shape_cast %159 : vector<16x32xf32> to vector<1x16x32xf32>
    tpu.vector_store %arg17[%c0_72, %c0_73, %c0_74], %162 {strides = array<i32>} : memref<1x16x32xf32, #tpu.memory_space<vmem>>, vector<1x16x32xf32>,
    return
  }
  func.func @transform_0(%arg0: i32) -> (i32, i32, i32) {
    %c0_i32 = arith.constant 0 : i32
    %c0_i32_0 = arith.constant 0 : i32
    %c0_i32_1 = arith.constant 0 : i32
    return %arg0, %c0_i32, %c0_i32_0 : i32, i32, i32
  }
  func.func @transform_1(%arg0: i32) -> (i32, i32, i32) {
    %c0_i32 = arith.constant 0 : i32
    %c0_i32_0 = arith.constant 0 : i32
    %c0_i32_1 = arith.constant 0 : i32
    return %arg0, %c0_i32, %c0_i32_0 : i32, i32, i32
  }
  func.func @transform_2(%arg0: i32) -> (i32, i32) {
    %c0_i32 = arith.constant 0 : i32
    %c0_i32_0 = arith.constant 0 : i32
    %c0_i32_1 = arith.constant 0 : i32
    return %c0_i32, %c0_i32_0 : i32, i32
  }
  func.func @transform_3(%arg0: i32) -> (i32, i32) {
    %c0_i32 = arith.constant 0 : i32
    %c0_i32_0 = arith.constant 0 : i32
    %c0_i32_1 = arith.constant 0 : i32
    return %c0_i32, %c0_i32_0 : i32, i32
  }
  func.func @transform_4(%arg0: i32) -> (i32, i32) {
    %c0_i32 = arith.constant 0 : i32
    %c0_i32_0 = arith.constant 0 : i32
    %c0_i32_1 = arith.constant 0 : i32
    return %c0_i32, %c0_i32_0 : i32, i32
  }
  func.func @transform_5(%arg0: i32) -> (i32, i32) {
    %c0_i32 = arith.constant 0 : i32
    %c0_i32_0 = arith.constant 0 : i32
    %c0_i32_1 = arith.constant 0 : i32
    return %c0_i32, %c0_i32_0 : i32, i32
  }
  func.func @transform_6(%arg0: i32) -> (i32, i32) {
    %c0_i32 = arith.constant 0 : i32
    %c0_i32_0 = arith.constant 0 : i32
    %c0_i32_1 = arith.constant 0 : i32
    return %c0_i32, %c0_i32_0 : i32, i32
  }
  func.func @transform_7(%arg0: i32) -> (i32, i32) {
    %c0_i32 = arith.constant 0 : i32
    %c0_i32_0 = arith.constant 0 : i32
    %c0_i32_1 = arith.constant 0 : i32
    return %c0_i32, %c0_i32_0 : i32, i32
  }
  func.func @transform_8(%arg0: i32) -> (i32, i32) {
    %c0_i32 = arith.constant 0 : i32
    %c0_i32_0 = arith.constant 0 : i32
    %c0_i32_1 = arith.constant 0 : i32
    return %c0_i32, %c0_i32_0 : i32, i32
  }
  func.func @transform_9(%arg0: i32) -> (i32, i32) {
    %c0_i32 = arith.constant 0 : i32
    %c0_i32_0 = arith.constant 0 : i32
    %c0_i32_1 = arith.constant 0 : i32
    return %c0_i32, %c0_i32_0 : i32, i32
  }
  func.func @transform_10(%arg0: i32) -> (i32, i32) {
    %c0_i32 = arith.constant 0 : i32
    %c0_i32_0 = arith.constant 0 : i32
    %c0_i32_1 = arith.constant 0 : i32
    return %c0_i32, %c0_i32_0 : i32, i32
  }
  func.func @transform_11(%arg0: i32) -> (i32, i32) {
    %c0_i32 = arith.constant 0 : i32
    %c0_i32_0 = arith.constant 0 : i32
    %c0_i32_1 = arith.constant 0 : i32
    return %c0_i32, %c0_i32_0 : i32, i32
  }
  func.func @transform_12(%arg0: i32) -> (i32, i32) {
    %c0_i32 = arith.constant 0 : i32
    %c0_i32_0 = arith.constant 0 : i32
    %c0_i32_1 = arith.constant 0 : i32
    return %c0_i32, %c0_i32_0 : i32, i32
  }
  func.func @transform_13(%arg0: i32) -> (i32, i32) {
    %c0_i32 = arith.constant 0 : i32
    %c0_i32_0 = arith.constant 0 : i32
    %c0_i32_1 = arith.constant 0 : i32
    return %c0_i32, %c0_i32_0 : i32, i32
  }
  func.func @transform_14(%arg0: i32) -> (i32, i32) {
    %c0_i32 = arith.constant 0 : i32
    %c0_i32_0 = arith.constant 0 : i32
    %c0_i32_1 = arith.constant 0 : i32
    return %c0_i32, %c0_i32_0 : i32, i32
  }
  func.func @transform_15(%arg0: i32) -> (i32, i32) {
    %c0_i32 = arith.constant 0 : i32
    %c0_i32_0 = arith.constant 0 : i32
    %c0_i32_1 = arith.constant 0 : i32
    return %c0_i32, %c0_i32_0 : i32, i32
  }
  func.func @transform_16(%arg0: i32) -> (i32, i32, i32) {
    %c0_i32 = arith.constant 0 : i32
    %c0_i32_0 = arith.constant 0 : i32
    %c0_i32_1 = arith.constant 0 : i32
    return %arg0, %c0_i32, %c0_i32_0 : i32, i32, i32
  }
}

module attributes {stable_mosaic.version = 11 : i64} {
  func.func @kernel(%arg0: i32, %arg1: memref<1x16x32xf32, #tpu.memory_space<vmem>>, %arg2: memref<1x16x32xf32, #tpu.memory_space<vmem>>, %arg3: memref<1x32xf32, #tpu.memory_space<vmem>>, %arg4: memref<1x32xf32, #tpu.memory_space<vmem>>, %arg5: memref<1x32xf32, #tpu.memory_space<vmem>>, %arg6: memref<1x32xf32, #tpu.memory_space<vmem>>, %arg7: memref<32x32xf32, #tpu.memory_space<vmem>>, %arg8: memref<32x64xf32, #tpu.memory_space<vmem>>, %arg9: memref<32x32xf32, #tpu.memory_space<vmem>>, %arg10: memref<1x32xf32, #tpu.memory_space<vmem>>, %arg11: memref<1x32xf32, #tpu.memory_space<vmem>>, %arg12: memref<1x32xf32, #tpu.memory_space<vmem>>, %arg13: memref<32x256xf32, #tpu.memory_space<vmem>>, %arg14: memref<1x256xf32, #tpu.memory_space<vmem>>, %arg15: memref<128x32xf32, #tpu.memory_space<vmem>>, %arg16: memref<1x32xf32, #tpu.memory_space<vmem>>, %arg17: memref<1x16x32xf32, #tpu.memory_space<vmem>>) attributes {dimension_semantics = [#tpu.dimension_semantics<parallel>], iteration_bounds = array<i64: 2>, scalar_prefetch = 0 : i64, scratch_operands = 0 : i64, tpu.core_type = #tpu.core_type<tc>, window_params = [{transform_indices = @transform_0, window_bounds = array<i64: 1, 16, 32>}, {transform_indices = @transform_1, window_bounds = array<i64: 1, 16, 32>}, {pipeline_mode = #tpu.pipeline_mode<synchronous>, transform_indices = @transform_2, window_bounds = array<i64: 1, 32>}, {pipeline_mode = #tpu.pipeline_mode<synchronous>, transform_indices = @transform_3, window_bounds = array<i64: 1, 32>}, {pipeline_mode = #tpu.pipeline_mode<synchronous>, transform_indices = @transform_4, window_bounds = array<i64: 1, 32>}, {pipeline_mode = #tpu.pipeline_mode<synchronous>, transform_indices = @transform_5, window_bounds = array<i64: 1, 32>}, {pipeline_mode = #tpu.pipeline_mode<synchronous>, transform_indices = @transform_6, window_bounds = array<i64: 32, 32>}, {pipeline_mode = #tpu.pipeline_mode<synchronous>, transform_indices = @transform_7, window_bounds = array<i64: 32, 64>}, {pipeline_mode = #tpu.pipeline_mode<synchronous>, transform_indices = @transform_8, window_bounds = array<i64: 32, 32>}, {pipeline_mode = #tpu.pipeline_mode<synchronous>, transform_indices = @transform_9, window_bounds = array<i64: 1, 32>}, {pipeline_mode = #tpu.pipeline_mode<synchronous>, transform_indices = @transform_10, window_bounds = array<i64: 1, 32>}, {pipeline_mode = #tpu.pipeline_mode<synchronous>, transform_indices = @transform_11, window_bounds = array<i64: 1, 32>}, {pipeline_mode = #tpu.pipeline_mode<synchronous>, transform_indices = @transform_12, window_bounds = array<i64: 32, 256>}, {pipeline_mode = #tpu.pipeline_mode<synchronous>, transform_indices = @transform_13, window_bounds = array<i64: 1, 256>}, {pipeline_mode = #tpu.pipeline_mode<synchronous>, transform_indices = @transform_14, window_bounds = array<i64: 128, 32>}, {pipeline_mode = #tpu.pipeline_mode<synchronous>, transform_indices = @transform_15, window_bounds = array<i64: 1, 32>}, {transform_indices = @transform_16, window_bounds = array<i64: 1, 16, 32>}]} {
    %c0 = arith.constant 0 : index
    %c0_0 = arith.constant 0 : index
    %c0_1 = arith.constant 0 : index
    %0 = vector.load %arg1[%c0, %c0_0, %c0_1] : memref<1x16x32xf32, #tpu.memory_space<vmem>>, vector<1x16x32xf32>
    %1 = vector.shape_cast %0 : vector<1x16x32xf32> to vector<16x32xf32>
    %c0_2 = arith.constant 0 : index
    %c0_3 = arith.constant 0 : index
    %c0_4 = arith.constant 0 : index
    %2 = vector.load %arg2[%c0_2, %c0_3, %c0_4] : memref<1x16x32xf32, #tpu.memory_space<vmem>>, vector<1x16x32xf32>
    %3 = vector.shape_cast %2 : vector<1x16x32xf32> to vector<16x32xf32>
    %c0_5 = arith.constant 0 : index
    %c0_6 = arith.constant 0 : index
    %4 = vector.load %arg3[%c0_5, %c0_6] : memref<1x32xf32, #tpu.memory_space<vmem>>, vector<1x32xf32>
    %c0_7 = arith.constant 0 : index
    %c0_8 = arith.constant 0 : index
    %5 = vector.load %arg4[%c0_7, %c0_8] : memref<1x32xf32, #tpu.memory_space<vmem>>, vector<1x32xf32>
    %c0_9 = arith.constant 0 : index
    %c0_10 = arith.constant 0 : index
    %6 = vector.load %arg5[%c0_9, %c0_10] : memref<1x32xf32, #tpu.memory_space<vmem>>, vector<1x32xf32>
    %c0_11 = arith.constant 0 : index
    %c0_12 = arith.constant 0 : index
    %7 = vector.load %arg6[%c0_11, %c0_12] : memref<1x32xf32, #tpu.memory_space<vmem>>, vector<1x32xf32>
    %c0_13 = arith.constant 0 : index
    %c0_14 = arith.constant 0 : index
    %8 = vector.load %arg7[%c0_13, %c0_14] : memref<32x32xf32, #tpu.memory_space<vmem>>, vector<32x32xf32>
    %c0_15 = arith.constant 0 : index
    %c0_16 = arith.constant 0 : index
    %9 = vector.load %arg8[%c0_15, %c0_16] : memref<32x64xf32, #tpu.memory_space<vmem>>, vector<32x64xf32>
    %c0_17 = arith.constant 0 : index
    %c0_18 = arith.constant 0 : index
    %10 = vector.load %arg9[%c0_17, %c0_18] : memref<32x32xf32, #tpu.memory_space<vmem>>, vector<32x32xf32>
    %c0_19 = arith.constant 0 : index
    %c0_20 = arith.constant 0 : index
    %11 = vector.load %arg10[%c0_19, %c0_20] : memref<1x32xf32, #tpu.memory_space<vmem>>, vector<1x32xf32>
    %cst = arith.constant dense<0.000000e+00> : vector<16xf32>
    %12 = vector.multi_reduction <add>, %1, %cst [1] : vector<16x32xf32> to vector<16xf32>
    %13 = vector.shape_cast %12 : vector<16xf32> to vector<16x1xf32>
    %cst_21 = arith.constant 3.200000e+01 : f32
    %14 = vector.broadcast %cst_21 : f32 to vector<16x1xf32>
    %15 = arith.divf %13, %14 : vector<16x1xf32>
    %16 = vector.broadcast %15 : vector<16x1xf32> to vector<16x32xf32>
    %17 = arith.subf %1, %16 : vector<16x32xf32>
    %18 = arith.mulf %17, %17 : vector<16x32xf32>
    %cst_22 = arith.constant dense<0.000000e+00> : vector<16xf32>
    %19 = vector.multi_reduction <add>, %18, %cst_22 [1] : vector<16x32xf32> to vector<16xf32>
    %20 = vector.shape_cast %19 : vector<16xf32> to vector<16x1xf32>
    %cst_23 = arith.constant 3.200000e+01 : f32
    %21 = vector.broadcast %cst_23 : f32 to vector<16x1xf32>
    %22 = arith.divf %20, %21 : vector<16x1xf32>
    %cst_24 = arith.constant 9.99999974E-6 : f32
    %23 = vector.broadcast %cst_24 : f32 to vector<16x1xf32>
    %24 = arith.addf %22, %23 : vector<16x1xf32>
    %25 = math.rsqrt %24 : vector<16x1xf32>
    %26 = vector.broadcast %25 : vector<16x1xf32> to vector<16x32xf32>
    %27 = arith.mulf %17, %26 : vector<16x32xf32>
    %28 = vector.broadcast %4 : vector<1x32xf32> to vector<16x32xf32>
    %29 = arith.mulf %27, %28 : vector<16x32xf32>
    %30 = vector.broadcast %5 : vector<1x32xf32> to vector<16x32xf32>
    %31 = arith.addf %29, %30 : vector<16x32xf32>
    %cst_25 = arith.constant dense<0.000000e+00> : vector<16xf32>
    %32 = vector.multi_reduction <add>, %3, %cst_25 [1] : vector<16x32xf32> to vector<16xf32>
    %33 = vector.shape_cast %32 : vector<16xf32> to vector<16x1xf32>
    %cst_26 = arith.constant 3.200000e+01 : f32
    %34 = vector.broadcast %cst_26 : f32 to vector<16x1xf32>
    %35 = arith.divf %33, %34 : vector<16x1xf32>
    %36 = vector.broadcast %35 : vector<16x1xf32> to vector<16x32xf32>
    %37 = arith.subf %3, %36 : vector<16x32xf32>
    %38 = arith.mulf %37, %37 : vector<16x32xf32>
    %cst_27 = arith.constant dense<0.000000e+00> : vector<16xf32>
    %39 = vector.multi_reduction <add>, %38, %cst_27 [1] : vector<16x32xf32> to vector<16xf32>
    %40 = vector.shape_cast %39 : vector<16xf32> to vector<16x1xf32>
    %cst_28 = arith.constant 3.200000e+01 : f32
    %41 = vector.broadcast %cst_28 : f32 to vector<16x1xf32>
    %42 = arith.divf %40, %41 : vector<16x1xf32>
    %cst_29 = arith.constant 9.99999974E-6 : f32
    %43 = vector.broadcast %cst_29 : f32 to vector<16x1xf32>
    %44 = arith.addf %42, %43 : vector<16x1xf32>
    %45 = math.rsqrt %44 : vector<16x1xf32>
    %46 = vector.broadcast %45 : vector<16x1xf32> to vector<16x32xf32>
    %47 = arith.mulf %37, %46 : vector<16x32xf32>
    %48 = vector.broadcast %6 : vector<1x32xf32> to vector<16x32xf32>
    %49 = arith.mulf %47, %48 : vector<16x32xf32>
    %50 = vector.broadcast %7 : vector<1x32xf32> to vector<16x32xf32>
    %51 = arith.addf %49, %50 : vector<16x32xf32>
    %52 = arith.truncf %31 : vector<16x32xf32> to vector<16x32xbf16>
    %53 = arith.truncf %8 : vector<32x32xf32> to vector<32x32xbf16>
    %cst_30 = arith.constant dense<0.000000e+00> : vector<16x32xf32>
    %54 = tpu.matmul %52, %53, %cst_30 {dimension_numbers = #tpu.dot_dimension_numbers<[1], [0], [0], [1], [0, 0, 1, 1], [], []>} : vector<16x32xbf16>, vector<32x32xbf16>, vector<16x32xf32> -> vector<16x32xf32>
    %55 = arith.truncf %51 : vector<16x32xf32> to vector<16x32xbf16>
    %56 = arith.truncf %9 : vector<32x64xf32> to vector<32x64xbf16>
    %cst_31 = arith.constant dense<0.000000e+00> : vector<16x64xf32>
    %57 = tpu.matmul %55, %56, %cst_31 {dimension_numbers = #tpu.dot_dimension_numbers<[1], [0], [0], [1], [0, 0, 1, 1], [], []>} : vector<16x32xbf16>, vector<32x64xbf16>, vector<16x64xf32> -> vector<16x64xf32>
    %58 = vector.extract_strided_slice %57 {offsets = [0, 0], sizes = [16, 32], strides = [1, 1]} : vector<16x64xf32> to vector<16x32xf32>
    %59 = vector.extract_strided_slice %57 {offsets = [0, 32], sizes = [16, 32], strides = [1, 1]} : vector<16x64xf32> to vector<16x32xf32>
    %60 = vector.extract_strided_slice %54 {offsets = [0, 0], sizes = [16, 16], strides = [1, 1]} : vector<16x32xf32> to vector<16x16xf32>
    %61 = vector.extract_strided_slice %58 {offsets = [0, 0], sizes = [16, 16], strides = [1, 1]} : vector<16x32xf32> to vector<16x16xf32>
    %62 = vector.extract_strided_slice %59 {offsets = [0, 0], sizes = [16, 16], strides = [1, 1]} : vector<16x32xf32> to vector<16x16xf32>
    %cst_32 = arith.constant dense<0.000000e+00> : vector<16x16xf32>
    %63 = tpu.matmul %60, %61, %cst_32 {dimension_numbers = #tpu.dot_dimension_numbers<[1], [1], [0], [0], [0, 0, 1, 0], [], []>} : vector<16x16xf32>, vector<16x16xf32>, vector<16x16xf32> -> vector<16x16xf32>
    %cst_33 = arith.constant 2.500000e-01 : f32
    %64 = vector.broadcast %cst_33 : f32 to vector<16x16xf32>
    %65 = arith.mulf %63, %64 : vector<16x16xf32>
    %cst_34 = arith.constant dense<0xFF800000> : vector<16xf32>
    %66 = vector.multi_reduction <maximumf>, %65, %cst_34 [1] : vector<16x16xf32> to vector<16xf32>
    %67 = vector.shape_cast %66 : vector<16xf32> to vector<16x1xf32>
    %68 = vector.broadcast %67 : vector<16x1xf32> to vector<16x16xf32>
    %69 = arith.subf %65, %68 : vector<16x16xf32>
    %70 = math.exp %69 : vector<16x16xf32>
    %cst_35 = arith.constant dense<0.000000e+00> : vector<16xf32>
    %71 = vector.multi_reduction <add>, %70, %cst_35 [1] : vector<16x16xf32> to vector<16xf32>
    %72 = vector.shape_cast %71 : vector<16xf32> to vector<16x1xf32>
    %73 = tpu.reciprocal %72 {approx = true} : vector<16x1xf32> -> vector<16x1xf32>
    %74 = vector.broadcast %73 : vector<16x1xf32> to vector<16x16xf32>
    %75 = arith.mulf %70, %74 : vector<16x16xf32>
    %cst_36 = arith.constant dense<0.000000e+00> : vector<16x16xf32>
    %76 = tpu.matmul %75, %62, %cst_36 {dimension_numbers = #tpu.dot_dimension_numbers<[1], [0], [0], [1], [0, 0, 1, 1], [], []>} : vector<16x16xf32>, vector<16x16xf32>, vector<16x16xf32> -> vector<16x16xf32>
    %77 = vector.extract_strided_slice %54 {offsets = [0, 16], sizes = [16, 16], strides = [1, 1]} : vector<16x32xf32> to vector<16x16xf32>
    %78 = vector.extract_strided_slice %58 {offsets = [0, 16], sizes = [16, 16], strides = [1, 1]} : vector<16x32xf32> to vector<16x16xf32>
    %79 = vector.extract_strided_slice %59 {offsets = [0, 16], sizes = [16, 16], strides = [1, 1]} : vector<16x32xf32> to vector<16x16xf32>
    %cst_37 = arith.constant dense<0.000000e+00> : vector<16x16xf32>
    %80 = tpu.matmul %77, %78, %cst_37 {dimension_numbers = #tpu.dot_dimension_numbers<[1], [1], [0], [0], [0, 0, 1, 0], [], []>} : vector<16x16xf32>, vector<16x16xf32>, vector<16x16xf32> -> vector<16x16xf32>
    %cst_38 = arith.constant 2.500000e-01 : f32
    %81 = vector.broadcast %cst_38 : f32 to vector<16x16xf32>
    %82 = arith.mulf %80, %81 : vector<16x16xf32>
    %cst_39 = arith.constant dense<0xFF800000> : vector<16xf32>
    %83 = vector.multi_reduction <maximumf>, %82, %cst_39 [1] : vector<16x16xf32> to vector<16xf32>
    %84 = vector.shape_cast %83 : vector<16xf32> to vector<16x1xf32>
    %85 = vector.broadcast %84 : vector<16x1xf32> to vector<16x16xf32>
    %86 = arith.subf %82, %85 : vector<16x16xf32>
    %87 = math.exp %86 : vector<16x16xf32>
    %cst_40 = arith.constant dense<0.000000e+00> : vector<16xf32>
    %88 = vector.multi_reduction <add>, %87, %cst_40 [1] : vector<16x16xf32> to vector<16xf32>
    %89 = vector.shape_cast %88 : vector<16xf32> to vector<16x1xf32>
    %90 = tpu.reciprocal %89 {approx = true} : vector<16x1xf32> -> vector<16x1xf32>
    %91 = vector.broadcast %90 : vector<16x1xf32> to vector<16x16xf32>
    %92 = arith.mulf %87, %91 : vector<16x16xf32>
    %cst_41 = arith.constant dense<0.000000e+00> : vector<16x16xf32>
    %93 = tpu.matmul %92, %79, %cst_41 {dimension_numbers = #tpu.dot_dimension_numbers<[1], [0], [0], [1], [0, 0, 1, 1], [], []>} : vector<16x16xf32>, vector<16x16xf32>, vector<16x16xf32> -> vector<16x16xf32>
    %94 = tpu.concatenate %76, %93 in 1 : vector<16x16xf32>, vector<16x16xf32> -> vector<16x32xf32>
    %95 = arith.truncf %94 : vector<16x32xf32> to vector<16x32xbf16>
    %96 = arith.truncf %10 : vector<32x32xf32> to vector<32x32xbf16>
    %cst_42 = arith.constant dense<0.000000e+00> : vector<16x32xf32>
    %97 = tpu.matmul %95, %96, %cst_42 {dimension_numbers = #tpu.dot_dimension_numbers<[1], [0], [0], [1], [0, 0, 1, 1], [], []>} : vector<16x32xbf16>, vector<32x32xbf16>, vector<16x32xf32> -> vector<16x32xf32>
    %98 = vector.broadcast %11 : vector<1x32xf32> to vector<16x32xf32>
    %99 = arith.addf %97, %98 : vector<16x32xf32>
    %100 = arith.addf %99, %1 : vector<16x32xf32>
    %c0_43 = arith.constant 0 : index
    %c0_44 = arith.constant 0 : index
    %101 = vector.load %arg11[%c0_43, %c0_44] : memref<1x32xf32, #tpu.memory_space<vmem>>, vector<1x32xf32>
    %c0_45 = arith.constant 0 : index
    %c0_46 = arith.constant 0 : index
    %102 = vector.load %arg12[%c0_45, %c0_46] : memref<1x32xf32, #tpu.memory_space<vmem>>, vector<1x32xf32>
    %c0_47 = arith.constant 0 : index
    %c0_48 = arith.constant 0 : index
    %103 = vector.load %arg13[%c0_47, %c0_48] : memref<32x256xf32, #tpu.memory_space<vmem>>, vector<32x256xf32>
    %c0_49 = arith.constant 0 : index
    %c0_50 = arith.constant 0 : index
    %104 = vector.load %arg14[%c0_49, %c0_50] : memref<1x256xf32, #tpu.memory_space<vmem>>, vector<1x256xf32>
    %c0_51 = arith.constant 0 : index
    %c0_52 = arith.constant 0 : index
    %105 = vector.load %arg15[%c0_51, %c0_52] : memref<128x32xf32, #tpu.memory_space<vmem>>, vector<128x32xf32>
    %c0_53 = arith.constant 0 : index
    %c0_54 = arith.constant 0 : index
    %106 = vector.load %arg16[%c0_53, %c0_54] : memref<1x32xf32, #tpu.memory_space<vmem>>, vector<1x32xf32>
    %cst_55 = arith.constant dense<0.000000e+00> : vector<16xf32>
    %107 = vector.multi_reduction <add>, %100, %cst_55 [1] : vector<16x32xf32> to vector<16xf32>
    %108 = vector.shape_cast %107 : vector<16xf32> to vector<16x1xf32>
    %cst_56 = arith.constant 3.200000e+01 : f32
    %109 = vector.broadcast %cst_56 : f32 to vector<16x1xf32>
    %110 = arith.divf %108, %109 : vector<16x1xf32>
    %111 = vector.broadcast %110 : vector<16x1xf32> to vector<16x32xf32>
    %112 = arith.subf %100, %111 : vector<16x32xf32>
    %113 = arith.mulf %112, %112 : vector<16x32xf32>
    %cst_57 = arith.constant dense<0.000000e+00> : vector<16xf32>
    %114 = vector.multi_reduction <add>, %113, %cst_57 [1] : vector<16x32xf32> to vector<16xf32>
    %115 = vector.shape_cast %114 : vector<16xf32> to vector<16x1xf32>
    %cst_58 = arith.constant 3.200000e+01 : f32
    %116 = vector.broadcast %cst_58 : f32 to vector<16x1xf32>
    %117 = arith.divf %115, %116 : vector<16x1xf32>
    %cst_59 = arith.constant 9.99999974E-6 : f32
    %118 = vector.broadcast %cst_59 : f32 to vector<16x1xf32>
    %119 = arith.addf %117, %118 : vector<16x1xf32>
    %120 = math.rsqrt %119 : vector<16x1xf32>
    %121 = vector.broadcast %120 : vector<16x1xf32> to vector<16x32xf32>
    %122 = arith.mulf %112, %121 : vector<16x32xf32>
    %123 = vector.broadcast %101 : vector<1x32xf32> to vector<16x32xf32>
    %124 = arith.mulf %122, %123 : vector<16x32xf32>
    %125 = vector.broadcast %102 : vector<1x32xf32> to vector<16x32xf32>
    %126 = arith.addf %124, %125 : vector<16x32xf32>
    %127 = arith.truncf %126 : vector<16x32xf32> to vector<16x32xbf16>
    %128 = arith.truncf %103 : vector<32x256xf32> to vector<32x256xbf16>
    %cst_60 = arith.constant dense<0.000000e+00> : vector<16x256xf32>
    %129 = tpu.matmul %127, %128, %cst_60 {dimension_numbers = #tpu.dot_dimension_numbers<[1], [0], [0], [1], [0, 0, 1, 1], [], []>} : vector<16x32xbf16>, vector<32x256xbf16>, vector<16x256xf32> -> vector<16x256xf32>
    %130 = vector.broadcast %104 : vector<1x256xf32> to vector<16x256xf32>
    %131 = arith.addf %129, %130 : vector<16x256xf32>
    %132 = vector.extract_strided_slice %131 {offsets = [0, 0], sizes = [16, 128], strides = [1, 1]} : vector<16x256xf32> to vector<16x128xf32>
    %133 = vector.extract_strided_slice %131 {offsets = [0, 128], sizes = [16, 128], strides = [1, 1]} : vector<16x256xf32> to vector<16x128xf32>
    %cst_61 = arith.constant 0.707106769 : f32
    %134 = vector.broadcast %cst_61 : f32 to vector<16x128xf32>
    %135 = arith.mulf %133, %134 : vector<16x128xf32>
    %136 = math.absf %135 : vector<16x128xf32>
    %cst_62 = arith.constant 0.327591091 : f32
    %137 = vector.broadcast %cst_62 : f32 to vector<16x128xf32>
    %138 = arith.mulf %137, %136 : vector<16x128xf32>
    %cst_63 = arith.constant 1.000000e+00 : f32
    %139 = vector.broadcast %cst_63 : f32 to vector<16x128xf32>
    %140 = arith.addf %139, %138 : vector<16x128xf32>
    %cst_64 = arith.constant 1.000000e+00 : f32
    %141 = vector.broadcast %cst_64 : f32 to vector<16x128xf32>
    %142 = arith.divf %141, %140 : vector<16x128xf32>
    %cst_65 = arith.constant 1.06140542 : f32
    %143 = vector.broadcast %cst_65 : f32 to vector<16x128xf32>
    %144 = arith.mulf %142, %143 : vector<16x128xf32>
    %cst_66 = arith.constant -1.45315206 : f32
    %145 = vector.broadcast %cst_66 : f32 to vector<16x128xf32>
    %146 = arith.addf %145, %144 : vector<16x128xf32>
    %147 = arith.mulf %142, %146 : vector<16x128xf32>
    %cst_67 = arith.constant 1.42141378 : f32
    %148 = vector.broadcast %cst_67 : f32 to vector<16x128xf32>
    %149 = arith.addf %148, %147 : vector<16x128xf32>
    %150 = arith.mulf %142, %149 : vector<16x128xf32>
    %cst_68 = arith.constant -0.284496725 : f32
    %151 = vector.broadcast %cst_68 : f32 to vector<16x128xf32>
    %152 = arith.addf %151, %150 : vector<16x128xf32>
    %153 = arith.mulf %142, %152 : vector<16x128xf32>
    %cst_69 = arith.constant 0.254829586 : f32
    %154 = vector.broadcast %cst_69 : f32 to vector<16x128xf32>
    %155 = arith.addf %154, %153 : vector<16x128xf32>
    %156 = arith.mulf %142, %155 : vector<16x128xf32>
    %cst_70 = arith.constant 0.000000e+00 : f32
    %157 = vector.broadcast %cst_70 : f32 to vector<16x128xf32>
    %158 = arith.subf %157, %136 : vector<16x128xf32>
    %159 = arith.mulf %158, %136 : vector<16x128xf32>
    %160 = math.exp %159 : vector<16x128xf32>
    %161 = arith.mulf %156, %160 : vector<16x128xf32>
    %cst_71 = arith.constant 1.000000e+00 : f32
    %162 = vector.broadcast %cst_71 : f32 to vector<16x128xf32>
    %163 = arith.subf %162, %161 : vector<16x128xf32>
    %cst_72 = arith.constant 0.000000e+00 : f32
    %164 = vector.broadcast %cst_72 : f32 to vector<16x128xf32>
    %165 = arith.cmpf olt, %135, %164 : vector<16x128xf32>
    %cst_73 = arith.constant 0.000000e+00 : f32
    %166 = vector.broadcast %cst_73 : f32 to vector<16x128xf32>
    %167 = arith.subf %166, %163 : vector<16x128xf32>
    %168 = arith.select %165, %167, %163 : vector<16x128xi1>, vector<16x128xf32>
    %cst_74 = arith.constant 5.000000e-01 : f32
    %169 = vector.broadcast %cst_74 : f32 to vector<16x128xf32>
    %170 = arith.mulf %169, %133 : vector<16x128xf32>
    %cst_75 = arith.constant 1.000000e+00 : f32
    %171 = vector.broadcast %cst_75 : f32 to vector<16x128xf32>
    %172 = arith.addf %171, %168 : vector<16x128xf32>
    %173 = arith.mulf %170, %172 : vector<16x128xf32>
    %174 = arith.mulf %132, %173 : vector<16x128xf32>
    %175 = arith.truncf %174 : vector<16x128xf32> to vector<16x128xbf16>
    %176 = arith.truncf %105 : vector<128x32xf32> to vector<128x32xbf16>
    %cst_76 = arith.constant dense<0.000000e+00> : vector<16x32xf32>
    %177 = tpu.matmul %175, %176, %cst_76 {dimension_numbers = #tpu.dot_dimension_numbers<[1], [0], [0], [1], [0, 0, 1, 1], [], []>} : vector<16x128xbf16>, vector<128x32xbf16>, vector<16x32xf32> -> vector<16x32xf32>
    %178 = arith.addf %100, %177 : vector<16x32xf32>
    %179 = vector.broadcast %106 : vector<1x32xf32> to vector<16x32xf32>
    %180 = arith.addf %178, %179 : vector<16x32xf32>
    %c0_77 = arith.constant 0 : index
    %c0_78 = arith.constant 0 : index
    %c0_79 = arith.constant 0 : index
    %181 = vector.load %arg17[%c0_77, %c0_78, %c0_79] : memref<1x16x32xf32, #tpu.memory_space<vmem>>, vector<1x16x32xf32>
    %182 = vector.shape_cast %181 : vector<1x16x32xf32> to vector<16x32xf32>
    %183 = vector.shape_cast %180 : vector<16x32xf32> to vector<1x16x32xf32>
    tpu.vector_store %arg17[%c0_77, %c0_78, %c0_79], %183 {strides = array<i32>} : memref<1x16x32xf32, #tpu.memory_space<vmem>>, vector<1x16x32xf32>,
    return
  }
  func.func @transform_0(%arg0: i32) -> (i32, i32, i32) {
    %c0_i32 = arith.constant 0 : i32
    %c0_i32_0 = arith.constant 0 : i32
    %c0_i32_1 = arith.constant 0 : i32
    return %arg0, %c0_i32, %c0_i32_0 : i32, i32, i32
  }
  func.func @transform_1(%arg0: i32) -> (i32, i32, i32) {
    %c0_i32 = arith.constant 0 : i32
    %c0_i32_0 = arith.constant 0 : i32
    %c0_i32_1 = arith.constant 0 : i32
    return %arg0, %c0_i32, %c0_i32_0 : i32, i32, i32
  }
  func.func @transform_2(%arg0: i32) -> (i32, i32) {
    %c0_i32 = arith.constant 0 : i32
    %c0_i32_0 = arith.constant 0 : i32
    %c0_i32_1 = arith.constant 0 : i32
    return %c0_i32, %c0_i32_0 : i32, i32
  }
  func.func @transform_3(%arg0: i32) -> (i32, i32) {
    %c0_i32 = arith.constant 0 : i32
    %c0_i32_0 = arith.constant 0 : i32
    %c0_i32_1 = arith.constant 0 : i32
    return %c0_i32, %c0_i32_0 : i32, i32
  }
  func.func @transform_4(%arg0: i32) -> (i32, i32) {
    %c0_i32 = arith.constant 0 : i32
    %c0_i32_0 = arith.constant 0 : i32
    %c0_i32_1 = arith.constant 0 : i32
    return %c0_i32, %c0_i32_0 : i32, i32
  }
  func.func @transform_5(%arg0: i32) -> (i32, i32) {
    %c0_i32 = arith.constant 0 : i32
    %c0_i32_0 = arith.constant 0 : i32
    %c0_i32_1 = arith.constant 0 : i32
    return %c0_i32, %c0_i32_0 : i32, i32
  }
  func.func @transform_6(%arg0: i32) -> (i32, i32) {
    %c0_i32 = arith.constant 0 : i32
    %c0_i32_0 = arith.constant 0 : i32
    %c0_i32_1 = arith.constant 0 : i32
    return %c0_i32, %c0_i32_0 : i32, i32
  }
  func.func @transform_7(%arg0: i32) -> (i32, i32) {
    %c0_i32 = arith.constant 0 : i32
    %c0_i32_0 = arith.constant 0 : i32
    %c0_i32_1 = arith.constant 0 : i32
    return %c0_i32, %c0_i32_0 : i32, i32
  }
  func.func @transform_8(%arg0: i32) -> (i32, i32) {
    %c0_i32 = arith.constant 0 : i32
    %c0_i32_0 = arith.constant 0 : i32
    %c0_i32_1 = arith.constant 0 : i32
    return %c0_i32, %c0_i32_0 : i32, i32
  }
  func.func @transform_9(%arg0: i32) -> (i32, i32) {
    %c0_i32 = arith.constant 0 : i32
    %c0_i32_0 = arith.constant 0 : i32
    %c0_i32_1 = arith.constant 0 : i32
    return %c0_i32, %c0_i32_0 : i32, i32
  }
  func.func @transform_10(%arg0: i32) -> (i32, i32) {
    %c0_i32 = arith.constant 0 : i32
    %c0_i32_0 = arith.constant 0 : i32
    %c0_i32_1 = arith.constant 0 : i32
    return %c0_i32, %c0_i32_0 : i32, i32
  }
  func.func @transform_11(%arg0: i32) -> (i32, i32) {
    %c0_i32 = arith.constant 0 : i32
    %c0_i32_0 = arith.constant 0 : i32
    %c0_i32_1 = arith.constant 0 : i32
    return %c0_i32, %c0_i32_0 : i32, i32
  }
  func.func @transform_12(%arg0: i32) -> (i32, i32) {
    %c0_i32 = arith.constant 0 : i32
    %c0_i32_0 = arith.constant 0 : i32
    %c0_i32_1 = arith.constant 0 : i32
    return %c0_i32, %c0_i32_0 : i32, i32
  }
  func.func @transform_13(%arg0: i32) -> (i32, i32) {
    %c0_i32 = arith.constant 0 : i32
    %c0_i32_0 = arith.constant 0 : i32
    %c0_i32_1 = arith.constant 0 : i32
    return %c0_i32, %c0_i32_0 : i32, i32
  }
  func.func @transform_14(%arg0: i32) -> (i32, i32) {
    %c0_i32 = arith.constant 0 : i32
    %c0_i32_0 = arith.constant 0 : i32
    %c0_i32_1 = arith.constant 0 : i32
    return %c0_i32, %c0_i32_0 : i32, i32
  }
  func.func @transform_15(%arg0: i32) -> (i32, i32) {
    %c0_i32 = arith.constant 0 : i32
    %c0_i32_0 = arith.constant 0 : i32
    %c0_i32_1 = arith.constant 0 : i32
    return %c0_i32, %c0_i32_0 : i32, i32
  }
  func.func @transform_16(%arg0: i32) -> (i32, i32, i32) {
    %c0_i32 = arith.constant 0 : i32
    %c0_i32_0 = arith.constant 0 : i32
    %c0_i32_1 = arith.constant 0 : i32
    return %arg0, %c0_i32, %c0_i32_0 : i32, i32, i32
  }
}

module attributes {stable_mosaic.version = 11 : i64} {
  func.func @kernel(%arg0: i32, %arg1: memref<1x85x16xf32, #tpu.memory_space<vmem>>, %arg2: memref<1x16x32xf32, #tpu.memory_space<vmem>>, %arg3: memref<1x16xf32, #tpu.memory_space<vmem>>, %arg4: memref<1x16xf32, #tpu.memory_space<vmem>>, %arg5: memref<1x32xf32, #tpu.memory_space<vmem>>, %arg6: memref<1x32xf32, #tpu.memory_space<vmem>>, %arg7: memref<16x16xf32, #tpu.memory_space<vmem>>, %arg8: memref<32x32xf32, #tpu.memory_space<vmem>>, %arg9: memref<16x16xf32, #tpu.memory_space<vmem>>, %arg10: memref<1x16xf32, #tpu.memory_space<vmem>>, %arg11: memref<3x8xf32, #tpu.memory_space<vmem>>, %arg12: memref<1x85x16xf32, #tpu.memory_space<vmem>>, %arg13: memref<1x3x16xf32, #tpu.memory_space<vmem>>, %arg14: memref<1x1x16xf32, #tpu.memory_space<vmem>>) attributes {dimension_semantics = [#tpu.dimension_semantics<parallel>], iteration_bounds = array<i64: 2>, scalar_prefetch = 0 : i64, scratch_operands = 0 : i64, tpu.core_type = #tpu.core_type<tc>, window_params = [{transform_indices = @transform_0, window_bounds = array<i64: 1, 85, 16>}, {transform_indices = @transform_1, window_bounds = array<i64: 1, 16, 32>}, {pipeline_mode = #tpu.pipeline_mode<synchronous>, transform_indices = @transform_2, window_bounds = array<i64: 1, 16>}, {pipeline_mode = #tpu.pipeline_mode<synchronous>, transform_indices = @transform_3, window_bounds = array<i64: 1, 16>}, {pipeline_mode = #tpu.pipeline_mode<synchronous>, transform_indices = @transform_4, window_bounds = array<i64: 1, 32>}, {pipeline_mode = #tpu.pipeline_mode<synchronous>, transform_indices = @transform_5, window_bounds = array<i64: 1, 32>}, {pipeline_mode = #tpu.pipeline_mode<synchronous>, transform_indices = @transform_6, window_bounds = array<i64: 16, 16>}, {pipeline_mode = #tpu.pipeline_mode<synchronous>, transform_indices = @transform_7, window_bounds = array<i64: 32, 32>}, {pipeline_mode = #tpu.pipeline_mode<synchronous>, transform_indices = @transform_8, window_bounds = array<i64: 16, 16>}, {pipeline_mode = #tpu.pipeline_mode<synchronous>, transform_indices = @transform_9, window_bounds = array<i64: 1, 16>}, {pipeline_mode = #tpu.pipeline_mode<synchronous>, transform_indices = @transform_10, window_bounds = array<i64: 3, 8>}, {transform_indices = @transform_11, window_bounds = array<i64: 1, 85, 16>}, {transform_indices = @transform_12, window_bounds = array<i64: 1, 3, 16>}, {transform_indices = @transform_13, window_bounds = array<i64: 1, 1, 16>}]} {
    %c0 = arith.constant 0 : index
    %c0_0 = arith.constant 0 : index
    %c0_1 = arith.constant 0 : index
    %0 = vector.load %arg1[%c0, %c0_0, %c0_1] : memref<1x85x16xf32, #tpu.memory_space<vmem>>, vector<1x85x16xf32>
    %1 = vector.shape_cast %0 : vector<1x85x16xf32> to vector<85x16xf32>
    %c0_2 = arith.constant 0 : index
    %c0_3 = arith.constant 0 : index
    %c0_4 = arith.constant 0 : index
    %2 = vector.load %arg2[%c0_2, %c0_3, %c0_4] : memref<1x16x32xf32, #tpu.memory_space<vmem>>, vector<1x16x32xf32>
    %3 = vector.shape_cast %2 : vector<1x16x32xf32> to vector<16x32xf32>
    %c0_5 = arith.constant 0 : index
    %c0_6 = arith.constant 0 : index
    %4 = vector.load %arg3[%c0_5, %c0_6] : memref<1x16xf32, #tpu.memory_space<vmem>>, vector<1x16xf32>
    %c0_7 = arith.constant 0 : index
    %c0_8 = arith.constant 0 : index
    %5 = vector.load %arg4[%c0_7, %c0_8] : memref<1x16xf32, #tpu.memory_space<vmem>>, vector<1x16xf32>
    %c0_9 = arith.constant 0 : index
    %c0_10 = arith.constant 0 : index
    %6 = vector.load %arg5[%c0_9, %c0_10] : memref<1x32xf32, #tpu.memory_space<vmem>>, vector<1x32xf32>
    %c0_11 = arith.constant 0 : index
    %c0_12 = arith.constant 0 : index
    %7 = vector.load %arg6[%c0_11, %c0_12] : memref<1x32xf32, #tpu.memory_space<vmem>>, vector<1x32xf32>
    %c0_13 = arith.constant 0 : index
    %c0_14 = arith.constant 0 : index
    %8 = vector.load %arg7[%c0_13, %c0_14] : memref<16x16xf32, #tpu.memory_space<vmem>>, vector<16x16xf32>
    %c0_15 = arith.constant 0 : index
    %c0_16 = arith.constant 0 : index
    %9 = vector.load %arg8[%c0_15, %c0_16] : memref<32x32xf32, #tpu.memory_space<vmem>>, vector<32x32xf32>
    %c0_17 = arith.constant 0 : index
    %c0_18 = arith.constant 0 : index
    %10 = vector.load %arg9[%c0_17, %c0_18] : memref<16x16xf32, #tpu.memory_space<vmem>>, vector<16x16xf32>
    %c0_19 = arith.constant 0 : index
    %c0_20 = arith.constant 0 : index
    %11 = vector.load %arg10[%c0_19, %c0_20] : memref<1x16xf32, #tpu.memory_space<vmem>>, vector<1x16xf32>
    %cst = arith.constant dense<0.000000e+00> : vector<85xf32>
    %12 = vector.multi_reduction <add>, %1, %cst [1] : vector<85x16xf32> to vector<85xf32>
    %13 = vector.shape_cast %12 : vector<85xf32> to vector<85x1xf32>
    %cst_21 = arith.constant 1.600000e+01 : f32
    %14 = vector.broadcast %cst_21 : f32 to vector<85x1xf32>
    %15 = arith.divf %13, %14 : vector<85x1xf32>
    %16 = vector.broadcast %15 : vector<85x1xf32> to vector<85x16xf32>
    %17 = arith.subf %1, %16 : vector<85x16xf32>
    %18 = arith.mulf %17, %17 : vector<85x16xf32>
    %cst_22 = arith.constant dense<0.000000e+00> : vector<85xf32>
    %19 = vector.multi_reduction <add>, %18, %cst_22 [1] : vector<85x16xf32> to vector<85xf32>
    %20 = vector.shape_cast %19 : vector<85xf32> to vector<85x1xf32>
    %cst_23 = arith.constant 1.600000e+01 : f32
    %21 = vector.broadcast %cst_23 : f32 to vector<85x1xf32>
    %22 = arith.divf %20, %21 : vector<85x1xf32>
    %cst_24 = arith.constant 9.99999974E-6 : f32
    %23 = vector.broadcast %cst_24 : f32 to vector<85x1xf32>
    %24 = arith.addf %22, %23 : vector<85x1xf32>
    %25 = math.rsqrt %24 : vector<85x1xf32>
    %26 = vector.broadcast %25 : vector<85x1xf32> to vector<85x16xf32>
    %27 = arith.mulf %17, %26 : vector<85x16xf32>
    %28 = vector.broadcast %4 : vector<1x16xf32> to vector<85x16xf32>
    %29 = arith.mulf %27, %28 : vector<85x16xf32>
    %30 = vector.broadcast %5 : vector<1x16xf32> to vector<85x16xf32>
    %31 = arith.addf %29, %30 : vector<85x16xf32>
    %cst_25 = arith.constant dense<0.000000e+00> : vector<16xf32>
    %32 = vector.multi_reduction <add>, %3, %cst_25 [1] : vector<16x32xf32> to vector<16xf32>
    %33 = vector.shape_cast %32 : vector<16xf32> to vector<16x1xf32>
    %cst_26 = arith.constant 3.200000e+01 : f32
    %34 = vector.broadcast %cst_26 : f32 to vector<16x1xf32>
    %35 = arith.divf %33, %34 : vector<16x1xf32>
    %36 = vector.broadcast %35 : vector<16x1xf32> to vector<16x32xf32>
    %37 = arith.subf %3, %36 : vector<16x32xf32>
    %38 = arith.mulf %37, %37 : vector<16x32xf32>
    %cst_27 = arith.constant dense<0.000000e+00> : vector<16xf32>
    %39 = vector.multi_reduction <add>, %38, %cst_27 [1] : vector<16x32xf32> to vector<16xf32>
    %40 = vector.shape_cast %39 : vector<16xf32> to vector<16x1xf32>
    %cst_28 = arith.constant 3.200000e+01 : f32
    %41 = vector.broadcast %cst_28 : f32 to vector<16x1xf32>
    %42 = arith.divf %40, %41 : vector<16x1xf32>
    %cst_29 = arith.constant 9.99999974E-6 : f32
    %43 = vector.broadcast %cst_29 : f32 to vector<16x1xf32>
    %44 = arith.addf %42, %43 : vector<16x1xf32>
    %45 = math.rsqrt %44 : vector<16x1xf32>
    %46 = vector.broadcast %45 : vector<16x1xf32> to vector<16x32xf32>
    %47 = arith.mulf %37, %46 : vector<16x32xf32>
    %48 = vector.broadcast %6 : vector<1x32xf32> to vector<16x32xf32>
    %49 = arith.mulf %47, %48 : vector<16x32xf32>
    %50 = vector.broadcast %7 : vector<1x32xf32> to vector<16x32xf32>
    %51 = arith.addf %49, %50 : vector<16x32xf32>
    %52 = arith.truncf %31 : vector<85x16xf32> to vector<85x16xbf16>
    %53 = arith.truncf %8 : vector<16x16xf32> to vector<16x16xbf16>
    %cst_30 = arith.constant dense<0.000000e+00> : vector<85x16xf32>
    %54 = tpu.matmul %52, %53, %cst_30 {dimension_numbers = #tpu.dot_dimension_numbers<[1], [0], [0], [1], [0, 0, 1, 1], [], []>} : vector<85x16xbf16>, vector<16x16xbf16>, vector<85x16xf32> -> vector<85x16xf32>
    %55 = arith.truncf %51 : vector<16x32xf32> to vector<16x32xbf16>
    %56 = arith.truncf %9 : vector<32x32xf32> to vector<32x32xbf16>
    %cst_31 = arith.constant dense<0.000000e+00> : vector<16x32xf32>
    %57 = tpu.matmul %55, %56, %cst_31 {dimension_numbers = #tpu.dot_dimension_numbers<[1], [0], [0], [1], [0, 0, 1, 1], [], []>} : vector<16x32xbf16>, vector<32x32xbf16>, vector<16x32xf32> -> vector<16x32xf32>
    %58 = vector.extract_strided_slice %57 {offsets = [0, 0], sizes = [16, 16], strides = [1, 1]} : vector<16x32xf32> to vector<16x16xf32>
    %59 = vector.extract_strided_slice %57 {offsets = [0, 16], sizes = [16, 16], strides = [1, 1]} : vector<16x32xf32> to vector<16x16xf32>
    %cst_32 = arith.constant dense<0.000000e+00> : vector<85x16xf32>
    %60 = tpu.matmul %54, %58, %cst_32 {dimension_numbers = #tpu.dot_dimension_numbers<[1], [1], [0], [0], [0, 0, 1, 0], [], []>} : vector<85x16xf32>, vector<16x16xf32>, vector<85x16xf32> -> vector<85x16xf32>
    %cst_33 = arith.constant 2.500000e-01 : f32
    %61 = vector.broadcast %cst_33 : f32 to vector<85x16xf32>
    %62 = arith.mulf %60, %61 : vector<85x16xf32>
    %cst_34 = arith.constant dense<0xFF800000> : vector<85xf32>
    %63 = vector.multi_reduction <maximumf>, %62, %cst_34 [1] : vector<85x16xf32> to vector<85xf32>
    %64 = vector.shape_cast %63 : vector<85xf32> to vector<85x1xf32>
    %65 = vector.broadcast %64 : vector<85x1xf32> to vector<85x16xf32>
    %66 = arith.subf %62, %65 : vector<85x16xf32>
    %67 = math.exp %66 : vector<85x16xf32>
    %cst_35 = arith.constant dense<0.000000e+00> : vector<85xf32>
    %68 = vector.multi_reduction <add>, %67, %cst_35 [1] : vector<85x16xf32> to vector<85xf32>
    %69 = vector.shape_cast %68 : vector<85xf32> to vector<85x1xf32>
    %70 = tpu.reciprocal %69 {approx = true} : vector<85x1xf32> -> vector<85x1xf32>
    %71 = vector.broadcast %70 : vector<85x1xf32> to vector<85x16xf32>
    %72 = arith.mulf %67, %71 : vector<85x16xf32>
    %cst_36 = arith.constant dense<0.000000e+00> : vector<85x16xf32>
    %73 = tpu.matmul %72, %59, %cst_36 {dimension_numbers = #tpu.dot_dimension_numbers<[1], [0], [0], [1], [0, 0, 1, 1], [], []>} : vector<85x16xf32>, vector<16x16xf32>, vector<85x16xf32> -> vector<85x16xf32>
    %74 = arith.truncf %73 : vector<85x16xf32> to vector<85x16xbf16>
    %75 = arith.truncf %10 : vector<16x16xf32> to vector<16x16xbf16>
    %cst_37 = arith.constant dense<0.000000e+00> : vector<85x16xf32>
    %76 = tpu.matmul %74, %75, %cst_37 {dimension_numbers = #tpu.dot_dimension_numbers<[1], [0], [0], [1], [0, 0, 1, 1], [], []>} : vector<85x16xbf16>, vector<16x16xbf16>, vector<85x16xf32> -> vector<85x16xf32>
    %77 = vector.broadcast %11 : vector<1x16xf32> to vector<85x16xf32>
    %78 = arith.addf %76, %77 : vector<85x16xf32>
    %c0_38 = arith.constant 0 : index
    %c0_39 = arith.constant 0 : index
    %c0_40 = arith.constant 0 : index
    %79 = vector.load %arg12[%c0_38, %c0_39, %c0_40] : memref<1x85x16xf32, #tpu.memory_space<vmem>>, vector<1x85x16xf32>
    %80 = vector.shape_cast %79 : vector<1x85x16xf32> to vector<85x16xf32>
    %81 = vector.shape_cast %78 : vector<85x16xf32> to vector<1x85x16xf32>
    tpu.vector_store %arg12[%c0_38, %c0_39, %c0_40], %81 {strides = array<i32>} : memref<1x85x16xf32, #tpu.memory_space<vmem>>, vector<1x85x16xf32>,
    %c0_41 = arith.constant 0 : index
    %c77 = arith.constant 77 : index
    %c0_42 = arith.constant 0 : index
    %82 = vector.load %arg12[%c0_41, %c77, %c0_42] : memref<1x85x16xf32, #tpu.memory_space<vmem>>, vector<1x8x16xf32>
    %83 = vector.shape_cast %82 : vector<1x8x16xf32> to vector<8x16xf32>
    %cst_43 = arith.constant dense<0xFF800000> : vector<16xf32>
    %84 = vector.multi_reduction <maximumf>, %83, %cst_43 [0] : vector<8x16xf32> to vector<16xf32>
    %85 = vector.shape_cast %84 : vector<16xf32> to vector<1x16xf32>
    %86 = vector.broadcast %85 : vector<1x16xf32> to vector<8x16xf32>
    %87 = arith.subf %83, %86 : vector<8x16xf32>
    %cst_44 = arith.constant 1.000000e+02 : f32
    %88 = vector.broadcast %cst_44 : f32 to vector<8x16xf32>
    %89 = arith.mulf %87, %88 : vector<8x16xf32>
    %90 = math.exp %89 : vector<8x16xf32>
    %cst_45 = arith.constant dense<0.000000e+00> : vector<16xf32>
    %91 = vector.multi_reduction <add>, %90, %cst_45 [0] : vector<8x16xf32> to vector<16xf32>
    %92 = vector.shape_cast %91 : vector<16xf32> to vector<1x16xf32>
    %c0_46 = arith.constant 0 : index
    %c0_47 = arith.constant 0 : index
    %93 = vector.load %arg11[%c0_46, %c0_47] : memref<3x8xf32, #tpu.memory_space<vmem>>, vector<3x8xf32>
    %cst_48 = arith.constant dense<0.000000e+00> : vector<3x16xf32>
    %94 = tpu.matmul %93, %90, %cst_48 {dimension_numbers = #tpu.dot_dimension_numbers<[1], [0], [0], [1], [0, 0, 1, 1], [], []>} : vector<3x8xf32>, vector<8x16xf32>, vector<3x16xf32> -> vector<3x16xf32>
    %95 = tpu.reciprocal %92 {approx = true} : vector<1x16xf32> -> vector<1x16xf32>
    %96 = vector.broadcast %95 : vector<1x16xf32> to vector<3x16xf32>
    %97 = arith.mulf %94, %96 : vector<3x16xf32>
    %c0_49 = arith.constant 0 : index
    %c0_50 = arith.constant 0 : index
    %c0_51 = arith.constant 0 : index
    %98 = vector.load %arg13[%c0_49, %c0_50, %c0_51] : memref<1x3x16xf32, #tpu.memory_space<vmem>>, vector<1x3x16xf32>
    %99 = vector.shape_cast %98 : vector<1x3x16xf32> to vector<3x16xf32>
    %100 = vector.shape_cast %97 : vector<3x16xf32> to vector<1x3x16xf32>
    tpu.vector_store %arg13[%c0_49, %c0_50, %c0_51], %100 {strides = array<i32>} : memref<1x3x16xf32, #tpu.memory_space<vmem>>, vector<1x3x16xf32>,
    %c0_52 = arith.constant 0 : index
    %c0_53 = arith.constant 0 : index
    %c0_54 = arith.constant 0 : index
    %101 = vector.load %arg14[%c0_52, %c0_53, %c0_54] : memref<1x1x16xf32, #tpu.memory_space<vmem>>, vector<1x1x16xf32>
    %102 = vector.shape_cast %101 : vector<1x1x16xf32> to vector<1x16xf32>
    %103 = vector.shape_cast %85 : vector<1x16xf32> to vector<1x1x16xf32>
    tpu.vector_store %arg14[%c0_52, %c0_53, %c0_54], %103 {strides = array<i32>} : memref<1x1x16xf32, #tpu.memory_space<vmem>>, vector<1x1x16xf32>,
    return
  }
  func.func @transform_0(%arg0: i32) -> (i32, i32, i32) {
    %c0_i32 = arith.constant 0 : i32
    %c0_i32_0 = arith.constant 0 : i32
    %c0_i32_1 = arith.constant 0 : i32
    return %arg0, %c0_i32, %c0_i32_0 : i32, i32, i32
  }
  func.func @transform_1(%arg0: i32) -> (i32, i32, i32) {
    %c0_i32 = arith.constant 0 : i32
    %c0_i32_0 = arith.constant 0 : i32
    %c0_i32_1 = arith.constant 0 : i32
    return %arg0, %c0_i32, %c0_i32_0 : i32, i32, i32
  }
  func.func @transform_2(%arg0: i32) -> (i32, i32) {
    %c0_i32 = arith.constant 0 : i32
    %c0_i32_0 = arith.constant 0 : i32
    %c0_i32_1 = arith.constant 0 : i32
    return %c0_i32, %c0_i32_0 : i32, i32
  }
  func.func @transform_3(%arg0: i32) -> (i32, i32) {
    %c0_i32 = arith.constant 0 : i32
    %c0_i32_0 = arith.constant 0 : i32
    %c0_i32_1 = arith.constant 0 : i32
    return %c0_i32, %c0_i32_0 : i32, i32
  }
  func.func @transform_4(%arg0: i32) -> (i32, i32) {
    %c0_i32 = arith.constant 0 : i32
    %c0_i32_0 = arith.constant 0 : i32
    %c0_i32_1 = arith.constant 0 : i32
    return %c0_i32, %c0_i32_0 : i32, i32
  }
  func.func @transform_5(%arg0: i32) -> (i32, i32) {
    %c0_i32 = arith.constant 0 : i32
    %c0_i32_0 = arith.constant 0 : i32
    %c0_i32_1 = arith.constant 0 : i32
    return %c0_i32, %c0_i32_0 : i32, i32
  }
  func.func @transform_6(%arg0: i32) -> (i32, i32) {
    %c0_i32 = arith.constant 0 : i32
    %c0_i32_0 = arith.constant 0 : i32
    %c0_i32_1 = arith.constant 0 : i32
    return %c0_i32, %c0_i32_0 : i32, i32
  }
  func.func @transform_7(%arg0: i32) -> (i32, i32) {
    %c0_i32 = arith.constant 0 : i32
    %c0_i32_0 = arith.constant 0 : i32
    %c0_i32_1 = arith.constant 0 : i32
    return %c0_i32, %c0_i32_0 : i32, i32
  }
  func.func @transform_8(%arg0: i32) -> (i32, i32) {
    %c0_i32 = arith.constant 0 : i32
    %c0_i32_0 = arith.constant 0 : i32
    %c0_i32_1 = arith.constant 0 : i32
    return %c0_i32, %c0_i32_0 : i32, i32
  }
  func.func @transform_9(%arg0: i32) -> (i32, i32) {
    %c0_i32 = arith.constant 0 : i32
    %c0_i32_0 = arith.constant 0 : i32
    %c0_i32_1 = arith.constant 0 : i32
    return %c0_i32, %c0_i32_0 : i32, i32
  }
  func.func @transform_10(%arg0: i32) -> (i32, i32) {
    %c0_i32 = arith.constant 0 : i32
    %c0_i32_0 = arith.constant 0 : i32
    %c0_i32_1 = arith.constant 0 : i32
    return %c0_i32, %c0_i32_0 : i32, i32
  }
  func.func @transform_11(%arg0: i32) -> (i32, i32, i32) {
    %c0_i32 = arith.constant 0 : i32
    %c0_i32_0 = arith.constant 0 : i32
    %c0_i32_1 = arith.constant 0 : i32
    return %arg0, %c0_i32, %c0_i32_0 : i32, i32, i32
  }
  func.func @transform_12(%arg0: i32) -> (i32, i32, i32) {
    %c0_i32 = arith.constant 0 : i32
    %c0_i32_0 = arith.constant 0 : i32
    %c0_i32_1 = arith.constant 0 : i32
    return %arg0, %c0_i32, %c0_i32_0 : i32, i32, i32
  }
  func.func @transform_13(%arg0: i32) -> (i32, i32, i32) {
    %c0_i32 = arith.constant 0 : i32
    %c0_i32_0 = arith.constant 0 : i32
    %c0_i32_1 = arith.constant 0 : i32
    return %arg0, %c0_i32, %c0_i32_0 : i32, i32, i32
  }
}

module attributes {stable_mosaic.version = 11 : i64} {
  func.func @_conv_gemm_ss_kernel(%arg0: i32, %arg1: memref<1x432x1000xf32, #tpu.memory_space<vmem>>, %arg2: memref<8x432xf32, #tpu.memory_space<vmem>>, %arg3: memref<8x1xf32, #tpu.memory_space<vmem>>, %arg4: memref<3x1000xf32, #tpu.memory_space<vmem>>, %arg5: memref<1x8x1000xf32, #tpu.memory_space<vmem>>, %arg6: memref<1x8x3xf32, #tpu.memory_space<vmem>>, %arg7: memref<1x8x1xf32, #tpu.memory_space<vmem>>) attributes {dimension_semantics = [#tpu.dimension_semantics<parallel>], iteration_bounds = array<i64: 2>, scalar_prefetch = 0 : i64, scratch_operands = 0 : i64, tpu.core_type = #tpu.core_type<tc>, window_params = [{transform_indices = @transform_0, window_bounds = array<i64: 1, 432, 1000>}, {pipeline_mode = #tpu.pipeline_mode<synchronous>, transform_indices = @transform_1, window_bounds = array<i64: 8, 432>}, {pipeline_mode = #tpu.pipeline_mode<synchronous>, transform_indices = @transform_2, window_bounds = array<i64: 8, 1>}, {pipeline_mode = #tpu.pipeline_mode<synchronous>, transform_indices = @transform_3, window_bounds = array<i64: 3, 1000>}, {transform_indices = @transform_4, window_bounds = array<i64: 1, 8, 1000>}, {transform_indices = @transform_5, window_bounds = array<i64: 1, 8, 3>}, {transform_indices = @transform_6, window_bounds = array<i64: 1, 8, 1>}]} {
    %c0 = arith.constant 0 : index
    %c0_0 = arith.constant 0 : index
    %0 = vector.load %arg2[%c0, %c0_0] : memref<8x432xf32, #tpu.memory_space<vmem>>, vector<8x432xf32>
    %c0_1 = arith.constant 0 : index
    %c0_2 = arith.constant 0 : index
    %c0_3 = arith.constant 0 : index
    %1 = vector.load %arg1[%c0_1, %c0_2, %c0_3] : memref<1x432x1000xf32, #tpu.memory_space<vmem>>, vector<1x432x1000xf32>
    %2 = vector.shape_cast %1 : vector<1x432x1000xf32> to vector<432x1000xf32>
    %cst = arith.constant dense<0.000000e+00> : vector<8x1000xf32>
    %3 = tpu.matmul %0, %2, %cst {dimension_numbers = #tpu.dot_dimension_numbers<[1], [0], [0], [1], [0, 0, 1, 1], [], []>} : vector<8x432xf32>, vector<432x1000xf32>, vector<8x1000xf32> -> vector<8x1000xf32>
    %c0_4 = arith.constant 0 : index
    %c0_5 = arith.constant 0 : index
    %4 = vector.load %arg3[%c0_4, %c0_5] : memref<8x1xf32, #tpu.memory_space<vmem>>, vector<8x1xf32>
    %5 = vector.broadcast %4 : vector<8x1xf32> to vector<8x1000xf32>
    %6 = arith.addf %3, %5 : vector<8x1000xf32>
    %cst_6 = arith.constant 0.000000e+00 : f32
    %7 = vector.broadcast %cst_6 : f32 to vector<8x1000xf32>
    %8 = arith.maximumf %6, %7 : vector<8x1000xf32>
    %c0_7 = arith.constant 0 : index
    %c0_8 = arith.constant 0 : index
    %c0_9 = arith.constant 0 : index
    %9 = vector.load %arg5[%c0_7, %c0_8, %c0_9] : memref<1x8x1000xf32, #tpu.memory_space<vmem>>, vector<1x8x1000xf32>
    %10 = vector.shape_cast %9 : vector<1x8x1000xf32> to vector<8x1000xf32>
    %11 = vector.shape_cast %8 : vector<8x1000xf32> to vector<1x8x1000xf32>
    tpu.vector_store %arg5[%c0_7, %c0_8, %c0_9], %11 {strides = array<i32>} : memref<1x8x1000xf32, #tpu.memory_space<vmem>>, vector<1x8x1000xf32>,
    %cst_10 = arith.constant dense<0xFF800000> : vector<8xf32>
    %12 = vector.multi_reduction <maximumf>, %8, %cst_10 [1] : vector<8x1000xf32> to vector<8xf32>
    %13 = vector.shape_cast %12 : vector<8xf32> to vector<8x1xf32>
    %14 = vector.broadcast %13 : vector<8x1xf32> to vector<8x1000xf32>
    %15 = arith.subf %8, %14 : vector<8x1000xf32>
    %cst_11 = arith.constant 1.000000e+02 : f32
    %16 = vector.broadcast %cst_11 : f32 to vector<8x1000xf32>
    %17 = arith.mulf %15, %16 : vector<8x1000xf32>
    %18 = math.exp %17 : vector<8x1000xf32>
    %cst_12 = arith.constant dense<0.000000e+00> : vector<8xf32>
    %19 = vector.multi_reduction <add>, %18, %cst_12 [1] : vector<8x1000xf32> to vector<8xf32>
    %20 = vector.shape_cast %19 : vector<8xf32> to vector<8x1xf32>
    %c0_13 = arith.constant 0 : index
    %c0_14 = arith.constant 0 : index
    %21 = vector.load %arg4[%c0_13, %c0_14] : memref<3x1000xf32, #tpu.memory_space<vmem>>, vector<3x1000xf32>
    %cst_15 = arith.constant dense<0.000000e+00> : vector<8x3xf32>
    %22 = tpu.matmul %18, %21, %cst_15 {dimension_numbers = #tpu.dot_dimension_numbers<[1], [1], [0], [0], [0, 0, 1, 0], [], []>} : vector<8x1000xf32>, vector<3x1000xf32>, vector<8x3xf32> -> vector<8x3xf32>
    %23 = tpu.reciprocal %20 {approx = true} : vector<8x1xf32> -> vector<8x1xf32>
    %24 = vector.broadcast %23 : vector<8x1xf32> to vector<8x3xf32>
    %25 = arith.mulf %22, %24 : vector<8x3xf32>
    %c0_16 = arith.constant 0 : index
    %c0_17 = arith.constant 0 : index
    %c0_18 = arith.constant 0 : index
    %26 = vector.load %arg6[%c0_16, %c0_17, %c0_18] : memref<1x8x3xf32, #tpu.memory_space<vmem>>, vector<1x8x3xf32>
    %27 = vector.shape_cast %26 : vector<1x8x3xf32> to vector<8x3xf32>
    %28 = vector.shape_cast %25 : vector<8x3xf32> to vector<1x8x3xf32>
    tpu.vector_store %arg6[%c0_16, %c0_17, %c0_18], %28 {strides = array<i32>} : memref<1x8x3xf32, #tpu.memory_space<vmem>>, vector<1x8x3xf32>,
    %c0_19 = arith.constant 0 : index
    %c0_20 = arith.constant 0 : index
    %c0_21 = arith.constant 0 : index
    %29 = vector.load %arg7[%c0_19, %c0_20, %c0_21] : memref<1x8x1xf32, #tpu.memory_space<vmem>>, vector<1x8x1xf32>
    %30 = vector.shape_cast %29 : vector<1x8x1xf32> to vector<8x1xf32>
    %31 = vector.shape_cast %13 : vector<8x1xf32> to vector<1x8x1xf32>
    tpu.vector_store %arg7[%c0_19, %c0_20, %c0_21], %31 {strides = array<i32>} : memref<1x8x1xf32, #tpu.memory_space<vmem>>, vector<1x8x1xf32>,
    return
  }
  func.func @transform_0(%arg0: i32) -> (i32, i32, i32) {
    %c0_i32 = arith.constant 0 : i32
    %c0_i32_0 = arith.constant 0 : i32
    %c0_i32_1 = arith.constant 0 : i32
    return %arg0, %c0_i32, %c0_i32_0 : i32, i32, i32
  }
  func.func @transform_1(%arg0: i32) -> (i32, i32) {
    %c0_i32 = arith.constant 0 : i32
    %c0_i32_0 = arith.constant 0 : i32
    %c0_i32_1 = arith.constant 0 : i32
    return %c0_i32, %c0_i32_0 : i32, i32
  }
  func.func @transform_2(%arg0: i32) -> (i32, i32) {
    %c0_i32 = arith.constant 0 : i32
    %c0_i32_0 = arith.constant 0 : i32
    %c0_i32_1 = arith.constant 0 : i32
    return %c0_i32, %c0_i32_0 : i32, i32
  }
  func.func @transform_3(%arg0: i32) -> (i32, i32) {
    %c0_i32 = arith.constant 0 : i32
    %c0_i32_0 = arith.constant 0 : i32
    %c0_i32_1 = arith.constant 0 : i32
    return %c0_i32, %c0_i32_0 : i32, i32
  }
  func.func @transform_4(%arg0: i32) -> (i32, i32, i32) {
    %c0_i32 = arith.constant 0 : i32
    %c0_i32_0 = arith.constant 0 : i32
    %c0_i32_1 = arith.constant 0 : i32
    return %arg0, %c0_i32, %c0_i32_0 : i32, i32, i32
  }
  func.func @transform_5(%arg0: i32) -> (i32, i32, i32) {
    %c0_i32 = arith.constant 0 : i32
    %c0_i32_0 = arith.constant 0 : i32
    %c0_i32_1 = arith.constant 0 : i32
    return %arg0, %c0_i32, %c0_i32_0 : i32, i32, i32
  }
  func.func @transform_6(%arg0: i32) -> (i32, i32, i32) {
    %c0_i32 = arith.constant 0 : i32
    %c0_i32_0 = arith.constant 0 : i32
    %c0_i32_1 = arith.constant 0 : i32
    return %arg0, %c0_i32, %c0_i32_0 : i32, i32, i32
  }
}

module attributes {stable_mosaic.version = 11 : i64} {
  func.func @_conv_gemm_kernel(%arg0: i32, %arg1: memref<1x216x1000xf32, #tpu.memory_space<vmem>>, %arg2: memref<1x216xf32, #tpu.memory_space<vmem>>, %arg3: memref<1x1xf32, #tpu.memory_space<vmem>>, %arg4: memref<1x1x1000xf32, #tpu.memory_space<vmem>>) attributes {dimension_semantics = [#tpu.dimension_semantics<parallel>], iteration_bounds = array<i64: 2>, scalar_prefetch = 0 : i64, scratch_operands = 0 : i64, tpu.core_type = #tpu.core_type<tc>, window_params = [{transform_indices = @transform_0, window_bounds = array<i64: 1, 216, 1000>}, {pipeline_mode = #tpu.pipeline_mode<synchronous>, transform_indices = @transform_1, window_bounds = array<i64: 1, 216>}, {pipeline_mode = #tpu.pipeline_mode<synchronous>, transform_indices = @transform_2, window_bounds = array<i64: 1, 1>}, {transform_indices = @transform_3, window_bounds = array<i64: 1, 1, 1000>}]} {
    %c0 = arith.constant 0 : index
    %c0_0 = arith.constant 0 : index
    %0 = vector.load %arg2[%c0, %c0_0] : memref<1x216xf32, #tpu.memory_space<vmem>>, vector<1x216xf32>
    %c0_1 = arith.constant 0 : index
    %c0_2 = arith.constant 0 : index
    %c0_3 = arith.constant 0 : index
    %1 = vector.load %arg1[%c0_1, %c0_2, %c0_3] : memref<1x216x1000xf32, #tpu.memory_space<vmem>>, vector<1x216x1000xf32>
    %2 = vector.shape_cast %1 : vector<1x216x1000xf32> to vector<216x1000xf32>
    %cst = arith.constant dense<0.000000e+00> : vector<1x1000xf32>
    %3 = tpu.matmul %0, %2, %cst {dimension_numbers = #tpu.dot_dimension_numbers<[1], [0], [0], [1], [0, 0, 1, 1], [], []>} : vector<1x216xf32>, vector<216x1000xf32>, vector<1x1000xf32> -> vector<1x1000xf32>
    %c0_4 = arith.constant 0 : index
    %c0_5 = arith.constant 0 : index
    %4 = vector.load %arg3[%c0_4, %c0_5] : memref<1x1xf32, #tpu.memory_space<vmem>>, vector<1x1xf32>
    %5 = vector.broadcast %4 : vector<1x1xf32> to vector<1x1000xf32>
    %6 = arith.addf %3, %5 : vector<1x1000xf32>
    %c0_6 = arith.constant 0 : index
    %c0_7 = arith.constant 0 : index
    %c0_8 = arith.constant 0 : index
    %7 = vector.load %arg4[%c0_6, %c0_7, %c0_8] : memref<1x1x1000xf32, #tpu.memory_space<vmem>>, vector<1x1x1000xf32>
    %8 = vector.shape_cast %7 : vector<1x1x1000xf32> to vector<1x1000xf32>
    %9 = vector.shape_cast %6 : vector<1x1000xf32> to vector<1x1x1000xf32>
    tpu.vector_store %arg4[%c0_6, %c0_7, %c0_8], %9 {strides = array<i32>} : memref<1x1x1000xf32, #tpu.memory_space<vmem>>, vector<1x1x1000xf32>,
    return
  }
  func.func @transform_0(%arg0: i32) -> (i32, i32, i32) {
    %c0_i32 = arith.constant 0 : i32
    %c0_i32_0 = arith.constant 0 : i32
    %c0_i32_1 = arith.constant 0 : i32
    return %arg0, %c0_i32, %c0_i32_0 : i32, i32, i32
  }
  func.func @transform_1(%arg0: i32) -> (i32, i32) {
    %c0_i32 = arith.constant 0 : i32
    %c0_i32_0 = arith.constant 0 : i32
    %c0_i32_1 = arith.constant 0 : i32
    return %c0_i32, %c0_i32_0 : i32, i32
  }
  func.func @transform_2(%arg0: i32) -> (i32, i32) {
    %c0_i32 = arith.constant 0 : i32
    %c0_i32_0 = arith.constant 0 : i32
    %c0_i32_1 = arith.constant 0 : i32
    return %c0_i32, %c0_i32_0 : i32, i32
  }
  func.func @transform_3(%arg0: i32) -> (i32, i32, i32) {
    %c0_i32 = arith.constant 0 : i32
    %c0_i32_0 = arith.constant 0 : i32
    %c0_i32_1 = arith.constant 0 : i32
    return %arg0, %c0_i32, %c0_i32_0 : i32, i32, i32
  }
}

</mosaic_0001>

<llo_original>
// kernel: perceiver_io_forward.8
$region0: #{perceiver_io_forward.8}
  #allocation0 [shape = 'u32[]', space=smem, size = 0x4, offset = 0x4, fixed_abs, tag = 'smem constant byte address 0x4 - core index']
  #allocation1 [shape = 'u32[72,128]{1,0:T(1,128)}', space=vmem, size = 0x9000, scoped, tag = 'internal scratch']
  %s0 = inlined_call_operand.vmem [shape: f32[154,512], index: 0, kind: input, shape index: {}]
  %s1 = inlined_call_operand.vmem [shape: f32[512,16], index: 1, kind: input, shape index: {}]
  %s2 = inlined_call_operand.vmem [shape: f32[1,16], index: 2, kind: input, shape index: {}]
  %s3 = inlined_call_operand.vmem [shape: f32[154,16], index: 3, kind: output, shape index: {}]
  %s4 = sld [smem:[#allocation0]]
  $region22: #{perceiver_io_forward.8} parent=0
    _
  %s6 = ssub.s32 1, %s4
  %s7 = scalar_select 0, %s6, %s4
  // Predicated region
  $region2: #{perceiver_io_forward.8} parent=0 // pred_check
    _
  $region3: #{perceiver_io_forward.8} parent=0 // pred_check_branch
    %9 = sbr.rel (0) target = $region5
  $region4: #{perceiver_io_forward.8} parent=0 // pred_region
    _
  $region5: #{perceiver_io_forward.8} parent=0 // pred_fallthru
    _
  // Predicated region
  $region6: #{perceiver_io_forward.8} parent=0 // pred_check
    _
  $region7: #{perceiver_io_forward.8} parent=0 // pred_check_branch
    %11 = sbr.rel (0) target = $region9
  $region8: #{perceiver_io_forward.8} parent=0 // pred_region
    _
  $region9: #{perceiver_io_forward.8} parent=0 // pred_fallthru
    _
  // Predicated region
  $region10: #{perceiver_io_forward.8} parent=0 // pred_check
    _
  $region11: #{perceiver_io_forward.8} parent=0 // pred_check_branch
    %13 = sbr.rel (0) target = $region13
  $region12: #{perceiver_io_forward.8} parent=0 // pred_region
    _
  $region13: #{perceiver_io_forward.8} parent=0 // pred_fallthru
    _
  %v14 = vld [vmem:[%s0] sm:$0xff]
  %v15 = vld [vmem:[%s0 + $0x8] sm:$0xff]
  %v16 = vld [vmem:[%s0 + $0x10] sm:$0xff]
  %v17 = vld [vmem:[%s0 + $0x18] sm:$0xff]
  %v18 = vld [vmem:[%s0 + $0x20] sm:$0xff]
  %v19 = vld [vmem:[%s0 + $0x28] sm:$0xff]
  %v20 = vld [vmem:[%s0 + $0x30] sm:$0xff]
  %v21 = vld [vmem:[%s0 + $0x38] sm:$0xff]
  %v22 = vld [vmem:[%s0 + $0x40] sm:$0xff]
  %v23 = vld [vmem:[%s0 + $0x48] sm:$0xff]
  %v24 = vld [vmem:[%s0 + $0x50] sm:$0xff]
  %v25 = vld [vmem:[%s0 + $0x58] sm:$0xff]
  %v26 = vld [vmem:[%s0 + $0x60] sm:$0xff]
  %v27 = vld [vmem:[%s0 + $0x68] sm:$0xff]
  %v28 = vld [vmem:[%s0 + $0x70] sm:$0xff]
  %v29 = vld [vmem:[%s0 + $0x78] sm:$0xff]
  %v30 = vld [vmem:[%s0 + $0x80] sm:$0xff]
  %v31 = vld [vmem:[%s0 + $0x88] sm:$0xff]
  %v32 = vld [vmem:[%s0 + $0x90] sm:$0xff]
  %v33 = vld [vmem:[%s0 + $0x98] sm:$0xff]
  %v34 = vld [vmem:[%s0 + $0xa0] sm:$0xff]
  %v35 = vld [vmem:[%s0 + $0xa8] sm:$0xff]
  %v36 = vld [vmem:[%s0 + $0xb0] sm:$0xff]
  %v37 = vld [vmem:[%s0 + $0xb8] sm:$0xff]
  %v38 = vld [vmem:[%s0 + $0xc0] sm:$0xff]
  %v39 = vld [vmem:[%s0 + $0xc8] sm:$0xff]
  %v40 = vld [vmem:[%s0 + $0xd0] sm:$0xff]
  %v41 = vld [vmem:[%s0 + $0xd8] sm:$0xff]
  %v42 = vld [vmem:[%s0 + $0xe0] sm:$0xff]
  %v43 = vld [vmem:[%s0 + $0xe8] sm:$0xff]
  %v44 = vld [vmem:[%s0 + $0xf0] sm:$0xff]
  %v45 = vld [vmem:[%s0 + $0xf8] sm:$0xff]
  %v46 = vld [vmem:[%s0 + $0x100] sm:$0xff]
  %v47 = vld [vmem:[%s0 + $0x108] sm:$0xff]
  %v48 = vld [vmem:[%s0 + $0x110] sm:$0xff]
  %v49 = vld [vmem:[%s0 + $0x118] sm:$0xff]
  %v50 = vld [vmem:[%s0 + $0x120] sm:$0xff]
  %v51 = vld [vmem:[%s0 + $0x128] sm:$0xff]
  %v52 = vld [vmem:[%s0 + $0x130] sm:$0xff]
  %v53 = vld [vmem:[%s0 + $0x138] sm:$0xff]
  %v54 = vld [vmem:[%s0 + $0x140] sm:$0xff]
  %v55 = vld [vmem:[%s0 + $0x148] sm:$0xff]
  %v56 = vld [vmem:[%s0 + $0x150] sm:$0xff]
  %v57 = vld [vmem:[%s0 + $0x158] sm:$0xff]
  %v58 = vld [vmem:[%s0 + $0x160] sm:$0xff]
  %v59 = vld [vmem:[%s0 + $0x168] sm:$0xff]
  %v60 = vld [vmem:[%s0 + $0x170] sm:$0xff]
  %v61 = vld [vmem:[%s0 + $0x178] sm:$0xff]
  %v62 = vld [vmem:[%s0 + $0x180] sm:$0xff]
  %v63 = vld [vmem:[%s0 + $0x188] sm:$0xff]
  %v64 = vld [vmem:[%s0 + $0x190] sm:$0xff]
  %v65 = vld [vmem:[%s0 + $0x198] sm:$0xff]
  %v66 = vld [vmem:[%s0 + $0x1a0] sm:$0xff]
  %v67 = vld [vmem:[%s0 + $0x1a8] sm:$0xff]
  %v68 = vld [vmem:[%s0 + $0x1b0] sm:$0xff]
  %v69 = vld [vmem:[%s0 + $0x1b8] sm:$0xff]
  %v70 = vld [vmem:[%s0 + $0x1c0] sm:$0xff]
  %v71 = vld [vmem:[%s0 + $0x1c8] sm:$0xff]
  %v72 = vld [vmem:[%s0 + $0x1d0] sm:$0xff]
  %v73 = vld [vmem:[%s0 + $0x1d8] sm:$0xff]
  %v74 = vld [vmem:[%s0 + $0x1e0] sm:$0xff]
  %v75 = vld [vmem:[%s0 + $0x1e8] sm:$0xff]
  %v76 = vld [vmem:[%s0 + $0x1f0] sm:$0xff]
  %v77 = vld [vmem:[%s0 + $0x1f8] sm:$0xff]
  %v78 = vld [vmem:[%s0 + $0x200] sm:$0xff]
  %v79 = vld [vmem:[%s0 + $0x208] sm:$0xff]
  %v80 = vld [vmem:[%s0 + $0x210] sm:$0xff]
  %v81 = vld [vmem:[%s0 + $0x218] sm:$0xff]
  %v82 = vld [vmem:[%s0 + $0x220] sm:$0xff]
  %v83 = vld [vmem:[%s0 + $0x228] sm:$0xff]
  %v84 = vld [vmem:[%s0 + $0x230] sm:$0xff]
  %v85 = vld [vmem:[%s0 + $0x238] sm:$0xff]
  %v86 = vld [vmem:[%s0 + $0x240] sm:$0xff]
  %v87 = vld [vmem:[%s0 + $0x248] sm:$0xff]
  %v88 = vld [vmem:[%s0 + $0x250] sm:$0xff]
  %v89 = vld [vmem:[%s0 + $0x258] sm:$0xff]
  %v90 = vld [vmem:[%s0 + $0x260] sm:$0x3]
  %v91 = vld [vmem:[%s0 + $0x268] sm:$0x3]
  %v92 = vld [vmem:[%s0 + $0x270] sm:$0x3]
  %v93 = vld [vmem:[%s0 + $0x278] sm:$0x3]
  %v94 = vld [vmem:[%s1] sm:$0xff]
  %v95 = vld [vmem:[%s1 + $0x8] sm:$0xff]
  %v96 = vld [vmem:[%s1 + $0x10] sm:$0xff]
  %v97 = vld [vmem:[%s1 + $0x18] sm:$0xff]
  %v98 = vld [vmem:[%s1 + $0x20] sm:$0xff]
  %v99 = vld [vmem:[%s1 + $0x28] sm:$0xff]
  %v100 = vld [vmem:[%s1 + $0x30] sm:$0xff]
  %v101 = vld [vmem:[%s1 + $0x38] sm:$0xff]
  %v102 = vld [vmem:[%s1 + $0x40] sm:$0xff]
  %v103 = vld [vmem:[%s1 + $0x48] sm:$0xff]
  %v104 = vld [vmem:[%s1 + $0x50] sm:$0xff]
  %v105 = vld [vmem:[%s1 + $0x58] sm:$0xff]
  %v106 = vld [vmem:[%s1 + $0x60] sm:$0xff]
  %v107 = vld [vmem:[%s1 + $0x68] sm:$0xff]
  %v108 = vld [vmem:[%s1 + $0x70] sm:$0xff]
  %v109 = vld [vmem:[%s1 + $0x78] sm:$0xff]
  %v110 = vld [vmem:[%s1 + $0x80] sm:$0xff]
  %v111 = vld [vmem:[%s1 + $0x88] sm:$0xff]
  %v112 = vld [vmem:[%s1 + $0x90] sm:$0xff]
  %v113 = vld [vmem:[%s1 + $0x98] sm:$0xff]
  %v114 = vld [vmem:[%s1 + $0xa0] sm:$0xff]
  %v115 = vld [vmem:[%s1 + $0xa8] sm:$0xff]
  %v116 = vld [vmem:[%s1 + $0xb0] sm:$0xff]
  %v117 = vld [vmem:[%s1 + $0xb8] sm:$0xff]
  %v118 = vld [vmem:[%s1 + $0xc0] sm:$0xff]
  %v119 = vld [vmem:[%s1 + $0xc8] sm:$0xff]
  %v120 = vld [vmem:[%s1 + $0xd0] sm:$0xff]
  %v121 = vld [vmem:[%s1 + $0xd8] sm:$0xff]
  %v122 = vld [vmem:[%s1 + $0xe0] sm:$0xff]
  %v123 = vld [vmem:[%s1 + $0xe8] sm:$0xff]
  %v124 = vld [vmem:[%s1 + $0xf0] sm:$0xff]
  %v125 = vld [vmem:[%s1 + $0xf8] sm:$0xff]
  %v126 = vld [vmem:[%s1 + $0x100] sm:$0xff]
  %v127 = vld [vmem:[%s1 + $0x108] sm:$0xff]
  %v128 = vld [vmem:[%s1 + $0x110] sm:$0xff]
  %v129 = vld [vmem:[%s1 + $0x118] sm:$0xff]
  %v130 = vld [vmem:[%s1 + $0x120] sm:$0xff]
  %v131 = vld [vmem:[%s1 + $0x128] sm:$0xff]
  %v132 = vld [vmem:[%s1 + $0x130] sm:$0xff]
  %v133 = vld [vmem:[%s1 + $0x138] sm:$0xff]
  %v134 = vld [vmem:[%s1 + $0x140] sm:$0xff]
  %v135 = vld [vmem:[%s1 + $0x148] sm:$0xff]
  %v136 = vld [vmem:[%s1 + $0x150] sm:$0xff]
  %v137 = vld [vmem:[%s1 + $0x158] sm:$0xff]
  %v138 = vld [vmem:[%s1 + $0x160] sm:$0xff]
  %v139 = vld [vmem:[%s1 + $0x168] sm:$0xff]
  %v140 = vld [vmem:[%s1 + $0x170] sm:$0xff]
  %v141 = vld [vmem:[%s1 + $0x178] sm:$0xff]
  %v142 = vld [vmem:[%s1 + $0x180] sm:$0xff]
  %v143 = vld [vmem:[%s1 + $0x188] sm:$0xff]
  %v144 = vld [vmem:[%s1 + $0x190] sm:$0xff]
  %v145 = vld [vmem:[%s1 + $0x198] sm:$0xff]
  %v146 = vld [vmem:[%s1 + $0x1a0] sm:$0xff]
  %v147 = vld [vmem:[%s1 + $0x1a8] sm:$0xff]
  %v148 = vld [vmem:[%s1 + $0x1b0] sm:$0xff]
  %v149 = vld [vmem:[%s1 + $0x1b8] sm:$0xff]
  %v150 = vld [vmem:[%s1 + $0x1c0] sm:$0xff]
  %v151 = vld [vmem:[%s1 + $0x1c8] sm:$0xff]
  %v152 = vld [vmem:[%s1 + $0x1d0] sm:$0xff]
  %v153 = vld [vmem:[%s1 + $0x1d8] sm:$0xff]
  %v154 = vld [vmem:[%s1 + $0x1e0] sm:$0xff]
  %v155 = vld [vmem:[%s1 + $0x1e8] sm:$0xff]
  %v156 = vld [vmem:[%s1 + $0x1f0] sm:$0xff]
  %v157 = vld [vmem:[%s1 + $0x1f8] sm:$0xff]
  %v158 = vld [vmem:[%s2] sm:$0x1]
  %v160 = vperm.slane %v158, 0
  %162 = vmatpush.msra.mxu0 %v109
  %163 = vmatpush.msra.mxu0 %v108
  %164 = vmatpush.msra.mxu0 %v107
  %165 = vmatpush.msra.mxu0 %v106
  %166 = vmatpush.msra.mxu0 %v105
  %167 = vmatpush.msra.mxu0 %v104
  %168 = vmatpush.msra.mxu0 %v103
  %169 = vmatpush.msra.mxu0 %v102
  %170 = vmatpush.msra.mxu0 %v101
  %171 = vmatpush.msra.mxu0 %v100
  %172 = vmatpush.msra.mxu0 %v99
  %173 = vmatpush.msra.mxu0 %v98
  %174 = vmatpush.msra.mxu0 %v97
  %175 = vmatpush.msra.mxu0 %v96
  %176 = vmatpush.msra.mxu0 %v95
  %177 = vmatpush.msra.mxu0 %v94
  %178 = vmatmul.f32.gmra.mxu0 %v14
  %v179 = vpop.f32.mrf.mxu0
  %v180 = vadd.f32 %v160, %v179
  %181 = vmatmul.f32.gmra.mxu0 %v18
  %v182 = vpop.f32.mrf.mxu0
  %v183 = vadd.f32 %v160, %v182
  %184 = vmatmul.f32.gmra.mxu0 %v22
  %v185 = vpop.f32.mrf.mxu0
  %v186 = vadd.f32 %v160, %v185
  %187 = vmatmul.f32.gmra.mxu0 %v26
  %v188 = vpop.f32.mrf.mxu0
  %v189 = vadd.f32 %v160, %v188
  %190 = vmatmul.f32.gmra.mxu0 %v30
  %v191 = vpop.f32.mrf.mxu0
  %v192 = vadd.f32 %v160, %v191
  %193 = vmatmul.f32.gmra.mxu0 %v34
  %v194 = vpop.f32.mrf.mxu0
  %v195 = vadd.f32 %v160, %v194
  %196 = vmatmul.f32.gmra.mxu0 %v38
  %v197 = vpop.f32.mrf.mxu0
  %v198 = vadd.f32 %v160, %v197
  %199 = vmatmul.f32.gmra.mxu0 %v42
  %v200 = vpop.f32.mrf.mxu0
  %v201 = vadd.f32 %v160, %v200
  %202 = vmatmul.f32.gmra.mxu0 %v46
  %v203 = vpop.f32.mrf.mxu0
  %v204 = vadd.f32 %v160, %v203
  %205 = vmatmul.f32.gmra.mxu0 %v50
  %v206 = vpop.f32.mrf.mxu0
  %v207 = vadd.f32 %v160, %v206
  %208 = vmatmul.f32.gmra.mxu0 %v54
  %v209 = vpop.f32.mrf.mxu0
  %v210 = vadd.f32 %v160, %v209
  %211 = vmatmul.f32.gmra.mxu0 %v58
  %v212 = vpop.f32.mrf.mxu0
  %v213 = vadd.f32 %v160, %v212
  %214 = vmatmul.f32.gmra.mxu0 %v62
  %v215 = vpop.f32.mrf.mxu0
  %v216 = vadd.f32 %v160, %v215
  %217 = vmatmul.f32.gmra.mxu0 %v66
  %v218 = vpop.f32.mrf.mxu0
  %v219 = vadd.f32 %v160, %v218
  %220 = vmatmul.f32.gmra.mxu0 %v70
  %v221 = vpop.f32.mrf.mxu0
  %v222 = vadd.f32 %v160, %v221
  %223 = vmatmul.f32.gmra.mxu0 %v74
  %v224 = vpop.f32.mrf.mxu0
  %v225 = vadd.f32 %v160, %v224
  %226 = vmatmul.f32.gmra.mxu0 %v78
  %v227 = vpop.f32.mrf.mxu0
  %v228 = vadd.f32 %v160, %v227
  %229 = vmatmul.f32.gmra.mxu0 %v82
  %v230 = vpop.f32.mrf.mxu0
  %v231 = vadd.f32 %v160, %v230
  %232 = vmatmul.f32.gmra.mxu0 %v86
  %v233 = vpop.f32.mrf.mxu0
  %v234 = vadd.f32 %v160, %v233
  %235 = vmatmul.f32.gmra.mxu0 %v90
  %v236 = vpop.f32.mrf.mxu0
  %v237 = vadd.f32 %v160, %v236
  %238 = vdwg.mxu0
  %239 = vmatpush.msra.mxu0 %v125
  %240 = vmatpush.msra.mxu0 %v124
  %241 = vmatpush.msra.mxu0 %v123
  %242 = vmatpush.msra.mxu0 %v122
  %243 = vmatpush.msra.mxu0 %v121
  %244 = vmatpush.msra.mxu0 %v120
  %245 = vmatpush.msra.mxu0 %v119
  %246 = vmatpush.msra.mxu0 %v118
  %247 = vmatpush.msra.mxu0 %v117
  %248 = vmatpush.msra.mxu0 %v116
  %249 = vmatpush.msra.mxu0 %v115
  %250 = vmatpush.msra.mxu0 %v114
  %251 = vmatpush.msra.mxu0 %v113
  %252 = vmatpush.msra.mxu0 %v112
  %253 = vmatpush.msra.mxu0 %v111
  %254 = vmatpush.msra.mxu0 %v110
  %255 = vmatmul.f32.gmra.mxu0 %v15
  %v256 = vpop.f32.mrf.mxu0
  %v257 = vadd.f32 %v180, %v256
  %258 = vmatmul.f32.gmra.mxu0 %v19
  %v259 = vpop.f32.mrf.mxu0
  %v260 = vadd.f32 %v183, %v259
  %261 = vmatmul.f32.gmra.mxu0 %v23
  %v262 = vpop.f32.mrf.mxu0
  %v263 = vadd.f32 %v186, %v262
  %264 = vmatmul.f32.gmra.mxu0 %v27
  %v265 = vpop.f32.mrf.mxu0
  %v266 = vadd.f32 %v189, %v265
  %267 = vmatmul.f32.gmra.mxu0 %v31
  %v268 = vpop.f32.mrf.mxu0
  %v269 = vadd.f32 %v192, %v268
  %270 = vmatmul.f32.gmra.mxu0 %v35
  %v271 = vpop.f32.mrf.mxu0
  %v272 = vadd.f32 %v195, %v271
  %273 = vmatmul.f32.gmra.mxu0 %v39
  %v274 = vpop.f32.mrf.mxu0
  %v275 = vadd.f32 %v198, %v274
  %276 = vmatmul.f32.gmra.mxu0 %v43
  %v277 = vpop.f32.mrf.mxu0
  %v278 = vadd.f32 %v201, %v277
  %279 = vmatmul.f32.gmra.mxu0 %v47
  %v280 = vpop.f32.mrf.mxu0
  %v281 = vadd.f32 %v204, %v280
  %282 = vmatmul.f32.gmra.mxu0 %v51
  %v283 = vpop.f32.mrf.mxu0
  %v284 = vadd.f32 %v207, %v283
  %285 = vmatmul.f32.gmra.mxu0 %v55
  %v286 = vpop.f32.mrf.mxu0
  %v287 = vadd.f32 %v210, %v286
  %288 = vmatmul.f32.gmra.mxu0 %v59
  %v289 = vpop.f32.mrf.mxu0
  %v290 = vadd.f32 %v213, %v289
  %291 = vmatmul.f32.gmra.mxu0 %v63
  %v292 = vpop.f32.mrf.mxu0
  %v293 = vadd.f32 %v216, %v292
  %294 = vmatmul.f32.gmra.mxu0 %v67
  %v295 = vpop.f32.mrf.mxu0
  %v296 = vadd.f32 %v219, %v295
  %297 = vmatmul.f32.gmra.mxu0 %v71
  %v298 = vpop.f32.mrf.mxu0
  %v299 = vadd.f32 %v222, %v298
  %300 = vmatmul.f32.gmra.mxu0 %v75
  %v301 = vpop.f32.mrf.mxu0
  %v302 = vadd.f32 %v225, %v301
  %303 = vmatmul.f32.gmra.mxu0 %v79
  %v304 = vpop.f32.mrf.mxu0
  %v305 = vadd.f32 %v228, %v304
  %306 = vmatmul.f32.gmra.mxu0 %v83
  %v307 = vpop.f32.mrf.mxu0
  %v308 = vadd.f32 %v231, %v307
  %309 = vmatmul.f32.gmra.mxu0 %v87
  %v310 = vpop.f32.mrf.mxu0
  %v311 = vadd.f32 %v234, %v310
  %312 = vmatmul.f32.gmra.mxu0 %v91
  %v313 = vpop.f32.mrf.mxu0
  %v314 = vadd.f32 %v237, %v313
  %315 = vdwg.mxu0
  %316 = vmatpush.msra.mxu0 %v141
  %317 = vmatpush.msra.mxu0 %v140
  %318 = vmatpush.msra.mxu0 %v139
  %319 = vmatpush.msra.mxu0 %v138
  %320 = vmatpush.msra.mxu0 %v137
  %321 = vmatpush.msra.mxu0 %v136
  %322 = vmatpush.msra.mxu0 %v135
  %323 = vmatpush.msra.mxu0 %v134
  %324 = vmatpush.msra.mxu0 %v133
  %325 = vmatpush.msra.mxu0 %v132
  %326 = vmatpush.msra.mxu0 %v131
  %327 = vmatpush.msra.mxu0 %v130
  %328 = vmatpush.msra.mxu0 %v129
  %329 = vmatpush.msra.mxu0 %v128
  %330 = vmatpush.msra.mxu0 %v127
  %331 = vmatpush.msra.mxu0 %v126
  %332 = vmatmul.f32.gmra.mxu0 %v16
  %v333 = vpop.f32.mrf.mxu0
  %v334 = vadd.f32 %v257, %v333
  %335 = vmatmul.f32.gmra.mxu0 %v20
  %v336 = vpop.f32.mrf.mxu0
  %v337 = vadd.f32 %v260, %v336
  %338 = vmatmul.f32.gmra.mxu0 %v24
  %v339 = vpop.f32.mrf.mxu0
  %v340 = vadd.f32 %v263, %v339
  %341 = vmatmul.f32.gmra.mxu0 %v28
  %v342 = vpop.f32.mrf.mxu0
  %v343 = vadd.f32 %v266, %v342
  %344 = vmatmul.f32.gmra.mxu0 %v32
  %v345 = vpop.f32.mrf.mxu0
  %v346 = vadd.f32 %v269, %v345
  %347 = vmatmul.f32.gmra.mxu0 %v36
  %v348 = vpop.f32.mrf.mxu0
  %v349 = vadd.f32 %v272, %v348
  %350 = vmatmul.f32.gmra.mxu0 %v40
  %v351 = vpop.f32.mrf.mxu0
  %v352 = vadd.f32 %v275, %v351
  %353 = vmatmul.f32.gmra.mxu0 %v44
  %v354 = vpop.f32.mrf.mxu0
  %v355 = vadd.f32 %v278, %v354
  %356 = vmatmul.f32.gmra.mxu0 %v48
  %v357 = vpop.f32.mrf.mxu0
  %v358 = vadd.f32 %v281, %v357
  %359 = vmatmul.f32.gmra.mxu0 %v52
  %v360 = vpop.f32.mrf.mxu0
  %v361 = vadd.f32 %v284, %v360
  %362 = vmatmul.f32.gmra.mxu0 %v56
  %v363 = vpop.f32.mrf.mxu0
  %v364 = vadd.f32 %v287, %v363
  %365 = vmatmul.f32.gmra.mxu0 %v60
  %v366 = vpop.f32.mrf.mxu0
  %v367 = vadd.f32 %v290, %v366
  %368 = vmatmul.f32.gmra.mxu0 %v64
  %v369 = vpop.f32.mrf.mxu0
  %v370 = vadd.f32 %v293, %v369
  %371 = vmatmul.f32.gmra.mxu0 %v68
  %v372 = vpop.f32.mrf.mxu0
  %v373 = vadd.f32 %v296, %v372
  %374 = vmatmul.f32.gmra.mxu0 %v72
  %v375 = vpop.f32.mrf.mxu0
  %v376 = vadd.f32 %v299, %v375
  %377 = vmatmul.f32.gmra.mxu0 %v76
  %v378 = vpop.f32.mrf.mxu0
  %v379 = vadd.f32 %v302, %v378
  %380 = vmatmul.f32.gmra.mxu0 %v80
  %v381 = vpop.f32.mrf.mxu0
  %v382 = vadd.f32 %v305, %v381
  %383 = vmatmul.f32.gmra.mxu0 %v84
  %v384 = vpop.f32.mrf.mxu0
  %v385 = vadd.f32 %v308, %v384
  %386 = vmatmul.f32.gmra.mxu0 %v88
  %v387 = vpop.f32.mrf.mxu0
  %v388 = vadd.f32 %v311, %v387
  %389 = vmatmul.f32.gmra.mxu0 %v92
  %v390 = vpop.f32.mrf.mxu0
  %v391 = vadd.f32 %v314, %v390
  %392 = vdwg.mxu0
  %393 = vmatpush.msra.mxu0 %v157
  %394 = vmatpush.msra.mxu0 %v156
  %395 = vmatpush.msra.mxu0 %v155
  %396 = vmatpush.msra.mxu0 %v154
  %397 = vmatpush.msra.mxu0 %v153
  %398 = vmatpush.msra.mxu0 %v152
  %399 = vmatpush.msra.mxu0 %v151
  %400 = vmatpush.msra.mxu0 %v150
  %401 = vmatpush.msra.mxu0 %v149
  %402 = vmatpush.msra.mxu0 %v148
  %403 = vmatpush.msra.mxu0 %v147
  %404 = vmatpush.msra.mxu0 %v146
  %405 = vmatpush.msra.mxu0 %v145
  %406 = vmatpush.msra.mxu0 %v144
  %407 = vmatpush.msra.mxu0 %v143
  %408 = vmatpush.msra.mxu0 %v142
  %409 = vmatmul.f32.gmra.mxu0 %v17
  %v410 = vpop.f32.mrf.mxu0
  %v411 = vadd.f32 %v334, %v410
  %412 = vmatmul.f32.gmra.mxu0 %v21
  %v413 = vpop.f32.mrf.mxu0
  %v414 = vadd.f32 %v337, %v413
  %415 = vmatmul.f32.gmra.mxu0 %v25
  %v416 = vpop.f32.mrf.mxu0
  %v417 = vadd.f32 %v340, %v416
  %418 = vmatmul.f32.gmra.mxu0 %v29
  %v419 = vpop.f32.mrf.mxu0
  %v420 = vadd.f32 %v343, %v419
  %421 = vmatmul.f32.gmra.mxu0 %v33
  %v422 = vpop.f32.mrf.mxu0
  %v423 = vadd.f32 %v346, %v422
  %424 = vmatmul.f32.gmra.mxu0 %v37
  %v425 = vpop.f32.mrf.mxu0
  %v426 = vadd.f32 %v349, %v425
  %427 = vmatmul.f32.gmra.mxu0 %v41
  %v428 = vpop.f32.mrf.mxu0
  %v429 = vadd.f32 %v352, %v428
  %430 = vmatmul.f32.gmra.mxu0 %v45
  %v431 = vpop.f32.mrf.mxu0
  %v432 = vadd.f32 %v355, %v431
  %433 = vmatmul.f32.gmra.mxu0 %v49
  %v434 = vpop.f32.mrf.mxu0
  %v435 = vadd.f32 %v358, %v434
  %436 = vmatmul.f32.gmra.mxu0 %v53
  %v437 = vpop.f32.mrf.mxu0
  %v438 = vadd.f32 %v361, %v437
  %439 = vmatmul.f32.gmra.mxu0 %v57
  %v440 = vpop.f32.mrf.mxu0
  %v441 = vadd.f32 %v364, %v440
  %442 = vmatmul.f32.gmra.mxu0 %v61
  %v443 = vpop.f32.mrf.mxu0
  %v444 = vadd.f32 %v367, %v443
  %445 = vmatmul.f32.gmra.mxu0 %v65
  %v446 = vpop.f32.mrf.mxu0
  %v447 = vadd.f32 %v370, %v446
  %448 = vmatmul.f32.gmra.mxu0 %v69
  %v449 = vpop.f32.mrf.mxu0
  %v450 = vadd.f32 %v373, %v449
  %451 = vmatmul.f32.gmra.mxu0 %v73
  %v452 = vpop.f32.mrf.mxu0
  %v453 = vadd.f32 %v376, %v452
  %454 = vmatmul.f32.gmra.mxu0 %v77
  %v455 = vpop.f32.mrf.mxu0
  %v456 = vadd.f32 %v379, %v455
  %457 = vmatmul.f32.gmra.mxu0 %v81
  %v458 = vpop.f32.mrf.mxu0
  %v459 = vadd.f32 %v382, %v458
  %460 = vmatmul.f32.gmra.mxu0 %v85
  %v461 = vpop.f32.mrf.mxu0
  %v462 = vadd.f32 %v385, %v461
  %463 = vmatmul.f32.gmra.mxu0 %v89
  %v464 = vpop.f32.mrf.mxu0
  %v465 = vadd.f32 %v388, %v464
  %466 = vmatmul.f32.gmra.mxu0 %v93
  %v467 = vpop.f32.mrf.mxu0
  %v468 = vadd.f32 %v391, %v467
  %469 = vdwg.mxu0
  %vm470 = vcmask 130048
  %471 = vst.msk [vmem:[%s3] sm:$0xff] %vm470, %v411
  %472 = vst.msk [vmem:[%s3 + $0x8] sm:$0xff] %vm470, %v414
  %473 = vst.msk [vmem:[%s3 + $0x10] sm:$0xff] %vm470, %v417
  %474 = vst.msk [vmem:[%s3 + $0x18] sm:$0xff] %vm470, %v420
  %475 = vst.msk [vmem:[%s3 + $0x20] sm:$0xff] %vm470, %v423
  %476 = vst.msk [vmem:[%s3 + $0x28] sm:$0xff] %vm470, %v426
  %477 = vst.msk [vmem:[%s3 + $0x30] sm:$0xff] %vm470, %v429
  %478 = vst.msk [vmem:[%s3 + $0x38] sm:$0xff] %vm470, %v432
  %479 = vst.msk [vmem:[%s3 + $0x40] sm:$0xff] %vm470, %v435
  %480 = vst.msk [vmem:[%s3 + $0x48] sm:$0xff] %vm470, %v438
  %481 = vst.msk [vmem:[%s3 + $0x50] sm:$0xff] %vm470, %v441
  %482 = vst.msk [vmem:[%s3 + $0x58] sm:$0xff] %vm470, %v444
  %483 = vst.msk [vmem:[%s3 + $0x60] sm:$0xff] %vm470, %v447
  %484 = vst.msk [vmem:[%s3 + $0x68] sm:$0xff] %vm470, %v450
  %485 = vst.msk [vmem:[%s3 + $0x70] sm:$0xff] %vm470, %v453
  %486 = vst.msk [vmem:[%s3 + $0x78] sm:$0xff] %vm470, %v456
  %487 = vst.msk [vmem:[%s3 + $0x80] sm:$0xff] %vm470, %v459
  %488 = vst.msk [vmem:[%s3 + $0x88] sm:$0xff] %vm470, %v462
  %489 = vst.msk [vmem:[%s3 + $0x90] sm:$0xff] %vm470, %v465
  %vm490 = vcmask 123904
  %491 = vst.msk [vmem:[%s3 + $0x98] sm:$0x3] %vm490, %v468
  // Predicated region
  $region14: #{perceiver_io_forward.8} parent=0 // pred_check
    _
  $region15: #{perceiver_io_forward.8} parent=0 // pred_check_branch
    %493 = sbr.rel (0) target = $region17
  $region16: #{perceiver_io_forward.8} parent=0 // pred_region
    _
  $region17: #{perceiver_io_forward.8} parent=0 // pred_fallthru
    _
  // Predicated region
  $region18: #{perceiver_io_forward.8} parent=0 // pred_check
    _
  $region19: #{perceiver_io_forward.8} parent=0 // pred_check_branch
    %495 = sbr.rel (0) target = $region21
  $region20: #{perceiver_io_forward.8} parent=0 // pred_region
    _
  $region21: #{perceiver_io_forward.8} parent=0 // pred_fallthru
    _

// kernel: perceiver_io_forward.7
$region0: #{perceiver_io_forward.7}
  #allocation0 [shape = 'u32[]', space=smem, size = 0x4, offset = 0x4, fixed_abs, tag = 'smem constant byte address 0x4 - core index']
  #allocation1 [shape = 'u32[72,128]{1,0:T(1,128)}', space=vmem, size = 0x9000, scoped, tag = 'internal scratch']
  %s0 = inlined_call_operand.vmem [shape: f32[2,10,1000], index: 0, kind: input, shape index: {}]
  %s1 = inlined_call_operand.vmem [shape: f32[8,10], index: 1, kind: input, shape index: {}]
  %s2 = inlined_call_operand.vmem [shape: f32[8,1], index: 2, kind: input, shape index: {}]
  %s3 = inlined_call_operand.vmem [shape: f32[3,1000], index: 3, kind: input, shape index: {}]
  %s4 = inlined_call_operand.vmem [shape: f32[2,8,1000], index: 4, kind: output, shape index: {0}]
  %s5 = inlined_call_operand.vmem [shape: f32[2,8,3], index: 5, kind: output, shape index: {1}]
  %s6 = inlined_call_operand.vmem [shape: f32[2,8,1], index: 6, kind: output, shape index: {2}]
  %7 = xla_tuple %s4, %s5, %s6
  %s8 = sld [smem:[#allocation0]]
  $region65: #{perceiver_io_forward.7} parent=0
    _
  %s10 = ssub.s32 1, %s8
  %s11 = scalar_select 0, %s10, %s8
  loop: start=0, step=1, limit=4
  $region2: #{perceiver_io_forward.7} parent=0 // loop_pre_header
    _
  $region3: #{perceiver_io_forward.7} parent=0 // loop_header
    %s13 = sphi 0, %s17
    %p14 = scmp.ge.s32.totalorder %s13, 4
    %s23 = sphi 0, %s25
    %s26 = sphi 0, %s23
    %s27 = sphi 0, %s26
    %s43 = sphi 0, %s27
    %s47 = sphi 0, %s47
    %s49 = sphi 0, %s47
    %s50 = sphi 0, %s49
    %s64 = sphi 0, %s50
    %s68 = sphi 0, %s68
    %s70 = sphi 0, %s68
    %s71 = sphi 0, %s70
    %s85 = sphi 0, %s71
    %s89 = sphi 0, %s89
    %s91 = sphi 0, %s89
    %s92 = sphi 0, %s91
    %s106 = sphi 0, %s92
    %s112 = sphi 0, %s114
    %s115 = sphi 0, %s112
    %s116 = sphi 0, %s115
    %s132 = sphi 0, %s116
    %s138 = sphi 0, %s140
    %s141 = sphi 0, %s138
    %s142 = sphi 0, %s141
    %s158 = sphi 0, %s142
    %s164 = sphi 0, %s166
    %s167 = sphi 0, %s164
    %s168 = sphi 0, %s167
    %s184 = sphi 0, %s168
  $region4: #{perceiver_io_forward.7} parent=0 // loop_header_branch
    %16 = sbr.rel (%p14) target = $region8
  $region5: #{perceiver_io_forward.7} parent=0 // loop_body
    %s18 = ssub.s32 %s13, 1
    %s19 = ssub.s32 %s13, 2
    %s20 = sadd.s32 %s13, 1
    %s21 = ssub.s32 %s13, %s20
    %p22 = scmp.eq.s32.totalorder %s21, 0
    %s24 = sadd.s32 %s23, 1
    %s25 = scalar_select %p22, %s23, %s24
    %p28 = pneg %p22
    %p29 = scmp.eq.s32.totalorder %s13, 1
    %p30 = por %p28, %p29
    %p31 = scmp.ne.s32.totalorder %s23, %s26
    %p32 = scmp.eq.s32.totalorder %s13, 0
    %p33 = por %p31, %p32
    %p34 = scmp.ne.s32.totalorder %s23, %s26
    %p35 = scmp.eq.s32.totalorder %s18, 1
    %p36 = por %p34, %p35
    %p37 = scmp.ne.s32.totalorder %s26, %s27
    %p38 = scmp.eq.s32.totalorder %s18, 0
    %p39 = por %p37, %p38
    %p40 = scmp.ne.s32.totalorder %s26, %s27
    %p41 = scmp.eq.s32.totalorder %s19, 1
    %p42 = por %p40, %p41
    %p44 = scmp.ne.s32.totalorder %s27, %s43
    %p45 = scmp.eq.s32.totalorder %s19, 0
    %p46 = por %p44, %p45
    %s48 = sadd.s32 %s47, 1
    %p51 = scmp.eq.s32.totalorder %s13, 1
    %p52 = scmp.ne.s32.totalorder %s47, %s49
    %p53 = scmp.eq.s32.totalorder %s13, 0
    %p54 = por %p52, %p53
    %p55 = scmp.ne.s32.totalorder %s47, %s49
    %p56 = scmp.eq.s32.totalorder %s18, 1
    %p57 = por %p55, %p56
    %p58 = scmp.ne.s32.totalorder %s49, %s50
    %p59 = scmp.eq.s32.totalorder %s18, 0
    %p60 = por %p58, %p59
    %p61 = scmp.ne.s32.totalorder %s49, %s50
    %p62 = scmp.eq.s32.totalorder %s19, 1
    %p63 = por %p61, %p62
    %p65 = scmp.ne.s32.totalorder %s50, %s64
    %p66 = scmp.eq.s32.totalorder %s19, 0
    %p67 = por %p65, %p66
    %s69 = sadd.s32 %s68, 1
    %p72 = scmp.eq.s32.totalorder %s13, 1
    %p73 = scmp.ne.s32.totalorder %s68, %s70
    %p74 = scmp.eq.s32.totalorder %s13, 0
    %p75 = por %p73, %p74
    %p76 = scmp.ne.s32.totalorder %s68, %s70
    %p77 = scmp.eq.s32.totalorder %s18, 1
    %p78 = por %p76, %p77
    %p79 = scmp.ne.s32.totalorder %s70, %s71
    %p80 = scmp.eq.s32.totalorder %s18, 0
    %p81 = por %p79, %p80
    %p82 = scmp.ne.s32.totalorder %s70, %s71
    %p83 = scmp.eq.s32.totalorder %s19, 1
    %p84 = por %p82, %p83
    %p86 = scmp.ne.s32.totalorder %s71, %s85
    %p87 = scmp.eq.s32.totalorder %s19, 0
    %p88 = por %p86, %p87
    %s90 = sadd.s32 %s89, 1
    %p93 = scmp.eq.s32.totalorder %s13, 1
    %p94 = scmp.ne.s32.totalorder %s89, %s91
    %p95 = scmp.eq.s32.totalorder %s13, 0
    %p96 = por %p94, %p95
    %p97 = scmp.ne.s32.totalorder %s89, %s91
    %p98 = scmp.eq.s32.totalorder %s18, 1
    %p99 = por %p97, %p98
    %p100 = scmp.ne.s32.totalorder %s91, %s92
    %p101 = scmp.eq.s32.totalorder %s18, 0
    %p102 = por %p100, %p101
    %p103 = scmp.ne.s32.totalorder %s91, %s92
    %p104 = scmp.eq.s32.totalorder %s19, 1
    %p105 = por %p103, %p104
    %p107 = scmp.ne.s32.totalorder %s92, %s106
    %p108 = scmp.eq.s32.totalorder %s19, 0
    %p109 = por %p107, %p108
    %s110 = ssub.s32 %s13, %s20
    %p111 = scmp.eq.s32.totalorder %s110, 0
    %s113 = sadd.s32 %s112, 1
    %s114 = scalar_select %p111, %s112, %s113
    %p117 = pneg %p111
    %p118 = scmp.eq.s32.totalorder %s13, 1
    %p119 = por %p117, %p118
    %p120 = scmp.ne.s32.totalorder %s112, %s115
    %p121 = scmp.eq.s32.totalorder %s13, 0
    %p122 = por %p120, %p121
    %p123 = scmp.ne.s32.totalorder %s112, %s115
    %p124 = scmp.eq.s32.totalorder %s18, 1
    %p125 = por %p123, %p124
    %p126 = scmp.ne.s32.totalorder %s115, %s116
    %p127 = scmp.eq.s32.totalorder %s18, 0
    %p128 = por %p126, %p127
    %p129 = scmp.ne.s32.totalorder %s115, %s116
    %p130 = scmp.eq.s32.totalorder %s19, 1
    %p131 = por %p129, %p130
    %p133 = scmp.ne.s32.totalorder %s116, %s132
    %p134 = scmp.eq.s32.totalorder %s19, 0
    %p135 = por %p133, %p134
    %s136 = ssub.s32 %s13, %s20
    %p137 = scmp.eq.s32.totalorder %s136, 0
    %s139 = sadd.s32 %s138, 1
    %s140 = scalar_select %p137, %s138, %s139
    %p143 = pneg %p137
    %p144 = scmp.eq.s32.totalorder %s13, 1
    %p145 = por %p143, %p144
    %p146 = scmp.ne.s32.totalorder %s138, %s141
    %p147 = scmp.eq.s32.totalorder %s13, 0
    %p148 = por %p146, %p147
    %p149 = scmp.ne.s32.totalorder %s138, %s141
    %p150 = scmp.eq.s32.totalorder %s18, 1
    %p151 = por %p149, %p150
    %p152 = scmp.ne.s32.totalorder %s141, %s142
    %p153 = scmp.eq.s32.totalorder %s18, 0
    %p154 = por %p152, %p153
    %p155 = scmp.ne.s32.totalorder %s141, %s142
    %p156 = scmp.eq.s32.totalorder %s19, 1
    %p157 = por %p155, %p156
    %p159 = scmp.ne.s32.totalorder %s142, %s158
    %p160 = scmp.eq.s32.totalorder %s19, 0
    %p161 = por %p159, %p160
    %s162 = ssub.s32 %s13, %s20
    %p163 = scmp.eq.s32.totalorder %s162, 0
    %s165 = sadd.s32 %s164, 1
    %s166 = scalar_select %p163, %s164, %s165
    %p169 = pneg %p163
    %p170 = scmp.eq.s32.totalorder %s13, 1
    %p171 = por %p169, %p170
    %p172 = scmp.ne.s32.totalorder %s164, %s167
    %p173 = scmp.eq.s32.totalorder %s13, 0
    %p174 = por %p172, %p173
    %p175 = scmp.ne.s32.totalorder %s164, %s167
    %p176 = scmp.eq.s32.totalorder %s18, 1
    %p177 = por %p175, %p176
    %p178 = scmp.ne.s32.totalorder %s167, %s168
    %p179 = scmp.eq.s32.totalorder %s18, 0
    %p180 = por %p178, %p179
    %p181 = scmp.ne.s32.totalorder %s167, %s168
    %p182 = scmp.eq.s32.totalorder %s19, 1
    %p183 = por %p181, %p182
    %p185 = scmp.ne.s32.totalorder %s168, %s184
    %p186 = scmp.eq.s32.totalorder %s19, 0
    %p187 = por %p185, %p186
    %p188 = scmp.le.s32.totalorder 1, %s13
    %p189 = scmp.lt.s32.totalorder %s13, 3
    %p190 = pnand %p188, %p189
    %p191 = pneg %p190
    // Predicated region
    $region9: #{perceiver_io_forward.7} parent=5 // pred_check
      _
    $region10: #{perceiver_io_forward.7} parent=5 // pred_check_branch
      %193 = sbr.rel (%p190) target = $region12
    $region11: #{perceiver_io_forward.7} parent=5 // pred_region
      %s194 = ssub.s32 %s13, 1
      // Predicated region
      $region13: #{perceiver_io_forward.7} parent=11 // pred_check
        %p195 = pneg %p60
      $region14: #{perceiver_io_forward.7} parent=11 // pred_check_branch
        %197 = sbr.rel (%p195) target = $region16
      $region15: #{perceiver_io_forward.7} parent=11 // pred_region
        _
      $region16: #{perceiver_io_forward.7} parent=11 // pred_fallthru
        _
      // Predicated region
      $region17: #{perceiver_io_forward.7} parent=11 // pred_check
        %p198 = pneg %p81
      $region18: #{perceiver_io_forward.7} parent=11 // pred_check_branch
        %200 = sbr.rel (%p198) target = $region20
      $region19: #{perceiver_io_forward.7} parent=11 // pred_region
        _
      $region20: #{perceiver_io_forward.7} parent=11 // pred_fallthru
        _
      // Predicated region
      $region21: #{perceiver_io_forward.7} parent=11 // pred_check
        %p201 = pneg %p102
      $region22: #{perceiver_io_forward.7} parent=11 // pred_check_branch
        %203 = sbr.rel (%p201) target = $region24
      $region23: #{perceiver_io_forward.7} parent=11 // pred_region
        _
      $region24: #{perceiver_io_forward.7} parent=11 // pred_fallthru
        _
    $region12: #{perceiver_io_forward.7} parent=5 // pred_fallthru
      _
    %p204 = scmp.lt.s32.totalorder %s13, 2
    // Predicated region
    $region25: #{perceiver_io_forward.7} parent=5 // pred_check
      %p205 = pneg %p204
    $region26: #{perceiver_io_forward.7} parent=5 // pred_check_branch
      %207 = sbr.rel (%p205) target = $region28
    $region27: #{perceiver_io_forward.7} parent=5 // pred_region
      // Predicated region
      $region29: #{perceiver_io_forward.7} parent=27 // pred_check
        %p208 = pneg %p33
      $region30: #{perceiver_io_forward.7} parent=27 // pred_check_branch
        %210 = sbr.rel (%p208) target = $region32
      $region31: #{perceiver_io_forward.7} parent=27 // pred_region
        %p211 = scmp.lt.s32.totalorder %s13, 1
        %s212 = scalar_select %p211, %s13, 1
        %s213 = smul.addr %s212, 16
        %s214 = smul.addr %s213, 8
        %s215 = scalar_lea.vmem %s0, %s214
      $region32: #{perceiver_io_forward.7} parent=27 // pred_fallthru
        _
    $region28: #{perceiver_io_forward.7} parent=5 // pred_fallthru
      _
    %p216 = scmp.le.s32.totalorder 1, %s13
    %p217 = scmp.lt.s32.totalorder %s13, 3
    %p218 = pnand %p216, %p217
    %p219 = pneg %p218
    // Predicated region
    $region33: #{perceiver_io_forward.7} parent=5 // pred_check
      _
    $region34: #{perceiver_io_forward.7} parent=5 // pred_check_branch
      %221 = sbr.rel (%p218) target = $region36
    $region35: #{perceiver_io_forward.7} parent=5 // pred_region
      %s222 = ssub.s32 %s13, 1
      %p223 = scmp.lt.s32.totalorder %s18, 1
      %s224 = scalar_select %p223, %s18, 1
      %s225 = smul.addr %s224, 16
      %s226 = smul.addr %s225, 8
      %s227 = scalar_lea.vmem %s0, %s226
      %p228 = pneg %p39
      %p229 = pneg %p36
      %p230 = pneg %p60
      %p231 = pneg %p57
      %p232 = pneg %p81
      %p233 = pneg %p78
      %p234 = pneg %p102
      %p235 = pneg %p99
      %p236 = pneg %p128
      %p237 = pneg %p125
      %p238 = scmp.lt.s32.totalorder %s18, 1
      %s239 = scalar_select %p238, %s18, 1
      %s240 = smul.addr %s239, 8
      %s241 = smul.addr %s240, 8
      %s242 = scalar_lea.vmem %s4, %s241
      %p243 = pneg %p154
      %p244 = pneg %p151
      %p245 = scmp.lt.s32.totalorder %s18, 1
      %s246 = scalar_select %p245, %s18, 1
      %s247 = smul.addr %s246, 8
      %s248 = scalar_lea.vmem %s5, %s247
      %p249 = pneg %p180
      %p250 = pneg %p177
      %p251 = scmp.lt.s32.totalorder %s18, 1
      %s252 = scalar_select %p251, %s18, 1
      %s253 = smul.addr %s252, 8
      %s254 = scalar_lea.vmem %s6, %s253
      %p255 = scmp.lt.s32.totalorder %s18, 1
      %s256 = scalar_select %p255, %s18, 1
      %s257 = smul.addr %s256, 16
      %s258 = smul.addr %s257, 8
      %s259 = scalar_lea.vmem %s0, %s258
      %p260 = scmp.lt.s32.totalorder %s18, 1
      %s261 = scalar_select %p260, %s18, 1
      %s262 = smul.addr %s261, 8
      %s263 = smul.addr %s262, 8
      %s264 = scalar_lea.vmem %s4, %s263
      %p265 = scmp.lt.s32.totalorder %s18, 1
      %s266 = scalar_select %p265, %s18, 1
      %s267 = smul.addr %s266, 8
      %s268 = scalar_lea.vmem %s5, %s267
      %p269 = scmp.lt.s32.totalorder %s18, 1
      %s270 = scalar_select %p269, %s18, 1
      %s271 = smul.addr %s270, 8
      %s272 = scalar_lea.vmem %s6, %s271
      %v273 = vld [vmem:[%s1] sm:$0xff]
      %v274 = vld [vmem:[%s259] sm:$0xff]
      %v275 = vld [vmem:[%s259 + $0x8] sm:$0xff]
      %v276 = vld [vmem:[%s259 + $0x10] sm:$0xff]
      %v277 = vld [vmem:[%s259 + $0x18] sm:$0xff]
      %v278 = vld [vmem:[%s259 + $0x20] sm:$0xff]
      %v279 = vld [vmem:[%s259 + $0x28] sm:$0xff]
      %v280 = vld [vmem:[%s259 + $0x30] sm:$0xff]
      %v281 = vld [vmem:[%s259 + $0x38] sm:$0xff]
      %v282 = vld [vmem:[%s259 + $0x40] sm:$0x3]
      %v283 = vld [vmem:[%s259 + $0x48] sm:$0x3]
      %v284 = vld [vmem:[%s259 + $0x50] sm:$0x3]
      %v285 = vld [vmem:[%s259 + $0x58] sm:$0x3]
      %v286 = vld [vmem:[%s259 + $0x60] sm:$0x3]
      %v287 = vld [vmem:[%s259 + $0x68] sm:$0x3]
      %v288 = vld [vmem:[%s259 + $0x70] sm:$0x3]
      %v289 = vld [vmem:[%s259 + $0x78] sm:$0x3]
      %v290 = vld [vmem:[%s2] sm:$0xff]
      %292 = vset.pattern.permute.xlu0 0
      %293 = vperm.xlu0 %292, %v290
      %v294 = vpop.permute.xlu0 %293
      %vm296 = vcmask 80896
      %v298 = vsel %vm296, %v273, 0
      %vm300 = vcmask 1041408
      %v302 = vsel %vm300, %v282, 0
      %v305 = vsel %vm300, %v283, 0
      %v308 = vsel %vm300, %v284, 0
      %v311 = vsel %vm300, %v285, 0
      %v314 = vsel %vm300, %v286, 0
      %v317 = vsel %vm300, %v287, 0
      %v320 = vsel %vm300, %v288, 0
      %v323 = vsel %vm300, %v289, 0
      %325 = vmatpush.msra.mxu0 0.0
      %326 = vmatpush.msra.mxu0 0.0
      %327 = vmatpush.msra.mxu0 0.0
      %328 = vmatpush.msra.mxu0 0.0
      %329 = vmatpush.msra.mxu0 0.0
      %330 = vmatpush.msra.mxu0 0.0
      %331 = vmatpush.msra.mxu0 0.0
      %332 = vmatpush.msra.mxu0 0.0
      %333 = vmatpush.msra.mxu0 0.0
      %334 = vmatpush.msra.mxu0 0.0
      %335 = vmatpush.msra.mxu0 0.0
      %336 = vmatpush.msra.mxu0 0.0
      %337 = vmatpush.msra.mxu0 0.0
      %338 = vmatpush.msra.mxu0 0.0
      %339 = vmatpush.msra.mxu0 %v302
      %340 = vmatpush.msra.mxu0 %v274
      %341 = vmatmul.f32.gmra.mxu0 %v298
      %v342 = vpop.f32.mrf.mxu0
      %v343 = vadd.f32 %v294, %v342
      %344 = vdwg.mxu0
      %345 = vmatpush.msra.mxu0 0.0
      %346 = vmatpush.msra.mxu0 0.0
      %347 = vmatpush.msra.mxu0 0.0
      %348 = vmatpush.msra.mxu0 0.0
      %349 = vmatpush.msra.mxu0 0.0
      %350 = vmatpush.msra.mxu0 0.0
      %351 = vmatpush.msra.mxu0 0.0
      %352 = vmatpush.msra.mxu0 0.0
      %353 = vmatpush.msra.mxu0 0.0
      %354 = vmatpush.msra.mxu0 0.0
      %355 = vmatpush.msra.mxu0 0.0
      %356 = vmatpush.msra.mxu0 0.0
      %357 = vmatpush.msra.mxu0 0.0
      %358 = vmatpush.msra.mxu0 0.0
      %359 = vmatpush.msra.mxu0 %v305
      %360 = vmatpush.msra.mxu0 %v275
      %361 = vmatmul.f32.gmra.mxu0 %v298
      %v362 = vpop.f32.mrf.mxu0
      %v363 = vadd.f32 %v294, %v362
      %364 = vdwg.mxu0
      %365 = vmatpush.msra.mxu0 0.0
      %366 = vmatpush.msra.mxu0 0.0
      %367 = vmatpush.msra.mxu0 0.0
      %368 = vmatpush.msra.mxu0 0.0
      %369 = vmatpush.msra.mxu0 0.0
      %370 = vmatpush.msra.mxu0 0.0
      %371 = vmatpush.msra.mxu0 0.0
      %372 = vmatpush.msra.mxu0 0.0
      %373 = vmatpush.msra.mxu0 0.0
      %374 = vmatpush.msra.mxu0 0.0
      %375 = vmatpush.msra.mxu0 0.0
      %376 = vmatpush.msra.mxu0 0.0
      %377 = vmatpush.msra.mxu0 0.0
      %378 = vmatpush.msra.mxu0 0.0
      %379 = vmatpush.msra.mxu0 %v308
      %380 = vmatpush.msra.mxu0 %v276
      %381 = vmatmul.f32.gmra.mxu0 %v298
      %v382 = vpop.f32.mrf.mxu0
      %v383 = vadd.f32 %v294, %v382
      %384 = vdwg.mxu0
      %385 = vmatpush.msra.mxu0 0.0
      %386 = vmatpush.msra.mxu0 0.0
      %387 = vmatpush.msra.mxu0 0.0
      %388 = vmatpush.msra.mxu0 0.0
      %389 = vmatpush.msra.mxu0 0.0
      %390 = vmatpush.msra.mxu0 0.0
      %391 = vmatpush.msra.mxu0 0.0
      %392 = vmatpush.msra.mxu0 0.0
      %393 = vmatpush.msra.mxu0 0.0
      %394 = vmatpush.msra.mxu0 0.0
      %395 = vmatpush.msra.mxu0 0.0
      %396 = vmatpush.msra.mxu0 0.0
      %397 = vmatpush.msra.mxu0 0.0
      %398 = vmatpush.msra.mxu0 0.0
      %399 = vmatpush.msra.mxu0 %v311
      %400 = vmatpush.msra.mxu0 %v277
      %401 = vmatmul.f32.gmra.mxu0 %v298
      %v402 = vpop.f32.mrf.mxu0
      %v403 = vadd.f32 %v294, %v402
      %404 = vdwg.mxu0
      %405 = vmatpush.msra.mxu0 0.0
      %406 = vmatpush.msra.mxu0 0.0
      %407 = vmatpush.msra.mxu0 0.0
      %408 = vmatpush.msra.mxu0 0.0
      %409 = vmatpush.msra.mxu0 0.0
      %410 = vmatpush.msra.mxu0 0.0
      %411 = vmatpush.msra.mxu0 0.0
      %412 = vmatpush.msra.mxu0 0.0
      %413 = vmatpush.msra.mxu0 0.0
      %414 = vmatpush.msra.mxu0 0.0
      %415 = vmatpush.msra.mxu0 0.0
      %416 = vmatpush.msra.mxu0 0.0
      %417 = vmatpush.msra.mxu0 0.0
      %418 = vmatpush.msra.mxu0 0.0
      %419 = vmatpush.msra.mxu0 %v314
      %420 = vmatpush.msra.mxu0 %v278
      %421 = vmatmul.f32.gmra.mxu0 %v298
      %v422 = vpop.f32.mrf.mxu0
      %v423 = vadd.f32 %v294, %v422
      %424 = vdwg.mxu0
      %425 = vmatpush.msra.mxu0 0.0
      %426 = vmatpush.msra.mxu0 0.0
      %427 = vmatpush.msra.mxu0 0.0
      %428 = vmatpush.msra.mxu0 0.0
      %429 = vmatpush.msra.mxu0 0.0
      %430 = vmatpush.msra.mxu0 0.0
      %431 = vmatpush.msra.mxu0 0.0
      %432 = vmatpush.msra.mxu0 0.0
      %433 = vmatpush.msra.mxu0 0.0
      %434 = vmatpush.msra.mxu0 0.0
      %435 = vmatpush.msra.mxu0 0.0
      %436 = vmatpush.msra.mxu0 0.0
      %437 = vmatpush.msra.mxu0 0.0
      %438 = vmatpush.msra.mxu0 0.0
      %439 = vmatpush.msra.mxu0 %v317
      %440 = vmatpush.msra.mxu0 %v279
      %441 = vmatmul.f32.gmra.mxu0 %v298
      %v442 = vpop.f32.mrf.mxu0
      %v443 = vadd.f32 %v294, %v442
      %444 = vdwg.mxu0
      %445 = vmatpush.msra.mxu0 0.0
      %446 = vmatpush.msra.mxu0 0.0
      %447 = vmatpush.msra.mxu0 0.0
      %448 = vmatpush.msra.mxu0 0.0
      %449 = vmatpush.msra.mxu0 0.0
      %450 = vmatpush.msra.mxu0 0.0
      %451 = vmatpush.msra.mxu0 0.0
      %452 = vmatpush.msra.mxu0 0.0
      %453 = vmatpush.msra.mxu0 0.0
      %454 = vmatpush.msra.mxu0 0.0
      %455 = vmatpush.msra.mxu0 0.0
      %456 = vmatpush.msra.mxu0 0.0
      %457 = vmatpush.msra.mxu0 0.0
      %458 = vmatpush.msra.mxu0 0.0
      %459 = vmatpush.msra.mxu0 %v320
      %460 = vmatpush.msra.mxu0 %v280
      %461 = vmatmul.f32.gmra.mxu0 %v298
      %v462 = vpop.f32.mrf.mxu0
      %v463 = vadd.f32 %v294, %v462
      %464 = vdwg.mxu0
      %465 = vmatpush.msra.mxu0 0.0
      %466 = vmatpush.msra.mxu0 0.0
      %467 = vmatpush.msra.mxu0 0.0
      %468 = vmatpush.msra.mxu0 0.0
      %469 = vmatpush.msra.mxu0 0.0
      %470 = vmatpush.msra.mxu0 0.0
      %471 = vmatpush.msra.mxu0 0.0
      %472 = vmatpush.msra.mxu0 0.0
      %473 = vmatpush.msra.mxu0 0.0
      %474 = vmatpush.msra.mxu0 0.0
      %475 = vmatpush.msra.mxu0 0.0
      %476 = vmatpush.msra.mxu0 0.0
      %477 = vmatpush.msra.mxu0 0.0
      %478 = vmatpush.msra.mxu0 0.0
      %479 = vmatpush.msra.mxu0 %v323
      %480 = vmatpush.msra.mxu0 %v281
      %481 = vmatmul.f32.gmra.mxu0 %v298
      %v482 = vpop.f32.mrf.mxu0
      %v483 = vadd.f32 %v294, %v482
      %484 = vdwg.mxu0
      %v485 = vmax.f32 %v343, 0.0
      %v486 = vmax.f32 %v363, 0.0
      %v487 = vmax.f32 %v383, 0.0
      %v488 = vmax.f32 %v403, 0.0
      %v489 = vmax.f32 %v423, 0.0
      %v490 = vmax.f32 %v443, 0.0
      %v491 = vmax.f32 %v463, 0.0
      %v492 = vmax.f32 %v483, 0.0
      %493 = vst [vmem:[%s264] sm:$0xff] %v485
      %494 = vst [vmem:[%s264 + $0x8] sm:$0xff] %v486
      %495 = vst [vmem:[%s264 + $0x10] sm:$0xff] %v487
      %496 = vst [vmem:[%s264 + $0x18] sm:$0xff] %v488
      %497 = vst [vmem:[%s264 + $0x20] sm:$0xff] %v489
      %498 = vst [vmem:[%s264 + $0x28] sm:$0xff] %v490
      %499 = vst [vmem:[%s264 + $0x30] sm:$0xff] %v491
      %vm500 = vcmask 850944
      %501 = vst.msk [vmem:[%s264 + $0x38] sm:$0xff] %vm500, %v492
      %v502 = vmax.f32 %v485, %v489
      %v503 = vmax.f32 %v486, %v490
      %v504 = vmax.f32 %v487, %v491
      %v505 = vsel %vm500, %v492, -inf
      %v506 = vmax.f32 %v488, %v505
      %v507 = vmax.f32 %v502, %v503
      %v508 = vmax.f32 %v504, %v506
      %v509 = vmax.f32 %v507, %v508
      %510 = vmax.xlane.f32.xlu0 %v509
      %v511 = vpop.xlane.xlu0 %510
      %v512 = vsub.f32 %v485, %v511
      %v513 = vsub.f32 %v486, %v511
      %v514 = vsub.f32 %v487, %v511
      %v515 = vsub.f32 %v488, %v511
      %v516 = vsub.f32 %v489, %v511
      %v517 = vsub.f32 %v490, %v511
      %v518 = vsub.f32 %v491, %v511
      %v519 = vsub.f32 %v492, %v511
      %v520 = vmul.f32 %v512, 100.0
      %v521 = vmul.f32 %v513, 100.0
      %v522 = vmul.f32 %v514, 100.0
      %v523 = vmul.f32 %v515, 100.0
      %v524 = vmul.f32 %v516, 100.0
      %v525 = vmul.f32 %v517, 100.0
      %v526 = vmul.f32 %v518, 100.0
      %v527 = vmul.f32 %v519, 100.0
      %v528 = vmul.f32 %v520, 1.442695
      %v529 = vpow.pop %v528
      %v530 = vmul.f32 %v521, 1.442695
      %v531 = vpow.pop %v530
      %v532 = vmul.f32 %v522, 1.442695
      %v533 = vpow.pop %v532
      %v534 = vmul.f32 %v523, 1.442695
      %v535 = vpow.pop %v534
      %v536 = vmul.f32 %v524, 1.442695
      %v537 = vpow.pop %v536
      %v538 = vmul.f32 %v525, 1.442695
      %v539 = vpow.pop %v538
      %v540 = vmul.f32 %v526, 1.442695
      %v541 = vpow.pop %v540
      %v542 = vmul.f32 %v527, 1.442695
      %v543 = vpow.pop %v542
      %v544 = vadd.f32 %v529, %v531
      %v545 = vadd.f32 %v544, %v533
      %v546 = vadd.f32 %v545, %v535
      %v547 = vadd.f32 %v546, %v537
      %v548 = vadd.f32 %v547, %v539
      %v549 = vadd.f32 %v548, %v541
      %v550 = vsel %vm500, %v543, 0.0
      %v551 = vadd.f32 %v549, %v550
      %552 = vadd.xlane.f32.xlu0 %v551
      %v553 = vpop.xlane.xlu0 %552
      %v554 = vld [vmem:[%s3] sm:$0x77]
      %v555 = vld [vmem:[%s3 + $0x8] sm:$0x77]
      %v556 = vld [vmem:[%s3 + $0x10] sm:$0x77]
      %v557 = vld [vmem:[%s3 + $0x18] sm:$0x77]
      %562 = vst [vmem:[#allocation1] ss:$2 sm:$0xff] %v554
      %s563 = scalar_lea.vmem [#allocation1], 16
      %564 = vst [vmem:[%s563] ss:$2 sm:$0xff] %v555
      %s565 = scalar_lea.vmem [#allocation1], 32
      %566 = vst [vmem:[%s565] ss:$2 sm:$0xff] %v556
      %s567 = scalar_lea.vmem [#allocation1], 48
      %568 = vst [vmem:[%s567] ss:$2 sm:$0xff] %v557
      %v569 = vld.sshfl [vmem:[#allocation1] sm:$0xff pattern:$0x75316420]
      %v570 = vld.sshfl [vmem:[#allocation1 + $0x8] sm:$0xff pattern:$0x75316420]
      %v571 = vld.sshfl [vmem:[#allocation1 + $0x10] sm:$0xff pattern:$0x75316420]
      %v572 = vld.sshfl [vmem:[#allocation1 + $0x18] sm:$0xff pattern:$0x75316420]
      %v573 = vld.sshfl [vmem:[#allocation1 + $0x20] sm:$0xff pattern:$0x75316420]
      %v574 = vld.sshfl [vmem:[#allocation1 + $0x28] sm:$0xff pattern:$0x75316420]
      %v575 = vld.sshfl [vmem:[#allocation1 + $0x30] sm:$0xff pattern:$0x75316420]
      %v576 = vld.sshfl [vmem:[#allocation1 + $0x38] sm:$0xff pattern:$0x75316420]
      %v585 = vsel %vm500, %v543, 0
      %v587 = vsel %vm500, %v576, 0
      %589 = vmatpush.xpose.msra.mxu0 0.0
      %590 = vmatpush.xpose.msra.mxu0 0.0
      %591 = vmatpush.xpose.msra.mxu0 0.0
      %592 = vmatpush.xpose.msra.mxu0 0.0
      %593 = vmatpush.xpose.msra.mxu0 0.0
      %594 = vmatpush.xpose.msra.mxu0 0.0
      %595 = vmatpush.xpose.msra.mxu0 0.0
      %596 = vmatpush.xpose.msra.mxu0 0.0
      %597 = vmatpush.xpose.msra.mxu0 0.0
      %598 = vmatpush.xpose.msra.mxu0 0.0
      %599 = vmatpush.xpose.msra.mxu0 0.0
      %600 = vmatpush.xpose.msra.mxu0 0.0
      %601 = vmatpush.xpose.msra.mxu0 0.0
      %602 = vmatpush.xpose.msra.mxu0 0.0
      %603 = vmatpush.xpose.msra.mxu0 0.0
      %604 = vmatpush.xpose.msra.mxu0 %v569
      %605 = vmatmul.f32.gmra.mxu0 %v529
      %v606 = vpop.f32.mrf.mxu0
      %v607 = vadd.f32 0.0, %v606
      %608 = vdwg.mxu0
      %609 = vmatpush.xpose.msra.mxu0 0.0
      %610 = vmatpush.xpose.msra.mxu0 0.0
      %611 = vmatpush.xpose.msra.mxu0 0.0
      %612 = vmatpush.xpose.msra.mxu0 0.0
      %613 = vmatpush.xpose.msra.mxu0 0.0
      %614 = vmatpush.xpose.msra.mxu0 0.0
      %615 = vmatpush.xpose.msra.mxu0 0.0
      %616 = vmatpush.xpose.msra.mxu0 0.0
      %617 = vmatpush.xpose.msra.mxu0 0.0
      %618 = vmatpush.xpose.msra.mxu0 0.0
      %619 = vmatpush.xpose.msra.mxu0 0.0
      %620 = vmatpush.xpose.msra.mxu0 0.0
      %621 = vmatpush.xpose.msra.mxu0 0.0
      %622 = vmatpush.xpose.msra.mxu0 0.0
      %623 = vmatpush.xpose.msra.mxu0 0.0
      %624 = vmatpush.xpose.msra.mxu0 %v570
      %625 = vmatmul.f32.gmra.mxu0 %v531
      %v626 = vpop.f32.mrf.mxu0
      %v627 = vadd.f32 %v607, %v626
      %628 = vdwg.mxu0
      %629 = vmatpush.xpose.msra.mxu0 0.0
      %630 = vmatpush.xpose.msra.mxu0 0.0
      %631 = vmatpush.xpose.msra.mxu0 0.0
      %632 = vmatpush.xpose.msra.mxu0 0.0
      %633 = vmatpush.xpose.msra.mxu0 0.0
      %634 = vmatpush.xpose.msra.mxu0 0.0
      %635 = vmatpush.xpose.msra.mxu0 0.0
      %636 = vmatpush.xpose.msra.mxu0 0.0
      %637 = vmatpush.xpose.msra.mxu0 0.0
      %638 = vmatpush.xpose.msra.mxu0 0.0
      %639 = vmatpush.xpose.msra.mxu0 0.0
      %640 = vmatpush.xpose.msra.mxu0 0.0
      %641 = vmatpush.xpose.msra.mxu0 0.0
      %642 = vmatpush.xpose.msra.mxu0 0.0
      %643 = vmatpush.xpose.msra.mxu0 0.0
      %644 = vmatpush.xpose.msra.mxu0 %v571
      %645 = vmatmul.f32.gmra.mxu0 %v533
      %v646 = vpop.f32.mrf.mxu0
      %v647 = vadd.f32 %v627, %v646
      %648 = vdwg.mxu0
      %649 = vmatpush.xpose.msra.mxu0 0.0
      %650 = vmatpush.xpose.msra.mxu0 0.0
      %651 = vmatpush.xpose.msra.mxu0 0.0
      %652 = vmatpush.xpose.msra.mxu0 0.0
      %653 = vmatpush.xpose.msra.mxu0 0.0
      %654 = vmatpush.xpose.msra.mxu0 0.0
      %655 = vmatpush.xpose.msra.mxu0 0.0
      %656 = vmatpush.xpose.msra.mxu0 0.0
      %657 = vmatpush.xpose.msra.mxu0 0.0
      %658 = vmatpush.xpose.msra.mxu0 0.0
      %659 = vmatpush.xpose.msra.mxu0 0.0
      %660 = vmatpush.xpose.msra.mxu0 0.0
      %661 = vmatpush.xpose.msra.mxu0 0.0
      %662 = vmatpush.xpose.msra.mxu0 0.0
      %663 = vmatpush.xpose.msra.mxu0 0.0
      %664 = vmatpush.xpose.msra.mxu0 %v572
      %665 = vmatmul.f32.gmra.mxu0 %v535
      %v666 = vpop.f32.mrf.mxu0
      %v667 = vadd.f32 %v647, %v666
      %668 = vdwg.mxu0
      %669 = vmatpush.xpose.msra.mxu0 0.0
      %670 = vmatpush.xpose.msra.mxu0 0.0
      %671 = vmatpush.xpose.msra.mxu0 0.0
      %672 = vmatpush.xpose.msra.mxu0 0.0
      %673 = vmatpush.xpose.msra.mxu0 0.0
      %674 = vmatpush.xpose.msra.mxu0 0.0
      %675 = vmatpush.xpose.msra.mxu0 0.0
      %676 = vmatpush.xpose.msra.mxu0 0.0
      %677 = vmatpush.xpose.msra.mxu0 0.0
      %678 = vmatpush.xpose.msra.mxu0 0.0
      %679 = vmatpush.xpose.msra.mxu0 0.0
      %680 = vmatpush.xpose.msra.mxu0 0.0
      %681 = vmatpush.xpose.msra.mxu0 0.0
      %682 = vmatpush.xpose.msra.mxu0 0.0
      %683 = vmatpush.xpose.msra.mxu0 0.0
      %684 = vmatpush.xpose.msra.mxu0 %v573
      %685 = vmatmul.f32.gmra.mxu0 %v537
      %v686 = vpop.f32.mrf.mxu0
      %v687 = vadd.f32 %v667, %v686
      %688 = vdwg.mxu0
      %689 = vmatpush.xpose.msra.mxu0 0.0
      %690 = vmatpush.xpose.msra.mxu0 0.0
      %691 = vmatpush.xpose.msra.mxu0 0.0
      %692 = vmatpush.xpose.msra.mxu0 0.0
      %693 = vmatpush.xpose.msra.mxu0 0.0
      %694 = vmatpush.xpose.msra.mxu0 0.0
      %695 = vmatpush.xpose.msra.mxu0 0.0
      %696 = vmatpush.xpose.msra.mxu0 0.0
      %697 = vmatpush.xpose.msra.mxu0 0.0
      %698 = vmatpush.xpose.msra.mxu0 0.0
      %699 = vmatpush.xpose.msra.mxu0 0.0
      %700 = vmatpush.xpose.msra.mxu0 0.0
      %701 = vmatpush.xpose.msra.mxu0 0.0
      %702 = vmatpush.xpose.msra.mxu0 0.0
      %703 = vmatpush.xpose.msra.mxu0 0.0
      %704 = vmatpush.xpose.msra.mxu0 %v574
      %705 = vmatmul.f32.gmra.mxu0 %v539
      %v706 = vpop.f32.mrf.mxu0
      %v707 = vadd.f32 %v687, %v706
      %708 = vdwg.mxu0
      %709 = vmatpush.xpose.msra.mxu0 0.0
      %710 = vmatpush.xpose.msra.mxu0 0.0
      %711 = vmatpush.xpose.msra.mxu0 0.0
      %712 = vmatpush.xpose.msra.mxu0 0.0
      %713 = vmatpush.xpose.msra.mxu0 0.0
      %714 = vmatpush.xpose.msra.mxu0 0.0
      %715 = vmatpush.xpose.msra.mxu0 0.0
      %716 = vmatpush.xpose.msra.mxu0 0.0
      %717 = vmatpush.xpose.msra.mxu0 0.0
      %718 = vmatpush.xpose.msra.mxu0 0.0
      %719 = vmatpush.xpose.msra.mxu0 0.0
      %720 = vmatpush.xpose.msra.mxu0 0.0
      %721 = vmatpush.xpose.msra.mxu0 0.0
      %722 = vmatpush.xpose.msra.mxu0 0.0
      %723 = vmatpush.xpose.msra.mxu0 0.0
      %724 = vmatpush.xpose.msra.mxu0 %v575
      %725 = vmatmul.f32.gmra.mxu0 %v541
      %v726 = vpop.f32.mrf.mxu0
      %v727 = vadd.f32 %v707, %v726
      %728 = vdwg.mxu0
      %729 = vmatpush.xpose.msra.mxu0 0.0
      %730 = vmatpush.xpose.msra.mxu0 0.0
      %731 = vmatpush.xpose.msra.mxu0 0.0
      %732 = vmatpush.xpose.msra.mxu0 0.0
      %733 = vmatpush.xpose.msra.mxu0 0.0
      %734 = vmatpush.xpose.msra.mxu0 0.0
      %735 = vmatpush.xpose.msra.mxu0 0.0
      %736 = vmatpush.xpose.msra.mxu0 0.0
      %737 = vmatpush.xpose.msra.mxu0 0.0
      %738 = vmatpush.xpose.msra.mxu0 0.0
      %739 = vmatpush.xpose.msra.mxu0 0.0
      %740 = vmatpush.xpose.msra.mxu0 0.0
      %741 = vmatpush.xpose.msra.mxu0 0.0
      %742 = vmatpush.xpose.msra.mxu0 0.0
      %743 = vmatpush.xpose.msra.mxu0 0.0
      %744 = vmatpush.xpose.msra.mxu0 %v587
      %745 = vmatmul.f32.gmra.mxu0 %v585
      %v746 = vpop.f32.mrf.mxu0
      %v747 = vadd.f32 %v727, %v746
      %748 = vdwg.mxu0
      %v749 = vrcp.pop %v553
      %v750 = vmul.f32 %v747, %v749
      %vm751 = vcmask 23552
      %752 = vst.msk [vmem:[%s268] sm:$0xff] %vm751, %v750
      %vm753 = vcmask 7168
      %754 = vst.msk [vmem:[%s272] sm:$0xff] %vm753, %v511
      %p755 = scmp.lt.s32.totalorder %s18, 1
      %s756 = scalar_select %p755, %s18, 1
      %s757 = smul.addr %s756, 8
      %s758 = smul.addr %s757, 8
      %s759 = scalar_lea.vmem %s4, %s758
      %p760 = scmp.lt.s32.totalorder %s18, 1
      %s761 = scalar_select %p760, %s18, 1
      %s762 = smul.addr %s761, 8
      %s763 = scalar_lea.vmem %s5, %s762
      %p764 = scmp.lt.s32.totalorder %s18, 1
      %s765 = scalar_select %p764, %s18, 1
      %s766 = smul.addr %s765, 8
      %s767 = scalar_lea.vmem %s6, %s766
      // Predicated region
      $region37: #{perceiver_io_forward.7} parent=35 // pred_check
        %p768 = pneg %p125
      $region38: #{perceiver_io_forward.7} parent=35 // pred_check_branch
        %770 = sbr.rel (%p768) target = $region40
      $region39: #{perceiver_io_forward.7} parent=35 // pred_region
        _
      $region40: #{perceiver_io_forward.7} parent=35 // pred_fallthru
        _
      // Predicated region
      $region41: #{perceiver_io_forward.7} parent=35 // pred_check
        %p771 = pneg %p151
      $region42: #{perceiver_io_forward.7} parent=35 // pred_check_branch
        %773 = sbr.rel (%p771) target = $region44
      $region43: #{perceiver_io_forward.7} parent=35 // pred_region
        _
      $region44: #{perceiver_io_forward.7} parent=35 // pred_fallthru
        _
      // Predicated region
      $region45: #{perceiver_io_forward.7} parent=35 // pred_check
        %p774 = pneg %p177
      $region46: #{perceiver_io_forward.7} parent=35 // pred_check_branch
        %776 = sbr.rel (%p774) target = $region48
      $region47: #{perceiver_io_forward.7} parent=35 // pred_region
        _
      $region48: #{perceiver_io_forward.7} parent=35 // pred_fallthru
        _
    $region36: #{perceiver_io_forward.7} parent=5 // pred_fallthru
      _
    %p777 = scmp.le.s32.totalorder 2, %s13
    // Predicated region
    $region49: #{perceiver_io_forward.7} parent=5 // pred_check
      %p778 = pneg %p777
    $region50: #{perceiver_io_forward.7} parent=5 // pred_check_branch
      %780 = sbr.rel (%p778) target = $region52
    $region51: #{perceiver_io_forward.7} parent=5 // pred_region
      %s781 = ssub.s32 %s13, 2
      // Predicated region
      $region53: #{perceiver_io_forward.7} parent=51 // pred_check
        %p782 = pneg %p131
      $region54: #{perceiver_io_forward.7} parent=51 // pred_check_branch
        %784 = sbr.rel (%p782) target = $region56
      $region55: #{perceiver_io_forward.7} parent=51 // pred_region
        %p785 = scmp.lt.s32.totalorder %s19, 1
        %s786 = scalar_select %p785, %s19, 1
        %s787 = smul.addr %s786, 8
        %s788 = smul.addr %s787, 8
        %s789 = scalar_lea.vmem %s4, %s788
      $region56: #{perceiver_io_forward.7} parent=51 // pred_fallthru
        _
      // Predicated region
      $region57: #{perceiver_io_forward.7} parent=51 // pred_check
        %p790 = pneg %p157
      $region58: #{perceiver_io_forward.7} parent=51 // pred_check_branch
        %792 = sbr.rel (%p790) target = $region60
      $region59: #{perceiver_io_forward.7} parent=51 // pred_region
        %p793 = scmp.lt.s32.totalorder %s19, 1
        %s794 = scalar_select %p793, %s19, 1
        %s795 = smul.addr %s794, 8
        %s796 = scalar_lea.vmem %s5, %s795
      $region60: #{perceiver_io_forward.7} parent=51 // pred_fallthru
        _
      // Predicated region
      $region61: #{perceiver_io_forward.7} parent=51 // pred_check
        %p797 = pneg %p183
      $region62: #{perceiver_io_forward.7} parent=51 // pred_check_branch
        %799 = sbr.rel (%p797) target = $region64
      $region63: #{perceiver_io_forward.7} parent=51 // pred_region
        %p800 = scmp.lt.s32.totalorder %s19, 1
        %s801 = scalar_select %p800, %s19, 1
        %s802 = smul.addr %s801, 8
        %s803 = scalar_lea.vmem %s6, %s802
      $region64: #{perceiver_io_forward.7} parent=51 // pred_fallthru
        _
    $region52: #{perceiver_io_forward.7} parent=5 // pred_fallthru
      _
  $region6: #{perceiver_io_forward.7} parent=0 // loop_footer
    %s17 = sadd.s32 1, %s13
  $region7: #{perceiver_io_forward.7} parent=0 // loop_footer_branch
    %12 = sbr.rel target = $region3
  $region8: #{perceiver_io_forward.7} parent=0 // loop_exit
    _

// kernel: perceiver_io_forward.9
$region0: #{perceiver_io_forward.9}
  #allocation0 [shape = 'u32[]', space=smem, size = 0x4, offset = 0x4, fixed_abs, tag = 'smem constant byte address 0x4 - core index']
  #allocation1 [shape = 'u32[72,128]{1,0:T(1,128)}', space=vmem, size = 0x9000, scoped, tag = 'internal scratch']
  %s0 = inlined_call_operand.vmem [shape: f32[2,16,32], index: 0, kind: input, shape index: {}]
  %s1 = inlined_call_operand.vmem [shape: f32[2,85,16], index: 1, kind: input, shape index: {}]
  %s2 = inlined_call_operand.vmem [shape: f32[1,32], index: 2, kind: input, shape index: {}]
  %s3 = inlined_call_operand.vmem [shape: f32[1,32], index: 3, kind: input, shape index: {}]
  %s4 = inlined_call_operand.vmem [shape: f32[1,16], index: 4, kind: input, shape index: {}]
  %s5 = inlined_call_operand.vmem [shape: f32[1,16], index: 5, kind: input, shape index: {}]
  %s6 = inlined_call_operand.vmem [shape: f32[32,16], index: 6, kind: input, shape index: {}]
  %s7 = inlined_call_operand.vmem [shape: f32[16,32], index: 7, kind: input, shape index: {}]
  %s8 = inlined_call_operand.vmem [shape: f32[16,32], index: 8, kind: input, shape index: {}]
  %s9 = inlined_call_operand.vmem [shape: f32[1,32], index: 9, kind: input, shape index: {}]
  %s10 = inlined_call_operand.vmem [shape: f32[1,32], index: 10, kind: input, shape index: {}]
  %s11 = inlined_call_operand.vmem [shape: f32[1,32], index: 11, kind: input, shape index: {}]
  %s12 = inlined_call_operand.vmem [shape: f32[32,256], index: 12, kind: input, shape index: {}]
  %s13 = inlined_call_operand.vmem [shape: f32[1,256], index: 13, kind: input, shape index: {}]
  %s14 = inlined_call_operand.vmem [shape: f32[128,32], index: 14, kind: input, shape index: {}]
  %s15 = inlined_call_operand.vmem [shape: f32[1,32], index: 15, kind: input, shape index: {}]
  %s16 = inlined_call_operand.vmem [shape: f32[2,16,32], index: 16, kind: output, shape index: {}]
  %s17 = sld [smem:[#allocation0]]
  $region97: #{perceiver_io_forward.9} parent=0
    _
  %s19 = ssub.s32 1, %s17
  %s20 = scalar_select 0, %s19, %s17
  loop: start=0, step=1, limit=4
  $region2: #{perceiver_io_forward.9} parent=0 // loop_pre_header
    _
  $region3: #{perceiver_io_forward.9} parent=0 // loop_header
    %s22 = sphi 0, %s26
    %p23 = scmp.ge.s32.totalorder %s22, 4
    %s32 = sphi 0, %s34
    %s35 = sphi 0, %s32
    %s36 = sphi 0, %s35
    %s52 = sphi 0, %s36
    %s58 = sphi 0, %s60
    %s61 = sphi 0, %s58
    %s62 = sphi 0, %s61
    %s78 = sphi 0, %s62
    %s82 = sphi 0, %s82
    %s84 = sphi 0, %s82
    %s85 = sphi 0, %s84
    %s99 = sphi 0, %s85
    %s103 = sphi 0, %s103
    %s105 = sphi 0, %s103
    %s106 = sphi 0, %s105
    %s120 = sphi 0, %s106
    %s124 = sphi 0, %s124
    %s126 = sphi 0, %s124
    %s127 = sphi 0, %s126
    %s141 = sphi 0, %s127
    %s145 = sphi 0, %s145
    %s147 = sphi 0, %s145
    %s148 = sphi 0, %s147
    %s162 = sphi 0, %s148
    %s166 = sphi 0, %s166
    %s168 = sphi 0, %s166
    %s169 = sphi 0, %s168
    %s183 = sphi 0, %s169
    %s187 = sphi 0, %s187
    %s189 = sphi 0, %s187
    %s190 = sphi 0, %s189
    %s204 = sphi 0, %s190
    %s208 = sphi 0, %s208
    %s210 = sphi 0, %s208
    %s211 = sphi 0, %s210
    %s225 = sphi 0, %s211
    %s229 = sphi 0, %s229
    %s231 = sphi 0, %s229
    %s232 = sphi 0, %s231
    %s246 = sphi 0, %s232
    %s250 = sphi 0, %s250
    %s252 = sphi 0, %s250
    %s253 = sphi 0, %s252
    %s267 = sphi 0, %s253
    %s271 = sphi 0, %s271
    %s273 = sphi 0, %s271
    %s274 = sphi 0, %s273
    %s288 = sphi 0, %s274
    %s292 = sphi 0, %s292
    %s294 = sphi 0, %s292
    %s295 = sphi 0, %s294
    %s309 = sphi 0, %s295
    %s313 = sphi 0, %s313
    %s315 = sphi 0, %s313
    %s316 = sphi 0, %s315
    %s330 = sphi 0, %s316
    %s334 = sphi 0, %s334
    %s336 = sphi 0, %s334
    %s337 = sphi 0, %s336
    %s351 = sphi 0, %s337
    %s355 = sphi 0, %s355
    %s357 = sphi 0, %s355
    %s358 = sphi 0, %s357
    %s372 = sphi 0, %s358
    %s378 = sphi 0, %s380
    %s381 = sphi 0, %s378
    %s382 = sphi 0, %s381
    %s398 = sphi 0, %s382
  $region4: #{perceiver_io_forward.9} parent=0 // loop_header_branch
    %25 = sbr.rel (%p23) target = $region8
  $region5: #{perceiver_io_forward.9} parent=0 // loop_body
    %s27 = ssub.s32 %s22, 1
    %s28 = ssub.s32 %s22, 2
    %s29 = sadd.s32 %s22, 1
    %s30 = ssub.s32 %s22, %s29
    %p31 = scmp.eq.s32.totalorder %s30, 0
    %s33 = sadd.s32 %s32, 1
    %s34 = scalar_select %p31, %s32, %s33
    %p37 = pneg %p31
    %p38 = scmp.eq.s32.totalorder %s22, 1
    %p39 = por %p37, %p38
    %p40 = scmp.ne.s32.totalorder %s32, %s35
    %p41 = scmp.eq.s32.totalorder %s22, 0
    %p42 = por %p40, %p41
    %p43 = scmp.ne.s32.totalorder %s32, %s35
    %p44 = scmp.eq.s32.totalorder %s27, 1
    %p45 = por %p43, %p44
    %p46 = scmp.ne.s32.totalorder %s35, %s36
    %p47 = scmp.eq.s32.totalorder %s27, 0
    %p48 = por %p46, %p47
    %p49 = scmp.ne.s32.totalorder %s35, %s36
    %p50 = scmp.eq.s32.totalorder %s28, 1
    %p51 = por %p49, %p50
    %p53 = scmp.ne.s32.totalorder %s36, %s52
    %p54 = scmp.eq.s32.totalorder %s28, 0
    %p55 = por %p53, %p54
    %s56 = ssub.s32 %s22, %s29
    %p57 = scmp.eq.s32.totalorder %s56, 0
    %s59 = sadd.s32 %s58, 1
    %s60 = scalar_select %p57, %s58, %s59
    %p63 = pneg %p57
    %p64 = scmp.eq.s32.totalorder %s22, 1
    %p65 = por %p63, %p64
    %p66 = scmp.ne.s32.totalorder %s58, %s61
    %p67 = scmp.eq.s32.totalorder %s22, 0
    %p68 = por %p66, %p67
    %p69 = scmp.ne.s32.totalorder %s58, %s61
    %p70 = scmp.eq.s32.totalorder %s27, 1
    %p71 = por %p69, %p70
    %p72 = scmp.ne.s32.totalorder %s61, %s62
    %p73 = scmp.eq.s32.totalorder %s27, 0
    %p74 = por %p72, %p73
    %p75 = scmp.ne.s32.totalorder %s61, %s62
    %p76 = scmp.eq.s32.totalorder %s28, 1
    %p77 = por %p75, %p76
    %p79 = scmp.ne.s32.totalorder %s62, %s78
    %p80 = scmp.eq.s32.totalorder %s28, 0
    %p81 = por %p79, %p80
    %s83 = sadd.s32 %s82, 1
    %p86 = scmp.eq.s32.totalorder %s22, 1
    %p87 = scmp.ne.s32.totalorder %s82, %s84
    %p88 = scmp.eq.s32.totalorder %s22, 0
    %p89 = por %p87, %p88
    %p90 = scmp.ne.s32.totalorder %s82, %s84
    %p91 = scmp.eq.s32.totalorder %s27, 1
    %p92 = por %p90, %p91
    %p93 = scmp.ne.s32.totalorder %s84, %s85
    %p94 = scmp.eq.s32.totalorder %s27, 0
    %p95 = por %p93, %p94
    %p96 = scmp.ne.s32.totalorder %s84, %s85
    %p97 = scmp.eq.s32.totalorder %s28, 1
    %p98 = por %p96, %p97
    %p100 = scmp.ne.s32.totalorder %s85, %s99
    %p101 = scmp.eq.s32.totalorder %s28, 0
    %p102 = por %p100, %p101
    %s104 = sadd.s32 %s103, 1
    %p107 = scmp.eq.s32.totalorder %s22, 1
    %p108 = scmp.ne.s32.totalorder %s103, %s105
    %p109 = scmp.eq.s32.totalorder %s22, 0
    %p110 = por %p108, %p109
    %p111 = scmp.ne.s32.totalorder %s103, %s105
    %p112 = scmp.eq.s32.totalorder %s27, 1
    %p113 = por %p111, %p112
    %p114 = scmp.ne.s32.totalorder %s105, %s106
    %p115 = scmp.eq.s32.totalorder %s27, 0
    %p116 = por %p114, %p115
    %p117 = scmp.ne.s32.totalorder %s105, %s106
    %p118 = scmp.eq.s32.totalorder %s28, 1
    %p119 = por %p117, %p118
    %p121 = scmp.ne.s32.totalorder %s106, %s120
    %p122 = scmp.eq.s32.totalorder %s28, 0
    %p123 = por %p121, %p122
    %s125 = sadd.s32 %s124, 1
    %p128 = scmp.eq.s32.totalorder %s22, 1
    %p129 = scmp.ne.s32.totalorder %s124, %s126
    %p130 = scmp.eq.s32.totalorder %s22, 0
    %p131 = por %p129, %p130
    %p132 = scmp.ne.s32.totalorder %s124, %s126
    %p133 = scmp.eq.s32.totalorder %s27, 1
    %p134 = por %p132, %p133
    %p135 = scmp.ne.s32.totalorder %s126, %s127
    %p136 = scmp.eq.s32.totalorder %s27, 0
    %p137 = por %p135, %p136
    %p138 = scmp.ne.s32.totalorder %s126, %s127
    %p139 = scmp.eq.s32.totalorder %s28, 1
    %p140 = por %p138, %p139
    %p142 = scmp.ne.s32.totalorder %s127, %s141
    %p143 = scmp.eq.s32.totalorder %s28, 0
    %p144 = por %p142, %p143
    %s146 = sadd.s32 %s145, 1
    %p149 = scmp.eq.s32.totalorder %s22, 1
    %p150 = scmp.ne.s32.totalorder %s145, %s147
    %p151 = scmp.eq.s32.totalorder %s22, 0
    %p152 = por %p150, %p151
    %p153 = scmp.ne.s32.totalorder %s145, %s147
    %p154 = scmp.eq.s32.totalorder %s27, 1
    %p155 = por %p153, %p154
    %p156 = scmp.ne.s32.totalorder %s147, %s148
    %p157 = scmp.eq.s32.totalorder %s27, 0
    %p158 = por %p156, %p157
    %p159 = scmp.ne.s32.totalorder %s147, %s148
    %p160 = scmp.eq.s32.totalorder %s28, 1
    %p161 = por %p159, %p160
    %p163 = scmp.ne.s32.totalorder %s148, %s162
    %p164 = scmp.eq.s32.totalorder %s28, 0
    %p165 = por %p163, %p164
    %s167 = sadd.s32 %s166, 1
    %p170 = scmp.eq.s32.totalorder %s22, 1
    %p171 = scmp.ne.s32.totalorder %s166, %s168
    %p172 = scmp.eq.s32.totalorder %s22, 0
    %p173 = por %p171, %p172
    %p174 = scmp.ne.s32.totalorder %s166, %s168
    %p175 = scmp.eq.s32.totalorder %s27, 1
    %p176 = por %p174, %p175
    %p177 = scmp.ne.s32.totalorder %s168, %s169
    %p178 = scmp.eq.s32.totalorder %s27, 0
    %p179 = por %p177, %p178
    %p180 = scmp.ne.s32.totalorder %s168, %s169
    %p181 = scmp.eq.s32.totalorder %s28, 1
    %p182 = por %p180, %p181
    %p184 = scmp.ne.s32.totalorder %s169, %s183
    %p185 = scmp.eq.s32.totalorder %s28, 0
    %p186 = por %p184, %p185
    %s188 = sadd.s32 %s187, 1
    %p191 = scmp.eq.s32.totalorder %s22, 1
    %p192 = scmp.ne.s32.totalorder %s187, %s189
    %p193 = scmp.eq.s32.totalorder %s22, 0
    %p194 = por %p192, %p193
    %p195 = scmp.ne.s32.totalorder %s187, %s189
    %p196 = scmp.eq.s32.totalorder %s27, 1
    %p197 = por %p195, %p196
    %p198 = scmp.ne.s32.totalorder %s189, %s190
    %p199 = scmp.eq.s32.totalorder %s27, 0
    %p200 = por %p198, %p199
    %p201 = scmp.ne.s32.totalorder %s189, %s190
    %p202 = scmp.eq.s32.totalorder %s28, 1
    %p203 = por %p201, %p202
    %p205 = scmp.ne.s32.totalorder %s190, %s204
    %p206 = scmp.eq.s32.totalorder %s28, 0
    %p207 = por %p205, %p206
    %s209 = sadd.s32 %s208, 1
    %p212 = scmp.eq.s32.totalorder %s22, 1
    %p213 = scmp.ne.s32.totalorder %s208, %s210
    %p214 = scmp.eq.s32.totalorder %s22, 0
    %p215 = por %p213, %p214
    %p216 = scmp.ne.s32.totalorder %s208, %s210
    %p217 = scmp.eq.s32.totalorder %s27, 1
    %p218 = por %p216, %p217
    %p219 = scmp.ne.s32.totalorder %s210, %s211
    %p220 = scmp.eq.s32.totalorder %s27, 0
    %p221 = por %p219, %p220
    %p222 = scmp.ne.s32.totalorder %s210, %s211
    %p223 = scmp.eq.s32.totalorder %s28, 1
    %p224 = por %p222, %p223
    %p226 = scmp.ne.s32.totalorder %s211, %s225
    %p227 = scmp.eq.s32.totalorder %s28, 0
    %p228 = por %p226, %p227
    %s230 = sadd.s32 %s229, 1
    %p233 = scmp.eq.s32.totalorder %s22, 1
    %p234 = scmp.ne.s32.totalorder %s229, %s231
    %p235 = scmp.eq.s32.totalorder %s22, 0
    %p236 = por %p234, %p235
    %p237 = scmp.ne.s32.totalorder %s229, %s231
    %p238 = scmp.eq.s32.totalorder %s27, 1
    %p239 = por %p237, %p238
    %p240 = scmp.ne.s32.totalorder %s231, %s232
    %p241 = scmp.eq.s32.totalorder %s27, 0
    %p242 = por %p240, %p241
    %p243 = scmp.ne.s32.totalorder %s231, %s232
    %p244 = scmp.eq.s32.totalorder %s28, 1
    %p245 = por %p243, %p244
    %p247 = scmp.ne.s32.totalorder %s232, %s246
    %p248 = scmp.eq.s32.totalorder %s28, 0
    %p249 = por %p247, %p248
    %s251 = sadd.s32 %s250, 1
    %p254 = scmp.eq.s32.totalorder %s22, 1
    %p255 = scmp.ne.s32.totalorder %s250, %s252
    %p256 = scmp.eq.s32.totalorder %s22, 0
    %p257 = por %p255, %p256
    %p258 = scmp.ne.s32.totalorder %s250, %s252
    %p259 = scmp.eq.s32.totalorder %s27, 1
    %p260 = por %p258, %p259
    %p261 = scmp.ne.s32.totalorder %s252, %s253
    %p262 = scmp.eq.s32.totalorder %s27, 0
    %p263 = por %p261, %p262
    %p264 = scmp.ne.s32.totalorder %s252, %s253
    %p265 = scmp.eq.s32.totalorder %s28, 1
    %p266 = por %p264, %p265
    %p268 = scmp.ne.s32.totalorder %s253, %s267
    %p269 = scmp.eq.s32.totalorder %s28, 0
    %p270 = por %p268, %p269
    %s272 = sadd.s32 %s271, 1
    %p275 = scmp.eq.s32.totalorder %s22, 1
    %p276 = scmp.ne.s32.totalorder %s271, %s273
    %p277 = scmp.eq.s32.totalorder %s22, 0
    %p278 = por %p276, %p277
    %p279 = scmp.ne.s32.totalorder %s271, %s273
    %p280 = scmp.eq.s32.totalorder %s27, 1
    %p281 = por %p279, %p280
    %p282 = scmp.ne.s32.totalorder %s273, %s274
    %p283 = scmp.eq.s32.totalorder %s27, 0
    %p284 = por %p282, %p283
    %p285 = scmp.ne.s32.totalorder %s273, %s274
    %p286 = scmp.eq.s32.totalorder %s28, 1
    %p287 = por %p285, %p286
    %p289 = scmp.ne.s32.totalorder %s274, %s288
    %p290 = scmp.eq.s32.totalorder %s28, 0
    %p291 = por %p289, %p290
    %s293 = sadd.s32 %s292, 1
    %p296 = scmp.eq.s32.totalorder %s22, 1
    %p297 = scmp.ne.s32.totalorder %s292, %s294
    %p298 = scmp.eq.s32.totalorder %s22, 0
    %p299 = por %p297, %p298
    %p300 = scmp.ne.s32.totalorder %s292, %s294
    %p301 = scmp.eq.s32.totalorder %s27, 1
    %p302 = por %p300, %p301
    %p303 = scmp.ne.s32.totalorder %s294, %s295
    %p304 = scmp.eq.s32.totalorder %s27, 0
    %p305 = por %p303, %p304
    %p306 = scmp.ne.s32.totalorder %s294, %s295
    %p307 = scmp.eq.s32.totalorder %s28, 1
    %p308 = por %p306, %p307
    %p310 = scmp.ne.s32.totalorder %s295, %s309
    %p311 = scmp.eq.s32.totalorder %s28, 0
    %p312 = por %p310, %p311
    %s314 = sadd.s32 %s313, 1
    %p317 = scmp.eq.s32.totalorder %s22, 1
    %p318 = scmp.ne.s32.totalorder %s313, %s315
    %p319 = scmp.eq.s32.totalorder %s22, 0
    %p320 = por %p318, %p319
    %p321 = scmp.ne.s32.totalorder %s313, %s315
    %p322 = scmp.eq.s32.totalorder %s27, 1
    %p323 = por %p321, %p322
    %p324 = scmp.ne.s32.totalorder %s315, %s316
    %p325 = scmp.eq.s32.totalorder %s27, 0
    %p326 = por %p324, %p325
    %p327 = scmp.ne.s32.totalorder %s315, %s316
    %p328 = scmp.eq.s32.totalorder %s28, 1
    %p329 = por %p327, %p328
    %p331 = scmp.ne.s32.totalorder %s316, %s330
    %p332 = scmp.eq.s32.totalorder %s28, 0
    %p333 = por %p331, %p332
    %s335 = sadd.s32 %s334, 1
    %p338 = scmp.eq.s32.totalorder %s22, 1
    %p339 = scmp.ne.s32.totalorder %s334, %s336
    %p340 = scmp.eq.s32.totalorder %s22, 0
    %p341 = por %p339, %p340
    %p342 = scmp.ne.s32.totalorder %s334, %s336
    %p343 = scmp.eq.s32.totalorder %s27, 1
    %p344 = por %p342, %p343
    %p345 = scmp.ne.s32.totalorder %s336, %s337
    %p346 = scmp.eq.s32.totalorder %s27, 0
    %p347 = por %p345, %p346
    %p348 = scmp.ne.s32.totalorder %s336, %s337
    %p349 = scmp.eq.s32.totalorder %s28, 1
    %p350 = por %p348, %p349
    %p352 = scmp.ne.s32.totalorder %s337, %s351
    %p353 = scmp.eq.s32.totalorder %s28, 0
    %p354 = por %p352, %p353
    %s356 = sadd.s32 %s355, 1
    %p359 = scmp.eq.s32.totalorder %s22, 1
    %p360 = scmp.ne.s32.totalorder %s355, %s357
    %p361 = scmp.eq.s32.totalorder %s22, 0
    %p362 = por %p360, %p361
    %p363 = scmp.ne.s32.totalorder %s355, %s357
    %p364 = scmp.eq.s32.totalorder %s27, 1
    %p365 = por %p363, %p364
    %p366 = scmp.ne.s32.totalorder %s357, %s358
    %p367 = scmp.eq.s32.totalorder %s27, 0
    %p368 = por %p366, %p367
    %p369 = scmp.ne.s32.totalorder %s357, %s358
    %p370 = scmp.eq.s32.totalorder %s28, 1
    %p371 = por %p369, %p370
    %p373 = scmp.ne.s32.totalorder %s358, %s372
    %p374 = scmp.eq.s32.totalorder %s28, 0
    %p375 = por %p373, %p374
    %s376 = ssub.s32 %s22, %s29
    %p377 = scmp.eq.s32.totalorder %s376, 0
    %s379 = sadd.s32 %s378, 1
    %s380 = scalar_select %p377, %s378, %s379
    %p383 = pneg %p377
    %p384 = scmp.eq.s32.totalorder %s22, 1
    %p385 = por %p383, %p384
    %p386 = scmp.ne.s32.totalorder %s378, %s381
    %p387 = scmp.eq.s32.totalorder %s22, 0
    %p388 = por %p386, %p387
    %p389 = scmp.ne.s32.totalorder %s378, %s381
    %p390 = scmp.eq.s32.totalorder %s27, 1
    %p391 = por %p389, %p390
    %p392 = scmp.ne.s32.totalorder %s381, %s382
    %p393 = scmp.eq.s32.totalorder %s27, 0
    %p394 = por %p392, %p393
    %p395 = scmp.ne.s32.totalorder %s381, %s382
    %p396 = scmp.eq.s32.totalorder %s28, 1
    %p397 = por %p395, %p396
    %p399 = scmp.ne.s32.totalorder %s382, %s398
    %p400 = scmp.eq.s32.totalorder %s28, 0
    %p401 = por %p399, %p400
    %p402 = scmp.le.s32.totalorder 1, %s22
    %p403 = scmp.lt.s32.totalorder %s22, 3
    %p404 = pnand %p402, %p403
    %p405 = pneg %p404
    // Predicated region
    $region9: #{perceiver_io_forward.9} parent=5 // pred_check
      _
    $region10: #{perceiver_io_forward.9} parent=5 // pred_check_branch
      %407 = sbr.rel (%p404) target = $region12
    $region11: #{perceiver_io_forward.9} parent=5 // pred_region
      %s408 = ssub.s32 %s22, 1
      // Predicated region
      $region13: #{perceiver_io_forward.9} parent=11 // pred_check
        %p409 = pneg %p95
      $region14: #{perceiver_io_forward.9} parent=11 // pred_check_branch
        %411 = sbr.rel (%p409) target = $region16
      $region15: #{perceiver_io_forward.9} parent=11 // pred_region
        _
      $region16: #{perceiver_io_forward.9} parent=11 // pred_fallthru
        _
      // Predicated region
      $region17: #{perceiver_io_forward.9} parent=11 // pred_check
        %p412 = pneg %p116
      $region18: #{perceiver_io_forward.9} parent=11 // pred_check_branch
        %414 = sbr.rel (%p412) target = $region20
      $region19: #{perceiver_io_forward.9} parent=11 // pred_region
        _
      $region20: #{perceiver_io_forward.9} parent=11 // pred_fallthru
        _
      // Predicated region
      $region21: #{perceiver_io_forward.9} parent=11 // pred_check
        %p415 = pneg %p137
      $region22: #{perceiver_io_forward.9} parent=11 // pred_check_branch
        %417 = sbr.rel (%p415) target = $region24
      $region23: #{perceiver_io_forward.9} parent=11 // pred_region
        _
      $region24: #{perceiver_io_forward.9} parent=11 // pred_fallthru
        _
      // Predicated region
      $region25: #{perceiver_io_forward.9} parent=11 // pred_check
        %p418 = pneg %p158
      $region26: #{perceiver_io_forward.9} parent=11 // pred_check_branch
        %420 = sbr.rel (%p418) target = $region28
      $region27: #{perceiver_io_forward.9} parent=11 // pred_region
        _
      $region28: #{perceiver_io_forward.9} parent=11 // pred_fallthru
        _
      // Predicated region
      $region29: #{perceiver_io_forward.9} parent=11 // pred_check
        %p421 = pneg %p179
      $region30: #{perceiver_io_forward.9} parent=11 // pred_check_branch
        %423 = sbr.rel (%p421) target = $region32
      $region31: #{perceiver_io_forward.9} parent=11 // pred_region
        _
      $region32: #{perceiver_io_forward.9} parent=11 // pred_fallthru
        _
      // Predicated region
      $region33: #{perceiver_io_forward.9} parent=11 // pred_check
        %p424 = pneg %p200
      $region34: #{perceiver_io_forward.9} parent=11 // pred_check_branch
        %426 = sbr.rel (%p424) target = $region36
      $region35: #{perceiver_io_forward.9} parent=11 // pred_region
        _
      $region36: #{perceiver_io_forward.9} parent=11 // pred_fallthru
        _
      // Predicated region
      $region37: #{perceiver_io_forward.9} parent=11 // pred_check
        %p427 = pneg %p221
      $region38: #{perceiver_io_forward.9} parent=11 // pred_check_branch
        %429 = sbr.rel (%p427) target = $region40
      $region39: #{perceiver_io_forward.9} parent=11 // pred_region
        _
      $region40: #{perceiver_io_forward.9} parent=11 // pred_fallthru
        _
      // Predicated region
      $region41: #{perceiver_io_forward.9} parent=11 // pred_check
        %p430 = pneg %p242
      $region42: #{perceiver_io_forward.9} parent=11 // pred_check_branch
        %432 = sbr.rel (%p430) target = $region44
      $region43: #{perceiver_io_forward.9} parent=11 // pred_region
        _
      $region44: #{perceiver_io_forward.9} parent=11 // pred_fallthru
        _
      // Predicated region
      $region45: #{perceiver_io_forward.9} parent=11 // pred_check
        %p433 = pneg %p263
      $region46: #{perceiver_io_forward.9} parent=11 // pred_check_branch
        %435 = sbr.rel (%p433) target = $region48
      $region47: #{perceiver_io_forward.9} parent=11 // pred_region
        _
      $region48: #{perceiver_io_forward.9} parent=11 // pred_fallthru
        _
      // Predicated region
      $region49: #{perceiver_io_forward.9} parent=11 // pred_check
        %p436 = pneg %p284
      $region50: #{perceiver_io_forward.9} parent=11 // pred_check_branch
        %438 = sbr.rel (%p436) target = $region52
      $region51: #{perceiver_io_forward.9} parent=11 // pred_region
        _
      $region52: #{perceiver_io_forward.9} parent=11 // pred_fallthru
        _
      // Predicated region
      $region53: #{perceiver_io_forward.9} parent=11 // pred_check
        %p439 = pneg %p305
      $region54: #{perceiver_io_forward.9} parent=11 // pred_check_branch
        %441 = sbr.rel (%p439) target = $region56
      $region55: #{perceiver_io_forward.9} parent=11 // pred_region
        _
      $region56: #{perceiver_io_forward.9} parent=11 // pred_fallthru
        _
      // Predicated region
      $region57: #{perceiver_io_forward.9} parent=11 // pred_check
        %p442 = pneg %p326
      $region58: #{perceiver_io_forward.9} parent=11 // pred_check_branch
        %444 = sbr.rel (%p442) target = $region60
      $region59: #{perceiver_io_forward.9} parent=11 // pred_region
        _
      $region60: #{perceiver_io_forward.9} parent=11 // pred_fallthru
        _
      // Predicated region
      $region61: #{perceiver_io_forward.9} parent=11 // pred_check
        %p445 = pneg %p347
      $region62: #{perceiver_io_forward.9} parent=11 // pred_check_branch
        %447 = sbr.rel (%p445) target = $region64
      $region63: #{perceiver_io_forward.9} parent=11 // pred_region
        _
      $region64: #{perceiver_io_forward.9} parent=11 // pred_fallthru
        _
      // Predicated region
      $region65: #{perceiver_io_forward.9} parent=11 // pred_check
        %p448 = pneg %p368
      $region66: #{perceiver_io_forward.9} parent=11 // pred_check_branch
        %450 = sbr.rel (%p448) target = $region68
      $region67: #{perceiver_io_forward.9} parent=11 // pred_region
        _
      $region68: #{perceiver_io_forward.9} parent=11 // pred_fallthru
        _
    $region12: #{perceiver_io_forward.9} parent=5 // pred_fallthru
      _
    %p451 = scmp.lt.s32.totalorder %s22, 2
    // Predicated region
    $region69: #{perceiver_io_forward.9} parent=5 // pred_check
      %p452 = pneg %p451
    $region70: #{perceiver_io_forward.9} parent=5 // pred_check_branch
      %454 = sbr.rel (%p452) target = $region72
    $region71: #{perceiver_io_forward.9} parent=5 // pred_region
      // Predicated region
      $region73: #{perceiver_io_forward.9} parent=71 // pred_check
        %p455 = pneg %p42
      $region74: #{perceiver_io_forward.9} parent=71 // pred_check_branch
        %457 = sbr.rel (%p455) target = $region76
      $region75: #{perceiver_io_forward.9} parent=71 // pred_region
        %p458 = scmp.lt.s32.totalorder %s22, 1
        %s459 = scalar_select %p458, %s22, 1
        %s460 = smul.addr %s459, 2
        %s461 = smul.addr %s460, 8
        %s462 = scalar_lea.vmem %s0, %s461
      $region76: #{perceiver_io_forward.9} parent=71 // pred_fallthru
        _
      // Predicated region
      $region77: #{perceiver_io_forward.9} parent=71 // pred_check
        %p463 = pneg %p68
      $region78: #{perceiver_io_forward.9} parent=71 // pred_check_branch
        %465 = sbr.rel (%p463) target = $region80
      $region79: #{perceiver_io_forward.9} parent=71 // pred_region
        %p466 = scmp.lt.s32.totalorder %s22, 1
        %s467 = scalar_select %p466, %s22, 1
        %s468 = smul.addr %s467, 11
        %s469 = smul.addr %s468, 8
        %s470 = scalar_lea.vmem %s1, %s469
      $region80: #{perceiver_io_forward.9} parent=71 // pred_fallthru
        _
    $region72: #{perceiver_io_forward.9} parent=5 // pred_fallthru
      _
    %p471 = scmp.le.s32.totalorder 1, %s22
    %p472 = scmp.lt.s32.totalorder %s22, 3
    %p473 = pnand %p471, %p472
    %p474 = pneg %p473
    // Predicated region
    $region81: #{perceiver_io_forward.9} parent=5 // pred_check
      _
    $region82: #{perceiver_io_forward.9} parent=5 // pred_check_branch
      %476 = sbr.rel (%p473) target = $region84
    $region83: #{perceiver_io_forward.9} parent=5 // pred_region
      %s477 = ssub.s32 %s22, 1
      %p478 = scmp.lt.s32.totalorder %s27, 1
      %s479 = scalar_select %p478, %s27, 1
      %s480 = smul.addr %s479, 2
      %s481 = smul.addr %s480, 8
      %s482 = scalar_lea.vmem %s0, %s481
      %p483 = pneg %p48
      %p484 = pneg %p45
      %p485 = scmp.lt.s32.totalorder %s27, 1
      %s486 = scalar_select %p485, %s27, 1
      %s487 = smul.addr %s486, 11
      %s488 = smul.addr %s487, 8
      %s489 = scalar_lea.vmem %s1, %s488
      %p490 = pneg %p74
      %p491 = pneg %p71
      %p492 = pneg %p95
      %p493 = pneg %p92
      %p494 = pneg %p116
      %p495 = pneg %p113
      %p496 = pneg %p137
      %p497 = pneg %p134
      %p498 = pneg %p158
      %p499 = pneg %p155
      %p500 = pneg %p179
      %p501 = pneg %p176
      %p502 = pneg %p200
      %p503 = pneg %p197
      %p504 = pneg %p221
      %p505 = pneg %p218
      %p506 = pneg %p242
      %p507 = pneg %p239
      %p508 = pneg %p263
      %p509 = pneg %p260
      %p510 = pneg %p284
      %p511 = pneg %p281
      %p512 = pneg %p305
      %p513 = pneg %p302
      %p514 = pneg %p326
      %p515 = pneg %p323
      %p516 = pneg %p347
      %p517 = pneg %p344
      %p518 = pneg %p368
      %p519 = pneg %p365
      %p520 = pneg %p394
      %p521 = pneg %p391
      %p522 = scmp.lt.s32.totalorder %s27, 1
      %s523 = scalar_select %p522, %s27, 1
      %s524 = smul.addr %s523, 2
      %s525 = smul.addr %s524, 8
      %s526 = scalar_lea.vmem %s16, %s525
      %p527 = scmp.lt.s32.totalorder %s27, 1
      %s528 = scalar_select %p527, %s27, 1
      %s529 = smul.addr %s528, 2
      %s530 = smul.addr %s529, 8
      %s531 = scalar_lea.vmem %s0, %s530
      %p532 = scmp.lt.s32.totalorder %s27, 1
      %s533 = scalar_select %p532, %s27, 1
      %s534 = smul.addr %s533, 11
      %s535 = smul.addr %s534, 8
      %s536 = scalar_lea.vmem %s1, %s535
      %p537 = scmp.lt.s32.totalorder %s27, 1
      %s538 = scalar_select %p537, %s27, 1
      %s539 = smul.addr %s538, 2
      %s540 = smul.addr %s539, 8
      %s541 = scalar_lea.vmem %s16, %s540
      %v543 = vld [vmem:[%s531] sm:$0xff]
      %v544 = vld [vmem:[%s531 + $0x8] sm:$0xff]
      %v545 = vld [vmem:[%s536] sm:$0xff]
      %v546 = vld [vmem:[%s536 + $0x8] sm:$0xff]
      %v547 = vld [vmem:[%s536 + $0x10] sm:$0xff]
      %v548 = vld [vmem:[%s536 + $0x18] sm:$0xff]
      %v549 = vld [vmem:[%s536 + $0x20] sm:$0xff]
      %v550 = vld [vmem:[%s536 + $0x28] sm:$0xff]
      %v551 = vld [vmem:[%s536 + $0x30] sm:$0xff]
      %v552 = vld [vmem:[%s536 + $0x38] sm:$0xff]
      %v553 = vld [vmem:[%s536 + $0x40] sm:$0xff]
      %v554 = vld [vmem:[%s536 + $0x48] sm:$0xff]
      %v555 = vld [vmem:[%s536 + $0x50] sm:$0x1f]
      %v556 = vld [vmem:[%s2] sm:$0x1]
      %v557 = vld [vmem:[%s3] sm:$0x1]
      %v558 = vld [vmem:[%s4] sm:$0x1]
      %v559 = vld [vmem:[%s5] sm:$0x1]
      %v560 = vld [vmem:[%s6] sm:$0xff]
      %v561 = vld [vmem:[%s6 + $0x8] sm:$0xff]
      %v562 = vld [vmem:[%s6 + $0x10] sm:$0xff]
      %v563 = vld [vmem:[%s6 + $0x18] sm:$0xff]
      %v564 = vld [vmem:[%s7] sm:$0xff]
      %v565 = vld [vmem:[%s7 + $0x8] sm:$0xff]
      %v566 = vld [vmem:[%s8] sm:$0xff]
      %v567 = vld [vmem:[%s8 + $0x8] sm:$0xff]
      %v568 = vld [vmem:[%s9] sm:$0x1]
      %vm569 = vcmask 261120
      %v570 = vsel %vm569, %v543, 0.0
      %571 = vadd.xlane.f32.xlu0 %v570
      %v572 = vpop.xlane.xlu0 %571
      %v573 = vsel %vm569, %v544, 0.0
      %574 = vadd.xlane.f32.xlu0 %v573
      %v575 = vpop.xlane.xlu0 %574
      %v576 = vrcp.pop 32.0
      %v577 = vmul.f32 32.0, %v576
      %v578 = vsub.f32 1.0, %v577
      %v579 = vmul.f32 %v576, %v578
      %v580 = vadd.f32 %v576, %v579
      %vm581 = vweird.f32 %v576
      %v582 = vsel %vm581, %v576, %v580
      %v583 = vmul.f32 %v572, %v582
      %v584 = vmul.f32 %v575, %v582
      %v585 = vsub.f32 %v543, %v583
      %v586 = vsub.f32 %v544, %v584
      %v587 = vmul.f32 %v585, %v585
      %v588 = vmul.f32 %v586, %v586
      %v589 = vsel %vm569, %v587, 0.0
      %590 = vadd.xlane.f32.xlu0 %v589
      %v591 = vpop.xlane.xlu0 %590
      %v592 = vsel %vm569, %v588, 0.0
      %593 = vadd.xlane.f32.xlu0 %v592
      %v594 = vpop.xlane.xlu0 %593
      %v595 = vmul.f32 %v591, %v582
      %v596 = vmul.f32 %v594, %v582
      %v597 = vadd.f32 %v595, 1e-05
      %v598 = vadd.f32 %v596, 1e-05
      %v599 = vrsqrt.pop %v597
      %v600 = vmul.f32 %v599, %v597
      %v601 = vmul.f32 %v600, %v599
      %v602 = vmul.f32 0.5, %v601
      %v603 = vsub.f32 1.5, %v602
      %v604 = vmul.f32 %v599, %v603
      %vm605 = vweird.f32 %v597
      %vm606 = vweird.f32 %v599
      %vm607 = vmor %vm605, %vm606
      %v608 = vsel %vm607, %v599, %v604
      %v609 = vrsqrt.pop %v598
      %v610 = vmul.f32 %v609, %v598
      %v611 = vmul.f32 %v610, %v609
      %v612 = vmul.f32 0.5, %v611
      %v613 = vsub.f32 1.5, %v612
      %v614 = vmul.f32 %v609, %v613
      %vm615 = vweird.f32 %v598
      %vm616 = vweird.f32 %v609
      %vm617 = vmor %vm615, %vm616
      %v618 = vsel %vm617, %v609, %v614
      %v619 = vmul.f32 %v585, %v608
      %v620 = vmul.f32 %v586, %v618
      %v622 = vperm.slane %v556, 0
      %v624 = vmul.f32 %v619, %v622
      %v625 = vmul.f32 %v620, %v622
      %v627 = vperm.slane %v557, 0
      %v629 = vadd.f32 %v624, %v627
      %v630 = vadd.f32 %v625, %v627
      %vm631 = vcmask 130048
      %v632 = vsel %vm631, %v545, 0.0
      %633 = vadd.xlane.f32.xlu0 %v632
      %v634 = vpop.xlane.xlu0 %633
      %v635 = vsel %vm631, %v546, 0.0
      %636 = vadd.xlane.f32.xlu0 %v635
      %v637 = vpop.xlane.xlu0 %636
      %v638 = vsel %vm631, %v547, 0.0
      %639 = vadd.xlane.f32.xlu0 %v638
      %v640 = vpop.xlane.xlu0 %639
      %v641 = vsel %vm631, %v548, 0.0
      %642 = vadd.xlane.f32.xlu0 %v641
      %v643 = vpop.xlane.xlu0 %642
      %v644 = vsel %vm631, %v549, 0.0
      %645 = vadd.xlane.f32.xlu0 %v644
      %v646 = vpop.xlane.xlu0 %645
      %v647 = vsel %vm631, %v550, 0.0
      %648 = vadd.xlane.f32.xlu0 %v647
      %v649 = vpop.xlane.xlu0 %648
      %v650 = vsel %vm631, %v551, 0.0
      %651 = vadd.xlane.f32.xlu0 %v650
      %v652 = vpop.xlane.xlu0 %651
      %v653 = vsel %vm631, %v552, 0.0
      %654 = vadd.xlane.f32.xlu0 %v653
      %v655 = vpop.xlane.xlu0 %654
      %v656 = vsel %vm631, %v553, 0.0
      %657 = vadd.xlane.f32.xlu0 %v656
      %v658 = vpop.xlane.xlu0 %657
      %v659 = vsel %vm631, %v554, 0.0
      %660 = vadd.xlane.f32.xlu0 %v659
      %v661 = vpop.xlane.xlu0 %660
      %vm662 = vcmask 126976
      %v663 = vsel %vm662, %v555, 0.0
      %664 = vadd.xlane.f32.xlu0 %v663
      %v665 = vpop.xlane.xlu0 %664
      %v666 = vrcp.pop 16.0
      %v667 = vmul.f32 16.0, %v666
      %v668 = vsub.f32 1.0, %v667
      %v669 = vmul.f32 %v666, %v668
      %v670 = vadd.f32 %v666, %v669
      %vm671 = vweird.f32 %v666
      %v672 = vsel %vm671, %v666, %v670
      %v673 = vmul.f32 %v634, %v672
      %v674 = vmul.f32 %v637, %v672
      %v675 = vmul.f32 %v640, %v672
      %v676 = vmul.f32 %v643, %v672
      %v677 = vmul.f32 %v646, %v672
      %v678 = vmul.f32 %v649, %v672
      %v679 = vmul.f32 %v652, %v672
      %v680 = vmul.f32 %v655, %v672
      %v681 = vmul.f32 %v658, %v672
      %v682 = vmul.f32 %v661, %v672
      %v683 = vmul.f32 %v665, %v672
      %v684 = vsub.f32 %v545, %v673
      %v685 = vsub.f32 %v546, %v674
      %v686 = vsub.f32 %v547, %v675
      %v687 = vsub.f32 %v548, %v676
      %v688 = vsub.f32 %v549, %v677
      %v689 = vsub.f32 %v550, %v678
      %v690 = vsub.f32 %v551, %v679
      %v691 = vsub.f32 %v552, %v680
      %v692 = vsub.f32 %v553, %v681
      %v693 = vsub.f32 %v554, %v682
      %v694 = vsub.f32 %v555, %v683
      %v695 = vmul.f32 %v684, %v684
      %v696 = vmul.f32 %v685, %v685
      %v697 = vmul.f32 %v686, %v686
      %v698 = vmul.f32 %v687, %v687
      %v699 = vmul.f32 %v688, %v688
      %v700 = vmul.f32 %v689, %v689
      %v701 = vmul.f32 %v690, %v690
      %v702 = vmul.f32 %v691, %v691
      %v703 = vmul.f32 %v692, %v692
      %v704 = vmul.f32 %v693, %v693
      %v705 = vmul.f32 %v694, %v694
      %v706 = vsel %vm631, %v695, 0.0
      %707 = vadd.xlane.f32.xlu0 %v706
      %v708 = vpop.xlane.xlu0 %707
      %v709 = vsel %vm631, %v696, 0.0
      %710 = vadd.xlane.f32.xlu0 %v709
      %v711 = vpop.xlane.xlu0 %710
      %v712 = vsel %vm631, %v697, 0.0
      %713 = vadd.xlane.f32.xlu0 %v712
      %v714 = vpop.xlane.xlu0 %713
      %v715 = vsel %vm631, %v698, 0.0
      %716 = vadd.xlane.f32.xlu0 %v715
      %v717 = vpop.xlane.xlu0 %716
      %v718 = vsel %vm631, %v699, 0.0
      %719 = vadd.xlane.f32.xlu0 %v718
      %v720 = vpop.xlane.xlu0 %719
      %v721 = vsel %vm631, %v700, 0.0
      %722 = vadd.xlane.f32.xlu0 %v721
      %v723 = vpop.xlane.xlu0 %722
      %v724 = vsel %vm631, %v701, 0.0
      %725 = vadd.xlane.f32.xlu0 %v724
      %v726 = vpop.xlane.xlu0 %725
      %v727 = vsel %vm631, %v702, 0.0
      %728 = vadd.xlane.f32.xlu0 %v727
      %v729 = vpop.xlane.xlu0 %728
      %v730 = vsel %vm631, %v703, 0.0
      %731 = vadd.xlane.f32.xlu0 %v730
      %v732 = vpop.xlane.xlu0 %731
      %v733 = vsel %vm631, %v704, 0.0
      %734 = vadd.xlane.f32.xlu0 %v733
      %v735 = vpop.xlane.xlu0 %734
      %v736 = vsel %vm662, %v705, 0.0
      %737 = vadd.xlane.f32.xlu0 %v736
      %v738 = vpop.xlane.xlu0 %737
      %v739 = vmul.f32 %v708, %v672
      %v740 = vmul.f32 %v711, %v672
      %v741 = vmul.f32 %v714, %v672
      %v742 = vmul.f32 %v717, %v672
      %v743 = vmul.f32 %v720, %v672
      %v744 = vmul.f32 %v723, %v672
      %v745 = vmul.f32 %v726, %v672
      %v746 = vmul.f32 %v729, %v672
      %v747 = vmul.f32 %v732, %v672
      %v748 = vmul.f32 %v735, %v672
      %v749 = vmul.f32 %v738, %v672
      %v750 = vadd.f32 %v739, 1e-05
      %v751 = vadd.f32 %v740, 1e-05
      %v752 = vadd.f32 %v741, 1e-05
      %v753 = vadd.f32 %v742, 1e-05
      %v754 = vadd.f32 %v743, 1e-05
      %v755 = vadd.f32 %v744, 1e-05
      %v756 = vadd.f32 %v745, 1e-05
      %v757 = vadd.f32 %v746, 1e-05
      %v758 = vadd.f32 %v747, 1e-05
      %v759 = vadd.f32 %v748, 1e-05
      %v760 = vadd.f32 %v749, 1e-05
      %v761 = vrsqrt.pop %v750
      %v762 = vmul.f32 %v761, %v750
      %v763 = vmul.f32 %v762, %v761
      %v764 = vmul.f32 0.5, %v763
      %v765 = vsub.f32 1.5, %v764
      %v766 = vmul.f32 %v761, %v765
      %vm767 = vweird.f32 %v750
      %vm768 = vweird.f32 %v761
      %vm769 = vmor %vm767, %vm768
      %v770 = vsel %vm769, %v761, %v766
      %v771 = vrsqrt.pop %v751
      %v772 = vmul.f32 %v771, %v751
      %v773 = vmul.f32 %v772, %v771
      %v774 = vmul.f32 0.5, %v773
      %v775 = vsub.f32 1.5, %v774
      %v776 = vmul.f32 %v771, %v775
      %vm777 = vweird.f32 %v751
      %vm778 = vweird.f32 %v771
      %vm779 = vmor %vm777, %vm778
      %v780 = vsel %vm779, %v771, %v776
      %v781 = vrsqrt.pop %v752
      %v782 = vmul.f32 %v781, %v752
      %v783 = vmul.f32 %v782, %v781
      %v784 = vmul.f32 0.5, %v783
      %v785 = vsub.f32 1.5, %v784
      %v786 = vmul.f32 %v781, %v785
      %vm787 = vweird.f32 %v752
      %vm788 = vweird.f32 %v781
      %vm789 = vmor %vm787, %vm788
      %v790 = vsel %vm789, %v781, %v786
      %v791 = vrsqrt.pop %v753
      %v792 = vmul.f32 %v791, %v753
      %v793 = vmul.f32 %v792, %v791
      %v794 = vmul.f32 0.5, %v793
      %v795 = vsub.f32 1.5, %v794
      %v796 = vmul.f32 %v791, %v795
      %vm797 = vweird.f32 %v753
      %vm798 = vweird.f32 %v791
      %vm799 = vmor %vm797, %vm798
      %v800 = vsel %vm799, %v791, %v796
      %v801 = vrsqrt.pop %v754
      %v802 = vmul.f32 %v801, %v754
      %v803 = vmul.f32 %v802, %v801
      %v804 = vmul.f32 0.5, %v803
      %v805 = vsub.f32 1.5, %v804
      %v806 = vmul.f32 %v801, %v805
      %vm807 = vweird.f32 %v754
      %vm808 = vweird.f32 %v801
      %vm809 = vmor %vm807, %vm808
      %v810 = vsel %vm809, %v801, %v806
      %v811 = vrsqrt.pop %v755
      %v812 = vmul.f32 %v811, %v755
      %v813 = vmul.f32 %v812, %v811
      %v814 = vmul.f32 0.5, %v813
      %v815 = vsub.f32 1.5, %v814
      %v816 = vmul.f32 %v811, %v815
      %vm817 = vweird.f32 %v755
      %vm818 = vweird.f32 %v811
      %vm819 = vmor %vm817, %vm818
      %v820 = vsel %vm819, %v811, %v816
      %v821 = vrsqrt.pop %v756
      %v822 = vmul.f32 %v821, %v756
      %v823 = vmul.f32 %v822, %v821
      %v824 = vmul.f32 0.5, %v823
      %v825 = vsub.f32 1.5, %v824
      %v826 = vmul.f32 %v821, %v825
      %vm827 = vweird.f32 %v756
      %vm828 = vweird.f32 %v821
      %vm829 = vmor %vm827, %vm828
      %v830 = vsel %vm829, %v821, %v826
      %v831 = vrsqrt.pop %v757
      %v832 = vmul.f32 %v831, %v757
      %v833 = vmul.f32 %v832, %v831
      %v834 = vmul.f32 0.5, %v833
      %v835 = vsub.f32 1.5, %v834
      %v836 = vmul.f32 %v831, %v835
      %vm837 = vweird.f32 %v757
      %vm838 = vweird.f32 %v831
      %vm839 = vmor %vm837, %vm838
      %v840 = vsel %vm839, %v831, %v836
      %v841 = vrsqrt.pop %v758
      %v842 = vmul.f32 %v841, %v758
      %v843 = vmul.f32 %v842, %v841
      %v844 = vmul.f32 0.5, %v843
      %v845 = vsub.f32 1.5, %v844
      %v846 = vmul.f32 %v841, %v845
      %vm847 = vweird.f32 %v758
      %vm848 = vweird.f32 %v841
      %vm849 = vmor %vm847, %vm848
      %v850 = vsel %vm849, %v841, %v846
      %v851 = vrsqrt.pop %v759
      %v852 = vmul.f32 %v851, %v759
      %v853 = vmul.f32 %v852, %v851
      %v854 = vmul.f32 0.5, %v853
      %v855 = vsub.f32 1.5, %v854
      %v856 = vmul.f32 %v851, %v855
      %vm857 = vweird.f32 %v759
      %vm858 = vweird.f32 %v851
      %vm859 = vmor %vm857, %vm858
      %v860 = vsel %vm859, %v851, %v856
      %v861 = vrsqrt.pop %v760
      %v862 = vmul.f32 %v861, %v760
      %v863 = vmul.f32 %v862, %v861
      %v864 = vmul.f32 0.5, %v863
      %v865 = vsub.f32 1.5, %v864
      %v866 = vmul.f32 %v861, %v865
      %vm867 = vweird.f32 %v760
      %vm868 = vweird.f32 %v861
      %vm869 = vmor %vm867, %vm868
      %v870 = vsel %vm869, %v861, %v866
      %v871 = vmul.f32 %v684, %v770
      %v872 = vmul.f32 %v685, %v780
      %v873 = vmul.f32 %v686, %v790
      %v874 = vmul.f32 %v687, %v800
      %v875 = vmul.f32 %v688, %v810
      %v876 = vmul.f32 %v689, %v820
      %v877 = vmul.f32 %v690, %v830
      %v878 = vmul.f32 %v691, %v840
      %v879 = vmul.f32 %v692, %v850
      %v880 = vmul.f32 %v693, %v860
      %v881 = vmul.f32 %v694, %v870
      %v883 = vperm.slane %v558, 0
      %v885 = vmul.f32 %v871, %v883
      %v886 = vmul.f32 %v872, %v883
      %v887 = vmul.f32 %v873, %v883
      %v888 = vmul.f32 %v874, %v883
      %v889 = vmul.f32 %v875, %v883
      %v890 = vmul.f32 %v876, %v883
      %v891 = vmul.f32 %v877, %v883
      %v892 = vmul.f32 %v878, %v883
      %v893 = vmul.f32 %v879, %v883
      %v894 = vmul.f32 %v880, %v883
      %v895 = vmul.f32 %v881, %v883
      %v897 = vperm.slane %v559, 0
      %v899 = vadd.f32 %v885, %v897
      %v900 = vadd.f32 %v886, %v897
      %v901 = vadd.f32 %v887, %v897
      %v902 = vadd.f32 %v888, %v897
      %v903 = vadd.f32 %v889, %v897
      %v904 = vadd.f32 %v890, %v897
      %v905 = vadd.f32 %v891, %v897
      %v906 = vadd.f32 %v892, %v897
      %v907 = vadd.f32 %v893, %v897
      %v908 = vadd.f32 %v894, %v897
      %v909 = vadd.f32 %v895, %v897
      %v910 = vpack.c.bf16 %v630, %v629
      %v911 = vpack.c.bf16 %v561, %v560
      %v912 = vpack.c.bf16 %v563, %v562
      %v914 = vsel %vm569, %v910, 0
      %916 = vmatpush.bf16.msra.mxu0 0
      %917 = vmatpush.bf16.msra.mxu0 0
      %918 = vmatpush.bf16.msra.mxu0 0
      %919 = vmatpush.bf16.msra.mxu0 0
      %920 = vmatpush.bf16.msra.mxu0 0
      %921 = vmatpush.bf16.msra.mxu0 0
      %922 = vmatpush.bf16.msra.mxu0 %v912
      %923 = vmatpush.bf16.msra.mxu0 %v911
      %924 = vmatmul.bf16.gmra.mxu0 %v914
      %v925 = vpop.f32.mrf.mxu0
      %v926 = vadd.f32 0.0, %v925
      %v927 = vpop.f32.mrf.mxu0
      %v928 = vadd.f32 0.0, %v927
      %929 = vdwg.mxu0
      %v930 = vpack.c.bf16 %v900, %v899
      %v931 = vpack.c.bf16 %v902, %v901
      %v932 = vpack.c.bf16 %v904, %v903
      %v933 = vpack.c.bf16 %v906, %v905
      %v934 = vpack.c.bf16 %v908, %v907
      %v935 = vpack.c.bf16 %v909, %v909
      %v936 = vpack.c.bf16 %v565, %v564
      %v938 = vsel %vm631, %v930, 0
      %v941 = vsel %vm631, %v931, 0
      %v944 = vsel %vm631, %v932, 0
      %v947 = vsel %vm631, %v933, 0
      %v950 = vsel %vm631, %v934, 0
      %v953 = vsel %vm631, %v935, 0
      %955 = vmatpush.bf16.msra.mxu0 0
      %956 = vmatpush.bf16.msra.mxu0 0
      %957 = vmatpush.bf16.msra.mxu0 0
      %958 = vmatpush.bf16.msra.mxu0 0
      %959 = vmatpush.bf16.msra.mxu0 0
      %960 = vmatpush.bf16.msra.mxu0 0
      %961 = vmatpush.bf16.msra.mxu0 0
      %962 = vmatpush.bf16.msra.mxu0 %v936
      %963 = vmatmul.bf16.gmra.mxu0 %v938
      %v964 = vpop.f32.mrf.mxu0
      %v965 = vadd.f32 0.0, %v964
      %v966 = vpop.f32.mrf.mxu0
      %v967 = vadd.f32 0.0, %v966
      %968 = vmatmul.bf16.gmra.mxu0 %v941
      %v969 = vpop.f32.mrf.mxu0
      %v970 = vadd.f32 0.0, %v969
      %v971 = vpop.f32.mrf.mxu0
      %v972 = vadd.f32 0.0, %v971
      %973 = vmatmul.bf16.gmra.mxu0 %v944
      %v974 = vpop.f32.mrf.mxu0
      %v975 = vadd.f32 0.0, %v974
      %v976 = vpop.f32.mrf.mxu0
      %v977 = vadd.f32 0.0, %v976
      %978 = vmatmul.bf16.gmra.mxu0 %v947
      %v979 = vpop.f32.mrf.mxu0
      %v980 = vadd.f32 0.0, %v979
      %v981 = vpop.f32.mrf.mxu0
      %v982 = vadd.f32 0.0, %v981
      %983 = vmatmul.bf16.gmra.mxu0 %v950
      %v984 = vpop.f32.mrf.mxu0
      %v985 = vadd.f32 0.0, %v984
      %v986 = vpop.f32.mrf.mxu0
      %v987 = vadd.f32 0.0, %v986
      %988 = vmatmul.bf16.gmra.mxu0 %v953
      %v989 = vpop.f32.mrf.mxu0
      %v990 = vadd.f32 0.0, %v989
      %v991 = vpop.f32.mrf.mxu0
      %992 = vdwg.mxu0
      %v994 = vsel %vm631, %v926, 0
      %v997 = vsel %vm631, %v928, 0
      %v1000 = vsel %vm631, %v965, 0
      %v1003 = vsel %vm631, %v967, 0
      %v1006 = vsel %vm631, %v970, 0
      %v1009 = vsel %vm631, %v972, 0
      %v1012 = vsel %vm631, %v975, 0
      %v1015 = vsel %vm631, %v977, 0
      %v1018 = vsel %vm631, %v980, 0
      %v1021 = vsel %vm631, %v982, 0
      %v1024 = vsel %vm631, %v985, 0
      %v1027 = vsel %vm631, %v987, 0
      %v1030 = vsel %vm631, %v990, 0
      %1032 = vmatpush.xpose.msra.mxu0 0.0
      %1033 = vmatpush.xpose.msra.mxu0 0.0
      %1034 = vmatpush.xpose.msra.mxu0 0.0
      %1035 = vmatpush.xpose.msra.mxu0 0.0
      %1036 = vmatpush.xpose.msra.mxu0 0.0
      %1037 = vmatpush.xpose.msra.mxu0 %v1030
      %1038 = vmatpush.xpose.msra.mxu0 %v1027
      %1039 = vmatpush.xpose.msra.mxu0 %v1024
      %1040 = vmatpush.xpose.msra.mxu0 %v1021
      %1041 = vmatpush.xpose.msra.mxu0 %v1018
      %1042 = vmatpush.xpose.msra.mxu0 %v1015
      %1043 = vmatpush.xpose.msra.mxu0 %v1012
      %1044 = vmatpush.xpose.msra.mxu0 %v1009
      %1045 = vmatpush.xpose.msra.mxu0 %v1006
      %1046 = vmatpush.xpose.msra.mxu0 %v1003
      %1047 = vmatpush.xpose.msra.mxu0 %v1000
      %1048 = vmatmul.f32.gmra.mxu0 %v994
      %v1049 = vpop.f32.mrf.mxu0
      %v1050 = vadd.f32 0.0, %v1049
      %1051 = vmatmul.f32.gmra.mxu0 %v997
      %v1052 = vpop.f32.mrf.mxu0
      %v1053 = vadd.f32 0.0, %v1052
      %1054 = vdwg.mxu0
      %v1055 = vmul.f32 %v1050, 0.25
      %v1056 = vmul.f32 %v1053, 0.25
      %vm1057 = vcmask 695296
      %v1058 = vsel %vm1057, %v1055, -inf
      %1059 = vmax.xlane.f32.xlu0 %v1058
      %v1060 = vpop.xlane.xlu0 %1059
      %v1061 = vsel %vm1057, %v1056, -inf
      %1062 = vmax.xlane.f32.xlu0 %v1061
      %v1063 = vpop.xlane.xlu0 %1062
      %v1064 = vsub.f32 %v1055, %v1060
      %v1065 = vsub.f32 %v1056, %v1063
      %v1066 = vmul.f32 %v1064, 1.442695
      %v1067 = vpow.pop %v1066
      %v1068 = vmul.f32 %v1065, 1.442695
      %v1069 = vpow.pop %v1068
      %v1070 = vsel %vm1057, %v1067, 0.0
      %1071 = vadd.xlane.f32.xlu0 %v1070
      %v1072 = vpop.xlane.xlu0 %1071
      %v1073 = vsel %vm1057, %v1069, 0.0
      %1074 = vadd.xlane.f32.xlu0 %v1073
      %v1075 = vpop.xlane.xlu0 %1074
      %v1076 = vrcp.pop %v1072
      %v1077 = vrcp.pop %v1075
      %v1078 = vmul.f32 %v1067, %v1076
      %v1079 = vmul.f32 %v1069, %v1077
      %1080 = vrot.lane.b32.xlu0 %v965, 112
      %v1081 = vpop.permute.xlu0 %1080
      %1082 = vrot.lane.b32.xlu0 %v967, 112
      %v1083 = vpop.permute.xlu0 %1082
      %1084 = vrot.lane.b32.xlu0 %v970, 112
      %v1085 = vpop.permute.xlu0 %1084
      %1086 = vrot.lane.b32.xlu0 %v972, 112
      %v1087 = vpop.permute.xlu0 %1086
      %1088 = vrot.lane.b32.xlu0 %v975, 112
      %v1089 = vpop.permute.xlu0 %1088
      %1090 = vrot.lane.b32.xlu0 %v977, 112
      %v1091 = vpop.permute.xlu0 %1090
      %1092 = vrot.lane.b32.xlu0 %v980, 112
      %v1093 = vpop.permute.xlu0 %1092
      %1094 = vrot.lane.b32.xlu0 %v982, 112
      %v1095 = vpop.permute.xlu0 %1094
      %1096 = vrot.lane.b32.xlu0 %v985, 112
      %v1097 = vpop.permute.xlu0 %1096
      %1098 = vrot.lane.b32.xlu0 %v987, 112
      %v1099 = vpop.permute.xlu0 %1098
      %1100 = vrot.lane.b32.xlu0 %v990, 112
      %v1101 = vpop.permute.xlu0 %1100
      %v1113 = vsel %vm1057, %v1078, 0
      %v1116 = vsel %vm1057, %v1079, 0
      %vm1118 = vcmask 1044480
      %v1119 = vsel %vm1118, %v1101, 0
      %1121 = vmatpush.msra.mxu0 0.0
      %1122 = vmatpush.msra.mxu0 0.0
      %1123 = vmatpush.msra.mxu0 0.0
      %1124 = vmatpush.msra.mxu0 0.0
      %1125 = vmatpush.msra.mxu0 0.0
      %1126 = vmatpush.msra.mxu0 %v1119
      %1127 = vmatpush.msra.mxu0 %v1099
      %1128 = vmatpush.msra.mxu0 %v1097
      %1129 = vmatpush.msra.mxu0 %v1095
      %1130 = vmatpush.msra.mxu0 %v1093
      %1131 = vmatpush.msra.mxu0 %v1091
      %1132 = vmatpush.msra.mxu0 %v1089
      %1133 = vmatpush.msra.mxu0 %v1087
      %1134 = vmatpush.msra.mxu0 %v1085
      %1135 = vmatpush.msra.mxu0 %v1083
      %1136 = vmatpush.msra.mxu0 %v1081
      %1137 = vmatmul.f32.gmra.mxu0 %v1113
      %v1138 = vpop.f32.mrf.mxu0
      %v1139 = vadd.f32 0.0, %v1138
      %1140 = vmatmul.f32.gmra.mxu0 %v1116
      %v1141 = vpop.f32.mrf.mxu0
      %v1142 = vadd.f32 0.0, %v1141
      %1143 = vdwg.mxu0
      %v1144 = vpack.c.bf16 %v1142, %v1139
      %v1145 = vpack.c.bf16 %v567, %v566
      %v1147 = vperm.slane %v568, 0
      %v1150 = vsel %vm631, %v1144, 0
      %1152 = vmatpush.bf16.msra.mxu0 0
      %1153 = vmatpush.bf16.msra.mxu0 0
      %1154 = vmatpush.bf16.msra.mxu0 0
      %1155 = vmatpush.bf16.msra.mxu0 0
      %1156 = vmatpush.bf16.msra.mxu0 0
      %1157 = vmatpush.bf16.msra.mxu0 0
      %1158 = vmatpush.bf16.msra.mxu0 0
      %1159 = vmatpush.bf16.msra.mxu0 %v1145
      %1160 = vmatmul.bf16.gmra.mxu0 %v1150
      %v1161 = vpop.f32.mrf.mxu0
      %v1162 = vadd.f32 %v1147, %v1161
      %v1163 = vpop.f32.mrf.mxu0
      %v1164 = vadd.f32 %v1147, %v1163
      %1165 = vdwg.mxu0
      %v1166 = vadd.f32 %v1162, %v543
      %v1167 = vadd.f32 %v1164, %v544
      %v1168 = vld [vmem:[%s10] sm:$0x1]
      %v1169 = vld [vmem:[%s11] sm:$0x1]
      %v1170 = vld [vmem:[%s12] sm:$0xff]
      %v1171 = vld [vmem:[%s12 + $0x8] sm:$0xff]
      %v1172 = vld [vmem:[%s12 + $0x10] sm:$0xff]
      %v1173 = vld [vmem:[%s12 + $0x18] sm:$0xff]
      %v1174 = vld [vmem:[%s12 + $0x20] sm:$0xff]
      %v1175 = vld [vmem:[%s12 + $0x28] sm:$0xff]
      %v1176 = vld [vmem:[%s12 + $0x30] sm:$0xff]
      %v1177 = vld [vmem:[%s12 + $0x38] sm:$0xff]
      %v1178 = vld [vmem:[%s13] sm:$0x3]
      %v1179 = vld [vmem:[%s14] sm:$0xff]
      %v1180 = vld [vmem:[%s14 + $0x8] sm:$0xff]
      %v1181 = vld [vmem:[%s14 + $0x10] sm:$0xff]
      %v1182 = vld [vmem:[%s14 + $0x18] sm:$0xff]
      %v1183 = vld [vmem:[%s14 + $0x20] sm:$0xff]
      %v1184 = vld [vmem:[%s14 + $0x28] sm:$0xff]
      %v1185 = vld [vmem:[%s14 + $0x30] sm:$0xff]
      %v1186 = vld [vmem:[%s14 + $0x38] sm:$0xff]
      %v1187 = vld [vmem:[%s14 + $0x40] sm:$0xff]
      %v1188 = vld [vmem:[%s14 + $0x48] sm:$0xff]
      %v1189 = vld [vmem:[%s14 + $0x50] sm:$0xff]
      %v1190 = vld [vmem:[%s14 + $0x58] sm:$0xff]
      %v1191 = vld [vmem:[%s14 + $0x60] sm:$0xff]
      %v1192 = vld [vmem:[%s14 + $0x68] sm:$0xff]
      %v1193 = vld [vmem:[%s14 + $0x70] sm:$0xff]
      %v1194 = vld [vmem:[%s14 + $0x78] sm:$0xff]
      %v1195 = vld [vmem:[%s15] sm:$0x1]
      %v1196 = vsel %vm569, %v1166, 0.0
      %1197 = vadd.xlane.f32.xlu0 %v1196
      %v1198 = vpop.xlane.xlu0 %1197
      %v1199 = vsel %vm569, %v1167, 0.0
      %1200 = vadd.xlane.f32.xlu0 %v1199
      %v1201 = vpop.xlane.xlu0 %1200
      %v1202 = vmul.f32 %v1198, %v582
      %v1203 = vmul.f32 %v1201, %v582
      %v1204 = vsub.f32 %v1166, %v1202
      %v1205 = vsub.f32 %v1167, %v1203
      %v1206 = vmul.f32 %v1204, %v1204
      %v1207 = vmul.f32 %v1205, %v1205
      %v1208 = vsel %vm569, %v1206, 0.0
      %1209 = vadd.xlane.f32.xlu0 %v1208
      %v1210 = vpop.xlane.xlu0 %1209
      %v1211 = vsel %vm569, %v1207, 0.0
      %1212 = vadd.xlane.f32.xlu0 %v1211
      %v1213 = vpop.xlane.xlu0 %1212
      %v1214 = vmul.f32 %v1210, %v582
      %v1215 = vmul.f32 %v1213, %v582
      %v1216 = vadd.f32 %v1214, 1e-05
      %v1217 = vadd.f32 %v1215, 1e-05
      %v1218 = vrsqrt.pop %v1216
      %v1219 = vmul.f32 %v1218, %v1216
      %v1220 = vmul.f32 %v1219, %v1218
      %v1221 = vmul.f32 0.5, %v1220
      %v1222 = vsub.f32 1.5, %v1221
      %v1223 = vmul.f32 %v1218, %v1222
      %vm1224 = vweird.f32 %v1216
      %vm1225 = vweird.f32 %v1218
      %vm1226 = vmor %vm1224, %vm1225
      %v1227 = vsel %vm1226, %v1218, %v1223
      %v1228 = vrsqrt.pop %v1217
      %v1229 = vmul.f32 %v1228, %v1217
      %v1230 = vmul.f32 %v1229, %v1228
      %v1231 = vmul.f32 0.5, %v1230
      %v1232 = vsub.f32 1.5, %v1231
      %v1233 = vmul.f32 %v1228, %v1232
      %vm1234 = vweird.f32 %v1217
      %vm1235 = vweird.f32 %v1228
      %vm1236 = vmor %vm1234, %vm1235
      %v1237 = vsel %vm1236, %v1228, %v1233
      %v1238 = vmul.f32 %v1204, %v1227
      %v1239 = vmul.f32 %v1205, %v1237
      %v1241 = vperm.slane %v1168, 0
      %v1243 = vmul.f32 %v1238, %v1241
      %v1244 = vmul.f32 %v1239, %v1241
      %v1246 = vperm.slane %v1169, 0
      %v1248 = vadd.f32 %v1243, %v1246
      %v1249 = vadd.f32 %v1244, %v1246
      %v1250 = vpack.c.bf16 %v1249, %v1248
      %v1251 = vpack.c.bf16 %v1172, %v1170
      %v1252 = vpack.c.bf16 %v1173, %v1171
      %v1253 = vpack.c.bf16 %v1176, %v1174
      %v1254 = vpack.c.bf16 %v1177, %v1175
      %v1256 = vperm.slane %v1178, 0
      %v1257 = vperm.slane %v1178, 1
      %v1261 = vsel %vm569, %v1250, 0
      %1263 = vmatpush.bf16.msra.mxu0 0
      %1264 = vmatpush.bf16.msra.mxu0 0
      %1265 = vmatpush.bf16.msra.mxu0 0
      %1266 = vmatpush.bf16.msra.mxu0 0
      %1267 = vmatpush.bf16.msra.mxu0 0
      %1268 = vmatpush.bf16.msra.mxu0 0
      %1269 = vmatpush.bf16.msra.mxu0 %v1253
      %1270 = vmatpush.bf16.msra.mxu0 %v1251
      %1271 = vmatmul.bf16.gmra.mxu0 %v1261
      %v1272 = vpop.f32.mrf.mxu0
      %v1273 = vadd.f32 %v1256, %v1272
      %v1274 = vpop.f32.mrf.mxu0
      %v1275 = vadd.f32 %v1256, %v1274
      %1276 = vdwg.mxu0
      %1277 = vmatpush.bf16.msra.mxu0 0
      %1278 = vmatpush.bf16.msra.mxu0 0
      %1279 = vmatpush.bf16.msra.mxu0 0
      %1280 = vmatpush.bf16.msra.mxu0 0
      %1281 = vmatpush.bf16.msra.mxu0 0
      %1282 = vmatpush.bf16.msra.mxu0 0
      %1283 = vmatpush.bf16.msra.mxu0 %v1254
      %1284 = vmatpush.bf16.msra.mxu0 %v1252
      %1285 = vmatmul.bf16.gmra.mxu0 %v1261
      %v1286 = vpop.f32.mrf.mxu0
      %v1287 = vadd.f32 %v1257, %v1286
      %v1288 = vpop.f32.mrf.mxu0
      %v1289 = vadd.f32 %v1257, %v1288
      %1290 = vdwg.mxu0
      %v1291 = vmul.f32 %v1287, 0.70710677
      %v1292 = vmul.f32 %v1289, 0.70710677
      %v1293 = vand.u32 2147483647, %v1291
      %v1294 = vand.u32 2147483647, %v1292
      %v1295 = vmul.f32 %v1293, 0.3275911
      %v1296 = vmul.f32 %v1294, 0.3275911
      %v1297 = vadd.f32 %v1295, 1.0
      %v1298 = vadd.f32 %v1296, 1.0
      %v1299 = vrcp.pop %v1297
      %v1300 = vmul.f32 %v1297, %v1299
      %v1301 = vsub.f32 1.0, %v1300
      %v1302 = vmul.f32 %v1299, %v1301
      %v1303 = vadd.f32 %v1299, %v1302
      %vm1304 = vweird.f32 %v1297
      %vm1305 = vweird.f32 %v1299
      %vm1306 = vmor %vm1304, %vm1305
      %v1307 = vsel %vm1306, %v1299, %v1303
      %v1308 = vand.u32 2147483647, %v1297
      %vm1309 = vcmp.eq.f32.partialorder %v1308, 8.507059e+37
      %v1310 = vand.u32 %v1297, 2147483648
      %v1311 = vor.u32 1.1754944e-38, %v1310
      %v1312 = vsel %vm1309, %v1311, %v1307
      %v1313 = vmul.f32 1.0, %v1312
      %v1314 = vrcp.pop %v1298
      %v1315 = vmul.f32 %v1298, %v1314
      %v1316 = vsub.f32 1.0, %v1315
      %v1317 = vmul.f32 %v1314, %v1316
      %v1318 = vadd.f32 %v1314, %v1317
      %vm1319 = vweird.f32 %v1298
      %vm1320 = vweird.f32 %v1314
      %vm1321 = vmor %vm1319, %vm1320
      %v1322 = vsel %vm1321, %v1314, %v1318
      %v1323 = vand.u32 2147483647, %v1298
      %vm1324 = vcmp.eq.f32.partialorder %v1323, 8.507059e+37
      %v1325 = vand.u32 %v1298, 2147483648
      %v1326 = vor.u32 1.1754944e-38, %v1325
      %v1327 = vsel %vm1324, %v1326, %v1322
      %v1328 = vmul.f32 1.0, %v1327
      %v1329 = vmul.f32 %v1313, 1.0614054
      %v1330 = vmul.f32 %v1328, 1.0614054
      %v1331 = vadd.f32 %v1329, -1.4531521
      %v1332 = vadd.f32 %v1330, -1.4531521
      %v1333 = vmul.f32 %v1313, %v1331
      %v1334 = vmul.f32 %v1328, %v1332
      %v1335 = vadd.f32 %v1333, 1.4214138
      %v1336 = vadd.f32 %v1334, 1.4214138
      %v1337 = vmul.f32 %v1313, %v1335
      %v1338 = vmul.f32 %v1328, %v1336
      %v1339 = vadd.f32 %v1337, -0.28449672
      %v1340 = vadd.f32 %v1338, -0.28449672
      %v1341 = vmul.f32 %v1313, %v1339
      %v1342 = vmul.f32 %v1328, %v1340
      %v1343 = vadd.f32 %v1341, 0.2548296
      %v1344 = vadd.f32 %v1342, 0.2548296
      %v1345 = vmul.f32 %v1313, %v1343
      %v1346 = vmul.f32 %v1328, %v1344
      %v1347 = vsub.f32 0.0, %v1293
      %v1348 = vsub.f32 0.0, %v1294
      %v1349 = vmul.f32 %v1347, %v1293
      %v1350 = vmul.f32 %v1348, %v1294
      %v1351 = vmul.f32 %v1349, 1.442695
      %v1352 = vpow.pop %v1351
      %v1353 = vmul.f32 %v1350, 1.442695
      %v1354 = vpow.pop %v1353
      %v1355 = vmul.f32 %v1345, %v1352
      %v1356 = vmul.f32 %v1346, %v1354
      %v1357 = vsub.f32 1.0, %v1355
      %v1358 = vsub.f32 1.0, %v1356
      %vm1359 = vcmp.lt.f32.partialorder %v1291, 0.0
      %vm1360 = vcmp.lt.f32.partialorder %v1292, 0.0
      %v1361 = vsub.f32 0.0, %v1357
      %v1362 = vsub.f32 0.0, %v1358
      %v1363 = vsel %vm1359, %v1361, %v1357
      %v1364 = vsel %vm1360, %v1362, %v1358
      %v1365 = vmul.f32 %v1287, 0.5
      %v1366 = vmul.f32 %v1289, 0.5
      %v1367 = vadd.f32 %v1363, 1.0
      %v1368 = vadd.f32 %v1364, 1.0
      %v1369 = vmul.f32 %v1365, %v1367
      %v1370 = vmul.f32 %v1366, %v1368
      %v1371 = vmul.f32 %v1273, %v1369
      %v1372 = vmul.f32 %v1275, %v1370
      %v1373 = vpack.c.bf16 %v1372, %v1371
      %v1374 = vpack.c.bf16 %v1180, %v1179
      %v1375 = vpack.c.bf16 %v1182, %v1181
      %v1376 = vpack.c.bf16 %v1184, %v1183
      %v1377 = vpack.c.bf16 %v1186, %v1185
      %v1378 = vpack.c.bf16 %v1188, %v1187
      %v1379 = vpack.c.bf16 %v1190, %v1189
      %v1380 = vpack.c.bf16 %v1192, %v1191
      %v1381 = vpack.c.bf16 %v1194, %v1193
      %1382 = vmatpush.bf16.msra.mxu0 %v1381
      %1383 = vmatpush.bf16.msra.mxu0 %v1380
      %1384 = vmatpush.bf16.msra.mxu0 %v1379
      %1385 = vmatpush.bf16.msra.mxu0 %v1378
      %1386 = vmatpush.bf16.msra.mxu0 %v1377
      %1387 = vmatpush.bf16.msra.mxu0 %v1376
      %1388 = vmatpush.bf16.msra.mxu0 %v1375
      %1389 = vmatpush.bf16.msra.mxu0 %v1374
      %1390 = vmatmul.bf16.gmra.mxu0 %v1373
      %v1391 = vpop.f32.mrf.mxu0
      %v1392 = vadd.f32 0.0, %v1391
      %v1393 = vpop.f32.mrf.mxu0
      %v1394 = vadd.f32 0.0, %v1393
      %1395 = vdwg.mxu0
      %v1396 = vadd.f32 %v1166, %v1392
      %v1397 = vadd.f32 %v1167, %v1394
      %v1399 = vperm.slane %v1195, 0
      %v1401 = vadd.f32 %v1396, %v1399
      %v1402 = vadd.f32 %v1397, %v1399
      %1403 = vst.msk [vmem:[%s541] sm:$0xff] %vm569, %v1401
      %1404 = vst.msk [vmem:[%s541 + $0x8] sm:$0xff] %vm569, %v1402
      %p1405 = scmp.lt.s32.totalorder %s27, 1
      %s1406 = scalar_select %p1405, %s27, 1
      %s1407 = smul.addr %s1406, 2
      %s1408 = smul.addr %s1407, 8
      %s1409 = scalar_lea.vmem %s16, %s1408
      // Predicated region
      $region85: #{perceiver_io_forward.9} parent=83 // pred_check
        %p1410 = pneg %p391
      $region86: #{perceiver_io_forward.9} parent=83 // pred_check_branch
        %1412 = sbr.rel (%p1410) target = $region88
      $region87: #{perceiver_io_forward.9} parent=83 // pred_region
        _
      $region88: #{perceiver_io_forward.9} parent=83 // pred_fallthru
        _
    $region84: #{perceiver_io_forward.9} parent=5 // pred_fallthru
      _
    %p1413 = scmp.le.s32.totalorder 2, %s22
    // Predicated region
    $region89: #{perceiver_io_forward.9} parent=5 // pred_check
      %p1414 = pneg %p1413
    $region90: #{perceiver_io_forward.9} parent=5 // pred_check_branch
      %1416 = sbr.rel (%p1414) target = $region92
    $region91: #{perceiver_io_forward.9} parent=5 // pred_region
      %s1417 = ssub.s32 %s22, 2
      // Predicated region
      $region93: #{perceiver_io_forward.9} parent=91 // pred_check
        %p1418 = pneg %p397
      $region94: #{perceiver_io_forward.9} parent=91 // pred_check_branch
        %1420 = sbr.rel (%p1418) target = $region96
      $region95: #{perceiver_io_forward.9} parent=91 // pred_region
        %p1421 = scmp.lt.s32.totalorder %s28, 1
        %s1422 = scalar_select %p1421, %s28, 1
        %s1423 = smul.addr %s1422, 2
        %s1424 = smul.addr %s1423, 8
        %s1425 = scalar_lea.vmem %s16, %s1424
      $region96: #{perceiver_io_forward.9} parent=91 // pred_fallthru
        _
    $region92: #{perceiver_io_forward.9} parent=5 // pred_fallthru
      _
  $region6: #{perceiver_io_forward.9} parent=0 // loop_footer
    %s26 = sadd.s32 1, %s22
  $region7: #{perceiver_io_forward.9} parent=0 // loop_footer_branch
    %21 = sbr.rel target = $region3
  $region8: #{perceiver_io_forward.9} parent=0 // loop_exit
    _

// kernel: perceiver_io_forward.10
$region0: #{perceiver_io_forward.10}
  #allocation0 [shape = 'u32[]', space=smem, size = 0x4, offset = 0x4, fixed_abs, tag = 'smem constant byte address 0x4 - core index']
  #allocation1 [shape = 'u32[72,128]{1,0:T(1,128)}', space=vmem, size = 0x9000, scoped, tag = 'internal scratch']
  %s0 = inlined_call_operand.vmem [shape: f32[2,16,32], index: 0, kind: input, shape index: {}, may-alias: {0,1}]
  %s1 = inlined_call_operand.vmem [shape: f32[2,16,32], index: 1, kind: input, shape index: {}, may-alias: {0,1}]
  %s2 = inlined_call_operand.vmem [shape: f32[1,32], index: 2, kind: input, shape index: {}, may-alias: {2,4}]
  %s3 = inlined_call_operand.vmem [shape: f32[1,32], index: 3, kind: input, shape index: {}, may-alias: {3,5}]
  %s4 = inlined_call_operand.vmem [shape: f32[1,32], index: 4, kind: input, shape index: {}, may-alias: {2,4}]
  %s5 = inlined_call_operand.vmem [shape: f32[1,32], index: 5, kind: input, shape index: {}, may-alias: {3,5}]
  %s6 = inlined_call_operand.vmem [shape: f32[32,32], index: 6, kind: input, shape index: {}]
  %s7 = inlined_call_operand.vmem [shape: f32[32,64], index: 7, kind: input, shape index: {}]
  %s8 = inlined_call_operand.vmem [shape: f32[32,32], index: 8, kind: input, shape index: {}]
  %s9 = inlined_call_operand.vmem [shape: f32[1,32], index: 9, kind: input, shape index: {}]
  %s10 = inlined_call_operand.vmem [shape: f32[1,32], index: 10, kind: input, shape index: {}]
  %s11 = inlined_call_operand.vmem [shape: f32[1,32], index: 11, kind: input, shape index: {}]
  %s12 = inlined_call_operand.vmem [shape: f32[32,256], index: 12, kind: input, shape index: {}]
  %s13 = inlined_call_operand.vmem [shape: f32[1,256], index: 13, kind: input, shape index: {}]
  %s14 = inlined_call_operand.vmem [shape: f32[128,32], index: 14, kind: input, shape index: {}]
  %s15 = inlined_call_operand.vmem [shape: f32[1,32], index: 15, kind: input, shape index: {}]
  %s16 = inlined_call_operand.vmem [shape: f32[2,16,32], index: 16, kind: output, shape index: {}]
  %s17 = sld [smem:[#allocation0]]
  $region97: #{perceiver_io_forward.10} parent=0
    _
  %s19 = ssub.s32 1, %s17
  %s20 = scalar_select 0, %s19, %s17
  loop: start=0, step=1, limit=4
  $region2: #{perceiver_io_forward.10} parent=0 // loop_pre_header
    _
  $region3: #{perceiver_io_forward.10} parent=0 // loop_header
    %s22 = sphi 0, %s26
    %p23 = scmp.ge.s32.totalorder %s22, 4
    %s32 = sphi 0, %s34
    %s35 = sphi 0, %s32
    %s36 = sphi 0, %s35
    %s52 = sphi 0, %s36
    %s58 = sphi 0, %s60
    %s61 = sphi 0, %s58
    %s62 = sphi 0, %s61
    %s78 = sphi 0, %s62
    %s82 = sphi 0, %s82
    %s84 = sphi 0, %s82
    %s85 = sphi 0, %s84
    %s99 = sphi 0, %s85
    %s103 = sphi 0, %s103
    %s105 = sphi 0, %s103
    %s106 = sphi 0, %s105
    %s120 = sphi 0, %s106
    %s124 = sphi 0, %s124
    %s126 = sphi 0, %s124
    %s127 = sphi 0, %s126
    %s141 = sphi 0, %s127
    %s145 = sphi 0, %s145
    %s147 = sphi 0, %s145
    %s148 = sphi 0, %s147
    %s162 = sphi 0, %s148
    %s166 = sphi 0, %s166
    %s168 = sphi 0, %s166
    %s169 = sphi 0, %s168
    %s183 = sphi 0, %s169
    %s187 = sphi 0, %s187
    %s189 = sphi 0, %s187
    %s190 = sphi 0, %s189
    %s204 = sphi 0, %s190
    %s208 = sphi 0, %s208
    %s210 = sphi 0, %s208
    %s211 = sphi 0, %s210
    %s225 = sphi 0, %s211
    %s229 = sphi 0, %s229
    %s231 = sphi 0, %s229
    %s232 = sphi 0, %s231
    %s246 = sphi 0, %s232
    %s250 = sphi 0, %s250
    %s252 = sphi 0, %s250
    %s253 = sphi 0, %s252
    %s267 = sphi 0, %s253
    %s271 = sphi 0, %s271
    %s273 = sphi 0, %s271
    %s274 = sphi 0, %s273
    %s288 = sphi 0, %s274
    %s292 = sphi 0, %s292
    %s294 = sphi 0, %s292
    %s295 = sphi 0, %s294
    %s309 = sphi 0, %s295
    %s313 = sphi 0, %s313
    %s315 = sphi 0, %s313
    %s316 = sphi 0, %s315
    %s330 = sphi 0, %s316
    %s334 = sphi 0, %s334
    %s336 = sphi 0, %s334
    %s337 = sphi 0, %s336
    %s351 = sphi 0, %s337
    %s355 = sphi 0, %s355
    %s357 = sphi 0, %s355
    %s358 = sphi 0, %s357
    %s372 = sphi 0, %s358
    %s378 = sphi 0, %s380
    %s381 = sphi 0, %s378
    %s382 = sphi 0, %s381
    %s398 = sphi 0, %s382
  $region4: #{perceiver_io_forward.10} parent=0 // loop_header_branch
    %25 = sbr.rel (%p23) target = $region8
  $region5: #{perceiver_io_forward.10} parent=0 // loop_body
    %s27 = ssub.s32 %s22, 1
    %s28 = ssub.s32 %s22, 2
    %s29 = sadd.s32 %s22, 1
    %s30 = ssub.s32 %s22, %s29
    %p31 = scmp.eq.s32.totalorder %s30, 0
    %s33 = sadd.s32 %s32, 1
    %s34 = scalar_select %p31, %s32, %s33
    %p37 = pneg %p31
    %p38 = scmp.eq.s32.totalorder %s22, 1
    %p39 = por %p37, %p38
    %p40 = scmp.ne.s32.totalorder %s32, %s35
    %p41 = scmp.eq.s32.totalorder %s22, 0
    %p42 = por %p40, %p41
    %p43 = scmp.ne.s32.totalorder %s32, %s35
    %p44 = scmp.eq.s32.totalorder %s27, 1
    %p45 = por %p43, %p44
    %p46 = scmp.ne.s32.totalorder %s35, %s36
    %p47 = scmp.eq.s32.totalorder %s27, 0
    %p48 = por %p46, %p47
    %p49 = scmp.ne.s32.totalorder %s35, %s36
    %p50 = scmp.eq.s32.totalorder %s28, 1
    %p51 = por %p49, %p50
    %p53 = scmp.ne.s32.totalorder %s36, %s52
    %p54 = scmp.eq.s32.totalorder %s28, 0
    %p55 = por %p53, %p54
    %s56 = ssub.s32 %s22, %s29
    %p57 = scmp.eq.s32.totalorder %s56, 0
    %s59 = sadd.s32 %s58, 1
    %s60 = scalar_select %p57, %s58, %s59
    %p63 = pneg %p57
    %p64 = scmp.eq.s32.totalorder %s22, 1
    %p65 = por %p63, %p64
    %p66 = scmp.ne.s32.totalorder %s58, %s61
    %p67 = scmp.eq.s32.totalorder %s22, 0
    %p68 = por %p66, %p67
    %p69 = scmp.ne.s32.totalorder %s58, %s61
    %p70 = scmp.eq.s32.totalorder %s27, 1
    %p71 = por %p69, %p70
    %p72 = scmp.ne.s32.totalorder %s61, %s62
    %p73 = scmp.eq.s32.totalorder %s27, 0
    %p74 = por %p72, %p73
    %p75 = scmp.ne.s32.totalorder %s61, %s62
    %p76 = scmp.eq.s32.totalorder %s28, 1
    %p77 = por %p75, %p76
    %p79 = scmp.ne.s32.totalorder %s62, %s78
    %p80 = scmp.eq.s32.totalorder %s28, 0
    %p81 = por %p79, %p80
    %s83 = sadd.s32 %s82, 1
    %p86 = scmp.eq.s32.totalorder %s22, 1
    %p87 = scmp.ne.s32.totalorder %s82, %s84
    %p88 = scmp.eq.s32.totalorder %s22, 0
    %p89 = por %p87, %p88
    %p90 = scmp.ne.s32.totalorder %s82, %s84
    %p91 = scmp.eq.s32.totalorder %s27, 1
    %p92 = por %p90, %p91
    %p93 = scmp.ne.s32.totalorder %s84, %s85
    %p94 = scmp.eq.s32.totalorder %s27, 0
    %p95 = por %p93, %p94
    %p96 = scmp.ne.s32.totalorder %s84, %s85
    %p97 = scmp.eq.s32.totalorder %s28, 1
    %p98 = por %p96, %p97
    %p100 = scmp.ne.s32.totalorder %s85, %s99
    %p101 = scmp.eq.s32.totalorder %s28, 0
    %p102 = por %p100, %p101
    %s104 = sadd.s32 %s103, 1
    %p107 = scmp.eq.s32.totalorder %s22, 1
    %p108 = scmp.ne.s32.totalorder %s103, %s105
    %p109 = scmp.eq.s32.totalorder %s22, 0
    %p110 = por %p108, %p109
    %p111 = scmp.ne.s32.totalorder %s103, %s105
    %p112 = scmp.eq.s32.totalorder %s27, 1
    %p113 = por %p111, %p112
    %p114 = scmp.ne.s32.totalorder %s105, %s106
    %p115 = scmp.eq.s32.totalorder %s27, 0
    %p116 = por %p114, %p115
    %p117 = scmp.ne.s32.totalorder %s105, %s106
    %p118 = scmp.eq.s32.totalorder %s28, 1
    %p119 = por %p117, %p118
    %p121 = scmp.ne.s32.totalorder %s106, %s120
    %p122 = scmp.eq.s32.totalorder %s28, 0
    %p123 = por %p121, %p122
    %s125 = sadd.s32 %s124, 1
    %p128 = scmp.eq.s32.totalorder %s22, 1
    %p129 = scmp.ne.s32.totalorder %s124, %s126
    %p130 = scmp.eq.s32.totalorder %s22, 0
    %p131 = por %p129, %p130
    %p132 = scmp.ne.s32.totalorder %s124, %s126
    %p133 = scmp.eq.s32.totalorder %s27, 1
    %p134 = por %p132, %p133
    %p135 = scmp.ne.s32.totalorder %s126, %s127
    %p136 = scmp.eq.s32.totalorder %s27, 0
    %p137 = por %p135, %p136
    %p138 = scmp.ne.s32.totalorder %s126, %s127
    %p139 = scmp.eq.s32.totalorder %s28, 1
    %p140 = por %p138, %p139
    %p142 = scmp.ne.s32.totalorder %s127, %s141
    %p143 = scmp.eq.s32.totalorder %s28, 0
    %p144 = por %p142, %p143
    %s146 = sadd.s32 %s145, 1
    %p149 = scmp.eq.s32.totalorder %s22, 1
    %p150 = scmp.ne.s32.totalorder %s145, %s147
    %p151 = scmp.eq.s32.totalorder %s22, 0
    %p152 = por %p150, %p151
    %p153 = scmp.ne.s32.totalorder %s145, %s147
    %p154 = scmp.eq.s32.totalorder %s27, 1
    %p155 = por %p153, %p154
    %p156 = scmp.ne.s32.totalorder %s147, %s148
    %p157 = scmp.eq.s32.totalorder %s27, 0
    %p158 = por %p156, %p157
    %p159 = scmp.ne.s32.totalorder %s147, %s148
    %p160 = scmp.eq.s32.totalorder %s28, 1
    %p161 = por %p159, %p160
    %p163 = scmp.ne.s32.totalorder %s148, %s162
    %p164 = scmp.eq.s32.totalorder %s28, 0
    %p165 = por %p163, %p164
    %s167 = sadd.s32 %s166, 1
    %p170 = scmp.eq.s32.totalorder %s22, 1
    %p171 = scmp.ne.s32.totalorder %s166, %s168
    %p172 = scmp.eq.s32.totalorder %s22, 0
    %p173 = por %p171, %p172
    %p174 = scmp.ne.s32.totalorder %s166, %s168
    %p175 = scmp.eq.s32.totalorder %s27, 1
    %p176 = por %p174, %p175
    %p177 = scmp.ne.s32.totalorder %s168, %s169
    %p178 = scmp.eq.s32.totalorder %s27, 0
    %p179 = por %p177, %p178
    %p180 = scmp.ne.s32.totalorder %s168, %s169
    %p181 = scmp.eq.s32.totalorder %s28, 1
    %p182 = por %p180, %p181
    %p184 = scmp.ne.s32.totalorder %s169, %s183
    %p185 = scmp.eq.s32.totalorder %s28, 0
    %p186 = por %p184, %p185
    %s188 = sadd.s32 %s187, 1
    %p191 = scmp.eq.s32.totalorder %s22, 1
    %p192 = scmp.ne.s32.totalorder %s187, %s189
    %p193 = scmp.eq.s32.totalorder %s22, 0
    %p194 = por %p192, %p193
    %p195 = scmp.ne.s32.totalorder %s187, %s189
    %p196 = scmp.eq.s32.totalorder %s27, 1
    %p197 = por %p195, %p196
    %p198 = scmp.ne.s32.totalorder %s189, %s190
    %p199 = scmp.eq.s32.totalorder %s27, 0
    %p200 = por %p198, %p199
    %p201 = scmp.ne.s32.totalorder %s189, %s190
    %p202 = scmp.eq.s32.totalorder %s28, 1
    %p203 = por %p201, %p202
    %p205 = scmp.ne.s32.totalorder %s190, %s204
    %p206 = scmp.eq.s32.totalorder %s28, 0
    %p207 = por %p205, %p206
    %s209 = sadd.s32 %s208, 1
    %p212 = scmp.eq.s32.totalorder %s22, 1
    %p213 = scmp.ne.s32.totalorder %s208, %s210
    %p214 = scmp.eq.s32.totalorder %s22, 0
    %p215 = por %p213, %p214
    %p216 = scmp.ne.s32.totalorder %s208, %s210
    %p217 = scmp.eq.s32.totalorder %s27, 1
    %p218 = por %p216, %p217
    %p219 = scmp.ne.s32.totalorder %s210, %s211
    %p220 = scmp.eq.s32.totalorder %s27, 0
    %p221 = por %p219, %p220
    %p222 = scmp.ne.s32.totalorder %s210, %s211
    %p223 = scmp.eq.s32.totalorder %s28, 1
    %p224 = por %p222, %p223
    %p226 = scmp.ne.s32.totalorder %s211, %s225
    %p227 = scmp.eq.s32.totalorder %s28, 0
    %p228 = por %p226, %p227
    %s230 = sadd.s32 %s229, 1
    %p233 = scmp.eq.s32.totalorder %s22, 1
    %p234 = scmp.ne.s32.totalorder %s229, %s231
    %p235 = scmp.eq.s32.totalorder %s22, 0
    %p236 = por %p234, %p235
    %p237 = scmp.ne.s32.totalorder %s229, %s231
    %p238 = scmp.eq.s32.totalorder %s27, 1
    %p239 = por %p237, %p238
    %p240 = scmp.ne.s32.totalorder %s231, %s232
    %p241 = scmp.eq.s32.totalorder %s27, 0
    %p242 = por %p240, %p241
    %p243 = scmp.ne.s32.totalorder %s231, %s232
    %p244 = scmp.eq.s32.totalorder %s28, 1
    %p245 = por %p243, %p244
    %p247 = scmp.ne.s32.totalorder %s232, %s246
    %p248 = scmp.eq.s32.totalorder %s28, 0
    %p249 = por %p247, %p248
    %s251 = sadd.s32 %s250, 1
    %p254 = scmp.eq.s32.totalorder %s22, 1
    %p255 = scmp.ne.s32.totalorder %s250, %s252
    %p256 = scmp.eq.s32.totalorder %s22, 0
    %p257 = por %p255, %p256
    %p258 = scmp.ne.s32.totalorder %s250, %s252
    %p259 = scmp.eq.s32.totalorder %s27, 1
    %p260 = por %p258, %p259
    %p261 = scmp.ne.s32.totalorder %s252, %s253
    %p262 = scmp.eq.s32.totalorder %s27, 0
    %p263 = por %p261, %p262
    %p264 = scmp.ne.s32.totalorder %s252, %s253
    %p265 = scmp.eq.s32.totalorder %s28, 1
    %p266 = por %p264, %p265
    %p268 = scmp.ne.s32.totalorder %s253, %s267
    %p269 = scmp.eq.s32.totalorder %s28, 0
    %p270 = por %p268, %p269
    %s272 = sadd.s32 %s271, 1
    %p275 = scmp.eq.s32.totalorder %s22, 1
    %p276 = scmp.ne.s32.totalorder %s271, %s273
    %p277 = scmp.eq.s32.totalorder %s22, 0
    %p278 = por %p276, %p277
    %p279 = scmp.ne.s32.totalorder %s271, %s273
    %p280 = scmp.eq.s32.totalorder %s27, 1
    %p281 = por %p279, %p280
    %p282 = scmp.ne.s32.totalorder %s273, %s274
    %p283 = scmp.eq.s32.totalorder %s27, 0
    %p284 = por %p282, %p283
    %p285 = scmp.ne.s32.totalorder %s273, %s274
    %p286 = scmp.eq.s32.totalorder %s28, 1
    %p287 = por %p285, %p286
    %p289 = scmp.ne.s32.totalorder %s274, %s288
    %p290 = scmp.eq.s32.totalorder %s28, 0
    %p291 = por %p289, %p290
    %s293 = sadd.s32 %s292, 1
    %p296 = scmp.eq.s32.totalorder %s22, 1
    %p297 = scmp.ne.s32.totalorder %s292, %s294
    %p298 = scmp.eq.s32.totalorder %s22, 0
    %p299 = por %p297, %p298
    %p300 = scmp.ne.s32.totalorder %s292, %s294
    %p301 = scmp.eq.s32.totalorder %s27, 1
    %p302 = por %p300, %p301
    %p303 = scmp.ne.s32.totalorder %s294, %s295
    %p304 = scmp.eq.s32.totalorder %s27, 0
    %p305 = por %p303, %p304
    %p306 = scmp.ne.s32.totalorder %s294, %s295
    %p307 = scmp.eq.s32.totalorder %s28, 1
    %p308 = por %p306, %p307
    %p310 = scmp.ne.s32.totalorder %s295, %s309
    %p311 = scmp.eq.s32.totalorder %s28, 0
    %p312 = por %p310, %p311
    %s314 = sadd.s32 %s313, 1
    %p317 = scmp.eq.s32.totalorder %s22, 1
    %p318 = scmp.ne.s32.totalorder %s313, %s315
    %p319 = scmp.eq.s32.totalorder %s22, 0
    %p320 = por %p318, %p319
    %p321 = scmp.ne.s32.totalorder %s313, %s315
    %p322 = scmp.eq.s32.totalorder %s27, 1
    %p323 = por %p321, %p322
    %p324 = scmp.ne.s32.totalorder %s315, %s316
    %p325 = scmp.eq.s32.totalorder %s27, 0
    %p326 = por %p324, %p325
    %p327 = scmp.ne.s32.totalorder %s315, %s316
    %p328 = scmp.eq.s32.totalorder %s28, 1
    %p329 = por %p327, %p328
    %p331 = scmp.ne.s32.totalorder %s316, %s330
    %p332 = scmp.eq.s32.totalorder %s28, 0
    %p333 = por %p331, %p332
    %s335 = sadd.s32 %s334, 1
    %p338 = scmp.eq.s32.totalorder %s22, 1
    %p339 = scmp.ne.s32.totalorder %s334, %s336
    %p340 = scmp.eq.s32.totalorder %s22, 0
    %p341 = por %p339, %p340
    %p342 = scmp.ne.s32.totalorder %s334, %s336
    %p343 = scmp.eq.s32.totalorder %s27, 1
    %p344 = por %p342, %p343
    %p345 = scmp.ne.s32.totalorder %s336, %s337
    %p346 = scmp.eq.s32.totalorder %s27, 0
    %p347 = por %p345, %p346
    %p348 = scmp.ne.s32.totalorder %s336, %s337
    %p349 = scmp.eq.s32.totalorder %s28, 1
    %p350 = por %p348, %p349
    %p352 = scmp.ne.s32.totalorder %s337, %s351
    %p353 = scmp.eq.s32.totalorder %s28, 0
    %p354 = por %p352, %p353
    %s356 = sadd.s32 %s355, 1
    %p359 = scmp.eq.s32.totalorder %s22, 1
    %p360 = scmp.ne.s32.totalorder %s355, %s357
    %p361 = scmp.eq.s32.totalorder %s22, 0
    %p362 = por %p360, %p361
    %p363 = scmp.ne.s32.totalorder %s355, %s357
    %p364 = scmp.eq.s32.totalorder %s27, 1
    %p365 = por %p363, %p364
    %p366 = scmp.ne.s32.totalorder %s357, %s358
    %p367 = scmp.eq.s32.totalorder %s27, 0
    %p368 = por %p366, %p367
    %p369 = scmp.ne.s32.totalorder %s357, %s358
    %p370 = scmp.eq.s32.totalorder %s28, 1
    %p371 = por %p369, %p370
    %p373 = scmp.ne.s32.totalorder %s358, %s372
    %p374 = scmp.eq.s32.totalorder %s28, 0
    %p375 = por %p373, %p374
    %s376 = ssub.s32 %s22, %s29
    %p377 = scmp.eq.s32.totalorder %s376, 0
    %s379 = sadd.s32 %s378, 1
    %s380 = scalar_select %p377, %s378, %s379
    %p383 = pneg %p377
    %p384 = scmp.eq.s32.totalorder %s22, 1
    %p385 = por %p383, %p384
    %p386 = scmp.ne.s32.totalorder %s378, %s381
    %p387 = scmp.eq.s32.totalorder %s22, 0
    %p388 = por %p386, %p387
    %p389 = scmp.ne.s32.totalorder %s378, %s381
    %p390 = scmp.eq.s32.totalorder %s27, 1
    %p391 = por %p389, %p390
    %p392 = scmp.ne.s32.totalorder %s381, %s382
    %p393 = scmp.eq.s32.totalorder %s27, 0
    %p394 = por %p392, %p393
    %p395 = scmp.ne.s32.totalorder %s381, %s382
    %p396 = scmp.eq.s32.totalorder %s28, 1
    %p397 = por %p395, %p396
    %p399 = scmp.ne.s32.totalorder %s382, %s398
    %p400 = scmp.eq.s32.totalorder %s28, 0
    %p401 = por %p399, %p400
    %p402 = scmp.le.s32.totalorder 1, %s22
    %p403 = scmp.lt.s32.totalorder %s22, 3
    %p404 = pnand %p402, %p403
    %p405 = pneg %p404
    // Predicated region
    $region9: #{perceiver_io_forward.10} parent=5 // pred_check
      _
    $region10: #{perceiver_io_forward.10} parent=5 // pred_check_branch
      %407 = sbr.rel (%p404) target = $region12
    $region11: #{perceiver_io_forward.10} parent=5 // pred_region
      %s408 = ssub.s32 %s22, 1
      // Predicated region
      $region13: #{perceiver_io_forward.10} parent=11 // pred_check
        %p409 = pneg %p95
      $region14: #{perceiver_io_forward.10} parent=11 // pred_check_branch
        %411 = sbr.rel (%p409) target = $region16
      $region15: #{perceiver_io_forward.10} parent=11 // pred_region
        _
      $region16: #{perceiver_io_forward.10} parent=11 // pred_fallthru
        _
      // Predicated region
      $region17: #{perceiver_io_forward.10} parent=11 // pred_check
        %p412 = pneg %p116
      $region18: #{perceiver_io_forward.10} parent=11 // pred_check_branch
        %414 = sbr.rel (%p412) target = $region20
      $region19: #{perceiver_io_forward.10} parent=11 // pred_region
        _
      $region20: #{perceiver_io_forward.10} parent=11 // pred_fallthru
        _
      // Predicated region
      $region21: #{perceiver_io_forward.10} parent=11 // pred_check
        %p415 = pneg %p137
      $region22: #{perceiver_io_forward.10} parent=11 // pred_check_branch
        %417 = sbr.rel (%p415) target = $region24
      $region23: #{perceiver_io_forward.10} parent=11 // pred_region
        _
      $region24: #{perceiver_io_forward.10} parent=11 // pred_fallthru
        _
      // Predicated region
      $region25: #{perceiver_io_forward.10} parent=11 // pred_check
        %p418 = pneg %p158
      $region26: #{perceiver_io_forward.10} parent=11 // pred_check_branch
        %420 = sbr.rel (%p418) target = $region28
      $region27: #{perceiver_io_forward.10} parent=11 // pred_region
        _
      $region28: #{perceiver_io_forward.10} parent=11 // pred_fallthru
        _
      // Predicated region
      $region29: #{perceiver_io_forward.10} parent=11 // pred_check
        %p421 = pneg %p179
      $region30: #{perceiver_io_forward.10} parent=11 // pred_check_branch
        %423 = sbr.rel (%p421) target = $region32
      $region31: #{perceiver_io_forward.10} parent=11 // pred_region
        _
      $region32: #{perceiver_io_forward.10} parent=11 // pred_fallthru
        _
      // Predicated region
      $region33: #{perceiver_io_forward.10} parent=11 // pred_check
        %p424 = pneg %p200
      $region34: #{perceiver_io_forward.10} parent=11 // pred_check_branch
        %426 = sbr.rel (%p424) target = $region36
      $region35: #{perceiver_io_forward.10} parent=11 // pred_region
        _
      $region36: #{perceiver_io_forward.10} parent=11 // pred_fallthru
        _
      // Predicated region
      $region37: #{perceiver_io_forward.10} parent=11 // pred_check
        %p427 = pneg %p221
      $region38: #{perceiver_io_forward.10} parent=11 // pred_check_branch
        %429 = sbr.rel (%p427) target = $region40
      $region39: #{perceiver_io_forward.10} parent=11 // pred_region
        _
      $region40: #{perceiver_io_forward.10} parent=11 // pred_fallthru
        _
      // Predicated region
      $region41: #{perceiver_io_forward.10} parent=11 // pred_check
        %p430 = pneg %p242
      $region42: #{perceiver_io_forward.10} parent=11 // pred_check_branch
        %432 = sbr.rel (%p430) target = $region44
      $region43: #{perceiver_io_forward.10} parent=11 // pred_region
        _
      $region44: #{perceiver_io_forward.10} parent=11 // pred_fallthru
        _
      // Predicated region
      $region45: #{perceiver_io_forward.10} parent=11 // pred_check
        %p433 = pneg %p263
      $region46: #{perceiver_io_forward.10} parent=11 // pred_check_branch
        %435 = sbr.rel (%p433) target = $region48
      $region47: #{perceiver_io_forward.10} parent=11 // pred_region
        _
      $region48: #{perceiver_io_forward.10} parent=11 // pred_fallthru
        _
      // Predicated region
      $region49: #{perceiver_io_forward.10} parent=11 // pred_check
        %p436 = pneg %p284
      $region50: #{perceiver_io_forward.10} parent=11 // pred_check_branch
        %438 = sbr.rel (%p436) target = $region52
      $region51: #{perceiver_io_forward.10} parent=11 // pred_region
        _
      $region52: #{perceiver_io_forward.10} parent=11 // pred_fallthru
        _
      // Predicated region
      $region53: #{perceiver_io_forward.10} parent=11 // pred_check
        %p439 = pneg %p305
      $region54: #{perceiver_io_forward.10} parent=11 // pred_check_branch
        %441 = sbr.rel (%p439) target = $region56
      $region55: #{perceiver_io_forward.10} parent=11 // pred_region
        _
      $region56: #{perceiver_io_forward.10} parent=11 // pred_fallthru
        _
      // Predicated region
      $region57: #{perceiver_io_forward.10} parent=11 // pred_check
        %p442 = pneg %p326
      $region58: #{perceiver_io_forward.10} parent=11 // pred_check_branch
        %444 = sbr.rel (%p442) target = $region60
      $region59: #{perceiver_io_forward.10} parent=11 // pred_region
        _
      $region60: #{perceiver_io_forward.10} parent=11 // pred_fallthru
        _
      // Predicated region
      $region61: #{perceiver_io_forward.10} parent=11 // pred_check
        %p445 = pneg %p347
      $region62: #{perceiver_io_forward.10} parent=11 // pred_check_branch
        %447 = sbr.rel (%p445) target = $region64
      $region63: #{perceiver_io_forward.10} parent=11 // pred_region
        _
      $region64: #{perceiver_io_forward.10} parent=11 // pred_fallthru
        _
      // Predicated region
      $region65: #{perceiver_io_forward.10} parent=11 // pred_check
        %p448 = pneg %p368
      $region66: #{perceiver_io_forward.10} parent=11 // pred_check_branch
        %450 = sbr.rel (%p448) target = $region68
      $region67: #{perceiver_io_forward.10} parent=11 // pred_region
        _
      $region68: #{perceiver_io_forward.10} parent=11 // pred_fallthru
        _
    $region12: #{perceiver_io_forward.10} parent=5 // pred_fallthru
      _
    %p451 = scmp.lt.s32.totalorder %s22, 2
    // Predicated region
    $region69: #{perceiver_io_forward.10} parent=5 // pred_check
      %p452 = pneg %p451
    $region70: #{perceiver_io_forward.10} parent=5 // pred_check_branch
      %454 = sbr.rel (%p452) target = $region72
    $region71: #{perceiver_io_forward.10} parent=5 // pred_region
      // Predicated region
      $region73: #{perceiver_io_forward.10} parent=71 // pred_check
        %p455 = pneg %p42
      $region74: #{perceiver_io_forward.10} parent=71 // pred_check_branch
        %457 = sbr.rel (%p455) target = $region76
      $region75: #{perceiver_io_forward.10} parent=71 // pred_region
        %p458 = scmp.lt.s32.totalorder %s22, 1
        %s459 = scalar_select %p458, %s22, 1
        %s460 = smul.addr %s459, 2
        %s461 = smul.addr %s460, 8
        %s462 = scalar_lea.vmem %s0, %s461
      $region76: #{perceiver_io_forward.10} parent=71 // pred_fallthru
        _
      // Predicated region
      $region77: #{perceiver_io_forward.10} parent=71 // pred_check
        %p463 = pneg %p68
      $region78: #{perceiver_io_forward.10} parent=71 // pred_check_branch
        %465 = sbr.rel (%p463) target = $region80
      $region79: #{perceiver_io_forward.10} parent=71 // pred_region
        %p466 = scmp.lt.s32.totalorder %s22, 1
        %s467 = scalar_select %p466, %s22, 1
        %s468 = smul.addr %s467, 2
        %s469 = smul.addr %s468, 8
        %s470 = scalar_lea.vmem %s1, %s469
      $region80: #{perceiver_io_forward.10} parent=71 // pred_fallthru
        _
    $region72: #{perceiver_io_forward.10} parent=5 // pred_fallthru
      _
    %p471 = scmp.le.s32.totalorder 1, %s22
    %p472 = scmp.lt.s32.totalorder %s22, 3
    %p473 = pnand %p471, %p472
    %p474 = pneg %p473
    // Predicated region
    $region81: #{perceiver_io_forward.10} parent=5 // pred_check
      _
    $region82: #{perceiver_io_forward.10} parent=5 // pred_check_branch
      %476 = sbr.rel (%p473) target = $region84
    $region83: #{perceiver_io_forward.10} parent=5 // pred_region
      %s477 = ssub.s32 %s22, 1
      %p478 = scmp.lt.s32.totalorder %s27, 1
      %s479 = scalar_select %p478, %s27, 1
      %s480 = smul.addr %s479, 2
      %s481 = smul.addr %s480, 8
      %s482 = scalar_lea.vmem %s0, %s481
      %p483 = pneg %p48
      %p484 = pneg %p45
      %p485 = scmp.lt.s32.totalorder %s27, 1
      %s486 = scalar_select %p485, %s27, 1
      %s487 = smul.addr %s486, 2
      %s488 = smul.addr %s487, 8
      %s489 = scalar_lea.vmem %s1, %s488
      %p490 = pneg %p74
      %p491 = pneg %p71
      %p492 = pneg %p95
      %p493 = pneg %p92
      %p494 = pneg %p116
      %p495 = pneg %p113
      %p496 = pneg %p137
      %p497 = pneg %p134
      %p498 = pneg %p158
      %p499 = pneg %p155
      %p500 = pneg %p179
      %p501 = pneg %p176
      %p502 = pneg %p200
      %p503 = pneg %p197
      %p504 = pneg %p221
      %p505 = pneg %p218
      %p506 = pneg %p242
      %p507 = pneg %p239
      %p508 = pneg %p263
      %p509 = pneg %p260
      %p510 = pneg %p284
      %p511 = pneg %p281
      %p512 = pneg %p305
      %p513 = pneg %p302
      %p514 = pneg %p326
      %p515 = pneg %p323
      %p516 = pneg %p347
      %p517 = pneg %p344
      %p518 = pneg %p368
      %p519 = pneg %p365
      %p520 = pneg %p394
      %p521 = pneg %p391
      %p522 = scmp.lt.s32.totalorder %s27, 1
      %s523 = scalar_select %p522, %s27, 1
      %s524 = smul.addr %s523, 2
      %s525 = smul.addr %s524, 8
      %s526 = scalar_lea.vmem %s16, %s525
      %p527 = scmp.lt.s32.totalorder %s27, 1
      %s528 = scalar_select %p527, %s27, 1
      %s529 = smul.addr %s528, 2
      %s530 = smul.addr %s529, 8
      %s531 = scalar_lea.vmem %s0, %s530
      %p532 = scmp.lt.s32.totalorder %s27, 1
      %s533 = scalar_select %p532, %s27, 1
      %s534 = smul.addr %s533, 2
      %s535 = smul.addr %s534, 8
      %s536 = scalar_lea.vmem %s1, %s535
      %p537 = scmp.lt.s32.totalorder %s27, 1
      %s538 = scalar_select %p537, %s27, 1
      %s539 = smul.addr %s538, 2
      %s540 = smul.addr %s539, 8
      %s541 = scalar_lea.vmem %s16, %s540
      %v543 = vld [vmem:[%s531] sm:$0xff]
      %v544 = vld [vmem:[%s531 + $0x8] sm:$0xff]
      %v545 = vld [vmem:[%s536] sm:$0xff]
      %v546 = vld [vmem:[%s536 + $0x8] sm:$0xff]
      %v547 = vld [vmem:[%s2] sm:$0x1]
      %v548 = vld [vmem:[%s3] sm:$0x1]
      %v549 = vld [vmem:[%s4] sm:$0x1]
      %v550 = vld [vmem:[%s5] sm:$0x1]
      %v551 = vld [vmem:[%s6] sm:$0xff]
      %v552 = vld [vmem:[%s6 + $0x8] sm:$0xff]
      %v553 = vld [vmem:[%s6 + $0x10] sm:$0xff]
      %v554 = vld [vmem:[%s6 + $0x18] sm:$0xff]
      %v555 = vld [vmem:[%s7] sm:$0xff]
      %v556 = vld [vmem:[%s7 + $0x8] sm:$0xff]
      %v557 = vld [vmem:[%s7 + $0x10] sm:$0xff]
      %v558 = vld [vmem:[%s7 + $0x18] sm:$0xff]
      %v559 = vld [vmem:[%s8] sm:$0xff]
      %v560 = vld [vmem:[%s8 + $0x8] sm:$0xff]
      %v561 = vld [vmem:[%s8 + $0x10] sm:$0xff]
      %v562 = vld [vmem:[%s8 + $0x18] sm:$0xff]
      %v563 = vld [vmem:[%s9] sm:$0x1]
      %vm564 = vcmask 261120
      %v565 = vsel %vm564, %v543, 0.0
      %566 = vadd.xlane.f32.xlu0 %v565
      %v567 = vpop.xlane.xlu0 %566
      %v568 = vsel %vm564, %v544, 0.0
      %569 = vadd.xlane.f32.xlu0 %v568
      %v570 = vpop.xlane.xlu0 %569
      %v571 = vrcp.pop 32.0
      %v572 = vmul.f32 32.0, %v571
      %v573 = vsub.f32 1.0, %v572
      %v574 = vmul.f32 %v571, %v573
      %v575 = vadd.f32 %v571, %v574
      %vm576 = vweird.f32 %v571
      %v577 = vsel %vm576, %v571, %v575
      %v578 = vmul.f32 %v567, %v577
      %v579 = vmul.f32 %v570, %v577
      %v580 = vsub.f32 %v543, %v578
      %v581 = vsub.f32 %v544, %v579
      %v582 = vmul.f32 %v580, %v580
      %v583 = vmul.f32 %v581, %v581
      %v584 = vsel %vm564, %v582, 0.0
      %585 = vadd.xlane.f32.xlu0 %v584
      %v586 = vpop.xlane.xlu0 %585
      %v587 = vsel %vm564, %v583, 0.0
      %588 = vadd.xlane.f32.xlu0 %v587
      %v589 = vpop.xlane.xlu0 %588
      %v590 = vmul.f32 %v586, %v577
      %v591 = vmul.f32 %v589, %v577
      %v592 = vadd.f32 %v590, 1e-05
      %v593 = vadd.f32 %v591, 1e-05
      %v594 = vrsqrt.pop %v592
      %v595 = vmul.f32 %v594, %v592
      %v596 = vmul.f32 %v595, %v594
      %v597 = vmul.f32 0.5, %v596
      %v598 = vsub.f32 1.5, %v597
      %v599 = vmul.f32 %v594, %v598
      %vm600 = vweird.f32 %v592
      %vm601 = vweird.f32 %v594
      %vm602 = vmor %vm600, %vm601
      %v603 = vsel %vm602, %v594, %v599
      %v604 = vrsqrt.pop %v593
      %v605 = vmul.f32 %v604, %v593
      %v606 = vmul.f32 %v605, %v604
      %v607 = vmul.f32 0.5, %v606
      %v608 = vsub.f32 1.5, %v607
      %v609 = vmul.f32 %v604, %v608
      %vm610 = vweird.f32 %v593
      %vm611 = vweird.f32 %v604
      %vm612 = vmor %vm610, %vm611
      %v613 = vsel %vm612, %v604, %v609
      %v614 = vmul.f32 %v580, %v603
      %v615 = vmul.f32 %v581, %v613
      %v617 = vperm.slane %v547, 0
      %v619 = vmul.f32 %v614, %v617
      %v620 = vmul.f32 %v615, %v617
      %v622 = vperm.slane %v548, 0
      %v624 = vadd.f32 %v619, %v622
      %v625 = vadd.f32 %v620, %v622
      %v626 = vsel %vm564, %v545, 0.0
      %627 = vadd.xlane.f32.xlu0 %v626
      %v628 = vpop.xlane.xlu0 %627
      %v629 = vsel %vm564, %v546, 0.0
      %630 = vadd.xlane.f32.xlu0 %v629
      %v631 = vpop.xlane.xlu0 %630
      %v632 = vmul.f32 %v628, %v577
      %v633 = vmul.f32 %v631, %v577
      %v634 = vsub.f32 %v545, %v632
      %v635 = vsub.f32 %v546, %v633
      %v636 = vmul.f32 %v634, %v634
      %v637 = vmul.f32 %v635, %v635
      %v638 = vsel %vm564, %v636, 0.0
      %639 = vadd.xlane.f32.xlu0 %v638
      %v640 = vpop.xlane.xlu0 %639
      %v641 = vsel %vm564, %v637, 0.0
      %642 = vadd.xlane.f32.xlu0 %v641
      %v643 = vpop.xlane.xlu0 %642
      %v644 = vmul.f32 %v640, %v577
      %v645 = vmul.f32 %v643, %v577
      %v646 = vadd.f32 %v644, 1e-05
      %v647 = vadd.f32 %v645, 1e-05
      %v648 = vrsqrt.pop %v646
      %v649 = vmul.f32 %v648, %v646
      %v650 = vmul.f32 %v649, %v648
      %v651 = vmul.f32 0.5, %v650
      %v652 = vsub.f32 1.5, %v651
      %v653 = vmul.f32 %v648, %v652
      %vm654 = vweird.f32 %v646
      %vm655 = vweird.f32 %v648
      %vm656 = vmor %vm654, %vm655
      %v657 = vsel %vm656, %v648, %v653
      %v658 = vrsqrt.pop %v647
      %v659 = vmul.f32 %v658, %v647
      %v660 = vmul.f32 %v659, %v658
      %v661 = vmul.f32 0.5, %v660
      %v662 = vsub.f32 1.5, %v661
      %v663 = vmul.f32 %v658, %v662
      %vm664 = vweird.f32 %v647
      %vm665 = vweird.f32 %v658
      %vm666 = vmor %vm664, %vm665
      %v667 = vsel %vm666, %v658, %v663
      %v668 = vmul.f32 %v634, %v657
      %v669 = vmul.f32 %v635, %v667
      %v671 = vperm.slane %v549, 0
      %v673 = vmul.f32 %v668, %v671
      %v674 = vmul.f32 %v669, %v671
      %v676 = vperm.slane %v550, 0
      %v678 = vadd.f32 %v673, %v676
      %v679 = vadd.f32 %v674, %v676
      %v680 = vpack.c.bf16 %v625, %v624
      %v681 = vpack.c.bf16 %v552, %v551
      %v682 = vpack.c.bf16 %v554, %v553
      %v684 = vsel %vm564, %v680, 0
      %686 = vmatpush.bf16.msra.mxu0 0
      %687 = vmatpush.bf16.msra.mxu0 0
      %688 = vmatpush.bf16.msra.mxu0 0
      %689 = vmatpush.bf16.msra.mxu0 0
      %690 = vmatpush.bf16.msra.mxu0 0
      %691 = vmatpush.bf16.msra.mxu0 0
      %692 = vmatpush.bf16.msra.mxu0 %v682
      %693 = vmatpush.bf16.msra.mxu0 %v681
      %694 = vmatmul.bf16.gmra.mxu0 %v684
      %v695 = vpop.f32.mrf.mxu0
      %v696 = vadd.f32 0.0, %v695
      %v697 = vpop.f32.mrf.mxu0
      %v698 = vadd.f32 0.0, %v697
      %699 = vdwg.mxu0
      %v700 = vpack.c.bf16 %v679, %v678
      %v701 = vpack.c.bf16 %v556, %v555
      %v702 = vpack.c.bf16 %v558, %v557
      %v704 = vsel %vm564, %v700, 0
      %706 = vmatpush.bf16.msra.mxu0 0
      %707 = vmatpush.bf16.msra.mxu0 0
      %708 = vmatpush.bf16.msra.mxu0 0
      %709 = vmatpush.bf16.msra.mxu0 0
      %710 = vmatpush.bf16.msra.mxu0 0
      %711 = vmatpush.bf16.msra.mxu0 0
      %712 = vmatpush.bf16.msra.mxu0 %v702
      %713 = vmatpush.bf16.msra.mxu0 %v701
      %714 = vmatmul.bf16.gmra.mxu0 %v704
      %v715 = vpop.f32.mrf.mxu0
      %v716 = vadd.f32 0.0, %v715
      %v717 = vpop.f32.mrf.mxu0
      %v718 = vadd.f32 0.0, %v717
      %719 = vdwg.mxu0
      %vm720 = vcmask 130048
      %v722 = vsel %vm720, %v696, 0
      %v725 = vsel %vm720, %v698, 0
      %v728 = vsel %vm720, %v716, 0
      %v731 = vsel %vm720, %v718, 0
      %733 = vmatpush.xpose.msra.mxu0 0.0
      %734 = vmatpush.xpose.msra.mxu0 0.0
      %735 = vmatpush.xpose.msra.mxu0 0.0
      %736 = vmatpush.xpose.msra.mxu0 0.0
      %737 = vmatpush.xpose.msra.mxu0 0.0
      %738 = vmatpush.xpose.msra.mxu0 0.0
      %739 = vmatpush.xpose.msra.mxu0 0.0
      %740 = vmatpush.xpose.msra.mxu0 0.0
      %741 = vmatpush.xpose.msra.mxu0 0.0
      %742 = vmatpush.xpose.msra.mxu0 0.0
      %743 = vmatpush.xpose.msra.mxu0 0.0
      %744 = vmatpush.xpose.msra.mxu0 0.0
      %745 = vmatpush.xpose.msra.mxu0 0.0
      %746 = vmatpush.xpose.msra.mxu0 0.0
      %747 = vmatpush.xpose.msra.mxu0 %v731
      %748 = vmatpush.xpose.msra.mxu0 %v728
      %749 = vmatmul.f32.gmra.mxu0 %v722
      %v750 = vpop.f32.mrf.mxu0
      %v751 = vadd.f32 0.0, %v750
      %752 = vmatmul.f32.gmra.mxu0 %v725
      %v753 = vpop.f32.mrf.mxu0
      %v754 = vadd.f32 0.0, %v753
      %755 = vdwg.mxu0
      %v756 = vmul.f32 %v751, 0.25
      %v757 = vmul.f32 %v754, 0.25
      %v758 = vsel %vm720, %v756, -inf
      %759 = vmax.xlane.f32.xlu0 %v758
      %v760 = vpop.xlane.xlu0 %759
      %v761 = vsel %vm720, %v757, -inf
      %762 = vmax.xlane.f32.xlu0 %v761
      %v763 = vpop.xlane.xlu0 %762
      %v764 = vsub.f32 %v756, %v760
      %v765 = vsub.f32 %v757, %v763
      %v766 = vmul.f32 %v764, 1.442695
      %v767 = vpow.pop %v766
      %v768 = vmul.f32 %v765, 1.442695
      %v769 = vpow.pop %v768
      %v770 = vsel %vm720, %v767, 0.0
      %771 = vadd.xlane.f32.xlu0 %v770
      %v772 = vpop.xlane.xlu0 %771
      %v773 = vsel %vm720, %v769, 0.0
      %774 = vadd.xlane.f32.xlu0 %v773
      %v775 = vpop.xlane.xlu0 %774
      %v776 = vrcp.pop %v772
      %v777 = vrcp.pop %v775
      %v778 = vmul.f32 %v767, %v776
      %v779 = vmul.f32 %v769, %v777
      %780 = vrot.lane.b32.xlu0 %v716, 96
      %v781 = vpop.permute.xlu0 %780
      %782 = vrot.lane.b32.xlu0 %v718, 96
      %v783 = vpop.permute.xlu0 %782
      %v787 = vsel %vm720, %v778, 0
      %v790 = vsel %vm720, %v779, 0
      %792 = vmatpush.msra.mxu0 0.0
      %793 = vmatpush.msra.mxu0 0.0
      %794 = vmatpush.msra.mxu0 0.0
      %795 = vmatpush.msra.mxu0 0.0
      %796 = vmatpush.msra.mxu0 0.0
      %797 = vmatpush.msra.mxu0 0.0
      %798 = vmatpush.msra.mxu0 0.0
      %799 = vmatpush.msra.mxu0 0.0
      %800 = vmatpush.msra.mxu0 0.0
      %801 = vmatpush.msra.mxu0 0.0
      %802 = vmatpush.msra.mxu0 0.0
      %803 = vmatpush.msra.mxu0 0.0
      %804 = vmatpush.msra.mxu0 0.0
      %805 = vmatpush.msra.mxu0 0.0
      %806 = vmatpush.msra.mxu0 %v783
      %807 = vmatpush.msra.mxu0 %v781
      %808 = vmatmul.f32.gmra.mxu0 %v787
      %v809 = vpop.f32.mrf.mxu0
      %v810 = vadd.f32 0.0, %v809
      %811 = vmatmul.f32.gmra.mxu0 %v790
      %v812 = vpop.f32.mrf.mxu0
      %v813 = vadd.f32 0.0, %v812
      %814 = vdwg.mxu0
      %815 = vrot.lane.b32.xlu0 %v696, 112
      %v816 = vpop.permute.xlu0 %815
      %817 = vrot.lane.b32.xlu0 %v698, 112
      %v818 = vpop.permute.xlu0 %817
      %819 = vrot.lane.b32.xlu0 %v716, 112
      %v820 = vpop.permute.xlu0 %819
      %821 = vrot.lane.b32.xlu0 %v718, 112
      %v822 = vpop.permute.xlu0 %821
      %v823 = vsel %vm720, %v816, 0
      %v825 = vsel %vm720, %v818, 0
      %v827 = vsel %vm720, %v820, 0
      %v829 = vsel %vm720, %v822, 0
      %831 = vmatpush.xpose.msra.mxu0 0.0
      %832 = vmatpush.xpose.msra.mxu0 0.0
      %833 = vmatpush.xpose.msra.mxu0 0.0
      %834 = vmatpush.xpose.msra.mxu0 0.0
      %835 = vmatpush.xpose.msra.mxu0 0.0
      %836 = vmatpush.xpose.msra.mxu0 0.0
      %837 = vmatpush.xpose.msra.mxu0 0.0
      %838 = vmatpush.xpose.msra.mxu0 0.0
      %839 = vmatpush.xpose.msra.mxu0 0.0
      %840 = vmatpush.xpose.msra.mxu0 0.0
      %841 = vmatpush.xpose.msra.mxu0 0.0
      %842 = vmatpush.xpose.msra.mxu0 0.0
      %843 = vmatpush.xpose.msra.mxu0 0.0
      %844 = vmatpush.xpose.msra.mxu0 0.0
      %845 = vmatpush.xpose.msra.mxu0 %v829
      %846 = vmatpush.xpose.msra.mxu0 %v827
      %847 = vmatmul.f32.gmra.mxu0 %v823
      %v848 = vpop.f32.mrf.mxu0
      %v849 = vadd.f32 0.0, %v848
      %850 = vmatmul.f32.gmra.mxu0 %v825
      %v851 = vpop.f32.mrf.mxu0
      %v852 = vadd.f32 0.0, %v851
      %853 = vdwg.mxu0
      %v854 = vmul.f32 %v849, 0.25
      %v855 = vmul.f32 %v852, 0.25
      %v856 = vsel %vm720, %v854, -inf
      %857 = vmax.xlane.f32.xlu0 %v856
      %v858 = vpop.xlane.xlu0 %857
      %v859 = vsel %vm720, %v855, -inf
      %860 = vmax.xlane.f32.xlu0 %v859
      %v861 = vpop.xlane.xlu0 %860
      %v862 = vsub.f32 %v854, %v858
      %v863 = vsub.f32 %v855, %v861
      %v864 = vmul.f32 %v862, 1.442695
      %v865 = vpow.pop %v864
      %v866 = vmul.f32 %v863, 1.442695
      %v867 = vpow.pop %v866
      %v868 = vsel %vm720, %v865, 0.0
      %869 = vadd.xlane.f32.xlu0 %v868
      %v870 = vpop.xlane.xlu0 %869
      %v871 = vsel %vm720, %v867, 0.0
      %872 = vadd.xlane.f32.xlu0 %v871
      %v873 = vpop.xlane.xlu0 %872
      %v874 = vrcp.pop %v870
      %v875 = vrcp.pop %v873
      %v876 = vmul.f32 %v865, %v874
      %v877 = vmul.f32 %v867, %v875
      %878 = vrot.lane.b32.xlu0 %v716, 80
      %v879 = vpop.permute.xlu0 %878
      %880 = vrot.lane.b32.xlu0 %v718, 80
      %v881 = vpop.permute.xlu0 %880
      %v885 = vsel %vm720, %v876, 0
      %v888 = vsel %vm720, %v877, 0
      %890 = vmatpush.msra.mxu0 0.0
      %891 = vmatpush.msra.mxu0 0.0
      %892 = vmatpush.msra.mxu0 0.0
      %893 = vmatpush.msra.mxu0 0.0
      %894 = vmatpush.msra.mxu0 0.0
      %895 = vmatpush.msra.mxu0 0.0
      %896 = vmatpush.msra.mxu0 0.0
      %897 = vmatpush.msra.mxu0 0.0
      %898 = vmatpush.msra.mxu0 0.0
      %899 = vmatpush.msra.mxu0 0.0
      %900 = vmatpush.msra.mxu0 0.0
      %901 = vmatpush.msra.mxu0 0.0
      %902 = vmatpush.msra.mxu0 0.0
      %903 = vmatpush.msra.mxu0 0.0
      %904 = vmatpush.msra.mxu0 %v881
      %905 = vmatpush.msra.mxu0 %v879
      %906 = vmatmul.f32.gmra.mxu0 %v885
      %v907 = vpop.f32.mrf.mxu0
      %v908 = vadd.f32 0.0, %v907
      %909 = vmatmul.f32.gmra.mxu0 %v888
      %v910 = vpop.f32.mrf.mxu0
      %v911 = vadd.f32 0.0, %v910
      %912 = vdwg.mxu0
      %915 = vrot.lane.b32.xlu0 %v908, 16
      %v916 = vpop.permute.xlu0 %915
      %917 = vrot.lane.b32.xlu0 %v911, 16
      %v918 = vpop.permute.xlu0 %917
      %v921 = vsel %vm720, %v810, %v916
      %v922 = vsel %vm720, %v813, %v918
      %v923 = vpack.c.bf16 %v922, %v921
      %v924 = vpack.c.bf16 %v560, %v559
      %v925 = vpack.c.bf16 %v562, %v561
      %v927 = vperm.slane %v563, 0
      %v930 = vsel %vm564, %v923, 0
      %932 = vmatpush.bf16.msra.mxu0 0
      %933 = vmatpush.bf16.msra.mxu0 0
      %934 = vmatpush.bf16.msra.mxu0 0
      %935 = vmatpush.bf16.msra.mxu0 0
      %936 = vmatpush.bf16.msra.mxu0 0
      %937 = vmatpush.bf16.msra.mxu0 0
      %938 = vmatpush.bf16.msra.mxu0 %v925
      %939 = vmatpush.bf16.msra.mxu0 %v924
      %940 = vmatmul.bf16.gmra.mxu0 %v930
      %v941 = vpop.f32.mrf.mxu0
      %v942 = vadd.f32 %v927, %v941
      %v943 = vpop.f32.mrf.mxu0
      %v944 = vadd.f32 %v927, %v943
      %945 = vdwg.mxu0
      %v946 = vadd.f32 %v942, %v543
      %v947 = vadd.f32 %v944, %v544
      %v948 = vld [vmem:[%s10] sm:$0x1]
      %v949 = vld [vmem:[%s11] sm:$0x1]
      %v950 = vld [vmem:[%s12] sm:$0xff]
      %v951 = vld [vmem:[%s12 + $0x8] sm:$0xff]
      %v952 = vld [vmem:[%s12 + $0x10] sm:$0xff]
      %v953 = vld [vmem:[%s12 + $0x18] sm:$0xff]
      %v954 = vld [vmem:[%s12 + $0x20] sm:$0xff]
      %v955 = vld [vmem:[%s12 + $0x28] sm:$0xff]
      %v956 = vld [vmem:[%s12 + $0x30] sm:$0xff]
      %v957 = vld [vmem:[%s12 + $0x38] sm:$0xff]
      %v958 = vld [vmem:[%s13] sm:$0x3]
      %v959 = vld [vmem:[%s14] sm:$0xff]
      %v960 = vld [vmem:[%s14 + $0x8] sm:$0xff]
      %v961 = vld [vmem:[%s14 + $0x10] sm:$0xff]
      %v962 = vld [vmem:[%s14 + $0x18] sm:$0xff]
      %v963 = vld [vmem:[%s14 + $0x20] sm:$0xff]
      %v964 = vld [vmem:[%s14 + $0x28] sm:$0xff]
      %v965 = vld [vmem:[%s14 + $0x30] sm:$0xff]
      %v966 = vld [vmem:[%s14 + $0x38] sm:$0xff]
      %v967 = vld [vmem:[%s14 + $0x40] sm:$0xff]
      %v968 = vld [vmem:[%s14 + $0x48] sm:$0xff]
      %v969 = vld [vmem:[%s14 + $0x50] sm:$0xff]
      %v970 = vld [vmem:[%s14 + $0x58] sm:$0xff]
      %v971 = vld [vmem:[%s14 + $0x60] sm:$0xff]
      %v972 = vld [vmem:[%s14 + $0x68] sm:$0xff]
      %v973 = vld [vmem:[%s14 + $0x70] sm:$0xff]
      %v974 = vld [vmem:[%s14 + $0x78] sm:$0xff]
      %v975 = vld [vmem:[%s15] sm:$0x1]
      %v976 = vsel %vm564, %v946, 0.0
      %977 = vadd.xlane.f32.xlu0 %v976
      %v978 = vpop.xlane.xlu0 %977
      %v979 = vsel %vm564, %v947, 0.0
      %980 = vadd.xlane.f32.xlu0 %v979
      %v981 = vpop.xlane.xlu0 %980
      %v982 = vmul.f32 %v978, %v577
      %v983 = vmul.f32 %v981, %v577
      %v984 = vsub.f32 %v946, %v982
      %v985 = vsub.f32 %v947, %v983
      %v986 = vmul.f32 %v984, %v984
      %v987 = vmul.f32 %v985, %v985
      %v988 = vsel %vm564, %v986, 0.0
      %989 = vadd.xlane.f32.xlu0 %v988
      %v990 = vpop.xlane.xlu0 %989
      %v991 = vsel %vm564, %v987, 0.0
      %992 = vadd.xlane.f32.xlu0 %v991
      %v993 = vpop.xlane.xlu0 %992
      %v994 = vmul.f32 %v990, %v577
      %v995 = vmul.f32 %v993, %v577
      %v996 = vadd.f32 %v994, 1e-05
      %v997 = vadd.f32 %v995, 1e-05
      %v998 = vrsqrt.pop %v996
      %v999 = vmul.f32 %v998, %v996
      %v1000 = vmul.f32 %v999, %v998
      %v1001 = vmul.f32 0.5, %v1000
      %v1002 = vsub.f32 1.5, %v1001
      %v1003 = vmul.f32 %v998, %v1002
      %vm1004 = vweird.f32 %v996
      %vm1005 = vweird.f32 %v998
      %vm1006 = vmor %vm1004, %vm1005
      %v1007 = vsel %vm1006, %v998, %v1003
      %v1008 = vrsqrt.pop %v997
      %v1009 = vmul.f32 %v1008, %v997
      %v1010 = vmul.f32 %v1009, %v1008
      %v1011 = vmul.f32 0.5, %v1010
      %v1012 = vsub.f32 1.5, %v1011
      %v1013 = vmul.f32 %v1008, %v1012
      %vm1014 = vweird.f32 %v997
      %vm1015 = vweird.f32 %v1008
      %vm1016 = vmor %vm1014, %vm1015
      %v1017 = vsel %vm1016, %v1008, %v1013
      %v1018 = vmul.f32 %v984, %v1007
      %v1019 = vmul.f32 %v985, %v1017
      %v1021 = vperm.slane %v948, 0
      %v1023 = vmul.f32 %v1018, %v1021
      %v1024 = vmul.f32 %v1019, %v1021
      %v1026 = vperm.slane %v949, 0
      %v1028 = vadd.f32 %v1023, %v1026
      %v1029 = vadd.f32 %v1024, %v1026
      %v1030 = vpack.c.bf16 %v1029, %v1028
      %v1031 = vpack.c.bf16 %v952, %v950
      %v1032 = vpack.c.bf16 %v953, %v951
      %v1033 = vpack.c.bf16 %v956, %v954
      %v1034 = vpack.c.bf16 %v957, %v955
      %v1036 = vperm.slane %v958, 0
      %v1037 = vperm.slane %v958, 1
      %v1041 = vsel %vm564, %v1030, 0
      %1043 = vmatpush.bf16.msra.mxu0 0
      %1044 = vmatpush.bf16.msra.mxu0 0
      %1045 = vmatpush.bf16.msra.mxu0 0
      %1046 = vmatpush.bf16.msra.mxu0 0
      %1047 = vmatpush.bf16.msra.mxu0 0
      %1048 = vmatpush.bf16.msra.mxu0 0
      %1049 = vmatpush.bf16.msra.mxu0 %v1033
      %1050 = vmatpush.bf16.msra.mxu0 %v1031
      %1051 = vmatmul.bf16.gmra.mxu0 %v1041
      %v1052 = vpop.f32.mrf.mxu0
      %v1053 = vadd.f32 %v1036, %v1052
      %v1054 = vpop.f32.mrf.mxu0
      %v1055 = vadd.f32 %v1036, %v1054
      %1056 = vdwg.mxu0
      %1057 = vmatpush.bf16.msra.mxu0 0
      %1058 = vmatpush.bf16.msra.mxu0 0
      %1059 = vmatpush.bf16.msra.mxu0 0
      %1060 = vmatpush.bf16.msra.mxu0 0
      %1061 = vmatpush.bf16.msra.mxu0 0
      %1062 = vmatpush.bf16.msra.mxu0 0
      %1063 = vmatpush.bf16.msra.mxu0 %v1034
      %1064 = vmatpush.bf16.msra.mxu0 %v1032
      %1065 = vmatmul.bf16.gmra.mxu0 %v1041
      %v1066 = vpop.f32.mrf.mxu0
      %v1067 = vadd.f32 %v1037, %v1066
      %v1068 = vpop.f32.mrf.mxu0
      %v1069 = vadd.f32 %v1037, %v1068
      %1070 = vdwg.mxu0
      %v1071 = vmul.f32 %v1067, 0.70710677
      %v1072 = vmul.f32 %v1069, 0.70710677
      %v1073 = vand.u32 2147483647, %v1071
      %v1074 = vand.u32 2147483647, %v1072
      %v1075 = vmul.f32 %v1073, 0.3275911
      %v1076 = vmul.f32 %v1074, 0.3275911
      %v1077 = vadd.f32 %v1075, 1.0
      %v1078 = vadd.f32 %v1076, 1.0
      %v1079 = vrcp.pop %v1077
      %v1080 = vmul.f32 %v1077, %v1079
      %v1081 = vsub.f32 1.0, %v1080
      %v1082 = vmul.f32 %v1079, %v1081
      %v1083 = vadd.f32 %v1079, %v1082
      %vm1084 = vweird.f32 %v1077
      %vm1085 = vweird.f32 %v1079
      %vm1086 = vmor %vm1084, %vm1085
      %v1087 = vsel %vm1086, %v1079, %v1083
      %v1088 = vand.u32 2147483647, %v1077
      %vm1089 = vcmp.eq.f32.partialorder %v1088, 8.507059e+37
      %v1090 = vand.u32 %v1077, 2147483648
      %v1091 = vor.u32 1.1754944e-38, %v1090
      %v1092 = vsel %vm1089, %v1091, %v1087
      %v1093 = vmul.f32 1.0, %v1092
      %v1094 = vrcp.pop %v1078
      %v1095 = vmul.f32 %v1078, %v1094
      %v1096 = vsub.f32 1.0, %v1095
      %v1097 = vmul.f32 %v1094, %v1096
      %v1098 = vadd.f32 %v1094, %v1097
      %vm1099 = vweird.f32 %v1078
      %vm1100 = vweird.f32 %v1094
      %vm1101 = vmor %vm1099, %vm1100
      %v1102 = vsel %vm1101, %v1094, %v1098
      %v1103 = vand.u32 2147483647, %v1078
      %vm1104 = vcmp.eq.f32.partialorder %v1103, 8.507059e+37
      %v1105 = vand.u32 %v1078, 2147483648
      %v1106 = vor.u32 1.1754944e-38, %v1105
      %v1107 = vsel %vm1104, %v1106, %v1102
      %v1108 = vmul.f32 1.0, %v1107
      %v1109 = vmul.f32 %v1093, 1.0614054
      %v1110 = vmul.f32 %v1108, 1.0614054
      %v1111 = vadd.f32 %v1109, -1.4531521
      %v1112 = vadd.f32 %v1110, -1.4531521
      %v1113 = vmul.f32 %v1093, %v1111
      %v1114 = vmul.f32 %v1108, %v1112
      %v1115 = vadd.f32 %v1113, 1.4214138
      %v1116 = vadd.f32 %v1114, 1.4214138
      %v1117 = vmul.f32 %v1093, %v1115
      %v1118 = vmul.f32 %v1108, %v1116
      %v1119 = vadd.f32 %v1117, -0.28449672
      %v1120 = vadd.f32 %v1118, -0.28449672
      %v1121 = vmul.f32 %v1093, %v1119
      %v1122 = vmul.f32 %v1108, %v1120
      %v1123 = vadd.f32 %v1121, 0.2548296
      %v1124 = vadd.f32 %v1122, 0.2548296
      %v1125 = vmul.f32 %v1093, %v1123
      %v1126 = vmul.f32 %v1108, %v1124
      %v1127 = vsub.f32 0.0, %v1073
      %v1128 = vsub.f32 0.0, %v1074
      %v1129 = vmul.f32 %v1127, %v1073
      %v1130 = vmul.f32 %v1128, %v1074
      %v1131 = vmul.f32 %v1129, 1.442695
      %v1132 = vpow.pop %v1131
      %v1133 = vmul.f32 %v1130, 1.442695
      %v1134 = vpow.pop %v1133
      %v1135 = vmul.f32 %v1125, %v1132
      %v1136 = vmul.f32 %v1126, %v1134
      %v1137 = vsub.f32 1.0, %v1135
      %v1138 = vsub.f32 1.0, %v1136
      %vm1139 = vcmp.lt.f32.partialorder %v1071, 0.0
      %vm1140 = vcmp.lt.f32.partialorder %v1072, 0.0
      %v1141 = vsub.f32 0.0, %v1137
      %v1142 = vsub.f32 0.0, %v1138
      %v1143 = vsel %vm1139, %v1141, %v1137
      %v1144 = vsel %vm1140, %v1142, %v1138
      %v1145 = vmul.f32 %v1067, 0.5
      %v1146 = vmul.f32 %v1069, 0.5
      %v1147 = vadd.f32 %v1143, 1.0
      %v1148 = vadd.f32 %v1144, 1.0
      %v1149 = vmul.f32 %v1145, %v1147
      %v1150 = vmul.f32 %v1146, %v1148
      %v1151 = vmul.f32 %v1053, %v1149
      %v1152 = vmul.f32 %v1055, %v1150
      %v1153 = vpack.c.bf16 %v1152, %v1151
      %v1154 = vpack.c.bf16 %v960, %v959
      %v1155 = vpack.c.bf16 %v962, %v961
      %v1156 = vpack.c.bf16 %v964, %v963
      %v1157 = vpack.c.bf16 %v966, %v965
      %v1158 = vpack.c.bf16 %v968, %v967
      %v1159 = vpack.c.bf16 %v970, %v969
      %v1160 = vpack.c.bf16 %v972, %v971
      %v1161 = vpack.c.bf16 %v974, %v973
      %1162 = vmatpush.bf16.msra.mxu0 %v1161
      %1163 = vmatpush.bf16.msra.mxu0 %v1160
      %1164 = vmatpush.bf16.msra.mxu0 %v1159
      %1165 = vmatpush.bf16.msra.mxu0 %v1158
      %1166 = vmatpush.bf16.msra.mxu0 %v1157
      %1167 = vmatpush.bf16.msra.mxu0 %v1156
      %1168 = vmatpush.bf16.msra.mxu0 %v1155
      %1169 = vmatpush.bf16.msra.mxu0 %v1154
      %1170 = vmatmul.bf16.gmra.mxu0 %v1153
      %v1171 = vpop.f32.mrf.mxu0
      %v1172 = vadd.f32 0.0, %v1171
      %v1173 = vpop.f32.mrf.mxu0
      %v1174 = vadd.f32 0.0, %v1173
      %1175 = vdwg.mxu0
      %v1176 = vadd.f32 %v946, %v1172
      %v1177 = vadd.f32 %v947, %v1174
      %v1179 = vperm.slane %v975, 0
      %v1181 = vadd.f32 %v1176, %v1179
      %v1182 = vadd.f32 %v1177, %v1179
      %1183 = vst.msk [vmem:[%s541] sm:$0xff] %vm564, %v1181
      %1184 = vst.msk [vmem:[%s541 + $0x8] sm:$0xff] %vm564, %v1182
      %p1185 = scmp.lt.s32.totalorder %s27, 1
      %s1186 = scalar_select %p1185, %s27, 1
      %s1187 = smul.addr %s1186, 2
      %s1188 = smul.addr %s1187, 8
      %s1189 = scalar_lea.vmem %s16, %s1188
      // Predicated region
      $region85: #{perceiver_io_forward.10} parent=83 // pred_check
        %p1190 = pneg %p391
      $region86: #{perceiver_io_forward.10} parent=83 // pred_check_branch
        %1192 = sbr.rel (%p1190) target = $region88
      $region87: #{perceiver_io_forward.10} parent=83 // pred_region
        _
      $region88: #{perceiver_io_forward.10} parent=83 // pred_fallthru
        _
    $region84: #{perceiver_io_forward.10} parent=5 // pred_fallthru
      _
    %p1193 = scmp.le.s32.totalorder 2, %s22
    // Predicated region
    $region89: #{perceiver_io_forward.10} parent=5 // pred_check
      %p1194 = pneg %p1193
    $region90: #{perceiver_io_forward.10} parent=5 // pred_check_branch
      %1196 = sbr.rel (%p1194) target = $region92
    $region91: #{perceiver_io_forward.10} parent=5 // pred_region
      %s1197 = ssub.s32 %s22, 2
      // Predicated region
      $region93: #{perceiver_io_forward.10} parent=91 // pred_check
        %p1198 = pneg %p397
      $region94: #{perceiver_io_forward.10} parent=91 // pred_check_branch
        %1200 = sbr.rel (%p1198) target = $region96
      $region95: #{perceiver_io_forward.10} parent=91 // pred_region
        %p1201 = scmp.lt.s32.totalorder %s28, 1
        %s1202 = scalar_select %p1201, %s28, 1
        %s1203 = smul.addr %s1202, 2
        %s1204 = smul.addr %s1203, 8
        %s1205 = scalar_lea.vmem %s16, %s1204
      $region96: #{perceiver_io_forward.10} parent=91 // pred_fallthru
        _
    $region92: #{perceiver_io_forward.10} parent=5 // pred_fallthru
      _
  $region6: #{perceiver_io_forward.10} parent=0 // loop_footer
    %s26 = sadd.s32 1, %s22
  $region7: #{perceiver_io_forward.10} parent=0 // loop_footer_branch
    %21 = sbr.rel target = $region3
  $region8: #{perceiver_io_forward.10} parent=0 // loop_exit
    _

// kernel: perceiver_io_forward.11
$region0: #{perceiver_io_forward.11}
  #allocation0 [shape = 'u32[]', space=smem, size = 0x4, offset = 0x4, fixed_abs, tag = 'smem constant byte address 0x4 - core index']
  #allocation1 [shape = 'u32[72,128]{1,0:T(1,128)}', space=vmem, size = 0x9000, scoped, tag = 'internal scratch']
  %s0 = inlined_call_operand.vmem [shape: f32[2,85,16], index: 0, kind: input, shape index: {}]
  %s1 = inlined_call_operand.vmem [shape: f32[2,16,32], index: 1, kind: input, shape index: {}]
  %s2 = inlined_call_operand.vmem [shape: f32[1,16], index: 2, kind: input, shape index: {}]
  %s3 = inlined_call_operand.vmem [shape: f32[1,16], index: 3, kind: input, shape index: {}]
  %s4 = inlined_call_operand.vmem [shape: f32[1,32], index: 4, kind: input, shape index: {}]
  %s5 = inlined_call_operand.vmem [shape: f32[1,32], index: 5, kind: input, shape index: {}]
  %s6 = inlined_call_operand.vmem [shape: f32[16,16], index: 6, kind: input, shape index: {}]
  %s7 = inlined_call_operand.vmem [shape: f32[32,32], index: 7, kind: input, shape index: {}]
  %s8 = inlined_call_operand.vmem [shape: f32[16,16], index: 8, kind: input, shape index: {}]
  %s9 = inlined_call_operand.vmem [shape: f32[1,16], index: 9, kind: input, shape index: {}]
  %s10 = inlined_call_operand.vmem [shape: f32[3,8], index: 10, kind: input, shape index: {}]
  %s11 = inlined_call_operand.vmem [shape: f32[2,85,16], index: 11, kind: output, shape index: {0}]
  %s12 = inlined_call_operand.vmem [shape: f32[2,3,16], index: 12, kind: output, shape index: {1}]
  %s13 = inlined_call_operand.vmem [shape: f32[2,1,16], index: 13, kind: output, shape index: {2}]
  %14 = xla_tuple %s11, %s12, %s13
  %s15 = sld [smem:[#allocation0]]
  $region93: #{perceiver_io_forward.11} parent=0
    _
  %s17 = ssub.s32 1, %s15
  %s18 = scalar_select 0, %s17, %s15
  loop: start=0, step=1, limit=4
  $region2: #{perceiver_io_forward.11} parent=0 // loop_pre_header
    _
  $region3: #{perceiver_io_forward.11} parent=0 // loop_header
    %s20 = sphi 0, %s24
    %p21 = scmp.ge.s32.totalorder %s20, 4
    %s30 = sphi 0, %s32
    %s33 = sphi 0, %s30
    %s34 = sphi 0, %s33
    %s50 = sphi 0, %s34
    %s56 = sphi 0, %s58
    %s59 = sphi 0, %s56
    %s60 = sphi 0, %s59
    %s76 = sphi 0, %s60
    %s80 = sphi 0, %s80
    %s82 = sphi 0, %s80
    %s83 = sphi 0, %s82
    %s97 = sphi 0, %s83
    %s101 = sphi 0, %s101
    %s103 = sphi 0, %s101
    %s104 = sphi 0, %s103
    %s118 = sphi 0, %s104
    %s122 = sphi 0, %s122
    %s124 = sphi 0, %s122
    %s125 = sphi 0, %s124
    %s139 = sphi 0, %s125
    %s143 = sphi 0, %s143
    %s145 = sphi 0, %s143
    %s146 = sphi 0, %s145
    %s160 = sphi 0, %s146
    %s164 = sphi 0, %s164
    %s166 = sphi 0, %s164
    %s167 = sphi 0, %s166
    %s181 = sphi 0, %s167
    %s185 = sphi 0, %s185
    %s187 = sphi 0, %s185
    %s188 = sphi 0, %s187
    %s202 = sphi 0, %s188
    %s206 = sphi 0, %s206
    %s208 = sphi 0, %s206
    %s209 = sphi 0, %s208
    %s223 = sphi 0, %s209
    %s227 = sphi 0, %s227
    %s229 = sphi 0, %s227
    %s230 = sphi 0, %s229
    %s244 = sphi 0, %s230
    %s248 = sphi 0, %s248
    %s250 = sphi 0, %s248
    %s251 = sphi 0, %s250
    %s265 = sphi 0, %s251
    %s271 = sphi 0, %s273
    %s274 = sphi 0, %s271
    %s275 = sphi 0, %s274
    %s291 = sphi 0, %s275
    %s297 = sphi 0, %s299
    %s300 = sphi 0, %s297
    %s301 = sphi 0, %s300
    %s317 = sphi 0, %s301
    %s323 = sphi 0, %s325
    %s326 = sphi 0, %s323
    %s327 = sphi 0, %s326
    %s343 = sphi 0, %s327
  $region4: #{perceiver_io_forward.11} parent=0 // loop_header_branch
    %23 = sbr.rel (%p21) target = $region8
  $region5: #{perceiver_io_forward.11} parent=0 // loop_body
    %s25 = ssub.s32 %s20, 1
    %s26 = ssub.s32 %s20, 2
    %s27 = sadd.s32 %s20, 1
    %s28 = ssub.s32 %s20, %s27
    %p29 = scmp.eq.s32.totalorder %s28, 0
    %s31 = sadd.s32 %s30, 1
    %s32 = scalar_select %p29, %s30, %s31
    %p35 = pneg %p29
    %p36 = scmp.eq.s32.totalorder %s20, 1
    %p37 = por %p35, %p36
    %p38 = scmp.ne.s32.totalorder %s30, %s33
    %p39 = scmp.eq.s32.totalorder %s20, 0
    %p40 = por %p38, %p39
    %p41 = scmp.ne.s32.totalorder %s30, %s33
    %p42 = scmp.eq.s32.totalorder %s25, 1
    %p43 = por %p41, %p42
    %p44 = scmp.ne.s32.totalorder %s33, %s34
    %p45 = scmp.eq.s32.totalorder %s25, 0
    %p46 = por %p44, %p45
    %p47 = scmp.ne.s32.totalorder %s33, %s34
    %p48 = scmp.eq.s32.totalorder %s26, 1
    %p49 = por %p47, %p48
    %p51 = scmp.ne.s32.totalorder %s34, %s50
    %p52 = scmp.eq.s32.totalorder %s26, 0
    %p53 = por %p51, %p52
    %s54 = ssub.s32 %s20, %s27
    %p55 = scmp.eq.s32.totalorder %s54, 0
    %s57 = sadd.s32 %s56, 1
    %s58 = scalar_select %p55, %s56, %s57
    %p61 = pneg %p55
    %p62 = scmp.eq.s32.totalorder %s20, 1
    %p63 = por %p61, %p62
    %p64 = scmp.ne.s32.totalorder %s56, %s59
    %p65 = scmp.eq.s32.totalorder %s20, 0
    %p66 = por %p64, %p65
    %p67 = scmp.ne.s32.totalorder %s56, %s59
    %p68 = scmp.eq.s32.totalorder %s25, 1
    %p69 = por %p67, %p68
    %p70 = scmp.ne.s32.totalorder %s59, %s60
    %p71 = scmp.eq.s32.totalorder %s25, 0
    %p72 = por %p70, %p71
    %p73 = scmp.ne.s32.totalorder %s59, %s60
    %p74 = scmp.eq.s32.totalorder %s26, 1
    %p75 = por %p73, %p74
    %p77 = scmp.ne.s32.totalorder %s60, %s76
    %p78 = scmp.eq.s32.totalorder %s26, 0
    %p79 = por %p77, %p78
    %s81 = sadd.s32 %s80, 1
    %p84 = scmp.eq.s32.totalorder %s20, 1
    %p85 = scmp.ne.s32.totalorder %s80, %s82
    %p86 = scmp.eq.s32.totalorder %s20, 0
    %p87 = por %p85, %p86
    %p88 = scmp.ne.s32.totalorder %s80, %s82
    %p89 = scmp.eq.s32.totalorder %s25, 1
    %p90 = por %p88, %p89
    %p91 = scmp.ne.s32.totalorder %s82, %s83
    %p92 = scmp.eq.s32.totalorder %s25, 0
    %p93 = por %p91, %p92
    %p94 = scmp.ne.s32.totalorder %s82, %s83
    %p95 = scmp.eq.s32.totalorder %s26, 1
    %p96 = por %p94, %p95
    %p98 = scmp.ne.s32.totalorder %s83, %s97
    %p99 = scmp.eq.s32.totalorder %s26, 0
    %p100 = por %p98, %p99
    %s102 = sadd.s32 %s101, 1
    %p105 = scmp.eq.s32.totalorder %s20, 1
    %p106 = scmp.ne.s32.totalorder %s101, %s103
    %p107 = scmp.eq.s32.totalorder %s20, 0
    %p108 = por %p106, %p107
    %p109 = scmp.ne.s32.totalorder %s101, %s103
    %p110 = scmp.eq.s32.totalorder %s25, 1
    %p111 = por %p109, %p110
    %p112 = scmp.ne.s32.totalorder %s103, %s104
    %p113 = scmp.eq.s32.totalorder %s25, 0
    %p114 = por %p112, %p113
    %p115 = scmp.ne.s32.totalorder %s103, %s104
    %p116 = scmp.eq.s32.totalorder %s26, 1
    %p117 = por %p115, %p116
    %p119 = scmp.ne.s32.totalorder %s104, %s118
    %p120 = scmp.eq.s32.totalorder %s26, 0
    %p121 = por %p119, %p120
    %s123 = sadd.s32 %s122, 1
    %p126 = scmp.eq.s32.totalorder %s20, 1
    %p127 = scmp.ne.s32.totalorder %s122, %s124
    %p128 = scmp.eq.s32.totalorder %s20, 0
    %p129 = por %p127, %p128
    %p130 = scmp.ne.s32.totalorder %s122, %s124
    %p131 = scmp.eq.s32.totalorder %s25, 1
    %p132 = por %p130, %p131
    %p133 = scmp.ne.s32.totalorder %s124, %s125
    %p134 = scmp.eq.s32.totalorder %s25, 0
    %p135 = por %p133, %p134
    %p136 = scmp.ne.s32.totalorder %s124, %s125
    %p137 = scmp.eq.s32.totalorder %s26, 1
    %p138 = por %p136, %p137
    %p140 = scmp.ne.s32.totalorder %s125, %s139
    %p141 = scmp.eq.s32.totalorder %s26, 0
    %p142 = por %p140, %p141
    %s144 = sadd.s32 %s143, 1
    %p147 = scmp.eq.s32.totalorder %s20, 1
    %p148 = scmp.ne.s32.totalorder %s143, %s145
    %p149 = scmp.eq.s32.totalorder %s20, 0
    %p150 = por %p148, %p149
    %p151 = scmp.ne.s32.totalorder %s143, %s145
    %p152 = scmp.eq.s32.totalorder %s25, 1
    %p153 = por %p151, %p152
    %p154 = scmp.ne.s32.totalorder %s145, %s146
    %p155 = scmp.eq.s32.totalorder %s25, 0
    %p156 = por %p154, %p155
    %p157 = scmp.ne.s32.totalorder %s145, %s146
    %p158 = scmp.eq.s32.totalorder %s26, 1
    %p159 = por %p157, %p158
    %p161 = scmp.ne.s32.totalorder %s146, %s160
    %p162 = scmp.eq.s32.totalorder %s26, 0
    %p163 = por %p161, %p162
    %s165 = sadd.s32 %s164, 1
    %p168 = scmp.eq.s32.totalorder %s20, 1
    %p169 = scmp.ne.s32.totalorder %s164, %s166
    %p170 = scmp.eq.s32.totalorder %s20, 0
    %p171 = por %p169, %p170
    %p172 = scmp.ne.s32.totalorder %s164, %s166
    %p173 = scmp.eq.s32.totalorder %s25, 1
    %p174 = por %p172, %p173
    %p175 = scmp.ne.s32.totalorder %s166, %s167
    %p176 = scmp.eq.s32.totalorder %s25, 0
    %p177 = por %p175, %p176
    %p178 = scmp.ne.s32.totalorder %s166, %s167
    %p179 = scmp.eq.s32.totalorder %s26, 1
    %p180 = por %p178, %p179
    %p182 = scmp.ne.s32.totalorder %s167, %s181
    %p183 = scmp.eq.s32.totalorder %s26, 0
    %p184 = por %p182, %p183
    %s186 = sadd.s32 %s185, 1
    %p189 = scmp.eq.s32.totalorder %s20, 1
    %p190 = scmp.ne.s32.totalorder %s185, %s187
    %p191 = scmp.eq.s32.totalorder %s20, 0
    %p192 = por %p190, %p191
    %p193 = scmp.ne.s32.totalorder %s185, %s187
    %p194 = scmp.eq.s32.totalorder %s25, 1
    %p195 = por %p193, %p194
    %p196 = scmp.ne.s32.totalorder %s187, %s188
    %p197 = scmp.eq.s32.totalorder %s25, 0
    %p198 = por %p196, %p197
    %p199 = scmp.ne.s32.totalorder %s187, %s188
    %p200 = scmp.eq.s32.totalorder %s26, 1
    %p201 = por %p199, %p200
    %p203 = scmp.ne.s32.totalorder %s188, %s202
    %p204 = scmp.eq.s32.totalorder %s26, 0
    %p205 = por %p203, %p204
    %s207 = sadd.s32 %s206, 1
    %p210 = scmp.eq.s32.totalorder %s20, 1
    %p211 = scmp.ne.s32.totalorder %s206, %s208
    %p212 = scmp.eq.s32.totalorder %s20, 0
    %p213 = por %p211, %p212
    %p214 = scmp.ne.s32.totalorder %s206, %s208
    %p215 = scmp.eq.s32.totalorder %s25, 1
    %p216 = por %p214, %p215
    %p217 = scmp.ne.s32.totalorder %s208, %s209
    %p218 = scmp.eq.s32.totalorder %s25, 0
    %p219 = por %p217, %p218
    %p220 = scmp.ne.s32.totalorder %s208, %s209
    %p221 = scmp.eq.s32.totalorder %s26, 1
    %p222 = por %p220, %p221
    %p224 = scmp.ne.s32.totalorder %s209, %s223
    %p225 = scmp.eq.s32.totalorder %s26, 0
    %p226 = por %p224, %p225
    %s228 = sadd.s32 %s227, 1
    %p231 = scmp.eq.s32.totalorder %s20, 1
    %p232 = scmp.ne.s32.totalorder %s227, %s229
    %p233 = scmp.eq.s32.totalorder %s20, 0
    %p234 = por %p232, %p233
    %p235 = scmp.ne.s32.totalorder %s227, %s229
    %p236 = scmp.eq.s32.totalorder %s25, 1
    %p237 = por %p235, %p236
    %p238 = scmp.ne.s32.totalorder %s229, %s230
    %p239 = scmp.eq.s32.totalorder %s25, 0
    %p240 = por %p238, %p239
    %p241 = scmp.ne.s32.totalorder %s229, %s230
    %p242 = scmp.eq.s32.totalorder %s26, 1
    %p243 = por %p241, %p242
    %p245 = scmp.ne.s32.totalorder %s230, %s244
    %p246 = scmp.eq.s32.totalorder %s26, 0
    %p247 = por %p245, %p246
    %s249 = sadd.s32 %s248, 1
    %p252 = scmp.eq.s32.totalorder %s20, 1
    %p253 = scmp.ne.s32.totalorder %s248, %s250
    %p254 = scmp.eq.s32.totalorder %s20, 0
    %p255 = por %p253, %p254
    %p256 = scmp.ne.s32.totalorder %s248, %s250
    %p257 = scmp.eq.s32.totalorder %s25, 1
    %p258 = por %p256, %p257
    %p259 = scmp.ne.s32.totalorder %s250, %s251
    %p260 = scmp.eq.s32.totalorder %s25, 0
    %p261 = por %p259, %p260
    %p262 = scmp.ne.s32.totalorder %s250, %s251
    %p263 = scmp.eq.s32.totalorder %s26, 1
    %p264 = por %p262, %p263
    %p266 = scmp.ne.s32.totalorder %s251, %s265
    %p267 = scmp.eq.s32.totalorder %s26, 0
    %p268 = por %p266, %p267
    %s269 = ssub.s32 %s20, %s27
    %p270 = scmp.eq.s32.totalorder %s269, 0
    %s272 = sadd.s32 %s271, 1
    %s273 = scalar_select %p270, %s271, %s272
    %p276 = pneg %p270
    %p277 = scmp.eq.s32.totalorder %s20, 1
    %p278 = por %p276, %p277
    %p279 = scmp.ne.s32.totalorder %s271, %s274
    %p280 = scmp.eq.s32.totalorder %s20, 0
    %p281 = por %p279, %p280
    %p282 = scmp.ne.s32.totalorder %s271, %s274
    %p283 = scmp.eq.s32.totalorder %s25, 1
    %p284 = por %p282, %p283
    %p285 = scmp.ne.s32.totalorder %s274, %s275
    %p286 = scmp.eq.s32.totalorder %s25, 0
    %p287 = por %p285, %p286
    %p288 = scmp.ne.s32.totalorder %s274, %s275
    %p289 = scmp.eq.s32.totalorder %s26, 1
    %p290 = por %p288, %p289
    %p292 = scmp.ne.s32.totalorder %s275, %s291
    %p293 = scmp.eq.s32.totalorder %s26, 0
    %p294 = por %p292, %p293
    %s295 = ssub.s32 %s20, %s27
    %p296 = scmp.eq.s32.totalorder %s295, 0
    %s298 = sadd.s32 %s297, 1
    %s299 = scalar_select %p296, %s297, %s298
    %p302 = pneg %p296
    %p303 = scmp.eq.s32.totalorder %s20, 1
    %p304 = por %p302, %p303
    %p305 = scmp.ne.s32.totalorder %s297, %s300
    %p306 = scmp.eq.s32.totalorder %s20, 0
    %p307 = por %p305, %p306
    %p308 = scmp.ne.s32.totalorder %s297, %s300
    %p309 = scmp.eq.s32.totalorder %s25, 1
    %p310 = por %p308, %p309
    %p311 = scmp.ne.s32.totalorder %s300, %s301
    %p312 = scmp.eq.s32.totalorder %s25, 0
    %p313 = por %p311, %p312
    %p314 = scmp.ne.s32.totalorder %s300, %s301
    %p315 = scmp.eq.s32.totalorder %s26, 1
    %p316 = por %p314, %p315
    %p318 = scmp.ne.s32.totalorder %s301, %s317
    %p319 = scmp.eq.s32.totalorder %s26, 0
    %p320 = por %p318, %p319
    %s321 = ssub.s32 %s20, %s27
    %p322 = scmp.eq.s32.totalorder %s321, 0
    %s324 = sadd.s32 %s323, 1
    %s325 = scalar_select %p322, %s323, %s324
    %p328 = pneg %p322
    %p329 = scmp.eq.s32.totalorder %s20, 1
    %p330 = por %p328, %p329
    %p331 = scmp.ne.s32.totalorder %s323, %s326
    %p332 = scmp.eq.s32.totalorder %s20, 0
    %p333 = por %p331, %p332
    %p334 = scmp.ne.s32.totalorder %s323, %s326
    %p335 = scmp.eq.s32.totalorder %s25, 1
    %p336 = por %p334, %p335
    %p337 = scmp.ne.s32.totalorder %s326, %s327
    %p338 = scmp.eq.s32.totalorder %s25, 0
    %p339 = por %p337, %p338
    %p340 = scmp.ne.s32.totalorder %s326, %s327
    %p341 = scmp.eq.s32.totalorder %s26, 1
    %p342 = por %p340, %p341
    %p344 = scmp.ne.s32.totalorder %s327, %s343
    %p345 = scmp.eq.s32.totalorder %s26, 0
    %p346 = por %p344, %p345
    %p347 = scmp.le.s32.totalorder 1, %s20
    %p348 = scmp.lt.s32.totalorder %s20, 3
    %p349 = pnand %p347, %p348
    %p350 = pneg %p349
    // Predicated region
    $region9: #{perceiver_io_forward.11} parent=5 // pred_check
      _
    $region10: #{perceiver_io_forward.11} parent=5 // pred_check_branch
      %352 = sbr.rel (%p349) target = $region12
    $region11: #{perceiver_io_forward.11} parent=5 // pred_region
      %s353 = ssub.s32 %s20, 1
      // Predicated region
      $region13: #{perceiver_io_forward.11} parent=11 // pred_check
        %p354 = pneg %p93
      $region14: #{perceiver_io_forward.11} parent=11 // pred_check_branch
        %356 = sbr.rel (%p354) target = $region16
      $region15: #{perceiver_io_forward.11} parent=11 // pred_region
        _
      $region16: #{perceiver_io_forward.11} parent=11 // pred_fallthru
        _
      // Predicated region
      $region17: #{perceiver_io_forward.11} parent=11 // pred_check
        %p357 = pneg %p114
      $region18: #{perceiver_io_forward.11} parent=11 // pred_check_branch
        %359 = sbr.rel (%p357) target = $region20
      $region19: #{perceiver_io_forward.11} parent=11 // pred_region
        _
      $region20: #{perceiver_io_forward.11} parent=11 // pred_fallthru
        _
      // Predicated region
      $region21: #{perceiver_io_forward.11} parent=11 // pred_check
        %p360 = pneg %p135
      $region22: #{perceiver_io_forward.11} parent=11 // pred_check_branch
        %362 = sbr.rel (%p360) target = $region24
      $region23: #{perceiver_io_forward.11} parent=11 // pred_region
        _
      $region24: #{perceiver_io_forward.11} parent=11 // pred_fallthru
        _
      // Predicated region
      $region25: #{perceiver_io_forward.11} parent=11 // pred_check
        %p363 = pneg %p156
      $region26: #{perceiver_io_forward.11} parent=11 // pred_check_branch
        %365 = sbr.rel (%p363) target = $region28
      $region27: #{perceiver_io_forward.11} parent=11 // pred_region
        _
      $region28: #{perceiver_io_forward.11} parent=11 // pred_fallthru
        _
      // Predicated region
      $region29: #{perceiver_io_forward.11} parent=11 // pred_check
        %p366 = pneg %p177
      $region30: #{perceiver_io_forward.11} parent=11 // pred_check_branch
        %368 = sbr.rel (%p366) target = $region32
      $region31: #{perceiver_io_forward.11} parent=11 // pred_region
        _
      $region32: #{perceiver_io_forward.11} parent=11 // pred_fallthru
        _
      // Predicated region
      $region33: #{perceiver_io_forward.11} parent=11 // pred_check
        %p369 = pneg %p198
      $region34: #{perceiver_io_forward.11} parent=11 // pred_check_branch
        %371 = sbr.rel (%p369) target = $region36
      $region35: #{perceiver_io_forward.11} parent=11 // pred_region
        _
      $region36: #{perceiver_io_forward.11} parent=11 // pred_fallthru
        _
      // Predicated region
      $region37: #{perceiver_io_forward.11} parent=11 // pred_check
        %p372 = pneg %p219
      $region38: #{perceiver_io_forward.11} parent=11 // pred_check_branch
        %374 = sbr.rel (%p372) target = $region40
      $region39: #{perceiver_io_forward.11} parent=11 // pred_region
        _
      $region40: #{perceiver_io_forward.11} parent=11 // pred_fallthru
        _
      // Predicated region
      $region41: #{perceiver_io_forward.11} parent=11 // pred_check
        %p375 = pneg %p240
      $region42: #{perceiver_io_forward.11} parent=11 // pred_check_branch
        %377 = sbr.rel (%p375) target = $region44
      $region43: #{perceiver_io_forward.11} parent=11 // pred_region
        _
      $region44: #{perceiver_io_forward.11} parent=11 // pred_fallthru
        _
      // Predicated region
      $region45: #{perceiver_io_forward.11} parent=11 // pred_check
        %p378 = pneg %p261
      $region46: #{perceiver_io_forward.11} parent=11 // pred_check_branch
        %380 = sbr.rel (%p378) target = $region48
      $region47: #{perceiver_io_forward.11} parent=11 // pred_region
        _
      $region48: #{perceiver_io_forward.11} parent=11 // pred_fallthru
        _
    $region12: #{perceiver_io_forward.11} parent=5 // pred_fallthru
      _
    %p381 = scmp.lt.s32.totalorder %s20, 2
    // Predicated region
    $region49: #{perceiver_io_forward.11} parent=5 // pred_check
      %p382 = pneg %p381
    $region50: #{perceiver_io_forward.11} parent=5 // pred_check_branch
      %384 = sbr.rel (%p382) target = $region52
    $region51: #{perceiver_io_forward.11} parent=5 // pred_region
      // Predicated region
      $region53: #{perceiver_io_forward.11} parent=51 // pred_check
        %p385 = pneg %p40
      $region54: #{perceiver_io_forward.11} parent=51 // pred_check_branch
        %387 = sbr.rel (%p385) target = $region56
      $region55: #{perceiver_io_forward.11} parent=51 // pred_region
        %p388 = scmp.lt.s32.totalorder %s20, 1
        %s389 = scalar_select %p388, %s20, 1
        %s390 = smul.addr %s389, 11
        %s391 = smul.addr %s390, 8
        %s392 = scalar_lea.vmem %s0, %s391
      $region56: #{perceiver_io_forward.11} parent=51 // pred_fallthru
        _
      // Predicated region
      $region57: #{perceiver_io_forward.11} parent=51 // pred_check
        %p393 = pneg %p66
      $region58: #{perceiver_io_forward.11} parent=51 // pred_check_branch
        %395 = sbr.rel (%p393) target = $region60
      $region59: #{perceiver_io_forward.11} parent=51 // pred_region
        %p396 = scmp.lt.s32.totalorder %s20, 1
        %s397 = scalar_select %p396, %s20, 1
        %s398 = smul.addr %s397, 2
        %s399 = smul.addr %s398, 8
        %s400 = scalar_lea.vmem %s1, %s399
      $region60: #{perceiver_io_forward.11} parent=51 // pred_fallthru
        _
    $region52: #{perceiver_io_forward.11} parent=5 // pred_fallthru
      _
    %p401 = scmp.le.s32.totalorder 1, %s20
    %p402 = scmp.lt.s32.totalorder %s20, 3
    %p403 = pnand %p401, %p402
    %p404 = pneg %p403
    // Predicated region
    $region61: #{perceiver_io_forward.11} parent=5 // pred_check
      _
    $region62: #{perceiver_io_forward.11} parent=5 // pred_check_branch
      %406 = sbr.rel (%p403) target = $region64
    $region63: #{perceiver_io_forward.11} parent=5 // pred_region
      %s407 = ssub.s32 %s20, 1
      %p408 = scmp.lt.s32.totalorder %s25, 1
      %s409 = scalar_select %p408, %s25, 1
      %s410 = smul.addr %s409, 11
      %s411 = smul.addr %s410, 8
      %s412 = scalar_lea.vmem %s0, %s411
      %p413 = pneg %p46
      %p414 = pneg %p43
      %p415 = scmp.lt.s32.totalorder %s25, 1
      %s416 = scalar_select %p415, %s25, 1
      %s417 = smul.addr %s416, 2
      %s418 = smul.addr %s417, 8
      %s419 = scalar_lea.vmem %s1, %s418
      %p420 = pneg %p72
      %p421 = pneg %p69
      %p422 = pneg %p93
      %p423 = pneg %p90
      %p424 = pneg %p114
      %p425 = pneg %p111
      %p426 = pneg %p135
      %p427 = pneg %p132
      %p428 = pneg %p156
      %p429 = pneg %p153
      %p430 = pneg %p177
      %p431 = pneg %p174
      %p432 = pneg %p198
      %p433 = pneg %p195
      %p434 = pneg %p219
      %p435 = pneg %p216
      %p436 = pneg %p240
      %p437 = pneg %p237
      %p438 = pneg %p261
      %p439 = pneg %p258
      %p440 = pneg %p287
      %p441 = pneg %p284
      %p442 = scmp.lt.s32.totalorder %s25, 1
      %s443 = scalar_select %p442, %s25, 1
      %s444 = smul.addr %s443, 11
      %s445 = smul.addr %s444, 8
      %s446 = scalar_lea.vmem %s11, %s445
      %p447 = pneg %p313
      %p448 = pneg %p310
      %p449 = scmp.lt.s32.totalorder %s25, 1
      %s450 = scalar_select %p449, %s25, 1
      %s451 = smul.addr %s450, 4
      %s452 = scalar_lea.vmem %s12, %s451
      %p453 = pneg %p339
      %p454 = pneg %p336
      %p455 = scmp.lt.s32.totalorder %s25, 1
      %s456 = scalar_select %p455, %s25, 1
      %s457 = scalar_lea.vmem %s13, %s456
      %p458 = scmp.lt.s32.totalorder %s25, 1
      %s459 = scalar_select %p458, %s25, 1
      %s460 = smul.addr %s459, 11
      %s461 = smul.addr %s460, 8
      %s462 = scalar_lea.vmem %s0, %s461
      %p463 = scmp.lt.s32.totalorder %s25, 1
      %s464 = scalar_select %p463, %s25, 1
      %s465 = smul.addr %s464, 2
      %s466 = smul.addr %s465, 8
      %s467 = scalar_lea.vmem %s1, %s466
      %p468 = scmp.lt.s32.totalorder %s25, 1
      %s469 = scalar_select %p468, %s25, 1
      %s470 = smul.addr %s469, 11
      %s471 = smul.addr %s470, 8
      %s472 = scalar_lea.vmem %s11, %s471
      %p473 = scmp.lt.s32.totalorder %s25, 1
      %s474 = scalar_select %p473, %s25, 1
      %s475 = smul.addr %s474, 4
      %s476 = scalar_lea.vmem %s12, %s475
      %p477 = scmp.lt.s32.totalorder %s25, 1
      %s478 = scalar_select %p477, %s25, 1
      %s479 = scalar_lea.vmem %s13, %s478
      %v481 = vld [vmem:[%s462] sm:$0xff]
      %v482 = vld [vmem:[%s462 + $0x8] sm:$0xff]
      %v483 = vld [vmem:[%s462 + $0x10] sm:$0xff]
      %v484 = vld [vmem:[%s462 + $0x18] sm:$0xff]
      %v485 = vld [vmem:[%s462 + $0x20] sm:$0xff]
      %v486 = vld [vmem:[%s462 + $0x28] sm:$0xff]
      %v487 = vld [vmem:[%s462 + $0x30] sm:$0xff]
      %v488 = vld [vmem:[%s462 + $0x38] sm:$0xff]
      %v489 = vld [vmem:[%s462 + $0x40] sm:$0xff]
      %v490 = vld [vmem:[%s462 + $0x48] sm:$0xff]
      %v491 = vld [vmem:[%s462 + $0x50] sm:$0x1f]
      %v492 = vld [vmem:[%s467] sm:$0xff]
      %v493 = vld [vmem:[%s467 + $0x8] sm:$0xff]
      %v494 = vld [vmem:[%s2] sm:$0x1]
      %v495 = vld [vmem:[%s3] sm:$0x1]
      %v496 = vld [vmem:[%s4] sm:$0x1]
      %v497 = vld [vmem:[%s5] sm:$0x1]
      %v498 = vld [vmem:[%s6] sm:$0xff]
      %v499 = vld [vmem:[%s6 + $0x8] sm:$0xff]
      %v500 = vld [vmem:[%s7] sm:$0xff]
      %v501 = vld [vmem:[%s7 + $0x8] sm:$0xff]
      %v502 = vld [vmem:[%s7 + $0x10] sm:$0xff]
      %v503 = vld [vmem:[%s7 + $0x18] sm:$0xff]
      %v504 = vld [vmem:[%s8] sm:$0xff]
      %v505 = vld [vmem:[%s8 + $0x8] sm:$0xff]
      %v506 = vld [vmem:[%s9] sm:$0x1]
      %vm507 = vcmask 130048
      %v508 = vsel %vm507, %v481, 0.0
      %509 = vadd.xlane.f32.xlu0 %v508
      %v510 = vpop.xlane.xlu0 %509
      %v511 = vsel %vm507, %v482, 0.0
      %512 = vadd.xlane.f32.xlu0 %v511
      %v513 = vpop.xlane.xlu0 %512
      %v514 = vsel %vm507, %v483, 0.0
      %515 = vadd.xlane.f32.xlu0 %v514
      %v516 = vpop.xlane.xlu0 %515
      %v517 = vsel %vm507, %v484, 0.0
      %518 = vadd.xlane.f32.xlu0 %v517
      %v519 = vpop.xlane.xlu0 %518
      %v520 = vsel %vm507, %v485, 0.0
      %521 = vadd.xlane.f32.xlu0 %v520
      %v522 = vpop.xlane.xlu0 %521
      %v523 = vsel %vm507, %v486, 0.0
      %524 = vadd.xlane.f32.xlu0 %v523
      %v525 = vpop.xlane.xlu0 %524
      %v526 = vsel %vm507, %v487, 0.0
      %527 = vadd.xlane.f32.xlu0 %v526
      %v528 = vpop.xlane.xlu0 %527
      %v529 = vsel %vm507, %v488, 0.0
      %530 = vadd.xlane.f32.xlu0 %v529
      %v531 = vpop.xlane.xlu0 %530
      %v532 = vsel %vm507, %v489, 0.0
      %533 = vadd.xlane.f32.xlu0 %v532
      %v534 = vpop.xlane.xlu0 %533
      %v535 = vsel %vm507, %v490, 0.0
      %536 = vadd.xlane.f32.xlu0 %v535
      %v537 = vpop.xlane.xlu0 %536
      %vm538 = vcmask 126976
      %v539 = vsel %vm538, %v491, 0.0
      %540 = vadd.xlane.f32.xlu0 %v539
      %v541 = vpop.xlane.xlu0 %540
      %v542 = vrcp.pop 16.0
      %v543 = vmul.f32 16.0, %v542
      %v544 = vsub.f32 1.0, %v543
      %v545 = vmul.f32 %v542, %v544
      %v546 = vadd.f32 %v542, %v545
      %vm547 = vweird.f32 %v542
      %v548 = vsel %vm547, %v542, %v546
      %v549 = vmul.f32 %v510, %v548
      %v550 = vmul.f32 %v513, %v548
      %v551 = vmul.f32 %v516, %v548
      %v552 = vmul.f32 %v519, %v548
      %v553 = vmul.f32 %v522, %v548
      %v554 = vmul.f32 %v525, %v548
      %v555 = vmul.f32 %v528, %v548
      %v556 = vmul.f32 %v531, %v548
      %v557 = vmul.f32 %v534, %v548
      %v558 = vmul.f32 %v537, %v548
      %v559 = vmul.f32 %v541, %v548
      %v560 = vsub.f32 %v481, %v549
      %v561 = vsub.f32 %v482, %v550
      %v562 = vsub.f32 %v483, %v551
      %v563 = vsub.f32 %v484, %v552
      %v564 = vsub.f32 %v485, %v553
      %v565 = vsub.f32 %v486, %v554
      %v566 = vsub.f32 %v487, %v555
      %v567 = vsub.f32 %v488, %v556
      %v568 = vsub.f32 %v489, %v557
      %v569 = vsub.f32 %v490, %v558
      %v570 = vsub.f32 %v491, %v559
      %v571 = vmul.f32 %v560, %v560
      %v572 = vmul.f32 %v561, %v561
      %v573 = vmul.f32 %v562, %v562
      %v574 = vmul.f32 %v563, %v563
      %v575 = vmul.f32 %v564, %v564
      %v576 = vmul.f32 %v565, %v565
      %v577 = vmul.f32 %v566, %v566
      %v578 = vmul.f32 %v567, %v567
      %v579 = vmul.f32 %v568, %v568
      %v580 = vmul.f32 %v569, %v569
      %v581 = vmul.f32 %v570, %v570
      %v582 = vsel %vm507, %v571, 0.0
      %583 = vadd.xlane.f32.xlu0 %v582
      %v584 = vpop.xlane.xlu0 %583
      %v585 = vsel %vm507, %v572, 0.0
      %586 = vadd.xlane.f32.xlu0 %v585
      %v587 = vpop.xlane.xlu0 %586
      %v588 = vsel %vm507, %v573, 0.0
      %589 = vadd.xlane.f32.xlu0 %v588
      %v590 = vpop.xlane.xlu0 %589
      %v591 = vsel %vm507, %v574, 0.0
      %592 = vadd.xlane.f32.xlu0 %v591
      %v593 = vpop.xlane.xlu0 %592
      %v594 = vsel %vm507, %v575, 0.0
      %595 = vadd.xlane.f32.xlu0 %v594
      %v596 = vpop.xlane.xlu0 %595
      %v597 = vsel %vm507, %v576, 0.0
      %598 = vadd.xlane.f32.xlu0 %v597
      %v599 = vpop.xlane.xlu0 %598
      %v600 = vsel %vm507, %v577, 0.0
      %601 = vadd.xlane.f32.xlu0 %v600
      %v602 = vpop.xlane.xlu0 %601
      %v603 = vsel %vm507, %v578, 0.0
      %604 = vadd.xlane.f32.xlu0 %v603
      %v605 = vpop.xlane.xlu0 %604
      %v606 = vsel %vm507, %v579, 0.0
      %607 = vadd.xlane.f32.xlu0 %v606
      %v608 = vpop.xlane.xlu0 %607
      %v609 = vsel %vm507, %v580, 0.0
      %610 = vadd.xlane.f32.xlu0 %v609
      %v611 = vpop.xlane.xlu0 %610
      %v612 = vsel %vm538, %v581, 0.0
      %613 = vadd.xlane.f32.xlu0 %v612
      %v614 = vpop.xlane.xlu0 %613
      %v615 = vmul.f32 %v584, %v548
      %v616 = vmul.f32 %v587, %v548
      %v617 = vmul.f32 %v590, %v548
      %v618 = vmul.f32 %v593, %v548
      %v619 = vmul.f32 %v596, %v548
      %v620 = vmul.f32 %v599, %v548
      %v621 = vmul.f32 %v602, %v548
      %v622 = vmul.f32 %v605, %v548
      %v623 = vmul.f32 %v608, %v548
      %v624 = vmul.f32 %v611, %v548
      %v625 = vmul.f32 %v614, %v548
      %v626 = vadd.f32 %v615, 1e-05
      %v627 = vadd.f32 %v616, 1e-05
      %v628 = vadd.f32 %v617, 1e-05
      %v629 = vadd.f32 %v618, 1e-05
      %v630 = vadd.f32 %v619, 1e-05
      %v631 = vadd.f32 %v620, 1e-05
      %v632 = vadd.f32 %v621, 1e-05
      %v633 = vadd.f32 %v622, 1e-05
      %v634 = vadd.f32 %v623, 1e-05
      %v635 = vadd.f32 %v624, 1e-05
      %v636 = vadd.f32 %v625, 1e-05
      %v637 = vrsqrt.pop %v626
      %v638 = vmul.f32 %v637, %v626
      %v639 = vmul.f32 %v638, %v637
      %v640 = vmul.f32 0.5, %v639
      %v641 = vsub.f32 1.5, %v640
      %v642 = vmul.f32 %v637, %v641
      %vm643 = vweird.f32 %v626
      %vm644 = vweird.f32 %v637
      %vm645 = vmor %vm643, %vm644
      %v646 = vsel %vm645, %v637, %v642
      %v647 = vrsqrt.pop %v627
      %v648 = vmul.f32 %v647, %v627
      %v649 = vmul.f32 %v648, %v647
      %v650 = vmul.f32 0.5, %v649
      %v651 = vsub.f32 1.5, %v650
      %v652 = vmul.f32 %v647, %v651
      %vm653 = vweird.f32 %v627
      %vm654 = vweird.f32 %v647
      %vm655 = vmor %vm653, %vm654
      %v656 = vsel %vm655, %v647, %v652
      %v657 = vrsqrt.pop %v628
      %v658 = vmul.f32 %v657, %v628
      %v659 = vmul.f32 %v658, %v657
      %v660 = vmul.f32 0.5, %v659
      %v661 = vsub.f32 1.5, %v660
      %v662 = vmul.f32 %v657, %v661
      %vm663 = vweird.f32 %v628
      %vm664 = vweird.f32 %v657
      %vm665 = vmor %vm663, %vm664
      %v666 = vsel %vm665, %v657, %v662
      %v667 = vrsqrt.pop %v629
      %v668 = vmul.f32 %v667, %v629
      %v669 = vmul.f32 %v668, %v667
      %v670 = vmul.f32 0.5, %v669
      %v671 = vsub.f32 1.5, %v670
      %v672 = vmul.f32 %v667, %v671
      %vm673 = vweird.f32 %v629
      %vm674 = vweird.f32 %v667
      %vm675 = vmor %vm673, %vm674
      %v676 = vsel %vm675, %v667, %v672
      %v677 = vrsqrt.pop %v630
      %v678 = vmul.f32 %v677, %v630
      %v679 = vmul.f32 %v678, %v677
      %v680 = vmul.f32 0.5, %v679
      %v681 = vsub.f32 1.5, %v680
      %v682 = vmul.f32 %v677, %v681
      %vm683 = vweird.f32 %v630
      %vm684 = vweird.f32 %v677
      %vm685 = vmor %vm683, %vm684
      %v686 = vsel %vm685, %v677, %v682
      %v687 = vrsqrt.pop %v631
      %v688 = vmul.f32 %v687, %v631
      %v689 = vmul.f32 %v688, %v687
      %v690 = vmul.f32 0.5, %v689
      %v691 = vsub.f32 1.5, %v690
      %v692 = vmul.f32 %v687, %v691
      %vm693 = vweird.f32 %v631
      %vm694 = vweird.f32 %v687
      %vm695 = vmor %vm693, %vm694
      %v696 = vsel %vm695, %v687, %v692
      %v697 = vrsqrt.pop %v632
      %v698 = vmul.f32 %v697, %v632
      %v699 = vmul.f32 %v698, %v697
      %v700 = vmul.f32 0.5, %v699
      %v701 = vsub.f32 1.5, %v700
      %v702 = vmul.f32 %v697, %v701
      %vm703 = vweird.f32 %v632
      %vm704 = vweird.f32 %v697
      %vm705 = vmor %vm703, %vm704
      %v706 = vsel %vm705, %v697, %v702
      %v707 = vrsqrt.pop %v633
      %v708 = vmul.f32 %v707, %v633
      %v709 = vmul.f32 %v708, %v707
      %v710 = vmul.f32 0.5, %v709
      %v711 = vsub.f32 1.5, %v710
      %v712 = vmul.f32 %v707, %v711
      %vm713 = vweird.f32 %v633
      %vm714 = vweird.f32 %v707
      %vm715 = vmor %vm713, %vm714
      %v716 = vsel %vm715, %v707, %v712
      %v717 = vrsqrt.pop %v634
      %v718 = vmul.f32 %v717, %v634
      %v719 = vmul.f32 %v718, %v717
      %v720 = vmul.f32 0.5, %v719
      %v721 = vsub.f32 1.5, %v720
      %v722 = vmul.f32 %v717, %v721
      %vm723 = vweird.f32 %v634
      %vm724 = vweird.f32 %v717
      %vm725 = vmor %vm723, %vm724
      %v726 = vsel %vm725, %v717, %v722
      %v727 = vrsqrt.pop %v635
      %v728 = vmul.f32 %v727, %v635
      %v729 = vmul.f32 %v728, %v727
      %v730 = vmul.f32 0.5, %v729
      %v731 = vsub.f32 1.5, %v730
      %v732 = vmul.f32 %v727, %v731
      %vm733 = vweird.f32 %v635
      %vm734 = vweird.f32 %v727
      %vm735 = vmor %vm733, %vm734
      %v736 = vsel %vm735, %v727, %v732
      %v737 = vrsqrt.pop %v636
      %v738 = vmul.f32 %v737, %v636
      %v739 = vmul.f32 %v738, %v737
      %v740 = vmul.f32 0.5, %v739
      %v741 = vsub.f32 1.5, %v740
      %v742 = vmul.f32 %v737, %v741
      %vm743 = vweird.f32 %v636
      %vm744 = vweird.f32 %v737
      %vm745 = vmor %vm743, %vm744
      %v746 = vsel %vm745, %v737, %v742
      %v747 = vmul.f32 %v560, %v646
      %v748 = vmul.f32 %v561, %v656
      %v749 = vmul.f32 %v562, %v666
      %v750 = vmul.f32 %v563, %v676
      %v751 = vmul.f32 %v564, %v686
      %v752 = vmul.f32 %v565, %v696
      %v753 = vmul.f32 %v566, %v706
      %v754 = vmul.f32 %v567, %v716
      %v755 = vmul.f32 %v568, %v726
      %v756 = vmul.f32 %v569, %v736
      %v757 = vmul.f32 %v570, %v746
      %v759 = vperm.slane %v494, 0
      %v761 = vmul.f32 %v747, %v759
      %v762 = vmul.f32 %v748, %v759
      %v763 = vmul.f32 %v749, %v759
      %v764 = vmul.f32 %v750, %v759
      %v765 = vmul.f32 %v751, %v759
      %v766 = vmul.f32 %v752, %v759
      %v767 = vmul.f32 %v753, %v759
      %v768 = vmul.f32 %v754, %v759
      %v769 = vmul.f32 %v755, %v759
      %v770 = vmul.f32 %v756, %v759
      %v771 = vmul.f32 %v757, %v759
      %v773 = vperm.slane %v495, 0
      %v775 = vadd.f32 %v761, %v773
      %v776 = vadd.f32 %v762, %v773
      %v777 = vadd.f32 %v763, %v773
      %v778 = vadd.f32 %v764, %v773
      %v779 = vadd.f32 %v765, %v773
      %v780 = vadd.f32 %v766, %v773
      %v781 = vadd.f32 %v767, %v773
      %v782 = vadd.f32 %v768, %v773
      %v783 = vadd.f32 %v769, %v773
      %v784 = vadd.f32 %v770, %v773
      %v785 = vadd.f32 %v771, %v773
      %vm786 = vcmask 261120
      %v787 = vsel %vm786, %v492, 0.0
      %788 = vadd.xlane.f32.xlu0 %v787
      %v789 = vpop.xlane.xlu0 %788
      %v790 = vsel %vm786, %v493, 0.0
      %791 = vadd.xlane.f32.xlu0 %v790
      %v792 = vpop.xlane.xlu0 %791
      %v793 = vrcp.pop 32.0
      %v794 = vmul.f32 32.0, %v793
      %v795 = vsub.f32 1.0, %v794
      %v796 = vmul.f32 %v793, %v795
      %v797 = vadd.f32 %v793, %v796
      %vm798 = vweird.f32 %v793
      %v799 = vsel %vm798, %v793, %v797
      %v800 = vmul.f32 %v789, %v799
      %v801 = vmul.f32 %v792, %v799
      %v802 = vsub.f32 %v492, %v800
      %v803 = vsub.f32 %v493, %v801
      %v804 = vmul.f32 %v802, %v802
      %v805 = vmul.f32 %v803, %v803
      %v806 = vsel %vm786, %v804, 0.0
      %807 = vadd.xlane.f32.xlu0 %v806
      %v808 = vpop.xlane.xlu0 %807
      %v809 = vsel %vm786, %v805, 0.0
      %810 = vadd.xlane.f32.xlu0 %v809
      %v811 = vpop.xlane.xlu0 %810
      %v812 = vmul.f32 %v808, %v799
      %v813 = vmul.f32 %v811, %v799
      %v814 = vadd.f32 %v812, 1e-05
      %v815 = vadd.f32 %v813, 1e-05
      %v816 = vrsqrt.pop %v814
      %v817 = vmul.f32 %v816, %v814
      %v818 = vmul.f32 %v817, %v816
      %v819 = vmul.f32 0.5, %v818
      %v820 = vsub.f32 1.5, %v819
      %v821 = vmul.f32 %v816, %v820
      %vm822 = vweird.f32 %v814
      %vm823 = vweird.f32 %v816
      %vm824 = vmor %vm822, %vm823
      %v825 = vsel %vm824, %v816, %v821
      %v826 = vrsqrt.pop %v815
      %v827 = vmul.f32 %v826, %v815
      %v828 = vmul.f32 %v827, %v826
      %v829 = vmul.f32 0.5, %v828
      %v830 = vsub.f32 1.5, %v829
      %v831 = vmul.f32 %v826, %v830
      %vm832 = vweird.f32 %v815
      %vm833 = vweird.f32 %v826
      %vm834 = vmor %vm832, %vm833
      %v835 = vsel %vm834, %v826, %v831
      %v836 = vmul.f32 %v802, %v825
      %v837 = vmul.f32 %v803, %v835
      %v839 = vperm.slane %v496, 0
      %v841 = vmul.f32 %v836, %v839
      %v842 = vmul.f32 %v837, %v839
      %v844 = vperm.slane %v497, 0
      %v846 = vadd.f32 %v841, %v844
      %v847 = vadd.f32 %v842, %v844
      %v848 = vpack.c.bf16 %v776, %v775
      %v849 = vpack.c.bf16 %v778, %v777
      %v850 = vpack.c.bf16 %v780, %v779
      %v851 = vpack.c.bf16 %v782, %v781
      %v852 = vpack.c.bf16 %v784, %v783
      %v853 = vpack.c.bf16 %v785, %v785
      %v854 = vpack.c.bf16 %v499, %v498
      %v856 = vsel %vm507, %v848, 0
      %v859 = vsel %vm507, %v849, 0
      %v862 = vsel %vm507, %v850, 0
      %v865 = vsel %vm507, %v851, 0
      %v868 = vsel %vm507, %v852, 0
      %v871 = vsel %vm507, %v853, 0
      %873 = vmatpush.bf16.msra.mxu0 0
      %874 = vmatpush.bf16.msra.mxu0 0
      %875 = vmatpush.bf16.msra.mxu0 0
      %876 = vmatpush.bf16.msra.mxu0 0
      %877 = vmatpush.bf16.msra.mxu0 0
      %878 = vmatpush.bf16.msra.mxu0 0
      %879 = vmatpush.bf16.msra.mxu0 0
      %880 = vmatpush.bf16.msra.mxu0 %v854
      %881 = vmatmul.bf16.gmra.mxu0 %v856
      %v882 = vpop.f32.mrf.mxu0
      %v883 = vadd.f32 0.0, %v882
      %v884 = vpop.f32.mrf.mxu0
      %v885 = vadd.f32 0.0, %v884
      %886 = vmatmul.bf16.gmra.mxu0 %v859
      %v887 = vpop.f32.mrf.mxu0
      %v888 = vadd.f32 0.0, %v887
      %v889 = vpop.f32.mrf.mxu0
      %v890 = vadd.f32 0.0, %v889
      %891 = vmatmul.bf16.gmra.mxu0 %v862
      %v892 = vpop.f32.mrf.mxu0
      %v893 = vadd.f32 0.0, %v892
      %v894 = vpop.f32.mrf.mxu0
      %v895 = vadd.f32 0.0, %v894
      %896 = vmatmul.bf16.gmra.mxu0 %v865
      %v897 = vpop.f32.mrf.mxu0
      %v898 = vadd.f32 0.0, %v897
      %v899 = vpop.f32.mrf.mxu0
      %v900 = vadd.f32 0.0, %v899
      %901 = vmatmul.bf16.gmra.mxu0 %v868
      %v902 = vpop.f32.mrf.mxu0
      %v903 = vadd.f32 0.0, %v902
      %v904 = vpop.f32.mrf.mxu0
      %v905 = vadd.f32 0.0, %v904
      %906 = vmatmul.bf16.gmra.mxu0 %v871
      %v907 = vpop.f32.mrf.mxu0
      %v908 = vadd.f32 0.0, %v907
      %v909 = vpop.f32.mrf.mxu0
      %910 = vdwg.mxu0
      %v911 = vpack.c.bf16 %v847, %v846
      %v912 = vpack.c.bf16 %v501, %v500
      %v913 = vpack.c.bf16 %v503, %v502
      %v915 = vsel %vm786, %v911, 0
      %917 = vmatpush.bf16.msra.mxu0 0
      %918 = vmatpush.bf16.msra.mxu0 0
      %919 = vmatpush.bf16.msra.mxu0 0
      %920 = vmatpush.bf16.msra.mxu0 0
      %921 = vmatpush.bf16.msra.mxu0 0
      %922 = vmatpush.bf16.msra.mxu0 0
      %923 = vmatpush.bf16.msra.mxu0 %v913
      %924 = vmatpush.bf16.msra.mxu0 %v912
      %925 = vmatmul.bf16.gmra.mxu0 %v915
      %v926 = vpop.f32.mrf.mxu0
      %v927 = vadd.f32 0.0, %v926
      %v928 = vpop.f32.mrf.mxu0
      %v929 = vadd.f32 0.0, %v928
      %930 = vdwg.mxu0
      %v932 = vsel %vm507, %v883, 0
      %v935 = vsel %vm507, %v885, 0
      %v938 = vsel %vm507, %v888, 0
      %v941 = vsel %vm507, %v890, 0
      %v944 = vsel %vm507, %v893, 0
      %v947 = vsel %vm507, %v895, 0
      %v950 = vsel %vm507, %v898, 0
      %v953 = vsel %vm507, %v900, 0
      %v956 = vsel %vm507, %v903, 0
      %v959 = vsel %vm507, %v905, 0
      %v962 = vsel %vm507, %v908, 0
      %v965 = vsel %vm507, %v927, 0
      %v968 = vsel %vm507, %v929, 0
      %970 = vmatpush.xpose.msra.mxu0 0.0
      %971 = vmatpush.xpose.msra.mxu0 0.0
      %972 = vmatpush.xpose.msra.mxu0 0.0
      %973 = vmatpush.xpose.msra.mxu0 0.0
      %974 = vmatpush.xpose.msra.mxu0 0.0
      %975 = vmatpush.xpose.msra.mxu0 0.0
      %976 = vmatpush.xpose.msra.mxu0 0.0
      %977 = vmatpush.xpose.msra.mxu0 0.0
      %978 = vmatpush.xpose.msra.mxu0 0.0
      %979 = vmatpush.xpose.msra.mxu0 0.0
      %980 = vmatpush.xpose.msra.mxu0 0.0
      %981 = vmatpush.xpose.msra.mxu0 0.0
      %982 = vmatpush.xpose.msra.mxu0 0.0
      %983 = vmatpush.xpose.msra.mxu0 0.0
      %984 = vmatpush.xpose.msra.mxu0 %v968
      %985 = vmatpush.xpose.msra.mxu0 %v965
      %986 = vmatmul.f32.gmra.mxu0 %v932
      %v987 = vpop.f32.mrf.mxu0
      %v988 = vadd.f32 0.0, %v987
      %989 = vmatmul.f32.gmra.mxu0 %v935
      %v990 = vpop.f32.mrf.mxu0
      %v991 = vadd.f32 0.0, %v990
      %992 = vmatmul.f32.gmra.mxu0 %v938
      %v993 = vpop.f32.mrf.mxu0
      %v994 = vadd.f32 0.0, %v993
      %995 = vmatmul.f32.gmra.mxu0 %v941
      %v996 = vpop.f32.mrf.mxu0
      %v997 = vadd.f32 0.0, %v996
      %998 = vmatmul.f32.gmra.mxu0 %v944
      %v999 = vpop.f32.mrf.mxu0
      %v1000 = vadd.f32 0.0, %v999
      %1001 = vmatmul.f32.gmra.mxu0 %v947
      %v1002 = vpop.f32.mrf.mxu0
      %v1003 = vadd.f32 0.0, %v1002
      %1004 = vmatmul.f32.gmra.mxu0 %v950
      %v1005 = vpop.f32.mrf.mxu0
      %v1006 = vadd.f32 0.0, %v1005
      %1007 = vmatmul.f32.gmra.mxu0 %v953
      %v1008 = vpop.f32.mrf.mxu0
      %v1009 = vadd.f32 0.0, %v1008
      %1010 = vmatmul.f32.gmra.mxu0 %v956
      %v1011 = vpop.f32.mrf.mxu0
      %v1012 = vadd.f32 0.0, %v1011
      %1013 = vmatmul.f32.gmra.mxu0 %v959
      %v1014 = vpop.f32.mrf.mxu0
      %v1015 = vadd.f32 0.0, %v1014
      %1016 = vmatmul.f32.gmra.mxu0 %v962
      %v1017 = vpop.f32.mrf.mxu0
      %v1018 = vadd.f32 0.0, %v1017
      %1019 = vdwg.mxu0
      %v1020 = vmul.f32 %v988, 0.25
      %v1021 = vmul.f32 %v991, 0.25
      %v1022 = vmul.f32 %v994, 0.25
      %v1023 = vmul.f32 %v997, 0.25
      %v1024 = vmul.f32 %v1000, 0.25
      %v1025 = vmul.f32 %v1003, 0.25
      %v1026 = vmul.f32 %v1006, 0.25
      %v1027 = vmul.f32 %v1009, 0.25
      %v1028 = vmul.f32 %v1012, 0.25
      %v1029 = vmul.f32 %v1015, 0.25
      %v1030 = vmul.f32 %v1018, 0.25
      %v1031 = vsel %vm507, %v1020, -inf
      %1032 = vmax.xlane.f32.xlu0 %v1031
      %v1033 = vpop.xlane.xlu0 %1032
      %v1034 = vsel %vm507, %v1021, -inf
      %1035 = vmax.xlane.f32.xlu0 %v1034
      %v1036 = vpop.xlane.xlu0 %1035
      %v1037 = vsel %vm507, %v1022, -inf
      %1038 = vmax.xlane.f32.xlu0 %v1037
      %v1039 = vpop.xlane.xlu0 %1038
      %v1040 = vsel %vm507, %v1023, -inf
      %1041 = vmax.xlane.f32.xlu0 %v1040
      %v1042 = vpop.xlane.xlu0 %1041
      %v1043 = vsel %vm507, %v1024, -inf
      %1044 = vmax.xlane.f32.xlu0 %v1043
      %v1045 = vpop.xlane.xlu0 %1044
      %v1046 = vsel %vm507, %v1025, -inf
      %1047 = vmax.xlane.f32.xlu0 %v1046
      %v1048 = vpop.xlane.xlu0 %1047
      %v1049 = vsel %vm507, %v1026, -inf
      %1050 = vmax.xlane.f32.xlu0 %v1049
      %v1051 = vpop.xlane.xlu0 %1050
      %v1052 = vsel %vm507, %v1027, -inf
      %1053 = vmax.xlane.f32.xlu0 %v1052
      %v1054 = vpop.xlane.xlu0 %1053
      %v1055 = vsel %vm507, %v1028, -inf
      %1056 = vmax.xlane.f32.xlu0 %v1055
      %v1057 = vpop.xlane.xlu0 %1056
      %v1058 = vsel %vm507, %v1029, -inf
      %1059 = vmax.xlane.f32.xlu0 %v1058
      %v1060 = vpop.xlane.xlu0 %1059
      %v1061 = vsel %vm538, %v1030, -inf
      %1062 = vmax.xlane.f32.xlu0 %v1061
      %v1063 = vpop.xlane.xlu0 %1062
      %v1064 = vsub.f32 %v1020, %v1033
      %v1065 = vsub.f32 %v1021, %v1036
      %v1066 = vsub.f32 %v1022, %v1039
      %v1067 = vsub.f32 %v1023, %v1042
      %v1068 = vsub.f32 %v1024, %v1045
      %v1069 = vsub.f32 %v1025, %v1048
      %v1070 = vsub.f32 %v1026, %v1051
      %v1071 = vsub.f32 %v1027, %v1054
      %v1072 = vsub.f32 %v1028, %v1057
      %v1073 = vsub.f32 %v1029, %v1060
      %v1074 = vsub.f32 %v1030, %v1063
      %v1075 = vmul.f32 %v1064, 1.442695
      %v1076 = vpow.pop %v1075
      %v1077 = vmul.f32 %v1065, 1.442695
      %v1078 = vpow.pop %v1077
      %v1079 = vmul.f32 %v1066, 1.442695
      %v1080 = vpow.pop %v1079
      %v1081 = vmul.f32 %v1067, 1.442695
      %v1082 = vpow.pop %v1081
      %v1083 = vmul.f32 %v1068, 1.442695
      %v1084 = vpow.pop %v1083
      %v1085 = vmul.f32 %v1069, 1.442695
      %v1086 = vpow.pop %v1085
      %v1087 = vmul.f32 %v1070, 1.442695
      %v1088 = vpow.pop %v1087
      %v1089 = vmul.f32 %v1071, 1.442695
      %v1090 = vpow.pop %v1089
      %v1091 = vmul.f32 %v1072, 1.442695
      %v1092 = vpow.pop %v1091
      %v1093 = vmul.f32 %v1073, 1.442695
      %v1094 = vpow.pop %v1093
      %v1095 = vmul.f32 %v1074, 1.442695
      %v1096 = vpow.pop %v1095
      %v1097 = vsel %vm507, %v1076, 0.0
      %1098 = vadd.xlane.f32.xlu0 %v1097
      %v1099 = vpop.xlane.xlu0 %1098
      %v1100 = vsel %vm507, %v1078, 0.0
      %1101 = vadd.xlane.f32.xlu0 %v1100
      %v1102 = vpop.xlane.xlu0 %1101
      %v1103 = vsel %vm507, %v1080, 0.0
      %1104 = vadd.xlane.f32.xlu0 %v1103
      %v1105 = vpop.xlane.xlu0 %1104
      %v1106 = vsel %vm507, %v1082, 0.0
      %1107 = vadd.xlane.f32.xlu0 %v1106
      %v1108 = vpop.xlane.xlu0 %1107
      %v1109 = vsel %vm507, %v1084, 0.0
      %1110 = vadd.xlane.f32.xlu0 %v1109
      %v1111 = vpop.xlane.xlu0 %1110
      %v1112 = vsel %vm507, %v1086, 0.0
      %1113 = vadd.xlane.f32.xlu0 %v1112
      %v1114 = vpop.xlane.xlu0 %1113
      %v1115 = vsel %vm507, %v1088, 0.0
      %1116 = vadd.xlane.f32.xlu0 %v1115
      %v1117 = vpop.xlane.xlu0 %1116
      %v1118 = vsel %vm507, %v1090, 0.0
      %1119 = vadd.xlane.f32.xlu0 %v1118
      %v1120 = vpop.xlane.xlu0 %1119
      %v1121 = vsel %vm507, %v1092, 0.0
      %1122 = vadd.xlane.f32.xlu0 %v1121
      %v1123 = vpop.xlane.xlu0 %1122
      %v1124 = vsel %vm507, %v1094, 0.0
      %1125 = vadd.xlane.f32.xlu0 %v1124
      %v1126 = vpop.xlane.xlu0 %1125
      %v1127 = vsel %vm538, %v1096, 0.0
      %1128 = vadd.xlane.f32.xlu0 %v1127
      %v1129 = vpop.xlane.xlu0 %1128
      %v1130 = vrcp.pop %v1099
      %v1131 = vrcp.pop %v1102
      %v1132 = vrcp.pop %v1105
      %v1133 = vrcp.pop %v1108
      %v1134 = vrcp.pop %v1111
      %v1135 = vrcp.pop %v1114
      %v1136 = vrcp.pop %v1117
      %v1137 = vrcp.pop %v1120
      %v1138 = vrcp.pop %v1123
      %v1139 = vrcp.pop %v1126
      %v1140 = vrcp.pop %v1129
      %v1141 = vmul.f32 %v1076, %v1130
      %v1142 = vmul.f32 %v1078, %v1131
      %v1143 = vmul.f32 %v1080, %v1132
      %v1144 = vmul.f32 %v1082, %v1133
      %v1145 = vmul.f32 %v1084, %v1134
      %v1146 = vmul.f32 %v1086, %v1135
      %v1147 = vmul.f32 %v1088, %v1136
      %v1148 = vmul.f32 %v1090, %v1137
      %v1149 = vmul.f32 %v1092, %v1138
      %v1150 = vmul.f32 %v1094, %v1139
      %v1151 = vmul.f32 %v1096, %v1140
      %1152 = vrot.lane.b32.xlu0 %v927, 112
      %v1153 = vpop.permute.xlu0 %1152
      %1154 = vrot.lane.b32.xlu0 %v929, 112
      %v1155 = vpop.permute.xlu0 %1154
      %v1159 = vsel %vm507, %v1141, 0
      %v1162 = vsel %vm507, %v1142, 0
      %v1165 = vsel %vm507, %v1143, 0
      %v1168 = vsel %vm507, %v1144, 0
      %v1171 = vsel %vm507, %v1145, 0
      %v1174 = vsel %vm507, %v1146, 0
      %v1177 = vsel %vm507, %v1147, 0
      %v1180 = vsel %vm507, %v1148, 0
      %v1183 = vsel %vm507, %v1149, 0
      %v1186 = vsel %vm507, %v1150, 0
      %v1189 = vsel %vm507, %v1151, 0
      %1191 = vmatpush.msra.mxu0 0.0
      %1192 = vmatpush.msra.mxu0 0.0
      %1193 = vmatpush.msra.mxu0 0.0
      %1194 = vmatpush.msra.mxu0 0.0
      %1195 = vmatpush.msra.mxu0 0.0
      %1196 = vmatpush.msra.mxu0 0.0
      %1197 = vmatpush.msra.mxu0 0.0
      %1198 = vmatpush.msra.mxu0 0.0
      %1199 = vmatpush.msra.mxu0 0.0
      %1200 = vmatpush.msra.mxu0 0.0
      %1201 = vmatpush.msra.mxu0 0.0
      %1202 = vmatpush.msra.mxu0 0.0
      %1203 = vmatpush.msra.mxu0 0.0
      %1204 = vmatpush.msra.mxu0 0.0
      %1205 = vmatpush.msra.mxu0 %v1155
      %1206 = vmatpush.msra.mxu0 %v1153
      %1207 = vmatmul.f32.gmra.mxu0 %v1159
      %v1208 = vpop.f32.mrf.mxu0
      %v1209 = vadd.f32 0.0, %v1208
      %1210 = vmatmul.f32.gmra.mxu0 %v1162
      %v1211 = vpop.f32.mrf.mxu0
      %v1212 = vadd.f32 0.0, %v1211
      %1213 = vmatmul.f32.gmra.mxu0 %v1165
      %v1214 = vpop.f32.mrf.mxu0
      %v1215 = vadd.f32 0.0, %v1214
      %1216 = vmatmul.f32.gmra.mxu0 %v1168
      %v1217 = vpop.f32.mrf.mxu0
      %v1218 = vadd.f32 0.0, %v1217
      %1219 = vmatmul.f32.gmra.mxu0 %v1171
      %v1220 = vpop.f32.mrf.mxu0
      %v1221 = vadd.f32 0.0, %v1220
      %1222 = vmatmul.f32.gmra.mxu0 %v1174
      %v1223 = vpop.f32.mrf.mxu0
      %v1224 = vadd.f32 0.0, %v1223
      %1225 = vmatmul.f32.gmra.mxu0 %v1177
      %v1226 = vpop.f32.mrf.mxu0
      %v1227 = vadd.f32 0.0, %v1226
      %1228 = vmatmul.f32.gmra.mxu0 %v1180
      %v1229 = vpop.f32.mrf.mxu0
      %v1230 = vadd.f32 0.0, %v1229
      %1231 = vmatmul.f32.gmra.mxu0 %v1183
      %v1232 = vpop.f32.mrf.mxu0
      %v1233 = vadd.f32 0.0, %v1232
      %1234 = vmatmul.f32.gmra.mxu0 %v1186
      %v1235 = vpop.f32.mrf.mxu0
      %v1236 = vadd.f32 0.0, %v1235
      %1237 = vmatmul.f32.gmra.mxu0 %v1189
      %v1238 = vpop.f32.mrf.mxu0
      %v1239 = vadd.f32 0.0, %v1238
      %1240 = vdwg.mxu0
      %v1241 = vpack.c.bf16 %v1212, %v1209
      %v1242 = vpack.c.bf16 %v1218, %v1215
      %v1243 = vpack.c.bf16 %v1224, %v1221
      %v1244 = vpack.c.bf16 %v1230, %v1227
      %v1245 = vpack.c.bf16 %v1236, %v1233
      %v1246 = vpack.c.bf16 %v1239, %v1239
      %v1247 = vpack.c.bf16 %v505, %v504
      %v1249 = vperm.slane %v506, 0
      %v1252 = vsel %vm507, %v1241, 0
      %v1255 = vsel %vm507, %v1242, 0
      %v1258 = vsel %vm507, %v1243, 0
      %v1261 = vsel %vm507, %v1244, 0
      %v1264 = vsel %vm507, %v1245, 0
      %v1267 = vsel %vm507, %v1246, 0
      %1269 = vmatpush.bf16.msra.mxu0 0
      %1270 = vmatpush.bf16.msra.mxu0 0
      %1271 = vmatpush.bf16.msra.mxu0 0
      %1272 = vmatpush.bf16.msra.mxu0 0
      %1273 = vmatpush.bf16.msra.mxu0 0
      %1274 = vmatpush.bf16.msra.mxu0 0
      %1275 = vmatpush.bf16.msra.mxu0 0
      %1276 = vmatpush.bf16.msra.mxu0 %v1247
      %1277 = vmatmul.bf16.gmra.mxu0 %v1252
      %v1278 = vpop.f32.mrf.mxu0
      %v1279 = vadd.f32 %v1249, %v1278
      %v1280 = vpop.f32.mrf.mxu0
      %v1281 = vadd.f32 %v1249, %v1280
      %1282 = vmatmul.bf16.gmra.mxu0 %v1255
      %v1283 = vpop.f32.mrf.mxu0
      %v1284 = vadd.f32 %v1249, %v1283
      %v1285 = vpop.f32.mrf.mxu0
      %v1286 = vadd.f32 %v1249, %v1285
      %1287 = vmatmul.bf16.gmra.mxu0 %v1258
      %v1288 = vpop.f32.mrf.mxu0
      %v1289 = vadd.f32 %v1249, %v1288
      %v1290 = vpop.f32.mrf.mxu0
      %v1291 = vadd.f32 %v1249, %v1290
      %1292 = vmatmul.bf16.gmra.mxu0 %v1261
      %v1293 = vpop.f32.mrf.mxu0
      %v1294 = vadd.f32 %v1249, %v1293
      %v1295 = vpop.f32.mrf.mxu0
      %v1296 = vadd.f32 %v1249, %v1295
      %1297 = vmatmul.bf16.gmra.mxu0 %v1264
      %v1298 = vpop.f32.mrf.mxu0
      %v1299 = vadd.f32 %v1249, %v1298
      %v1300 = vpop.f32.mrf.mxu0
      %v1301 = vadd.f32 %v1249, %v1300
      %1302 = vmatmul.bf16.gmra.mxu0 %v1267
      %v1303 = vpop.f32.mrf.mxu0
      %v1304 = vadd.f32 %v1249, %v1303
      %v1305 = vpop.f32.mrf.mxu0
      %1306 = vdwg.mxu0
      %1307 = vst.msk [vmem:[%s472] sm:$0xff] %vm507, %v1279
      %1308 = vst.msk [vmem:[%s472 + $0x8] sm:$0xff] %vm507, %v1281
      %1309 = vst.msk [vmem:[%s472 + $0x10] sm:$0xff] %vm507, %v1284
      %1310 = vst.msk [vmem:[%s472 + $0x18] sm:$0xff] %vm507, %v1286
      %1311 = vst.msk [vmem:[%s472 + $0x20] sm:$0xff] %vm507, %v1289
      %1312 = vst.msk [vmem:[%s472 + $0x28] sm:$0xff] %vm507, %v1291
      %1313 = vst.msk [vmem:[%s472 + $0x30] sm:$0xff] %vm507, %v1294
      %1314 = vst.msk [vmem:[%s472 + $0x38] sm:$0xff] %vm507, %v1296
      %1315 = vst.msk [vmem:[%s472 + $0x40] sm:$0xff] %vm507, %v1299
      %1316 = vst.msk [vmem:[%s472 + $0x48] sm:$0xff] %vm507, %v1301
      %1317 = vst.msk [vmem:[%s472 + $0x50] sm:$0x1f] %vm538, %v1304
      %v1318 = vld [vmem:[%s472 + $0x4d] sm:$0xff]
      %v1319 = vsel %vm507, %v1318, -inf
      %v1320 = vrot.slane %v1319, 4
      %v1321 = vmax.f32 %v1319, %v1320
      %v1322 = vrot.slane %v1321, 2
      %v1323 = vmax.f32 %v1321, %v1322
      %v1324 = vrot.slane %v1323, 1
      %v1325 = vmax.f32 %v1323, %v1324
      %v1326 = vsub.f32 %v1318, %v1325
      %v1327 = vmul.f32 %v1326, 100.0
      %v1328 = vmul.f32 %v1327, 1.442695
      %v1329 = vpow.pop %v1328
      %v1330 = vsel %vm507, %v1329, 0.0
      %v1331 = vrot.slane %v1330, 4
      %v1332 = vadd.f32 %v1330, %v1331
      %v1333 = vrot.slane %v1332, 2
      %v1334 = vadd.f32 %v1332, %v1333
      %v1335 = vrot.slane %v1334, 1
      %v1336 = vadd.f32 %v1334, %v1335
      %v1337 = vld [vmem:[%s10] sm:$0x7]
      %vm1338 = vcmask 64512
      %v1340 = vsel %vm1338, %v1337, 0
      %1342 = vmatpush.msra.mxu0 0.0
      %1343 = vmatpush.msra.mxu0 0.0
      %1344 = vmatpush.msra.mxu0 0.0
      %1345 = vmatpush.msra.mxu0 0.0
      %1346 = vmatpush.msra.mxu0 0.0
      %1347 = vmatpush.msra.mxu0 0.0
      %1348 = vmatpush.msra.mxu0 0.0
      %1349 = vmatpush.msra.mxu0 0.0
      %1350 = vmatpush.msra.mxu0 0.0
      %1351 = vmatpush.msra.mxu0 0.0
      %1352 = vmatpush.msra.mxu0 0.0
      %1353 = vmatpush.msra.mxu0 0.0
      %1354 = vmatpush.msra.mxu0 0.0
      %1355 = vmatpush.msra.mxu0 0.0
      %1356 = vmatpush.msra.mxu0 0.0
      %1357 = vmatpush.msra.mxu0 %v1329
      %1358 = vmatmul.f32.gmra.mxu0 %v1340
      %v1359 = vpop.f32.mrf.mxu0
      %v1360 = vadd.f32 0.0, %v1359
      %1361 = vdwg.mxu0
      %v1362 = vrcp.pop %v1336
      %v1363 = vmul.f32 %v1360, %v1362
      %vm1364 = vcmask 124928
      %1365 = vst.msk [vmem:[%s476] sm:$0x7] %vm1364, %v1363
      %vm1366 = vcmask 122880
      %1367 = vst.msk [vmem:[%s479] sm:$0x1] %vm1366, %v1325
      %p1368 = scmp.lt.s32.totalorder %s25, 1
      %s1369 = scalar_select %p1368, %s25, 1
      %s1370 = smul.addr %s1369, 11
      %s1371 = smul.addr %s1370, 8
      %s1372 = scalar_lea.vmem %s11, %s1371
      %p1373 = scmp.lt.s32.totalorder %s25, 1
      %s1374 = scalar_select %p1373, %s25, 1
      %s1375 = smul.addr %s1374, 4
      %s1376 = scalar_lea.vmem %s12, %s1375
      %p1377 = scmp.lt.s32.totalorder %s25, 1
      %s1378 = scalar_select %p1377, %s25, 1
      %s1379 = scalar_lea.vmem %s13, %s1378
      // Predicated region
      $region65: #{perceiver_io_forward.11} parent=63 // pred_check
        %p1380 = pneg %p284
      $region66: #{perceiver_io_forward.11} parent=63 // pred_check_branch
        %1382 = sbr.rel (%p1380) target = $region68
      $region67: #{perceiver_io_forward.11} parent=63 // pred_region
        _
      $region68: #{perceiver_io_forward.11} parent=63 // pred_fallthru
        _
      // Predicated region
      $region69: #{perceiver_io_forward.11} parent=63 // pred_check
        %p1383 = pneg %p310
      $region70: #{perceiver_io_forward.11} parent=63 // pred_check_branch
        %1385 = sbr.rel (%p1383) target = $region72
      $region71: #{perceiver_io_forward.11} parent=63 // pred_region
        _
      $region72: #{perceiver_io_forward.11} parent=63 // pred_fallthru
        _
      // Predicated region
      $region73: #{perceiver_io_forward.11} parent=63 // pred_check
        %p1386 = pneg %p336
      $region74: #{perceiver_io_forward.11} parent=63 // pred_check_branch
        %1388 = sbr.rel (%p1386) target = $region76
      $region75: #{perceiver_io_forward.11} parent=63 // pred_region
        _
      $region76: #{perceiver_io_forward.11} parent=63 // pred_fallthru
        _
    $region64: #{perceiver_io_forward.11} parent=5 // pred_fallthru
      _
    %p1389 = scmp.le.s32.totalorder 2, %s20
    // Predicated region
    $region77: #{perceiver_io_forward.11} parent=5 // pred_check
      %p1390 = pneg %p1389
    $region78: #{perceiver_io_forward.11} parent=5 // pred_check_branch
      %1392 = sbr.rel (%p1390) target = $region80
    $region79: #{perceiver_io_forward.11} parent=5 // pred_region
      %s1393 = ssub.s32 %s20, 2
      // Predicated region
      $region81: #{perceiver_io_forward.11} parent=79 // pred_check
        %p1394 = pneg %p290
      $region82: #{perceiver_io_forward.11} parent=79 // pred_check_branch
        %1396 = sbr.rel (%p1394) target = $region84
      $region83: #{perceiver_io_forward.11} parent=79 // pred_region
        %p1397 = scmp.lt.s32.totalorder %s26, 1
        %s1398 = scalar_select %p1397, %s26, 1
        %s1399 = smul.addr %s1398, 11
        %s1400 = smul.addr %s1399, 8
        %s1401 = scalar_lea.vmem %s11, %s1400
      $region84: #{perceiver_io_forward.11} parent=79 // pred_fallthru
        _
      // Predicated region
      $region85: #{perceiver_io_forward.11} parent=79 // pred_check
        %p1402 = pneg %p316
      $region86: #{perceiver_io_forward.11} parent=79 // pred_check_branch
        %1404 = sbr.rel (%p1402) target = $region88
      $region87: #{perceiver_io_forward.11} parent=79 // pred_region
        %p1405 = scmp.lt.s32.totalorder %s26, 1
        %s1406 = scalar_select %p1405, %s26, 1
        %s1407 = smul.addr %s1406, 4
        %s1408 = scalar_lea.vmem %s12, %s1407
      $region88: #{perceiver_io_forward.11} parent=79 // pred_fallthru
        _
      // Predicated region
      $region89: #{perceiver_io_forward.11} parent=79 // pred_check
        %p1409 = pneg %p342
      $region90: #{perceiver_io_forward.11} parent=79 // pred_check_branch
        %1411 = sbr.rel (%p1409) target = $region92
      $region91: #{perceiver_io_forward.11} parent=79 // pred_region
        %p1412 = scmp.lt.s32.totalorder %s26, 1
        %s1413 = scalar_select %p1412, %s26, 1
        %s1414 = scalar_lea.vmem %s13, %s1413
      $region92: #{perceiver_io_forward.11} parent=79 // pred_fallthru
        _
    $region80: #{perceiver_io_forward.11} parent=5 // pred_fallthru
      _
  $region6: #{perceiver_io_forward.11} parent=0 // loop_footer
    %s24 = sadd.s32 1, %s20
  $region7: #{perceiver_io_forward.11} parent=0 // loop_footer_branch
    %19 = sbr.rel target = $region3
  $region8: #{perceiver_io_forward.11} parent=0 // loop_exit
    _

// kernel: perceiver_io_forward.12
$region0: #{perceiver_io_forward.12}
  #allocation0 [shape = 'u32[]', space=smem, size = 0x4, offset = 0x4, fixed_abs, tag = 'smem constant byte address 0x4 - core index']
  #allocation1 [shape = 'u32[72,128]{1,0:T(1,128)}', space=vmem, size = 0x9000, scoped, tag = 'internal scratch']
  %s0 = inlined_call_operand.vmem [shape: f32[2,432,1000], index: 0, kind: input, shape index: {}]
  %s1 = inlined_call_operand.vmem [shape: f32[8,432], index: 1, kind: input, shape index: {}]
  %s2 = inlined_call_operand.vmem [shape: f32[8,1], index: 2, kind: input, shape index: {}]
  %s3 = inlined_call_operand.vmem [shape: f32[3,1000], index: 3, kind: input, shape index: {}]
  %s4 = inlined_call_operand.vmem [shape: f32[2,8,1000], index: 4, kind: output, shape index: {0}]
  %s5 = inlined_call_operand.vmem [shape: f32[2,8,3], index: 5, kind: output, shape index: {1}]
  %s6 = inlined_call_operand.vmem [shape: f32[2,8,1], index: 6, kind: output, shape index: {2}]
  %7 = xla_tuple %s4, %s5, %s6
  %s8 = sld [smem:[#allocation0]]
  $region65: #{perceiver_io_forward.12} parent=0
    _
  %s10 = ssub.s32 1, %s8
  %s11 = scalar_select 0, %s10, %s8
  loop: start=0, step=1, limit=4
  $region2: #{perceiver_io_forward.12} parent=0 // loop_pre_header
    _
  $region3: #{perceiver_io_forward.12} parent=0 // loop_header
    %s13 = sphi 0, %s17
    %p14 = scmp.ge.s32.totalorder %s13, 4
    %s23 = sphi 0, %s25
    %s26 = sphi 0, %s23
    %s27 = sphi 0, %s26
    %s43 = sphi 0, %s27
    %s47 = sphi 0, %s47
    %s49 = sphi 0, %s47
    %s50 = sphi 0, %s49
    %s64 = sphi 0, %s50
    %s68 = sphi 0, %s68
    %s70 = sphi 0, %s68
    %s71 = sphi 0, %s70
    %s85 = sphi 0, %s71
    %s89 = sphi 0, %s89
    %s91 = sphi 0, %s89
    %s92 = sphi 0, %s91
    %s106 = sphi 0, %s92
    %s112 = sphi 0, %s114
    %s115 = sphi 0, %s112
    %s116 = sphi 0, %s115
    %s132 = sphi 0, %s116
    %s138 = sphi 0, %s140
    %s141 = sphi 0, %s138
    %s142 = sphi 0, %s141
    %s158 = sphi 0, %s142
    %s164 = sphi 0, %s166
    %s167 = sphi 0, %s164
    %s168 = sphi 0, %s167
    %s184 = sphi 0, %s168
  $region4: #{perceiver_io_forward.12} parent=0 // loop_header_branch
    %16 = sbr.rel (%p14) target = $region8
  $region5: #{perceiver_io_forward.12} parent=0 // loop_body
    %s18 = ssub.s32 %s13, 1
    %s19 = ssub.s32 %s13, 2
    %s20 = sadd.s32 %s13, 1
    %s21 = ssub.s32 %s13, %s20
    %p22 = scmp.eq.s32.totalorder %s21, 0
    %s24 = sadd.s32 %s23, 1
    %s25 = scalar_select %p22, %s23, %s24
    %p28 = pneg %p22
    %p29 = scmp.eq.s32.totalorder %s13, 1
    %p30 = por %p28, %p29
    %p31 = scmp.ne.s32.totalorder %s23, %s26
    %p32 = scmp.eq.s32.totalorder %s13, 0
    %p33 = por %p31, %p32
    %p34 = scmp.ne.s32.totalorder %s23, %s26
    %p35 = scmp.eq.s32.totalorder %s18, 1
    %p36 = por %p34, %p35
    %p37 = scmp.ne.s32.totalorder %s26, %s27
    %p38 = scmp.eq.s32.totalorder %s18, 0
    %p39 = por %p37, %p38
    %p40 = scmp.ne.s32.totalorder %s26, %s27
    %p41 = scmp.eq.s32.totalorder %s19, 1
    %p42 = por %p40, %p41
    %p44 = scmp.ne.s32.totalorder %s27, %s43
    %p45 = scmp.eq.s32.totalorder %s19, 0
    %p46 = por %p44, %p45
    %s48 = sadd.s32 %s47, 1
    %p51 = scmp.eq.s32.totalorder %s13, 1
    %p52 = scmp.ne.s32.totalorder %s47, %s49
    %p53 = scmp.eq.s32.totalorder %s13, 0
    %p54 = por %p52, %p53
    %p55 = scmp.ne.s32.totalorder %s47, %s49
    %p56 = scmp.eq.s32.totalorder %s18, 1
    %p57 = por %p55, %p56
    %p58 = scmp.ne.s32.totalorder %s49, %s50
    %p59 = scmp.eq.s32.totalorder %s18, 0
    %p60 = por %p58, %p59
    %p61 = scmp.ne.s32.totalorder %s49, %s50
    %p62 = scmp.eq.s32.totalorder %s19, 1
    %p63 = por %p61, %p62
    %p65 = scmp.ne.s32.totalorder %s50, %s64
    %p66 = scmp.eq.s32.totalorder %s19, 0
    %p67 = por %p65, %p66
    %s69 = sadd.s32 %s68, 1
    %p72 = scmp.eq.s32.totalorder %s13, 1
    %p73 = scmp.ne.s32.totalorder %s68, %s70
    %p74 = scmp.eq.s32.totalorder %s13, 0
    %p75 = por %p73, %p74
    %p76 = scmp.ne.s32.totalorder %s68, %s70
    %p77 = scmp.eq.s32.totalorder %s18, 1
    %p78 = por %p76, %p77
    %p79 = scmp.ne.s32.totalorder %s70, %s71
    %p80 = scmp.eq.s32.totalorder %s18, 0
    %p81 = por %p79, %p80
    %p82 = scmp.ne.s32.totalorder %s70, %s71
    %p83 = scmp.eq.s32.totalorder %s19, 1
    %p84 = por %p82, %p83
    %p86 = scmp.ne.s32.totalorder %s71, %s85
    %p87 = scmp.eq.s32.totalorder %s19, 0
    %p88 = por %p86, %p87
    %s90 = sadd.s32 %s89, 1
    %p93 = scmp.eq.s32.totalorder %s13, 1
    %p94 = scmp.ne.s32.totalorder %s89, %s91
    %p95 = scmp.eq.s32.totalorder %s13, 0
    %p96 = por %p94, %p95
    %p97 = scmp.ne.s32.totalorder %s89, %s91
    %p98 = scmp.eq.s32.totalorder %s18, 1
    %p99 = por %p97, %p98
    %p100 = scmp.ne.s32.totalorder %s91, %s92
    %p101 = scmp.eq.s32.totalorder %s18, 0
    %p102 = por %p100, %p101
    %p103 = scmp.ne.s32.totalorder %s91, %s92
    %p104 = scmp.eq.s32.totalorder %s19, 1
    %p105 = por %p103, %p104
    %p107 = scmp.ne.s32.totalorder %s92, %s106
    %p108 = scmp.eq.s32.totalorder %s19, 0
    %p109 = por %p107, %p108
    %s110 = ssub.s32 %s13, %s20
    %p111 = scmp.eq.s32.totalorder %s110, 0
    %s113 = sadd.s32 %s112, 1
    %s114 = scalar_select %p111, %s112, %s113
    %p117 = pneg %p111
    %p118 = scmp.eq.s32.totalorder %s13, 1
    %p119 = por %p117, %p118
    %p120 = scmp.ne.s32.totalorder %s112, %s115
    %p121 = scmp.eq.s32.totalorder %s13, 0
    %p122 = por %p120, %p121
    %p123 = scmp.ne.s32.totalorder %s112, %s115
    %p124 = scmp.eq.s32.totalorder %s18, 1
    %p125 = por %p123, %p124
    %p126 = scmp.ne.s32.totalorder %s115, %s116
    %p127 = scmp.eq.s32.totalorder %s18, 0
    %p128 = por %p126, %p127
    %p129 = scmp.ne.s32.totalorder %s115, %s116
    %p130 = scmp.eq.s32.totalorder %s19, 1
    %p131 = por %p129, %p130
    %p133 = scmp.ne.s32.totalorder %s116, %s132
    %p134 = scmp.eq.s32.totalorder %s19, 0
    %p135 = por %p133, %p134
    %s136 = ssub.s32 %s13, %s20
    %p137 = scmp.eq.s32.totalorder %s136, 0
    %s139 = sadd.s32 %s138, 1
    %s140 = scalar_select %p137, %s138, %s139
    %p143 = pneg %p137
    %p144 = scmp.eq.s32.totalorder %s13, 1
    %p145 = por %p143, %p144
    %p146 = scmp.ne.s32.totalorder %s138, %s141
    %p147 = scmp.eq.s32.totalorder %s13, 0
    %p148 = por %p146, %p147
    %p149 = scmp.ne.s32.totalorder %s138, %s141
    %p150 = scmp.eq.s32.totalorder %s18, 1
    %p151 = por %p149, %p150
    %p152 = scmp.ne.s32.totalorder %s141, %s142
    %p153 = scmp.eq.s32.totalorder %s18, 0
    %p154 = por %p152, %p153
    %p155 = scmp.ne.s32.totalorder %s141, %s142
    %p156 = scmp.eq.s32.totalorder %s19, 1
    %p157 = por %p155, %p156
    %p159 = scmp.ne.s32.totalorder %s142, %s158
    %p160 = scmp.eq.s32.totalorder %s19, 0
    %p161 = por %p159, %p160
    %s162 = ssub.s32 %s13, %s20
    %p163 = scmp.eq.s32.totalorder %s162, 0
    %s165 = sadd.s32 %s164, 1
    %s166 = scalar_select %p163, %s164, %s165
    %p169 = pneg %p163
    %p170 = scmp.eq.s32.totalorder %s13, 1
    %p171 = por %p169, %p170
    %p172 = scmp.ne.s32.totalorder %s164, %s167
    %p173 = scmp.eq.s32.totalorder %s13, 0
    %p174 = por %p172, %p173
    %p175 = scmp.ne.s32.totalorder %s164, %s167
    %p176 = scmp.eq.s32.totalorder %s18, 1
    %p177 = por %p175, %p176
    %p178 = scmp.ne.s32.totalorder %s167, %s168
    %p179 = scmp.eq.s32.totalorder %s18, 0
    %p180 = por %p178, %p179
    %p181 = scmp.ne.s32.totalorder %s167, %s168
    %p182 = scmp.eq.s32.totalorder %s19, 1
    %p183 = por %p181, %p182
    %p185 = scmp.ne.s32.totalorder %s168, %s184
    %p186 = scmp.eq.s32.totalorder %s19, 0
    %p187 = por %p185, %p186
    %p188 = scmp.le.s32.totalorder 1, %s13
    %p189 = scmp.lt.s32.totalorder %s13, 3
    %p190 = pnand %p188, %p189
    %p191 = pneg %p190
    // Predicated region
    $region9: #{perceiver_io_forward.12} parent=5 // pred_check
      _
    $region10: #{perceiver_io_forward.12} parent=5 // pred_check_branch
      %193 = sbr.rel (%p190) target = $region12
    $region11: #{perceiver_io_forward.12} parent=5 // pred_region
      %s194 = ssub.s32 %s13, 1
      // Predicated region
      $region13: #{perceiver_io_forward.12} parent=11 // pred_check
        %p195 = pneg %p60
      $region14: #{perceiver_io_forward.12} parent=11 // pred_check_branch
        %197 = sbr.rel (%p195) target = $region16
      $region15: #{perceiver_io_forward.12} parent=11 // pred_region
        _
      $region16: #{perceiver_io_forward.12} parent=11 // pred_fallthru
        _
      // Predicated region
      $region17: #{perceiver_io_forward.12} parent=11 // pred_check
        %p198 = pneg %p81
      $region18: #{perceiver_io_forward.12} parent=11 // pred_check_branch
        %200 = sbr.rel (%p198) target = $region20
      $region19: #{perceiver_io_forward.12} parent=11 // pred_region
        _
      $region20: #{perceiver_io_forward.12} parent=11 // pred_fallthru
        _
      // Predicated region
      $region21: #{perceiver_io_forward.12} parent=11 // pred_check
        %p201 = pneg %p102
      $region22: #{perceiver_io_forward.12} parent=11 // pred_check_branch
        %203 = sbr.rel (%p201) target = $region24
      $region23: #{perceiver_io_forward.12} parent=11 // pred_region
        _
      $region24: #{perceiver_io_forward.12} parent=11 // pred_fallthru
        _
    $region12: #{perceiver_io_forward.12} parent=5 // pred_fallthru
      _
    %p204 = scmp.lt.s32.totalorder %s13, 2
    // Predicated region
    $region25: #{perceiver_io_forward.12} parent=5 // pred_check
      %p205 = pneg %p204
    $region26: #{perceiver_io_forward.12} parent=5 // pred_check_branch
      %207 = sbr.rel (%p205) target = $region28
    $region27: #{perceiver_io_forward.12} parent=5 // pred_region
      // Predicated region
      $region29: #{perceiver_io_forward.12} parent=27 // pred_check
        %p208 = pneg %p33
      $region30: #{perceiver_io_forward.12} parent=27 // pred_check_branch
        %210 = sbr.rel (%p208) target = $region32
      $region31: #{perceiver_io_forward.12} parent=27 // pred_region
        %p211 = scmp.lt.s32.totalorder %s13, 1
        %s212 = scalar_select %p211, %s13, 1
        %s213 = smul.addr %s212, 432
        %s214 = smul.addr %s213, 8
        %s215 = scalar_lea.vmem %s0, %s214
      $region32: #{perceiver_io_forward.12} parent=27 // pred_fallthru
        _
    $region28: #{perceiver_io_forward.12} parent=5 // pred_fallthru
      _
    %p216 = scmp.le.s32.totalorder 1, %s13
    %p217 = scmp.lt.s32.totalorder %s13, 3
    %p218 = pnand %p216, %p217
    %p219 = pneg %p218
    // Predicated region
    $region33: #{perceiver_io_forward.12} parent=5 // pred_check
      _
    $region34: #{perceiver_io_forward.12} parent=5 // pred_check_branch
      %221 = sbr.rel (%p218) target = $region36
    $region35: #{perceiver_io_forward.12} parent=5 // pred_region
      %s222 = ssub.s32 %s13, 1
      %p223 = scmp.lt.s32.totalorder %s18, 1
      %s224 = scalar_select %p223, %s18, 1
      %s225 = smul.addr %s224, 432
      %s226 = smul.addr %s225, 8
      %s227 = scalar_lea.vmem %s0, %s226
      %p228 = pneg %p39
      %p229 = pneg %p36
      %p230 = pneg %p60
      %p231 = pneg %p57
      %p232 = pneg %p81
      %p233 = pneg %p78
      %p234 = pneg %p102
      %p235 = pneg %p99
      %p236 = pneg %p128
      %p237 = pneg %p125
      %p238 = scmp.lt.s32.totalorder %s18, 1
      %s239 = scalar_select %p238, %s18, 1
      %s240 = smul.addr %s239, 8
      %s241 = smul.addr %s240, 8
      %s242 = scalar_lea.vmem %s4, %s241
      %p243 = pneg %p154
      %p244 = pneg %p151
      %p245 = scmp.lt.s32.totalorder %s18, 1
      %s246 = scalar_select %p245, %s18, 1
      %s247 = smul.addr %s246, 8
      %s248 = scalar_lea.vmem %s5, %s247
      %p249 = pneg %p180
      %p250 = pneg %p177
      %p251 = scmp.lt.s32.totalorder %s18, 1
      %s252 = scalar_select %p251, %s18, 1
      %s253 = smul.addr %s252, 8
      %s254 = scalar_lea.vmem %s6, %s253
      %p255 = scmp.lt.s32.totalorder %s18, 1
      %s256 = scalar_select %p255, %s18, 1
      %s257 = smul.addr %s256, 432
      %s258 = smul.addr %s257, 8
      %s259 = scalar_lea.vmem %s0, %s258
      %p260 = scmp.lt.s32.totalorder %s18, 1
      %s261 = scalar_select %p260, %s18, 1
      %s262 = smul.addr %s261, 8
      %s263 = smul.addr %s262, 8
      %s264 = scalar_lea.vmem %s4, %s263
      %p265 = scmp.lt.s32.totalorder %s18, 1
      %s266 = scalar_select %p265, %s18, 1
      %s267 = smul.addr %s266, 8
      %s268 = scalar_lea.vmem %s5, %s267
      %p269 = scmp.lt.s32.totalorder %s18, 1
      %s270 = scalar_select %p269, %s18, 1
      %s271 = smul.addr %s270, 8
      %s272 = scalar_lea.vmem %s6, %s271
      %v273 = vld [vmem:[%s1] sm:$0xff]
      %v274 = vld [vmem:[%s1 + $0x8] sm:$0xff]
      %v275 = vld [vmem:[%s1 + $0x10] sm:$0xff]
      %v276 = vld [vmem:[%s1 + $0x18] sm:$0xff]
      %v277 = vld [vmem:[%s259] sm:$0xff]
      %v278 = vld [vmem:[%s259 + $0x8] sm:$0xff]
      %v279 = vld [vmem:[%s259 + $0x10] sm:$0xff]
      %v280 = vld [vmem:[%s259 + $0x18] sm:$0xff]
      %v281 = vld [vmem:[%s259 + $0x20] sm:$0xff]
      %v282 = vld [vmem:[%s259 + $0x28] sm:$0xff]
      %v283 = vld [vmem:[%s259 + $0x30] sm:$0xff]
      %v284 = vld [vmem:[%s259 + $0x38] sm:$0xff]
      %v285 = vld [vmem:[%s259 + $0x40] sm:$0xff]
      %v286 = vld [vmem:[%s259 + $0x48] sm:$0xff]
      %v287 = vld [vmem:[%s259 + $0x50] sm:$0xff]
      %v288 = vld [vmem:[%s259 + $0x58] sm:$0xff]
      %v289 = vld [vmem:[%s259 + $0x60] sm:$0xff]
      %v290 = vld [vmem:[%s259 + $0x68] sm:$0xff]
      %v291 = vld [vmem:[%s259 + $0x70] sm:$0xff]
      %v292 = vld [vmem:[%s259 + $0x78] sm:$0xff]
      %v293 = vld [vmem:[%s259 + $0x80] sm:$0xff]
      %v294 = vld [vmem:[%s259 + $0x88] sm:$0xff]
      %v295 = vld [vmem:[%s259 + $0x90] sm:$0xff]
      %v296 = vld [vmem:[%s259 + $0x98] sm:$0xff]
      %v297 = vld [vmem:[%s259 + $0xa0] sm:$0xff]
      %v298 = vld [vmem:[%s259 + $0xa8] sm:$0xff]
      %v299 = vld [vmem:[%s259 + $0xb0] sm:$0xff]
      %v300 = vld [vmem:[%s259 + $0xb8] sm:$0xff]
      %v301 = vld [vmem:[%s259 + $0xc0] sm:$0xff]
      %v302 = vld [vmem:[%s259 + $0xc8] sm:$0xff]
      %v303 = vld [vmem:[%s259 + $0xd0] sm:$0xff]
      %v304 = vld [vmem:[%s259 + $0xd8] sm:$0xff]
      %v305 = vld [vmem:[%s259 + $0xe0] sm:$0xff]
      %v306 = vld [vmem:[%s259 + $0xe8] sm:$0xff]
      %v307 = vld [vmem:[%s259 + $0xf0] sm:$0xff]
      %v308 = vld [vmem:[%s259 + $0xf8] sm:$0xff]
      %v309 = vld [vmem:[%s259 + $0x100] sm:$0xff]
      %v310 = vld [vmem:[%s259 + $0x108] sm:$0xff]
      %v311 = vld [vmem:[%s259 + $0x110] sm:$0xff]
      %v312 = vld [vmem:[%s259 + $0x118] sm:$0xff]
      %v313 = vld [vmem:[%s259 + $0x120] sm:$0xff]
      %v314 = vld [vmem:[%s259 + $0x128] sm:$0xff]
      %v315 = vld [vmem:[%s259 + $0x130] sm:$0xff]
      %v316 = vld [vmem:[%s259 + $0x138] sm:$0xff]
      %v317 = vld [vmem:[%s259 + $0x140] sm:$0xff]
      %v318 = vld [vmem:[%s259 + $0x148] sm:$0xff]
      %v319 = vld [vmem:[%s259 + $0x150] sm:$0xff]
      %v320 = vld [vmem:[%s259 + $0x158] sm:$0xff]
      %v321 = vld [vmem:[%s259 + $0x160] sm:$0xff]
      %v322 = vld [vmem:[%s259 + $0x168] sm:$0xff]
      %v323 = vld [vmem:[%s259 + $0x170] sm:$0xff]
      %v324 = vld [vmem:[%s259 + $0x178] sm:$0xff]
      %v325 = vld [vmem:[%s259 + $0x180] sm:$0xff]
      %v326 = vld [vmem:[%s259 + $0x188] sm:$0xff]
      %v327 = vld [vmem:[%s259 + $0x190] sm:$0xff]
      %v328 = vld [vmem:[%s259 + $0x198] sm:$0xff]
      %v329 = vld [vmem:[%s259 + $0x1a0] sm:$0xff]
      %v330 = vld [vmem:[%s259 + $0x1a8] sm:$0xff]
      %v331 = vld [vmem:[%s259 + $0x1b0] sm:$0xff]
      %v332 = vld [vmem:[%s259 + $0x1b8] sm:$0xff]
      %v333 = vld [vmem:[%s259 + $0x1c0] sm:$0xff]
      %v334 = vld [vmem:[%s259 + $0x1c8] sm:$0xff]
      %v335 = vld [vmem:[%s259 + $0x1d0] sm:$0xff]
      %v336 = vld [vmem:[%s259 + $0x1d8] sm:$0xff]
      %v337 = vld [vmem:[%s259 + $0x1e0] sm:$0xff]
      %v338 = vld [vmem:[%s259 + $0x1e8] sm:$0xff]
      %v339 = vld [vmem:[%s259 + $0x1f0] sm:$0xff]
      %v340 = vld [vmem:[%s259 + $0x1f8] sm:$0xff]
      %v341 = vld [vmem:[%s259 + $0x200] sm:$0xff]
      %v342 = vld [vmem:[%s259 + $0x208] sm:$0xff]
      %v343 = vld [vmem:[%s259 + $0x210] sm:$0xff]
      %v344 = vld [vmem:[%s259 + $0x218] sm:$0xff]
      %v345 = vld [vmem:[%s259 + $0x220] sm:$0xff]
      %v346 = vld [vmem:[%s259 + $0x228] sm:$0xff]
      %v347 = vld [vmem:[%s259 + $0x230] sm:$0xff]
      %v348 = vld [vmem:[%s259 + $0x238] sm:$0xff]
      %v349 = vld [vmem:[%s259 + $0x240] sm:$0xff]
      %v350 = vld [vmem:[%s259 + $0x248] sm:$0xff]
      %v351 = vld [vmem:[%s259 + $0x250] sm:$0xff]
      %v352 = vld [vmem:[%s259 + $0x258] sm:$0xff]
      %v353 = vld [vmem:[%s259 + $0x260] sm:$0xff]
      %v354 = vld [vmem:[%s259 + $0x268] sm:$0xff]
      %v355 = vld [vmem:[%s259 + $0x270] sm:$0xff]
      %v356 = vld [vmem:[%s259 + $0x278] sm:$0xff]
      %v357 = vld [vmem:[%s259 + $0x280] sm:$0xff]
      %v358 = vld [vmem:[%s259 + $0x288] sm:$0xff]
      %v359 = vld [vmem:[%s259 + $0x290] sm:$0xff]
      %v360 = vld [vmem:[%s259 + $0x298] sm:$0xff]
      %v361 = vld [vmem:[%s259 + $0x2a0] sm:$0xff]
      %v362 = vld [vmem:[%s259 + $0x2a8] sm:$0xff]
      %v363 = vld [vmem:[%s259 + $0x2b0] sm:$0xff]
      %v364 = vld [vmem:[%s259 + $0x2b8] sm:$0xff]
      %v365 = vld [vmem:[%s259 + $0x2c0] sm:$0xff]
      %v366 = vld [vmem:[%s259 + $0x2c8] sm:$0xff]
      %v367 = vld [vmem:[%s259 + $0x2d0] sm:$0xff]
      %v368 = vld [vmem:[%s259 + $0x2d8] sm:$0xff]
      %v369 = vld [vmem:[%s259 + $0x2e0] sm:$0xff]
      %v370 = vld [vmem:[%s259 + $0x2e8] sm:$0xff]
      %v371 = vld [vmem:[%s259 + $0x2f0] sm:$0xff]
      %v372 = vld [vmem:[%s259 + $0x2f8] sm:$0xff]
      %v373 = vld [vmem:[%s259 + $0x300] sm:$0xff]
      %v374 = vld [vmem:[%s259 + $0x308] sm:$0xff]
      %v375 = vld [vmem:[%s259 + $0x310] sm:$0xff]
      %v376 = vld [vmem:[%s259 + $0x318] sm:$0xff]
      %v377 = vld [vmem:[%s259 + $0x320] sm:$0xff]
      %v378 = vld [vmem:[%s259 + $0x328] sm:$0xff]
      %v379 = vld [vmem:[%s259 + $0x330] sm:$0xff]
      %v380 = vld [vmem:[%s259 + $0x338] sm:$0xff]
      %v381 = vld [vmem:[%s259 + $0x340] sm:$0xff]
      %v382 = vld [vmem:[%s259 + $0x348] sm:$0xff]
      %v383 = vld [vmem:[%s259 + $0x350] sm:$0xff]
      %v384 = vld [vmem:[%s259 + $0x358] sm:$0xff]
      %v385 = vld [vmem:[%s259 + $0x360] sm:$0xff]
      %v386 = vld [vmem:[%s259 + $0x368] sm:$0xff]
      %v387 = vld [vmem:[%s259 + $0x370] sm:$0xff]
      %v388 = vld [vmem:[%s259 + $0x378] sm:$0xff]
      %v389 = vld [vmem:[%s259 + $0x380] sm:$0xff]
      %v390 = vld [vmem:[%s259 + $0x388] sm:$0xff]
      %v391 = vld [vmem:[%s259 + $0x390] sm:$0xff]
      %v392 = vld [vmem:[%s259 + $0x398] sm:$0xff]
      %v393 = vld [vmem:[%s259 + $0x3a0] sm:$0xff]
      %v394 = vld [vmem:[%s259 + $0x3a8] sm:$0xff]
      %v395 = vld [vmem:[%s259 + $0x3b0] sm:$0xff]
      %v396 = vld [vmem:[%s259 + $0x3b8] sm:$0xff]
      %v397 = vld [vmem:[%s259 + $0x3c0] sm:$0xff]
      %v398 = vld [vmem:[%s259 + $0x3c8] sm:$0xff]
      %v399 = vld [vmem:[%s259 + $0x3d0] sm:$0xff]
      %v400 = vld [vmem:[%s259 + $0x3d8] sm:$0xff]
      %v401 = vld [vmem:[%s259 + $0x3e0] sm:$0xff]
      %v402 = vld [vmem:[%s259 + $0x3e8] sm:$0xff]
      %v403 = vld [vmem:[%s259 + $0x3f0] sm:$0xff]
      %v404 = vld [vmem:[%s259 + $0x3f8] sm:$0xff]
      %v405 = vld [vmem:[%s259 + $0x400] sm:$0xff]
      %v406 = vld [vmem:[%s259 + $0x408] sm:$0xff]
      %v407 = vld [vmem:[%s259 + $0x410] sm:$0xff]
      %v408 = vld [vmem:[%s259 + $0x418] sm:$0xff]
      %v409 = vld [vmem:[%s259 + $0x420] sm:$0xff]
      %v410 = vld [vmem:[%s259 + $0x428] sm:$0xff]
      %v411 = vld [vmem:[%s259 + $0x430] sm:$0xff]
      %v412 = vld [vmem:[%s259 + $0x438] sm:$0xff]
      %v413 = vld [vmem:[%s259 + $0x440] sm:$0xff]
      %v414 = vld [vmem:[%s259 + $0x448] sm:$0xff]
      %v415 = vld [vmem:[%s259 + $0x450] sm:$0xff]
      %v416 = vld [vmem:[%s259 + $0x458] sm:$0xff]
      %v417 = vld [vmem:[%s259 + $0x460] sm:$0xff]
      %v418 = vld [vmem:[%s259 + $0x468] sm:$0xff]
      %v419 = vld [vmem:[%s259 + $0x470] sm:$0xff]
      %v420 = vld [vmem:[%s259 + $0x478] sm:$0xff]
      %v421 = vld [vmem:[%s259 + $0x480] sm:$0xff]
      %v422 = vld [vmem:[%s259 + $0x488] sm:$0xff]
      %v423 = vld [vmem:[%s259 + $0x490] sm:$0xff]
      %v424 = vld [vmem:[%s259 + $0x498] sm:$0xff]
      %v425 = vld [vmem:[%s259 + $0x4a0] sm:$0xff]
      %v426 = vld [vmem:[%s259 + $0x4a8] sm:$0xff]
      %v427 = vld [vmem:[%s259 + $0x4b0] sm:$0xff]
      %v428 = vld [vmem:[%s259 + $0x4b8] sm:$0xff]
      %v429 = vld [vmem:[%s259 + $0x4c0] sm:$0xff]
      %v430 = vld [vmem:[%s259 + $0x4c8] sm:$0xff]
      %v431 = vld [vmem:[%s259 + $0x4d0] sm:$0xff]
      %v432 = vld [vmem:[%s259 + $0x4d8] sm:$0xff]
      %v433 = vld [vmem:[%s259 + $0x4e0] sm:$0xff]
      %v434 = vld [vmem:[%s259 + $0x4e8] sm:$0xff]
      %v435 = vld [vmem:[%s259 + $0x4f0] sm:$0xff]
      %v436 = vld [vmem:[%s259 + $0x4f8] sm:$0xff]
      %v437 = vld [vmem:[%s259 + $0x500] sm:$0xff]
      %v438 = vld [vmem:[%s259 + $0x508] sm:$0xff]
      %v439 = vld [vmem:[%s259 + $0x510] sm:$0xff]
      %v440 = vld [vmem:[%s259 + $0x518] sm:$0xff]
      %v441 = vld [vmem:[%s259 + $0x520] sm:$0xff]
      %v442 = vld [vmem:[%s259 + $0x528] sm:$0xff]
      %v443 = vld [vmem:[%s259 + $0x530] sm:$0xff]
      %v444 = vld [vmem:[%s259 + $0x538] sm:$0xff]
      %v445 = vld [vmem:[%s259 + $0x540] sm:$0xff]
      %v446 = vld [vmem:[%s259 + $0x548] sm:$0xff]
      %v447 = vld [vmem:[%s259 + $0x550] sm:$0xff]
      %v448 = vld [vmem:[%s259 + $0x558] sm:$0xff]
      %v449 = vld [vmem:[%s259 + $0x560] sm:$0xff]
      %v450 = vld [vmem:[%s259 + $0x568] sm:$0xff]
      %v451 = vld [vmem:[%s259 + $0x570] sm:$0xff]
      %v452 = vld [vmem:[%s259 + $0x578] sm:$0xff]
      %v453 = vld [vmem:[%s259 + $0x580] sm:$0xff]
      %v454 = vld [vmem:[%s259 + $0x588] sm:$0xff]
      %v455 = vld [vmem:[%s259 + $0x590] sm:$0xff]
      %v456 = vld [vmem:[%s259 + $0x598] sm:$0xff]
      %v457 = vld [vmem:[%s259 + $0x5a0] sm:$0xff]
      %v458 = vld [vmem:[%s259 + $0x5a8] sm:$0xff]
      %v459 = vld [vmem:[%s259 + $0x5b0] sm:$0xff]
      %v460 = vld [vmem:[%s259 + $0x5b8] sm:$0xff]
      %v461 = vld [vmem:[%s259 + $0x5c0] sm:$0xff]
      %v462 = vld [vmem:[%s259 + $0x5c8] sm:$0xff]
      %v463 = vld [vmem:[%s259 + $0x5d0] sm:$0xff]
      %v464 = vld [vmem:[%s259 + $0x5d8] sm:$0xff]
      %v465 = vld [vmem:[%s259 + $0x5e0] sm:$0xff]
      %v466 = vld [vmem:[%s259 + $0x5e8] sm:$0xff]
      %v467 = vld [vmem:[%s259 + $0x5f0] sm:$0xff]
      %v468 = vld [vmem:[%s259 + $0x5f8] sm:$0xff]
      %v469 = vld [vmem:[%s259 + $0x600] sm:$0xff]
      %v470 = vld [vmem:[%s259 + $0x608] sm:$0xff]
      %v471 = vld [vmem:[%s259 + $0x610] sm:$0xff]
      %v472 = vld [vmem:[%s259 + $0x618] sm:$0xff]
      %v473 = vld [vmem:[%s259 + $0x620] sm:$0xff]
      %v474 = vld [vmem:[%s259 + $0x628] sm:$0xff]
      %v475 = vld [vmem:[%s259 + $0x630] sm:$0xff]
      %v476 = vld [vmem:[%s259 + $0x638] sm:$0xff]
      %v477 = vld [vmem:[%s259 + $0x640] sm:$0xff]
      %v478 = vld [vmem:[%s259 + $0x648] sm:$0xff]
      %v479 = vld [vmem:[%s259 + $0x650] sm:$0xff]
      %v480 = vld [vmem:[%s259 + $0x658] sm:$0xff]
      %v481 = vld [vmem:[%s259 + $0x660] sm:$0xff]
      %v482 = vld [vmem:[%s259 + $0x668] sm:$0xff]
      %v483 = vld [vmem:[%s259 + $0x670] sm:$0xff]
      %v484 = vld [vmem:[%s259 + $0x678] sm:$0xff]
      %v485 = vld [vmem:[%s259 + $0x680] sm:$0xff]
      %v486 = vld [vmem:[%s259 + $0x688] sm:$0xff]
      %v487 = vld [vmem:[%s259 + $0x690] sm:$0xff]
      %v488 = vld [vmem:[%s259 + $0x698] sm:$0xff]
      %v489 = vld [vmem:[%s259 + $0x6a0] sm:$0xff]
      %v490 = vld [vmem:[%s259 + $0x6a8] sm:$0xff]
      %v491 = vld [vmem:[%s259 + $0x6b0] sm:$0xff]
      %v492 = vld [vmem:[%s259 + $0x6b8] sm:$0xff]
      %v493 = vld [vmem:[%s259 + $0x6c0] sm:$0xff]
      %v494 = vld [vmem:[%s259 + $0x6c8] sm:$0xff]
      %v495 = vld [vmem:[%s259 + $0x6d0] sm:$0xff]
      %v496 = vld [vmem:[%s259 + $0x6d8] sm:$0xff]
      %v497 = vld [vmem:[%s259 + $0x6e0] sm:$0xff]
      %v498 = vld [vmem:[%s259 + $0x6e8] sm:$0xff]
      %v499 = vld [vmem:[%s259 + $0x6f0] sm:$0xff]
      %v500 = vld [vmem:[%s259 + $0x6f8] sm:$0xff]
      %v501 = vld [vmem:[%s259 + $0x700] sm:$0xff]
      %v502 = vld [vmem:[%s259 + $0x708] sm:$0xff]
      %v503 = vld [vmem:[%s259 + $0x710] sm:$0xff]
      %v504 = vld [vmem:[%s259 + $0x718] sm:$0xff]
      %v505 = vld [vmem:[%s259 + $0x720] sm:$0xff]
      %v506 = vld [vmem:[%s259 + $0x728] sm:$0xff]
      %v507 = vld [vmem:[%s259 + $0x730] sm:$0xff]
      %v508 = vld [vmem:[%s259 + $0x738] sm:$0xff]
      %v509 = vld [vmem:[%s259 + $0x740] sm:$0xff]
      %v510 = vld [vmem:[%s259 + $0x748] sm:$0xff]
      %v511 = vld [vmem:[%s259 + $0x750] sm:$0xff]
      %v512 = vld [vmem:[%s259 + $0x758] sm:$0xff]
      %v513 = vld [vmem:[%s259 + $0x760] sm:$0xff]
      %v514 = vld [vmem:[%s259 + $0x768] sm:$0xff]
      %v515 = vld [vmem:[%s259 + $0x770] sm:$0xff]
      %v516 = vld [vmem:[%s259 + $0x778] sm:$0xff]
      %v517 = vld [vmem:[%s259 + $0x780] sm:$0xff]
      %v518 = vld [vmem:[%s259 + $0x788] sm:$0xff]
      %v519 = vld [vmem:[%s259 + $0x790] sm:$0xff]
      %v520 = vld [vmem:[%s259 + $0x798] sm:$0xff]
      %v521 = vld [vmem:[%s259 + $0x7a0] sm:$0xff]
      %v522 = vld [vmem:[%s259 + $0x7a8] sm:$0xff]
      %v523 = vld [vmem:[%s259 + $0x7b0] sm:$0xff]
      %v524 = vld [vmem:[%s259 + $0x7b8] sm:$0xff]
      %v525 = vld [vmem:[%s259 + $0x7c0] sm:$0xff]
      %v526 = vld [vmem:[%s259 + $0x7c8] sm:$0xff]
      %v527 = vld [vmem:[%s259 + $0x7d0] sm:$0xff]
      %v528 = vld [vmem:[%s259 + $0x7d8] sm:$0xff]
      %v529 = vld [vmem:[%s259 + $0x7e0] sm:$0xff]
      %v530 = vld [vmem:[%s259 + $0x7e8] sm:$0xff]
      %v531 = vld [vmem:[%s259 + $0x7f0] sm:$0xff]
      %v532 = vld [vmem:[%s259 + $0x7f8] sm:$0xff]
      %v533 = vld [vmem:[%s259 + $0x800] sm:$0xff]
      %v534 = vld [vmem:[%s259 + $0x808] sm:$0xff]
      %v535 = vld [vmem:[%s259 + $0x810] sm:$0xff]
      %v536 = vld [vmem:[%s259 + $0x818] sm:$0xff]
      %v537 = vld [vmem:[%s259 + $0x820] sm:$0xff]
      %v538 = vld [vmem:[%s259 + $0x828] sm:$0xff]
      %v539 = vld [vmem:[%s259 + $0x830] sm:$0xff]
      %v540 = vld [vmem:[%s259 + $0x838] sm:$0xff]
      %v541 = vld [vmem:[%s259 + $0x840] sm:$0xff]
      %v542 = vld [vmem:[%s259 + $0x848] sm:$0xff]
      %v543 = vld [vmem:[%s259 + $0x850] sm:$0xff]
      %v544 = vld [vmem:[%s259 + $0x858] sm:$0xff]
      %v545 = vld [vmem:[%s259 + $0x860] sm:$0xff]
      %v546 = vld [vmem:[%s259 + $0x868] sm:$0xff]
      %v547 = vld [vmem:[%s259 + $0x870] sm:$0xff]
      %v548 = vld [vmem:[%s259 + $0x878] sm:$0xff]
      %v549 = vld [vmem:[%s259 + $0x880] sm:$0xff]
      %v550 = vld [vmem:[%s259 + $0x888] sm:$0xff]
      %v551 = vld [vmem:[%s259 + $0x890] sm:$0xff]
      %v552 = vld [vmem:[%s259 + $0x898] sm:$0xff]
      %v553 = vld [vmem:[%s259 + $0x8a0] sm:$0xff]
      %v554 = vld [vmem:[%s259 + $0x8a8] sm:$0xff]
      %v555 = vld [vmem:[%s259 + $0x8b0] sm:$0xff]
      %v556 = vld [vmem:[%s259 + $0x8b8] sm:$0xff]
      %v557 = vld [vmem:[%s259 + $0x8c0] sm:$0xff]
      %v558 = vld [vmem:[%s259 + $0x8c8] sm:$0xff]
      %v559 = vld [vmem:[%s259 + $0x8d0] sm:$0xff]
      %v560 = vld [vmem:[%s259 + $0x8d8] sm:$0xff]
      %v561 = vld [vmem:[%s259 + $0x8e0] sm:$0xff]
      %v562 = vld [vmem:[%s259 + $0x8e8] sm:$0xff]
      %v563 = vld [vmem:[%s259 + $0x8f0] sm:$0xff]
      %v564 = vld [vmem:[%s259 + $0x8f8] sm:$0xff]
      %v565 = vld [vmem:[%s259 + $0x900] sm:$0xff]
      %v566 = vld [vmem:[%s259 + $0x908] sm:$0xff]
      %v567 = vld [vmem:[%s259 + $0x910] sm:$0xff]
      %v568 = vld [vmem:[%s259 + $0x918] sm:$0xff]
      %v569 = vld [vmem:[%s259 + $0x920] sm:$0xff]
      %v570 = vld [vmem:[%s259 + $0x928] sm:$0xff]
      %v571 = vld [vmem:[%s259 + $0x930] sm:$0xff]
      %v572 = vld [vmem:[%s259 + $0x938] sm:$0xff]
      %v573 = vld [vmem:[%s259 + $0x940] sm:$0xff]
      %v574 = vld [vmem:[%s259 + $0x948] sm:$0xff]
      %v575 = vld [vmem:[%s259 + $0x950] sm:$0xff]
      %v576 = vld [vmem:[%s259 + $0x958] sm:$0xff]
      %v577 = vld [vmem:[%s259 + $0x960] sm:$0xff]
      %v578 = vld [vmem:[%s259 + $0x968] sm:$0xff]
      %v579 = vld [vmem:[%s259 + $0x970] sm:$0xff]
      %v580 = vld [vmem:[%s259 + $0x978] sm:$0xff]
      %v581 = vld [vmem:[%s259 + $0x980] sm:$0xff]
      %v582 = vld [vmem:[%s259 + $0x988] sm:$0xff]
      %v583 = vld [vmem:[%s259 + $0x990] sm:$0xff]
      %v584 = vld [vmem:[%s259 + $0x998] sm:$0xff]
      %v585 = vld [vmem:[%s259 + $0x9a0] sm:$0xff]
      %v586 = vld [vmem:[%s259 + $0x9a8] sm:$0xff]
      %v587 = vld [vmem:[%s259 + $0x9b0] sm:$0xff]
      %v588 = vld [vmem:[%s259 + $0x9b8] sm:$0xff]
      %v589 = vld [vmem:[%s259 + $0x9c0] sm:$0xff]
      %v590 = vld [vmem:[%s259 + $0x9c8] sm:$0xff]
      %v591 = vld [vmem:[%s259 + $0x9d0] sm:$0xff]
      %v592 = vld [vmem:[%s259 + $0x9d8] sm:$0xff]
      %v593 = vld [vmem:[%s259 + $0x9e0] sm:$0xff]
      %v594 = vld [vmem:[%s259 + $0x9e8] sm:$0xff]
      %v595 = vld [vmem:[%s259 + $0x9f0] sm:$0xff]
      %v596 = vld [vmem:[%s259 + $0x9f8] sm:$0xff]
      %v597 = vld [vmem:[%s259 + $0xa00] sm:$0xff]
      %v598 = vld [vmem:[%s259 + $0xa08] sm:$0xff]
      %v599 = vld [vmem:[%s259 + $0xa10] sm:$0xff]
      %v600 = vld [vmem:[%s259 + $0xa18] sm:$0xff]
      %v601 = vld [vmem:[%s259 + $0xa20] sm:$0xff]
      %v602 = vld [vmem:[%s259 + $0xa28] sm:$0xff]
      %v603 = vld [vmem:[%s259 + $0xa30] sm:$0xff]
      %v604 = vld [vmem:[%s259 + $0xa38] sm:$0xff]
      %v605 = vld [vmem:[%s259 + $0xa40] sm:$0xff]
      %v606 = vld [vmem:[%s259 + $0xa48] sm:$0xff]
      %v607 = vld [vmem:[%s259 + $0xa50] sm:$0xff]
      %v608 = vld [vmem:[%s259 + $0xa58] sm:$0xff]
      %v609 = vld [vmem:[%s259 + $0xa60] sm:$0xff]
      %v610 = vld [vmem:[%s259 + $0xa68] sm:$0xff]
      %v611 = vld [vmem:[%s259 + $0xa70] sm:$0xff]
      %v612 = vld [vmem:[%s259 + $0xa78] sm:$0xff]
      %v613 = vld [vmem:[%s259 + $0xa80] sm:$0xff]
      %v614 = vld [vmem:[%s259 + $0xa88] sm:$0xff]
      %v615 = vld [vmem:[%s259 + $0xa90] sm:$0xff]
      %v616 = vld [vmem:[%s259 + $0xa98] sm:$0xff]
      %v617 = vld [vmem:[%s259 + $0xaa0] sm:$0xff]
      %v618 = vld [vmem:[%s259 + $0xaa8] sm:$0xff]
      %v619 = vld [vmem:[%s259 + $0xab0] sm:$0xff]
      %v620 = vld [vmem:[%s259 + $0xab8] sm:$0xff]
      %v621 = vld [vmem:[%s259 + $0xac0] sm:$0xff]
      %v622 = vld [vmem:[%s259 + $0xac8] sm:$0xff]
      %v623 = vld [vmem:[%s259 + $0xad0] sm:$0xff]
      %v624 = vld [vmem:[%s259 + $0xad8] sm:$0xff]
      %v625 = vld [vmem:[%s259 + $0xae0] sm:$0xff]
      %v626 = vld [vmem:[%s259 + $0xae8] sm:$0xff]
      %v627 = vld [vmem:[%s259 + $0xaf0] sm:$0xff]
      %v628 = vld [vmem:[%s259 + $0xaf8] sm:$0xff]
      %v629 = vld [vmem:[%s259 + $0xb00] sm:$0xff]
      %v630 = vld [vmem:[%s259 + $0xb08] sm:$0xff]
      %v631 = vld [vmem:[%s259 + $0xb10] sm:$0xff]
      %v632 = vld [vmem:[%s259 + $0xb18] sm:$0xff]
      %v633 = vld [vmem:[%s259 + $0xb20] sm:$0xff]
      %v634 = vld [vmem:[%s259 + $0xb28] sm:$0xff]
      %v635 = vld [vmem:[%s259 + $0xb30] sm:$0xff]
      %v636 = vld [vmem:[%s259 + $0xb38] sm:$0xff]
      %v637 = vld [vmem:[%s259 + $0xb40] sm:$0xff]
      %v638 = vld [vmem:[%s259 + $0xb48] sm:$0xff]
      %v639 = vld [vmem:[%s259 + $0xb50] sm:$0xff]
      %v640 = vld [vmem:[%s259 + $0xb58] sm:$0xff]
      %v641 = vld [vmem:[%s259 + $0xb60] sm:$0xff]
      %v642 = vld [vmem:[%s259 + $0xb68] sm:$0xff]
      %v643 = vld [vmem:[%s259 + $0xb70] sm:$0xff]
      %v644 = vld [vmem:[%s259 + $0xb78] sm:$0xff]
      %v645 = vld [vmem:[%s259 + $0xb80] sm:$0xff]
      %v646 = vld [vmem:[%s259 + $0xb88] sm:$0xff]
      %v647 = vld [vmem:[%s259 + $0xb90] sm:$0xff]
      %v648 = vld [vmem:[%s259 + $0xb98] sm:$0xff]
      %v649 = vld [vmem:[%s259 + $0xba0] sm:$0xff]
      %v650 = vld [vmem:[%s259 + $0xba8] sm:$0xff]
      %v651 = vld [vmem:[%s259 + $0xbb0] sm:$0xff]
      %v652 = vld [vmem:[%s259 + $0xbb8] sm:$0xff]
      %v653 = vld [vmem:[%s259 + $0xbc0] sm:$0xff]
      %v654 = vld [vmem:[%s259 + $0xbc8] sm:$0xff]
      %v655 = vld [vmem:[%s259 + $0xbd0] sm:$0xff]
      %v656 = vld [vmem:[%s259 + $0xbd8] sm:$0xff]
      %v657 = vld [vmem:[%s259 + $0xbe0] sm:$0xff]
      %v658 = vld [vmem:[%s259 + $0xbe8] sm:$0xff]
      %v659 = vld [vmem:[%s259 + $0xbf0] sm:$0xff]
      %v660 = vld [vmem:[%s259 + $0xbf8] sm:$0xff]
      %v661 = vld [vmem:[%s259 + $0xc00] sm:$0xff]
      %v662 = vld [vmem:[%s259 + $0xc08] sm:$0xff]
      %v663 = vld [vmem:[%s259 + $0xc10] sm:$0xff]
      %v664 = vld [vmem:[%s259 + $0xc18] sm:$0xff]
      %v665 = vld [vmem:[%s259 + $0xc20] sm:$0xff]
      %v666 = vld [vmem:[%s259 + $0xc28] sm:$0xff]
      %v667 = vld [vmem:[%s259 + $0xc30] sm:$0xff]
      %v668 = vld [vmem:[%s259 + $0xc38] sm:$0xff]
      %v669 = vld [vmem:[%s259 + $0xc40] sm:$0xff]
      %v670 = vld [vmem:[%s259 + $0xc48] sm:$0xff]
      %v671 = vld [vmem:[%s259 + $0xc50] sm:$0xff]
      %v672 = vld [vmem:[%s259 + $0xc58] sm:$0xff]
      %v673 = vld [vmem:[%s259 + $0xc60] sm:$0xff]
      %v674 = vld [vmem:[%s259 + $0xc68] sm:$0xff]
      %v675 = vld [vmem:[%s259 + $0xc70] sm:$0xff]
      %v676 = vld [vmem:[%s259 + $0xc78] sm:$0xff]
      %v677 = vld [vmem:[%s259 + $0xc80] sm:$0xff]
      %v678 = vld [vmem:[%s259 + $0xc88] sm:$0xff]
      %v679 = vld [vmem:[%s259 + $0xc90] sm:$0xff]
      %v680 = vld [vmem:[%s259 + $0xc98] sm:$0xff]
      %v681 = vld [vmem:[%s259 + $0xca0] sm:$0xff]
      %v682 = vld [vmem:[%s259 + $0xca8] sm:$0xff]
      %v683 = vld [vmem:[%s259 + $0xcb0] sm:$0xff]
      %v684 = vld [vmem:[%s259 + $0xcb8] sm:$0xff]
      %v685 = vld [vmem:[%s259 + $0xcc0] sm:$0xff]
      %v686 = vld [vmem:[%s259 + $0xcc8] sm:$0xff]
      %v687 = vld [vmem:[%s259 + $0xcd0] sm:$0xff]
      %v688 = vld [vmem:[%s259 + $0xcd8] sm:$0xff]
      %v689 = vld [vmem:[%s259 + $0xce0] sm:$0xff]
      %v690 = vld [vmem:[%s259 + $0xce8] sm:$0xff]
      %v691 = vld [vmem:[%s259 + $0xcf0] sm:$0xff]
      %v692 = vld [vmem:[%s259 + $0xcf8] sm:$0xff]
      %v693 = vld [vmem:[%s259 + $0xd00] sm:$0xff]
      %v694 = vld [vmem:[%s259 + $0xd08] sm:$0xff]
      %v695 = vld [vmem:[%s259 + $0xd10] sm:$0xff]
      %v696 = vld [vmem:[%s259 + $0xd18] sm:$0xff]
      %v697 = vld [vmem:[%s259 + $0xd20] sm:$0xff]
      %v698 = vld [vmem:[%s259 + $0xd28] sm:$0xff]
      %v699 = vld [vmem:[%s259 + $0xd30] sm:$0xff]
      %v700 = vld [vmem:[%s259 + $0xd38] sm:$0xff]
      %v701 = vld [vmem:[%s259 + $0xd40] sm:$0xff]
      %v702 = vld [vmem:[%s259 + $0xd48] sm:$0xff]
      %v703 = vld [vmem:[%s259 + $0xd50] sm:$0xff]
      %v704 = vld [vmem:[%s259 + $0xd58] sm:$0xff]
      %v705 = vld [vmem:[%s259 + $0xd60] sm:$0xff]
      %v706 = vld [vmem:[%s259 + $0xd68] sm:$0xff]
      %v707 = vld [vmem:[%s259 + $0xd70] sm:$0xff]
      %v708 = vld [vmem:[%s259 + $0xd78] sm:$0xff]
      %v709 = vld [vmem:[%s2] sm:$0xff]
      %711 = vset.pattern.permute.xlu0 0
      %712 = vperm.xlu0 %711, %v709
      %v713 = vpop.permute.xlu0 %712
      %vm715 = vcmask 392192
      %v717 = vsel %vm715, %v276, 0
      %719 = vmatpush.msra.mxu0 %v397
      %720 = vmatpush.msra.mxu0 %v389
      %721 = vmatpush.msra.mxu0 %v381
      %722 = vmatpush.msra.mxu0 %v373
      %723 = vmatpush.msra.mxu0 %v365
      %724 = vmatpush.msra.mxu0 %v357
      %725 = vmatpush.msra.mxu0 %v349
      %726 = vmatpush.msra.mxu0 %v341
      %727 = vmatpush.msra.mxu0 %v333
      %728 = vmatpush.msra.mxu0 %v325
      %729 = vmatpush.msra.mxu0 %v317
      %730 = vmatpush.msra.mxu0 %v309
      %731 = vmatpush.msra.mxu0 %v301
      %732 = vmatpush.msra.mxu0 %v293
      %733 = vmatpush.msra.mxu0 %v285
      %734 = vmatpush.msra.mxu0 %v277
      %735 = vmatmul.f32.gmra.mxu0 %v273
      %v736 = vpop.f32.mrf.mxu0
      %v737 = vadd.f32 %v713, %v736
      %738 = vdwg.mxu0
      %739 = vmatpush.msra.mxu0 %v525
      %740 = vmatpush.msra.mxu0 %v517
      %741 = vmatpush.msra.mxu0 %v509
      %742 = vmatpush.msra.mxu0 %v501
      %743 = vmatpush.msra.mxu0 %v493
      %744 = vmatpush.msra.mxu0 %v485
      %745 = vmatpush.msra.mxu0 %v477
      %746 = vmatpush.msra.mxu0 %v469
      %747 = vmatpush.msra.mxu0 %v461
      %748 = vmatpush.msra.mxu0 %v453
      %749 = vmatpush.msra.mxu0 %v445
      %750 = vmatpush.msra.mxu0 %v437
      %751 = vmatpush.msra.mxu0 %v429
      %752 = vmatpush.msra.mxu0 %v421
      %753 = vmatpush.msra.mxu0 %v413
      %754 = vmatpush.msra.mxu0 %v405
      %755 = vmatmul.f32.gmra.mxu0 %v274
      %v756 = vpop.f32.mrf.mxu0
      %v757 = vadd.f32 %v737, %v756
      %758 = vdwg.mxu0
      %759 = vmatpush.msra.mxu0 %v653
      %760 = vmatpush.msra.mxu0 %v645
      %761 = vmatpush.msra.mxu0 %v637
      %762 = vmatpush.msra.mxu0 %v629
      %763 = vmatpush.msra.mxu0 %v621
      %764 = vmatpush.msra.mxu0 %v613
      %765 = vmatpush.msra.mxu0 %v605
      %766 = vmatpush.msra.mxu0 %v597
      %767 = vmatpush.msra.mxu0 %v589
      %768 = vmatpush.msra.mxu0 %v581
      %769 = vmatpush.msra.mxu0 %v573
      %770 = vmatpush.msra.mxu0 %v565
      %771 = vmatpush.msra.mxu0 %v557
      %772 = vmatpush.msra.mxu0 %v549
      %773 = vmatpush.msra.mxu0 %v541
      %774 = vmatpush.msra.mxu0 %v533
      %775 = vmatmul.f32.gmra.mxu0 %v275
      %v776 = vpop.f32.mrf.mxu0
      %v777 = vadd.f32 %v757, %v776
      %778 = vdwg.mxu0
      %779 = vmatpush.msra.mxu0 0.0
      %780 = vmatpush.msra.mxu0 0.0
      %781 = vmatpush.msra.mxu0 0.0
      %782 = vmatpush.msra.mxu0 0.0
      %783 = vmatpush.msra.mxu0 0.0
      %784 = vmatpush.msra.mxu0 0.0
      %785 = vmatpush.msra.mxu0 0.0
      %786 = vmatpush.msra.mxu0 0.0
      %787 = vmatpush.msra.mxu0 0.0
      %788 = vmatpush.msra.mxu0 0.0
      %789 = vmatpush.msra.mxu0 %v701
      %790 = vmatpush.msra.mxu0 %v693
      %791 = vmatpush.msra.mxu0 %v685
      %792 = vmatpush.msra.mxu0 %v677
      %793 = vmatpush.msra.mxu0 %v669
      %794 = vmatpush.msra.mxu0 %v661
      %795 = vmatmul.f32.gmra.mxu0 %v717
      %v796 = vpop.f32.mrf.mxu0
      %v797 = vadd.f32 %v777, %v796
      %798 = vdwg.mxu0
      %799 = vmatpush.msra.mxu0 %v398
      %800 = vmatpush.msra.mxu0 %v390
      %801 = vmatpush.msra.mxu0 %v382
      %802 = vmatpush.msra.mxu0 %v374
      %803 = vmatpush.msra.mxu0 %v366
      %804 = vmatpush.msra.mxu0 %v358
      %805 = vmatpush.msra.mxu0 %v350
      %806 = vmatpush.msra.mxu0 %v342
      %807 = vmatpush.msra.mxu0 %v334
      %808 = vmatpush.msra.mxu0 %v326
      %809 = vmatpush.msra.mxu0 %v318
      %810 = vmatpush.msra.mxu0 %v310
      %811 = vmatpush.msra.mxu0 %v302
      %812 = vmatpush.msra.mxu0 %v294
      %813 = vmatpush.msra.mxu0 %v286
      %814 = vmatpush.msra.mxu0 %v278
      %815 = vmatmul.f32.gmra.mxu0 %v273
      %v816 = vpop.f32.mrf.mxu0
      %v817 = vadd.f32 %v713, %v816
      %818 = vdwg.mxu0
      %819 = vmatpush.msra.mxu0 %v526
      %820 = vmatpush.msra.mxu0 %v518
      %821 = vmatpush.msra.mxu0 %v510
      %822 = vmatpush.msra.mxu0 %v502
      %823 = vmatpush.msra.mxu0 %v494
      %824 = vmatpush.msra.mxu0 %v486
      %825 = vmatpush.msra.mxu0 %v478
      %826 = vmatpush.msra.mxu0 %v470
      %827 = vmatpush.msra.mxu0 %v462
      %828 = vmatpush.msra.mxu0 %v454
      %829 = vmatpush.msra.mxu0 %v446
      %830 = vmatpush.msra.mxu0 %v438
      %831 = vmatpush.msra.mxu0 %v430
      %832 = vmatpush.msra.mxu0 %v422
      %833 = vmatpush.msra.mxu0 %v414
      %834 = vmatpush.msra.mxu0 %v406
      %835 = vmatmul.f32.gmra.mxu0 %v274
      %v836 = vpop.f32.mrf.mxu0
      %v837 = vadd.f32 %v817, %v836
      %838 = vdwg.mxu0
      %839 = vmatpush.msra.mxu0 %v654
      %840 = vmatpush.msra.mxu0 %v646
      %841 = vmatpush.msra.mxu0 %v638
      %842 = vmatpush.msra.mxu0 %v630
      %843 = vmatpush.msra.mxu0 %v622
      %844 = vmatpush.msra.mxu0 %v614
      %845 = vmatpush.msra.mxu0 %v606
      %846 = vmatpush.msra.mxu0 %v598
      %847 = vmatpush.msra.mxu0 %v590
      %848 = vmatpush.msra.mxu0 %v582
      %849 = vmatpush.msra.mxu0 %v574
      %850 = vmatpush.msra.mxu0 %v566
      %851 = vmatpush.msra.mxu0 %v558
      %852 = vmatpush.msra.mxu0 %v550
      %853 = vmatpush.msra.mxu0 %v542
      %854 = vmatpush.msra.mxu0 %v534
      %855 = vmatmul.f32.gmra.mxu0 %v275
      %v856 = vpop.f32.mrf.mxu0
      %v857 = vadd.f32 %v837, %v856
      %858 = vdwg.mxu0
      %859 = vmatpush.msra.mxu0 0.0
      %860 = vmatpush.msra.mxu0 0.0
      %861 = vmatpush.msra.mxu0 0.0
      %862 = vmatpush.msra.mxu0 0.0
      %863 = vmatpush.msra.mxu0 0.0
      %864 = vmatpush.msra.mxu0 0.0
      %865 = vmatpush.msra.mxu0 0.0
      %866 = vmatpush.msra.mxu0 0.0
      %867 = vmatpush.msra.mxu0 0.0
      %868 = vmatpush.msra.mxu0 0.0
      %869 = vmatpush.msra.mxu0 %v702
      %870 = vmatpush.msra.mxu0 %v694
      %871 = vmatpush.msra.mxu0 %v686
      %872 = vmatpush.msra.mxu0 %v678
      %873 = vmatpush.msra.mxu0 %v670
      %874 = vmatpush.msra.mxu0 %v662
      %875 = vmatmul.f32.gmra.mxu0 %v717
      %v876 = vpop.f32.mrf.mxu0
      %v877 = vadd.f32 %v857, %v876
      %878 = vdwg.mxu0
      %879 = vmatpush.msra.mxu0 %v399
      %880 = vmatpush.msra.mxu0 %v391
      %881 = vmatpush.msra.mxu0 %v383
      %882 = vmatpush.msra.mxu0 %v375
      %883 = vmatpush.msra.mxu0 %v367
      %884 = vmatpush.msra.mxu0 %v359
      %885 = vmatpush.msra.mxu0 %v351
      %886 = vmatpush.msra.mxu0 %v343
      %887 = vmatpush.msra.mxu0 %v335
      %888 = vmatpush.msra.mxu0 %v327
      %889 = vmatpush.msra.mxu0 %v319
      %890 = vmatpush.msra.mxu0 %v311
      %891 = vmatpush.msra.mxu0 %v303
      %892 = vmatpush.msra.mxu0 %v295
      %893 = vmatpush.msra.mxu0 %v287
      %894 = vmatpush.msra.mxu0 %v279
      %895 = vmatmul.f32.gmra.mxu0 %v273
      %v896 = vpop.f32.mrf.mxu0
      %v897 = vadd.f32 %v713, %v896
      %898 = vdwg.mxu0
      %899 = vmatpush.msra.mxu0 %v527
      %900 = vmatpush.msra.mxu0 %v519
      %901 = vmatpush.msra.mxu0 %v511
      %902 = vmatpush.msra.mxu0 %v503
      %903 = vmatpush.msra.mxu0 %v495
      %904 = vmatpush.msra.mxu0 %v487
      %905 = vmatpush.msra.mxu0 %v479
      %906 = vmatpush.msra.mxu0 %v471
      %907 = vmatpush.msra.mxu0 %v463
      %908 = vmatpush.msra.mxu0 %v455
      %909 = vmatpush.msra.mxu0 %v447
      %910 = vmatpush.msra.mxu0 %v439
      %911 = vmatpush.msra.mxu0 %v431
      %912 = vmatpush.msra.mxu0 %v423
      %913 = vmatpush.msra.mxu0 %v415
      %914 = vmatpush.msra.mxu0 %v407
      %915 = vmatmul.f32.gmra.mxu0 %v274
      %v916 = vpop.f32.mrf.mxu0
      %v917 = vadd.f32 %v897, %v916
      %918 = vdwg.mxu0
      %919 = vmatpush.msra.mxu0 %v655
      %920 = vmatpush.msra.mxu0 %v647
      %921 = vmatpush.msra.mxu0 %v639
      %922 = vmatpush.msra.mxu0 %v631
      %923 = vmatpush.msra.mxu0 %v623
      %924 = vmatpush.msra.mxu0 %v615
      %925 = vmatpush.msra.mxu0 %v607
      %926 = vmatpush.msra.mxu0 %v599
      %927 = vmatpush.msra.mxu0 %v591
      %928 = vmatpush.msra.mxu0 %v583
      %929 = vmatpush.msra.mxu0 %v575
      %930 = vmatpush.msra.mxu0 %v567
      %931 = vmatpush.msra.mxu0 %v559
      %932 = vmatpush.msra.mxu0 %v551
      %933 = vmatpush.msra.mxu0 %v543
      %934 = vmatpush.msra.mxu0 %v535
      %935 = vmatmul.f32.gmra.mxu0 %v275
      %v936 = vpop.f32.mrf.mxu0
      %v937 = vadd.f32 %v917, %v936
      %938 = vdwg.mxu0
      %939 = vmatpush.msra.mxu0 0.0
      %940 = vmatpush.msra.mxu0 0.0
      %941 = vmatpush.msra.mxu0 0.0
      %942 = vmatpush.msra.mxu0 0.0
      %943 = vmatpush.msra.mxu0 0.0
      %944 = vmatpush.msra.mxu0 0.0
      %945 = vmatpush.msra.mxu0 0.0
      %946 = vmatpush.msra.mxu0 0.0
      %947 = vmatpush.msra.mxu0 0.0
      %948 = vmatpush.msra.mxu0 0.0
      %949 = vmatpush.msra.mxu0 %v703
      %950 = vmatpush.msra.mxu0 %v695
      %951 = vmatpush.msra.mxu0 %v687
      %952 = vmatpush.msra.mxu0 %v679
      %953 = vmatpush.msra.mxu0 %v671
      %954 = vmatpush.msra.mxu0 %v663
      %955 = vmatmul.f32.gmra.mxu0 %v717
      %v956 = vpop.f32.mrf.mxu0
      %v957 = vadd.f32 %v937, %v956
      %958 = vdwg.mxu0
      %959 = vmatpush.msra.mxu0 %v400
      %960 = vmatpush.msra.mxu0 %v392
      %961 = vmatpush.msra.mxu0 %v384
      %962 = vmatpush.msra.mxu0 %v376
      %963 = vmatpush.msra.mxu0 %v368
      %964 = vmatpush.msra.mxu0 %v360
      %965 = vmatpush.msra.mxu0 %v352
      %966 = vmatpush.msra.mxu0 %v344
      %967 = vmatpush.msra.mxu0 %v336
      %968 = vmatpush.msra.mxu0 %v328
      %969 = vmatpush.msra.mxu0 %v320
      %970 = vmatpush.msra.mxu0 %v312
      %971 = vmatpush.msra.mxu0 %v304
      %972 = vmatpush.msra.mxu0 %v296
      %973 = vmatpush.msra.mxu0 %v288
      %974 = vmatpush.msra.mxu0 %v280
      %975 = vmatmul.f32.gmra.mxu0 %v273
      %v976 = vpop.f32.mrf.mxu0
      %v977 = vadd.f32 %v713, %v976
      %978 = vdwg.mxu0
      %979 = vmatpush.msra.mxu0 %v528
      %980 = vmatpush.msra.mxu0 %v520
      %981 = vmatpush.msra.mxu0 %v512
      %982 = vmatpush.msra.mxu0 %v504
      %983 = vmatpush.msra.mxu0 %v496
      %984 = vmatpush.msra.mxu0 %v488
      %985 = vmatpush.msra.mxu0 %v480
      %986 = vmatpush.msra.mxu0 %v472
      %987 = vmatpush.msra.mxu0 %v464
      %988 = vmatpush.msra.mxu0 %v456
      %989 = vmatpush.msra.mxu0 %v448
      %990 = vmatpush.msra.mxu0 %v440
      %991 = vmatpush.msra.mxu0 %v432
      %992 = vmatpush.msra.mxu0 %v424
      %993 = vmatpush.msra.mxu0 %v416
      %994 = vmatpush.msra.mxu0 %v408
      %995 = vmatmul.f32.gmra.mxu0 %v274
      %v996 = vpop.f32.mrf.mxu0
      %v997 = vadd.f32 %v977, %v996
      %998 = vdwg.mxu0
      %999 = vmatpush.msra.mxu0 %v656
      %1000 = vmatpush.msra.mxu0 %v648
      %1001 = vmatpush.msra.mxu0 %v640
      %1002 = vmatpush.msra.mxu0 %v632
      %1003 = vmatpush.msra.mxu0 %v624
      %1004 = vmatpush.msra.mxu0 %v616
      %1005 = vmatpush.msra.mxu0 %v608
      %1006 = vmatpush.msra.mxu0 %v600
      %1007 = vmatpush.msra.mxu0 %v592
      %1008 = vmatpush.msra.mxu0 %v584
      %1009 = vmatpush.msra.mxu0 %v576
      %1010 = vmatpush.msra.mxu0 %v568
      %1011 = vmatpush.msra.mxu0 %v560
      %1012 = vmatpush.msra.mxu0 %v552
      %1013 = vmatpush.msra.mxu0 %v544
      %1014 = vmatpush.msra.mxu0 %v536
      %1015 = vmatmul.f32.gmra.mxu0 %v275
      %v1016 = vpop.f32.mrf.mxu0
      %v1017 = vadd.f32 %v997, %v1016
      %1018 = vdwg.mxu0
      %1019 = vmatpush.msra.mxu0 0.0
      %1020 = vmatpush.msra.mxu0 0.0
      %1021 = vmatpush.msra.mxu0 0.0
      %1022 = vmatpush.msra.mxu0 0.0
      %1023 = vmatpush.msra.mxu0 0.0
      %1024 = vmatpush.msra.mxu0 0.0
      %1025 = vmatpush.msra.mxu0 0.0
      %1026 = vmatpush.msra.mxu0 0.0
      %1027 = vmatpush.msra.mxu0 0.0
      %1028 = vmatpush.msra.mxu0 0.0
      %1029 = vmatpush.msra.mxu0 %v704
      %1030 = vmatpush.msra.mxu0 %v696
      %1031 = vmatpush.msra.mxu0 %v688
      %1032 = vmatpush.msra.mxu0 %v680
      %1033 = vmatpush.msra.mxu0 %v672
      %1034 = vmatpush.msra.mxu0 %v664
      %1035 = vmatmul.f32.gmra.mxu0 %v717
      %v1036 = vpop.f32.mrf.mxu0
      %v1037 = vadd.f32 %v1017, %v1036
      %1038 = vdwg.mxu0
      %1039 = vmatpush.msra.mxu0 %v401
      %1040 = vmatpush.msra.mxu0 %v393
      %1041 = vmatpush.msra.mxu0 %v385
      %1042 = vmatpush.msra.mxu0 %v377
      %1043 = vmatpush.msra.mxu0 %v369
      %1044 = vmatpush.msra.mxu0 %v361
      %1045 = vmatpush.msra.mxu0 %v353
      %1046 = vmatpush.msra.mxu0 %v345
      %1047 = vmatpush.msra.mxu0 %v337
      %1048 = vmatpush.msra.mxu0 %v329
      %1049 = vmatpush.msra.mxu0 %v321
      %1050 = vmatpush.msra.mxu0 %v313
      %1051 = vmatpush.msra.mxu0 %v305
      %1052 = vmatpush.msra.mxu0 %v297
      %1053 = vmatpush.msra.mxu0 %v289
      %1054 = vmatpush.msra.mxu0 %v281
      %1055 = vmatmul.f32.gmra.mxu0 %v273
      %v1056 = vpop.f32.mrf.mxu0
      %v1057 = vadd.f32 %v713, %v1056
      %1058 = vdwg.mxu0
      %1059 = vmatpush.msra.mxu0 %v529
      %1060 = vmatpush.msra.mxu0 %v521
      %1061 = vmatpush.msra.mxu0 %v513
      %1062 = vmatpush.msra.mxu0 %v505
      %1063 = vmatpush.msra.mxu0 %v497
      %1064 = vmatpush.msra.mxu0 %v489
      %1065 = vmatpush.msra.mxu0 %v481
      %1066 = vmatpush.msra.mxu0 %v473
      %1067 = vmatpush.msra.mxu0 %v465
      %1068 = vmatpush.msra.mxu0 %v457
      %1069 = vmatpush.msra.mxu0 %v449
      %1070 = vmatpush.msra.mxu0 %v441
      %1071 = vmatpush.msra.mxu0 %v433
      %1072 = vmatpush.msra.mxu0 %v425
      %1073 = vmatpush.msra.mxu0 %v417
      %1074 = vmatpush.msra.mxu0 %v409
      %1075 = vmatmul.f32.gmra.mxu0 %v274
      %v1076 = vpop.f32.mrf.mxu0
      %v1077 = vadd.f32 %v1057, %v1076
      %1078 = vdwg.mxu0
      %1079 = vmatpush.msra.mxu0 %v657
      %1080 = vmatpush.msra.mxu0 %v649
      %1081 = vmatpush.msra.mxu0 %v641
      %1082 = vmatpush.msra.mxu0 %v633
      %1083 = vmatpush.msra.mxu0 %v625
      %1084 = vmatpush.msra.mxu0 %v617
      %1085 = vmatpush.msra.mxu0 %v609
      %1086 = vmatpush.msra.mxu0 %v601
      %1087 = vmatpush.msra.mxu0 %v593
      %1088 = vmatpush.msra.mxu0 %v585
      %1089 = vmatpush.msra.mxu0 %v577
      %1090 = vmatpush.msra.mxu0 %v569
      %1091 = vmatpush.msra.mxu0 %v561
      %1092 = vmatpush.msra.mxu0 %v553
      %1093 = vmatpush.msra.mxu0 %v545
      %1094 = vmatpush.msra.mxu0 %v537
      %1095 = vmatmul.f32.gmra.mxu0 %v275
      %v1096 = vpop.f32.mrf.mxu0
      %v1097 = vadd.f32 %v1077, %v1096
      %1098 = vdwg.mxu0
      %1099 = vmatpush.msra.mxu0 0.0
      %1100 = vmatpush.msra.mxu0 0.0
      %1101 = vmatpush.msra.mxu0 0.0
      %1102 = vmatpush.msra.mxu0 0.0
      %1103 = vmatpush.msra.mxu0 0.0
      %1104 = vmatpush.msra.mxu0 0.0
      %1105 = vmatpush.msra.mxu0 0.0
      %1106 = vmatpush.msra.mxu0 0.0
      %1107 = vmatpush.msra.mxu0 0.0
      %1108 = vmatpush.msra.mxu0 0.0
      %1109 = vmatpush.msra.mxu0 %v705
      %1110 = vmatpush.msra.mxu0 %v697
      %1111 = vmatpush.msra.mxu0 %v689
      %1112 = vmatpush.msra.mxu0 %v681
      %1113 = vmatpush.msra.mxu0 %v673
      %1114 = vmatpush.msra.mxu0 %v665
      %1115 = vmatmul.f32.gmra.mxu0 %v717
      %v1116 = vpop.f32.mrf.mxu0
      %v1117 = vadd.f32 %v1097, %v1116
      %1118 = vdwg.mxu0
      %1119 = vmatpush.msra.mxu0 %v402
      %1120 = vmatpush.msra.mxu0 %v394
      %1121 = vmatpush.msra.mxu0 %v386
      %1122 = vmatpush.msra.mxu0 %v378
      %1123 = vmatpush.msra.mxu0 %v370
      %1124 = vmatpush.msra.mxu0 %v362
      %1125 = vmatpush.msra.mxu0 %v354
      %1126 = vmatpush.msra.mxu0 %v346
      %1127 = vmatpush.msra.mxu0 %v338
      %1128 = vmatpush.msra.mxu0 %v330
      %1129 = vmatpush.msra.mxu0 %v322
      %1130 = vmatpush.msra.mxu0 %v314
      %1131 = vmatpush.msra.mxu0 %v306
      %1132 = vmatpush.msra.mxu0 %v298
      %1133 = vmatpush.msra.mxu0 %v290
      %1134 = vmatpush.msra.mxu0 %v282
      %1135 = vmatmul.f32.gmra.mxu0 %v273
      %v1136 = vpop.f32.mrf.mxu0
      %v1137 = vadd.f32 %v713, %v1136
      %1138 = vdwg.mxu0
      %1139 = vmatpush.msra.mxu0 %v530
      %1140 = vmatpush.msra.mxu0 %v522
      %1141 = vmatpush.msra.mxu0 %v514
      %1142 = vmatpush.msra.mxu0 %v506
      %1143 = vmatpush.msra.mxu0 %v498
      %1144 = vmatpush.msra.mxu0 %v490
      %1145 = vmatpush.msra.mxu0 %v482
      %1146 = vmatpush.msra.mxu0 %v474
      %1147 = vmatpush.msra.mxu0 %v466
      %1148 = vmatpush.msra.mxu0 %v458
      %1149 = vmatpush.msra.mxu0 %v450
      %1150 = vmatpush.msra.mxu0 %v442
      %1151 = vmatpush.msra.mxu0 %v434
      %1152 = vmatpush.msra.mxu0 %v426
      %1153 = vmatpush.msra.mxu0 %v418
      %1154 = vmatpush.msra.mxu0 %v410
      %1155 = vmatmul.f32.gmra.mxu0 %v274
      %v1156 = vpop.f32.mrf.mxu0
      %v1157 = vadd.f32 %v1137, %v1156
      %1158 = vdwg.mxu0
      %1159 = vmatpush.msra.mxu0 %v658
      %1160 = vmatpush.msra.mxu0 %v650
      %1161 = vmatpush.msra.mxu0 %v642
      %1162 = vmatpush.msra.mxu0 %v634
      %1163 = vmatpush.msra.mxu0 %v626
      %1164 = vmatpush.msra.mxu0 %v618
      %1165 = vmatpush.msra.mxu0 %v610
      %1166 = vmatpush.msra.mxu0 %v602
      %1167 = vmatpush.msra.mxu0 %v594
      %1168 = vmatpush.msra.mxu0 %v586
      %1169 = vmatpush.msra.mxu0 %v578
      %1170 = vmatpush.msra.mxu0 %v570
      %1171 = vmatpush.msra.mxu0 %v562
      %1172 = vmatpush.msra.mxu0 %v554
      %1173 = vmatpush.msra.mxu0 %v546
      %1174 = vmatpush.msra.mxu0 %v538
      %1175 = vmatmul.f32.gmra.mxu0 %v275
      %v1176 = vpop.f32.mrf.mxu0
      %v1177 = vadd.f32 %v1157, %v1176
      %1178 = vdwg.mxu0
      %1179 = vmatpush.msra.mxu0 0.0
      %1180 = vmatpush.msra.mxu0 0.0
      %1181 = vmatpush.msra.mxu0 0.0
      %1182 = vmatpush.msra.mxu0 0.0
      %1183 = vmatpush.msra.mxu0 0.0
      %1184 = vmatpush.msra.mxu0 0.0
      %1185 = vmatpush.msra.mxu0 0.0
      %1186 = vmatpush.msra.mxu0 0.0
      %1187 = vmatpush.msra.mxu0 0.0
      %1188 = vmatpush.msra.mxu0 0.0
      %1189 = vmatpush.msra.mxu0 %v706
      %1190 = vmatpush.msra.mxu0 %v698
      %1191 = vmatpush.msra.mxu0 %v690
      %1192 = vmatpush.msra.mxu0 %v682
      %1193 = vmatpush.msra.mxu0 %v674
      %1194 = vmatpush.msra.mxu0 %v666
      %1195 = vmatmul.f32.gmra.mxu0 %v717
      %v1196 = vpop.f32.mrf.mxu0
      %v1197 = vadd.f32 %v1177, %v1196
      %1198 = vdwg.mxu0
      %1199 = vmatpush.msra.mxu0 %v403
      %1200 = vmatpush.msra.mxu0 %v395
      %1201 = vmatpush.msra.mxu0 %v387
      %1202 = vmatpush.msra.mxu0 %v379
      %1203 = vmatpush.msra.mxu0 %v371
      %1204 = vmatpush.msra.mxu0 %v363
      %1205 = vmatpush.msra.mxu0 %v355
      %1206 = vmatpush.msra.mxu0 %v347
      %1207 = vmatpush.msra.mxu0 %v339
      %1208 = vmatpush.msra.mxu0 %v331
      %1209 = vmatpush.msra.mxu0 %v323
      %1210 = vmatpush.msra.mxu0 %v315
      %1211 = vmatpush.msra.mxu0 %v307
      %1212 = vmatpush.msra.mxu0 %v299
      %1213 = vmatpush.msra.mxu0 %v291
      %1214 = vmatpush.msra.mxu0 %v283
      %1215 = vmatmul.f32.gmra.mxu0 %v273
      %v1216 = vpop.f32.mrf.mxu0
      %v1217 = vadd.f32 %v713, %v1216
      %1218 = vdwg.mxu0
      %1219 = vmatpush.msra.mxu0 %v531
      %1220 = vmatpush.msra.mxu0 %v523
      %1221 = vmatpush.msra.mxu0 %v515
      %1222 = vmatpush.msra.mxu0 %v507
      %1223 = vmatpush.msra.mxu0 %v499
      %1224 = vmatpush.msra.mxu0 %v491
      %1225 = vmatpush.msra.mxu0 %v483
      %1226 = vmatpush.msra.mxu0 %v475
      %1227 = vmatpush.msra.mxu0 %v467
      %1228 = vmatpush.msra.mxu0 %v459
      %1229 = vmatpush.msra.mxu0 %v451
      %1230 = vmatpush.msra.mxu0 %v443
      %1231 = vmatpush.msra.mxu0 %v435
      %1232 = vmatpush.msra.mxu0 %v427
      %1233 = vmatpush.msra.mxu0 %v419
      %1234 = vmatpush.msra.mxu0 %v411
      %1235 = vmatmul.f32.gmra.mxu0 %v274
      %v1236 = vpop.f32.mrf.mxu0
      %v1237 = vadd.f32 %v1217, %v1236
      %1238 = vdwg.mxu0
      %1239 = vmatpush.msra.mxu0 %v659
      %1240 = vmatpush.msra.mxu0 %v651
      %1241 = vmatpush.msra.mxu0 %v643
      %1242 = vmatpush.msra.mxu0 %v635
      %1243 = vmatpush.msra.mxu0 %v627
      %1244 = vmatpush.msra.mxu0 %v619
      %1245 = vmatpush.msra.mxu0 %v611
      %1246 = vmatpush.msra.mxu0 %v603
      %1247 = vmatpush.msra.mxu0 %v595
      %1248 = vmatpush.msra.mxu0 %v587
      %1249 = vmatpush.msra.mxu0 %v579
      %1250 = vmatpush.msra.mxu0 %v571
      %1251 = vmatpush.msra.mxu0 %v563
      %1252 = vmatpush.msra.mxu0 %v555
      %1253 = vmatpush.msra.mxu0 %v547
      %1254 = vmatpush.msra.mxu0 %v539
      %1255 = vmatmul.f32.gmra.mxu0 %v275
      %v1256 = vpop.f32.mrf.mxu0
      %v1257 = vadd.f32 %v1237, %v1256
      %1258 = vdwg.mxu0
      %1259 = vmatpush.msra.mxu0 0.0
      %1260 = vmatpush.msra.mxu0 0.0
      %1261 = vmatpush.msra.mxu0 0.0
      %1262 = vmatpush.msra.mxu0 0.0
      %1263 = vmatpush.msra.mxu0 0.0
      %1264 = vmatpush.msra.mxu0 0.0
      %1265 = vmatpush.msra.mxu0 0.0
      %1266 = vmatpush.msra.mxu0 0.0
      %1267 = vmatpush.msra.mxu0 0.0
      %1268 = vmatpush.msra.mxu0 0.0
      %1269 = vmatpush.msra.mxu0 %v707
      %1270 = vmatpush.msra.mxu0 %v699
      %1271 = vmatpush.msra.mxu0 %v691
      %1272 = vmatpush.msra.mxu0 %v683
      %1273 = vmatpush.msra.mxu0 %v675
      %1274 = vmatpush.msra.mxu0 %v667
      %1275 = vmatmul.f32.gmra.mxu0 %v717
      %v1276 = vpop.f32.mrf.mxu0
      %v1277 = vadd.f32 %v1257, %v1276
      %1278 = vdwg.mxu0
      %1279 = vmatpush.msra.mxu0 %v404
      %1280 = vmatpush.msra.mxu0 %v396
      %1281 = vmatpush.msra.mxu0 %v388
      %1282 = vmatpush.msra.mxu0 %v380
      %1283 = vmatpush.msra.mxu0 %v372
      %1284 = vmatpush.msra.mxu0 %v364
      %1285 = vmatpush.msra.mxu0 %v356
      %1286 = vmatpush.msra.mxu0 %v348
      %1287 = vmatpush.msra.mxu0 %v340
      %1288 = vmatpush.msra.mxu0 %v332
      %1289 = vmatpush.msra.mxu0 %v324
      %1290 = vmatpush.msra.mxu0 %v316
      %1291 = vmatpush.msra.mxu0 %v308
      %1292 = vmatpush.msra.mxu0 %v300
      %1293 = vmatpush.msra.mxu0 %v292
      %1294 = vmatpush.msra.mxu0 %v284
      %1295 = vmatmul.f32.gmra.mxu0 %v273
      %v1296 = vpop.f32.mrf.mxu0
      %v1297 = vadd.f32 %v713, %v1296
      %1298 = vdwg.mxu0
      %1299 = vmatpush.msra.mxu0 %v532
      %1300 = vmatpush.msra.mxu0 %v524
      %1301 = vmatpush.msra.mxu0 %v516
      %1302 = vmatpush.msra.mxu0 %v508
      %1303 = vmatpush.msra.mxu0 %v500
      %1304 = vmatpush.msra.mxu0 %v492
      %1305 = vmatpush.msra.mxu0 %v484
      %1306 = vmatpush.msra.mxu0 %v476
      %1307 = vmatpush.msra.mxu0 %v468
      %1308 = vmatpush.msra.mxu0 %v460
      %1309 = vmatpush.msra.mxu0 %v452
      %1310 = vmatpush.msra.mxu0 %v444
      %1311 = vmatpush.msra.mxu0 %v436
      %1312 = vmatpush.msra.mxu0 %v428
      %1313 = vmatpush.msra.mxu0 %v420
      %1314 = vmatpush.msra.mxu0 %v412
      %1315 = vmatmul.f32.gmra.mxu0 %v274
      %v1316 = vpop.f32.mrf.mxu0
      %v1317 = vadd.f32 %v1297, %v1316
      %1318 = vdwg.mxu0
      %1319 = vmatpush.msra.mxu0 %v660
      %1320 = vmatpush.msra.mxu0 %v652
      %1321 = vmatpush.msra.mxu0 %v644
      %1322 = vmatpush.msra.mxu0 %v636
      %1323 = vmatpush.msra.mxu0 %v628
      %1324 = vmatpush.msra.mxu0 %v620
      %1325 = vmatpush.msra.mxu0 %v612
      %1326 = vmatpush.msra.mxu0 %v604
      %1327 = vmatpush.msra.mxu0 %v596
      %1328 = vmatpush.msra.mxu0 %v588
      %1329 = vmatpush.msra.mxu0 %v580
      %1330 = vmatpush.msra.mxu0 %v572
      %1331 = vmatpush.msra.mxu0 %v564
      %1332 = vmatpush.msra.mxu0 %v556
      %1333 = vmatpush.msra.mxu0 %v548
      %1334 = vmatpush.msra.mxu0 %v540
      %1335 = vmatmul.f32.gmra.mxu0 %v275
      %v1336 = vpop.f32.mrf.mxu0
      %v1337 = vadd.f32 %v1317, %v1336
      %1338 = vdwg.mxu0
      %1339 = vmatpush.msra.mxu0 0.0
      %1340 = vmatpush.msra.mxu0 0.0
      %1341 = vmatpush.msra.mxu0 0.0
      %1342 = vmatpush.msra.mxu0 0.0
      %1343 = vmatpush.msra.mxu0 0.0
      %1344 = vmatpush.msra.mxu0 0.0
      %1345 = vmatpush.msra.mxu0 0.0
      %1346 = vmatpush.msra.mxu0 0.0
      %1347 = vmatpush.msra.mxu0 0.0
      %1348 = vmatpush.msra.mxu0 0.0
      %1349 = vmatpush.msra.mxu0 %v708
      %1350 = vmatpush.msra.mxu0 %v700
      %1351 = vmatpush.msra.mxu0 %v692
      %1352 = vmatpush.msra.mxu0 %v684
      %1353 = vmatpush.msra.mxu0 %v676
      %1354 = vmatpush.msra.mxu0 %v668
      %1355 = vmatmul.f32.gmra.mxu0 %v717
      %v1356 = vpop.f32.mrf.mxu0
      %v1357 = vadd.f32 %v1337, %v1356
      %1358 = vdwg.mxu0
      %v1359 = vmax.f32 %v797, 0.0
      %v1360 = vmax.f32 %v877, 0.0
      %v1361 = vmax.f32 %v957, 0.0
      %v1362 = vmax.f32 %v1037, 0.0
      %v1363 = vmax.f32 %v1117, 0.0
      %v1364 = vmax.f32 %v1197, 0.0
      %v1365 = vmax.f32 %v1277, 0.0
      %v1366 = vmax.f32 %v1357, 0.0
      %1367 = vst [vmem:[%s264] sm:$0xff] %v1359
      %1368 = vst [vmem:[%s264 + $0x8] sm:$0xff] %v1360
      %1369 = vst [vmem:[%s264 + $0x10] sm:$0xff] %v1361
      %1370 = vst [vmem:[%s264 + $0x18] sm:$0xff] %v1362
      %1371 = vst [vmem:[%s264 + $0x20] sm:$0xff] %v1363
      %1372 = vst [vmem:[%s264 + $0x28] sm:$0xff] %v1364
      %1373 = vst [vmem:[%s264 + $0x30] sm:$0xff] %v1365
      %vm1374 = vcmask 850944
      %1375 = vst.msk [vmem:[%s264 + $0x38] sm:$0xff] %vm1374, %v1366
      %v1376 = vmax.f32 %v1359, %v1363
      %v1377 = vmax.f32 %v1360, %v1364
      %v1378 = vmax.f32 %v1361, %v1365
      %v1379 = vsel %vm1374, %v1366, -inf
      %v1380 = vmax.f32 %v1362, %v1379
      %v1381 = vmax.f32 %v1376, %v1377
      %v1382 = vmax.f32 %v1378, %v1380
      %v1383 = vmax.f32 %v1381, %v1382
      %1384 = vmax.xlane.f32.xlu0 %v1383
      %v1385 = vpop.xlane.xlu0 %1384
      %v1386 = vsub.f32 %v1359, %v1385
      %v1387 = vsub.f32 %v1360, %v1385
      %v1388 = vsub.f32 %v1361, %v1385
      %v1389 = vsub.f32 %v1362, %v1385
      %v1390 = vsub.f32 %v1363, %v1385
      %v1391 = vsub.f32 %v1364, %v1385
      %v1392 = vsub.f32 %v1365, %v1385
      %v1393 = vsub.f32 %v1366, %v1385
      %v1394 = vmul.f32 %v1386, 100.0
      %v1395 = vmul.f32 %v1387, 100.0
      %v1396 = vmul.f32 %v1388, 100.0
      %v1397 = vmul.f32 %v1389, 100.0
      %v1398 = vmul.f32 %v1390, 100.0
      %v1399 = vmul.f32 %v1391, 100.0
      %v1400 = vmul.f32 %v1392, 100.0
      %v1401 = vmul.f32 %v1393, 100.0
      %v1402 = vmul.f32 %v1394, 1.442695
      %v1403 = vpow.pop %v1402
      %v1404 = vmul.f32 %v1395, 1.442695
      %v1405 = vpow.pop %v1404
      %v1406 = vmul.f32 %v1396, 1.442695
      %v1407 = vpow.pop %v1406
      %v1408 = vmul.f32 %v1397, 1.442695
      %v1409 = vpow.pop %v1408
      %v1410 = vmul.f32 %v1398, 1.442695
      %v1411 = vpow.pop %v1410
      %v1412 = vmul.f32 %v1399, 1.442695
      %v1413 = vpow.pop %v1412
      %v1414 = vmul.f32 %v1400, 1.442695
      %v1415 = vpow.pop %v1414
      %v1416 = vmul.f32 %v1401, 1.442695
      %v1417 = vpow.pop %v1416
      %v1418 = vadd.f32 %v1403, %v1405
      %v1419 = vadd.f32 %v1418, %v1407
      %v1420 = vadd.f32 %v1419, %v1409
      %v1421 = vadd.f32 %v1420, %v1411
      %v1422 = vadd.f32 %v1421, %v1413
      %v1423 = vadd.f32 %v1422, %v1415
      %v1424 = vsel %vm1374, %v1417, 0.0
      %v1425 = vadd.f32 %v1423, %v1424
      %1426 = vadd.xlane.f32.xlu0 %v1425
      %v1427 = vpop.xlane.xlu0 %1426
      %v1428 = vld [vmem:[%s3] sm:$0x77]
      %v1429 = vld [vmem:[%s3 + $0x8] sm:$0x77]
      %v1430 = vld [vmem:[%s3 + $0x10] sm:$0x77]
      %v1431 = vld [vmem:[%s3 + $0x18] sm:$0x77]
      %1436 = vst [vmem:[#allocation1] ss:$2 sm:$0xff] %v1428
      %s1437 = scalar_lea.vmem [#allocation1], 16
      %1438 = vst [vmem:[%s1437] ss:$2 sm:$0xff] %v1429
      %s1439 = scalar_lea.vmem [#allocation1], 32
      %1440 = vst [vmem:[%s1439] ss:$2 sm:$0xff] %v1430
      %s1441 = scalar_lea.vmem [#allocation1], 48
      %1442 = vst [vmem:[%s1441] ss:$2 sm:$0xff] %v1431
      %v1443 = vld.sshfl [vmem:[#allocation1] sm:$0xff pattern:$0x75316420]
      %v1444 = vld.sshfl [vmem:[#allocation1 + $0x8] sm:$0xff pattern:$0x75316420]
      %v1445 = vld.sshfl [vmem:[#allocation1 + $0x10] sm:$0xff pattern:$0x75316420]
      %v1446 = vld.sshfl [vmem:[#allocation1 + $0x18] sm:$0xff pattern:$0x75316420]
      %v1447 = vld.sshfl [vmem:[#allocation1 + $0x20] sm:$0xff pattern:$0x75316420]
      %v1448 = vld.sshfl [vmem:[#allocation1 + $0x28] sm:$0xff pattern:$0x75316420]
      %v1449 = vld.sshfl [vmem:[#allocation1 + $0x30] sm:$0xff pattern:$0x75316420]
      %v1450 = vld.sshfl [vmem:[#allocation1 + $0x38] sm:$0xff pattern:$0x75316420]
      %v1459 = vsel %vm1374, %v1417, 0
      %v1461 = vsel %vm1374, %v1450, 0
      %1463 = vmatpush.xpose.msra.mxu0 0.0
      %1464 = vmatpush.xpose.msra.mxu0 0.0
      %1465 = vmatpush.xpose.msra.mxu0 0.0
      %1466 = vmatpush.xpose.msra.mxu0 0.0
      %1467 = vmatpush.xpose.msra.mxu0 0.0
      %1468 = vmatpush.xpose.msra.mxu0 0.0
      %1469 = vmatpush.xpose.msra.mxu0 0.0
      %1470 = vmatpush.xpose.msra.mxu0 0.0
      %1471 = vmatpush.xpose.msra.mxu0 0.0
      %1472 = vmatpush.xpose.msra.mxu0 0.0
      %1473 = vmatpush.xpose.msra.mxu0 0.0
      %1474 = vmatpush.xpose.msra.mxu0 0.0
      %1475 = vmatpush.xpose.msra.mxu0 0.0
      %1476 = vmatpush.xpose.msra.mxu0 0.0
      %1477 = vmatpush.xpose.msra.mxu0 0.0
      %1478 = vmatpush.xpose.msra.mxu0 %v1443
      %1479 = vmatmul.f32.gmra.mxu0 %v1403
      %v1480 = vpop.f32.mrf.mxu0
      %v1481 = vadd.f32 0.0, %v1480
      %1482 = vdwg.mxu0
      %1483 = vmatpush.xpose.msra.mxu0 0.0
      %1484 = vmatpush.xpose.msra.mxu0 0.0
      %1485 = vmatpush.xpose.msra.mxu0 0.0
      %1486 = vmatpush.xpose.msra.mxu0 0.0
      %1487 = vmatpush.xpose.msra.mxu0 0.0
      %1488 = vmatpush.xpose.msra.mxu0 0.0
      %1489 = vmatpush.xpose.msra.mxu0 0.0
      %1490 = vmatpush.xpose.msra.mxu0 0.0
      %1491 = vmatpush.xpose.msra.mxu0 0.0
      %1492 = vmatpush.xpose.msra.mxu0 0.0
      %1493 = vmatpush.xpose.msra.mxu0 0.0
      %1494 = vmatpush.xpose.msra.mxu0 0.0
      %1495 = vmatpush.xpose.msra.mxu0 0.0
      %1496 = vmatpush.xpose.msra.mxu0 0.0
      %1497 = vmatpush.xpose.msra.mxu0 0.0
      %1498 = vmatpush.xpose.msra.mxu0 %v1444
      %1499 = vmatmul.f32.gmra.mxu0 %v1405
      %v1500 = vpop.f32.mrf.mxu0
      %v1501 = vadd.f32 %v1481, %v1500
      %1502 = vdwg.mxu0
      %1503 = vmatpush.xpose.msra.mxu0 0.0
      %1504 = vmatpush.xpose.msra.mxu0 0.0
      %1505 = vmatpush.xpose.msra.mxu0 0.0
      %1506 = vmatpush.xpose.msra.mxu0 0.0
      %1507 = vmatpush.xpose.msra.mxu0 0.0
      %1508 = vmatpush.xpose.msra.mxu0 0.0
      %1509 = vmatpush.xpose.msra.mxu0 0.0
      %1510 = vmatpush.xpose.msra.mxu0 0.0
      %1511 = vmatpush.xpose.msra.mxu0 0.0
      %1512 = vmatpush.xpose.msra.mxu0 0.0
      %1513 = vmatpush.xpose.msra.mxu0 0.0
      %1514 = vmatpush.xpose.msra.mxu0 0.0
      %1515 = vmatpush.xpose.msra.mxu0 0.0
      %1516 = vmatpush.xpose.msra.mxu0 0.0
      %1517 = vmatpush.xpose.msra.mxu0 0.0
      %1518 = vmatpush.xpose.msra.mxu0 %v1445
      %1519 = vmatmul.f32.gmra.mxu0 %v1407
      %v1520 = vpop.f32.mrf.mxu0
      %v1521 = vadd.f32 %v1501, %v1520
      %1522 = vdwg.mxu0
      %1523 = vmatpush.xpose.msra.mxu0 0.0
      %1524 = vmatpush.xpose.msra.mxu0 0.0
      %1525 = vmatpush.xpose.msra.mxu0 0.0
      %1526 = vmatpush.xpose.msra.mxu0 0.0
      %1527 = vmatpush.xpose.msra.mxu0 0.0
      %1528 = vmatpush.xpose.msra.mxu0 0.0
      %1529 = vmatpush.xpose.msra.mxu0 0.0
      %1530 = vmatpush.xpose.msra.mxu0 0.0
      %1531 = vmatpush.xpose.msra.mxu0 0.0
      %1532 = vmatpush.xpose.msra.mxu0 0.0
      %1533 = vmatpush.xpose.msra.mxu0 0.0
      %1534 = vmatpush.xpose.msra.mxu0 0.0
      %1535 = vmatpush.xpose.msra.mxu0 0.0
      %1536 = vmatpush.xpose.msra.mxu0 0.0
      %1537 = vmatpush.xpose.msra.mxu0 0.0
      %1538 = vmatpush.xpose.msra.mxu0 %v1446
      %1539 = vmatmul.f32.gmra.mxu0 %v1409
      %v1540 = vpop.f32.mrf.mxu0
      %v1541 = vadd.f32 %v1521, %v1540
      %1542 = vdwg.mxu0
      %1543 = vmatpush.xpose.msra.mxu0 0.0
      %1544 = vmatpush.xpose.msra.mxu0 0.0
      %1545 = vmatpush.xpose.msra.mxu0 0.0
      %1546 = vmatpush.xpose.msra.mxu0 0.0
      %1547 = vmatpush.xpose.msra.mxu0 0.0
      %1548 = vmatpush.xpose.msra.mxu0 0.0
      %1549 = vmatpush.xpose.msra.mxu0 0.0
      %1550 = vmatpush.xpose.msra.mxu0 0.0
      %1551 = vmatpush.xpose.msra.mxu0 0.0
      %1552 = vmatpush.xpose.msra.mxu0 0.0
      %1553 = vmatpush.xpose.msra.mxu0 0.0
      %1554 = vmatpush.xpose.msra.mxu0 0.0
      %1555 = vmatpush.xpose.msra.mxu0 0.0
      %1556 = vmatpush.xpose.msra.mxu0 0.0
      %1557 = vmatpush.xpose.msra.mxu0 0.0
      %1558 = vmatpush.xpose.msra.mxu0 %v1447
      %1559 = vmatmul.f32.gmra.mxu0 %v1411
      %v1560 = vpop.f32.mrf.mxu0
      %v1561 = vadd.f32 %v1541, %v1560
      %1562 = vdwg.mxu0
      %1563 = vmatpush.xpose.msra.mxu0 0.0
      %1564 = vmatpush.xpose.msra.mxu0 0.0
      %1565 = vmatpush.xpose.msra.mxu0 0.0
      %1566 = vmatpush.xpose.msra.mxu0 0.0
      %1567 = vmatpush.xpose.msra.mxu0 0.0
      %1568 = vmatpush.xpose.msra.mxu0 0.0
      %1569 = vmatpush.xpose.msra.mxu0 0.0
      %1570 = vmatpush.xpose.msra.mxu0 0.0
      %1571 = vmatpush.xpose.msra.mxu0 0.0
      %1572 = vmatpush.xpose.msra.mxu0 0.0
      %1573 = vmatpush.xpose.msra.mxu0 0.0
      %1574 = vmatpush.xpose.msra.mxu0 0.0
      %1575 = vmatpush.xpose.msra.mxu0 0.0
      %1576 = vmatpush.xpose.msra.mxu0 0.0
      %1577 = vmatpush.xpose.msra.mxu0 0.0
      %1578 = vmatpush.xpose.msra.mxu0 %v1448
      %1579 = vmatmul.f32.gmra.mxu0 %v1413
      %v1580 = vpop.f32.mrf.mxu0
      %v1581 = vadd.f32 %v1561, %v1580
      %1582 = vdwg.mxu0
      %1583 = vmatpush.xpose.msra.mxu0 0.0
      %1584 = vmatpush.xpose.msra.mxu0 0.0
      %1585 = vmatpush.xpose.msra.mxu0 0.0
      %1586 = vmatpush.xpose.msra.mxu0 0.0
      %1587 = vmatpush.xpose.msra.mxu0 0.0
      %1588 = vmatpush.xpose.msra.mxu0 0.0
      %1589 = vmatpush.xpose.msra.mxu0 0.0
      %1590 = vmatpush.xpose.msra.mxu0 0.0
      %1591 = vmatpush.xpose.msra.mxu0 0.0
      %1592 = vmatpush.xpose.msra.mxu0 0.0
      %1593 = vmatpush.xpose.msra.mxu0 0.0
      %1594 = vmatpush.xpose.msra.mxu0 0.0
      %1595 = vmatpush.xpose.msra.mxu0 0.0
      %1596 = vmatpush.xpose.msra.mxu0 0.0
      %1597 = vmatpush.xpose.msra.mxu0 0.0
      %1598 = vmatpush.xpose.msra.mxu0 %v1449
      %1599 = vmatmul.f32.gmra.mxu0 %v1415
      %v1600 = vpop.f32.mrf.mxu0
      %v1601 = vadd.f32 %v1581, %v1600
      %1602 = vdwg.mxu0
      %1603 = vmatpush.xpose.msra.mxu0 0.0
      %1604 = vmatpush.xpose.msra.mxu0 0.0
      %1605 = vmatpush.xpose.msra.mxu0 0.0
      %1606 = vmatpush.xpose.msra.mxu0 0.0
      %1607 = vmatpush.xpose.msra.mxu0 0.0
      %1608 = vmatpush.xpose.msra.mxu0 0.0
      %1609 = vmatpush.xpose.msra.mxu0 0.0
      %1610 = vmatpush.xpose.msra.mxu0 0.0
      %1611 = vmatpush.xpose.msra.mxu0 0.0
      %1612 = vmatpush.xpose.msra.mxu0 0.0
      %1613 = vmatpush.xpose.msra.mxu0 0.0
      %1614 = vmatpush.xpose.msra.mxu0 0.0
      %1615 = vmatpush.xpose.msra.mxu0 0.0
      %1616 = vmatpush.xpose.msra.mxu0 0.0
      %1617 = vmatpush.xpose.msra.mxu0 0.0
      %1618 = vmatpush.xpose.msra.mxu0 %v1461
      %1619 = vmatmul.f32.gmra.mxu0 %v1459
      %v1620 = vpop.f32.mrf.mxu0
      %v1621 = vadd.f32 %v1601, %v1620
      %1622 = vdwg.mxu0
      %v1623 = vrcp.pop %v1427
      %v1624 = vmul.f32 %v1621, %v1623
      %vm1625 = vcmask 23552
      %1626 = vst.msk [vmem:[%s268] sm:$0xff] %vm1625, %v1624
      %vm1627 = vcmask 7168
      %1628 = vst.msk [vmem:[%s272] sm:$0xff] %vm1627, %v1385
      %p1629 = scmp.lt.s32.totalorder %s18, 1
      %s1630 = scalar_select %p1629, %s18, 1
      %s1631 = smul.addr %s1630, 8
      %s1632 = smul.addr %s1631, 8
      %s1633 = scalar_lea.vmem %s4, %s1632
      %p1634 = scmp.lt.s32.totalorder %s18, 1
      %s1635 = scalar_select %p1634, %s18, 1
      %s1636 = smul.addr %s1635, 8
      %s1637 = scalar_lea.vmem %s5, %s1636
      %p1638 = scmp.lt.s32.totalorder %s18, 1
      %s1639 = scalar_select %p1638, %s18, 1
      %s1640 = smul.addr %s1639, 8
      %s1641 = scalar_lea.vmem %s6, %s1640
      // Predicated region
      $region37: #{perceiver_io_forward.12} parent=35 // pred_check
        %p1642 = pneg %p125
      $region38: #{perceiver_io_forward.12} parent=35 // pred_check_branch
        %1644 = sbr.rel (%p1642) target = $region40
      $region39: #{perceiver_io_forward.12} parent=35 // pred_region
        _
      $region40: #{perceiver_io_forward.12} parent=35 // pred_fallthru
        _
      // Predicated region
      $region41: #{perceiver_io_forward.12} parent=35 // pred_check
        %p1645 = pneg %p151
      $region42: #{perceiver_io_forward.12} parent=35 // pred_check_branch
        %1647 = sbr.rel (%p1645) target = $region44
      $region43: #{perceiver_io_forward.12} parent=35 // pred_region
        _
      $region44: #{perceiver_io_forward.12} parent=35 // pred_fallthru
        _
      // Predicated region
      $region45: #{perceiver_io_forward.12} parent=35 // pred_check
        %p1648 = pneg %p177
      $region46: #{perceiver_io_forward.12} parent=35 // pred_check_branch
        %1650 = sbr.rel (%p1648) target = $region48
      $region47: #{perceiver_io_forward.12} parent=35 // pred_region
        _
      $region48: #{perceiver_io_forward.12} parent=35 // pred_fallthru
        _
    $region36: #{perceiver_io_forward.12} parent=5 // pred_fallthru
      _
    %p1651 = scmp.le.s32.totalorder 2, %s13
    // Predicated region
    $region49: #{perceiver_io_forward.12} parent=5 // pred_check
      %p1652 = pneg %p1651
    $region50: #{perceiver_io_forward.12} parent=5 // pred_check_branch
      %1654 = sbr.rel (%p1652) target = $region52
    $region51: #{perceiver_io_forward.12} parent=5 // pred_region
      %s1655 = ssub.s32 %s13, 2
      // Predicated region
      $region53: #{perceiver_io_forward.12} parent=51 // pred_check
        %p1656 = pneg %p131
      $region54: #{perceiver_io_forward.12} parent=51 // pred_check_branch
        %1658 = sbr.rel (%p1656) target = $region56
      $region55: #{perceiver_io_forward.12} parent=51 // pred_region
        %p1659 = scmp.lt.s32.totalorder %s19, 1
        %s1660 = scalar_select %p1659, %s19, 1
        %s1661 = smul.addr %s1660, 8
        %s1662 = smul.addr %s1661, 8
        %s1663 = scalar_lea.vmem %s4, %s1662
      $region56: #{perceiver_io_forward.12} parent=51 // pred_fallthru
        _
      // Predicated region
      $region57: #{perceiver_io_forward.12} parent=51 // pred_check
        %p1664 = pneg %p157
      $region58: #{perceiver_io_forward.12} parent=51 // pred_check_branch
        %1666 = sbr.rel (%p1664) target = $region60
      $region59: #{perceiver_io_forward.12} parent=51 // pred_region
        %p1667 = scmp.lt.s32.totalorder %s19, 1
        %s1668 = scalar_select %p1667, %s19, 1
        %s1669 = smul.addr %s1668, 8
        %s1670 = scalar_lea.vmem %s5, %s1669
      $region60: #{perceiver_io_forward.12} parent=51 // pred_fallthru
        _
      // Predicated region
      $region61: #{perceiver_io_forward.12} parent=51 // pred_check
        %p1671 = pneg %p183
      $region62: #{perceiver_io_forward.12} parent=51 // pred_check_branch
        %1673 = sbr.rel (%p1671) target = $region64
      $region63: #{perceiver_io_forward.12} parent=51 // pred_region
        %p1674 = scmp.lt.s32.totalorder %s19, 1
        %s1675 = scalar_select %p1674, %s19, 1
        %s1676 = smul.addr %s1675, 8
        %s1677 = scalar_lea.vmem %s6, %s1676
      $region64: #{perceiver_io_forward.12} parent=51 // pred_fallthru
        _
    $region52: #{perceiver_io_forward.12} parent=5 // pred_fallthru
      _
  $region6: #{perceiver_io_forward.12} parent=0 // loop_footer
    %s17 = sadd.s32 1, %s13
  $region7: #{perceiver_io_forward.12} parent=0 // loop_footer_branch
    %12 = sbr.rel target = $region3
  $region8: #{perceiver_io_forward.12} parent=0 // loop_exit
    _

// kernel: perceiver_io_forward.13
$region0: #{perceiver_io_forward.13}
  #allocation0 [shape = 'u32[]', space=smem, size = 0x4, offset = 0x4, fixed_abs, tag = 'smem constant byte address 0x4 - core index']
  #allocation1 [shape = 'u32[72,128]{1,0:T(1,128)}', space=vmem, size = 0x9000, scoped, tag = 'internal scratch']
  #allocation2 [shape = 'f32[1,1]{1,0:T(1,128)S(1)}', space=vmem, size = 0x200, scoped, tag = 'scoped memory for perceiver_io_forward.13']
  %s0 = inlined_call_operand.vmem [shape: f32[2,216,1000], index: 0, kind: input, shape index: {}]
  %s1 = inlined_call_operand.vmem [shape: f32[1,216], index: 1, kind: input, shape index: {}]
  %s2 = inlined_call_operand.<no memory space> [shape: f32[1,1], index: 2, kind: input, shape index: {}]
  %s3 = inlined_call_operand.vmem [shape: f32[2,1,1000], index: 3, kind: output, shape index: {}]
  %s4 = sld [smem:[#allocation0]]
  $region45: #{perceiver_io_forward.13} parent=0
    _
  %s6 = ssub.s32 1, %s4
  %s7 = scalar_select 0, %s6, %s4
  %v8 = vstv %s2
  %9 = vst [vmem:[#allocation2] sm:$0x1] %v8
  loop: start=0, step=1, limit=4
  $region2: #{perceiver_io_forward.13} parent=0 // loop_pre_header
    _
  $region3: #{perceiver_io_forward.13} parent=0 // loop_header
    %s11 = sphi 0, %s15
    %p12 = scmp.ge.s32.totalorder %s11, 4
    %s21 = sphi 0, %s23
    %s24 = sphi 0, %s21
    %s25 = sphi 0, %s24
    %s41 = sphi 0, %s25
    %s45 = sphi 0, %s45
    %s47 = sphi 0, %s45
    %s48 = sphi 0, %s47
    %s62 = sphi 0, %s48
    %s66 = sphi 0, %s66
    %s68 = sphi 0, %s66
    %s69 = sphi 0, %s68
    %s83 = sphi 0, %s69
    %s89 = sphi 0, %s91
    %s92 = sphi 0, %s89
    %s93 = sphi 0, %s92
    %s109 = sphi 0, %s93
  $region4: #{perceiver_io_forward.13} parent=0 // loop_header_branch
    %14 = sbr.rel (%p12) target = $region8
  $region5: #{perceiver_io_forward.13} parent=0 // loop_body
    %s16 = ssub.s32 %s11, 1
    %s17 = ssub.s32 %s11, 2
    %s18 = sadd.s32 %s11, 1
    %s19 = ssub.s32 %s11, %s18
    %p20 = scmp.eq.s32.totalorder %s19, 0
    %s22 = sadd.s32 %s21, 1
    %s23 = scalar_select %p20, %s21, %s22
    %p26 = pneg %p20
    %p27 = scmp.eq.s32.totalorder %s11, 1
    %p28 = por %p26, %p27
    %p29 = scmp.ne.s32.totalorder %s21, %s24
    %p30 = scmp.eq.s32.totalorder %s11, 0
    %p31 = por %p29, %p30
    %p32 = scmp.ne.s32.totalorder %s21, %s24
    %p33 = scmp.eq.s32.totalorder %s16, 1
    %p34 = por %p32, %p33
    %p35 = scmp.ne.s32.totalorder %s24, %s25
    %p36 = scmp.eq.s32.totalorder %s16, 0
    %p37 = por %p35, %p36
    %p38 = scmp.ne.s32.totalorder %s24, %s25
    %p39 = scmp.eq.s32.totalorder %s17, 1
    %p40 = por %p38, %p39
    %p42 = scmp.ne.s32.totalorder %s25, %s41
    %p43 = scmp.eq.s32.totalorder %s17, 0
    %p44 = por %p42, %p43
    %s46 = sadd.s32 %s45, 1
    %p49 = scmp.eq.s32.totalorder %s11, 1
    %p50 = scmp.ne.s32.totalorder %s45, %s47
    %p51 = scmp.eq.s32.totalorder %s11, 0
    %p52 = por %p50, %p51
    %p53 = scmp.ne.s32.totalorder %s45, %s47
    %p54 = scmp.eq.s32.totalorder %s16, 1
    %p55 = por %p53, %p54
    %p56 = scmp.ne.s32.totalorder %s47, %s48
    %p57 = scmp.eq.s32.totalorder %s16, 0
    %p58 = por %p56, %p57
    %p59 = scmp.ne.s32.totalorder %s47, %s48
    %p60 = scmp.eq.s32.totalorder %s17, 1
    %p61 = por %p59, %p60
    %p63 = scmp.ne.s32.totalorder %s48, %s62
    %p64 = scmp.eq.s32.totalorder %s17, 0
    %p65 = por %p63, %p64
    %s67 = sadd.s32 %s66, 1
    %p70 = scmp.eq.s32.totalorder %s11, 1
    %p71 = scmp.ne.s32.totalorder %s66, %s68
    %p72 = scmp.eq.s32.totalorder %s11, 0
    %p73 = por %p71, %p72
    %p74 = scmp.ne.s32.totalorder %s66, %s68
    %p75 = scmp.eq.s32.totalorder %s16, 1
    %p76 = por %p74, %p75
    %p77 = scmp.ne.s32.totalorder %s68, %s69
    %p78 = scmp.eq.s32.totalorder %s16, 0
    %p79 = por %p77, %p78
    %p80 = scmp.ne.s32.totalorder %s68, %s69
    %p81 = scmp.eq.s32.totalorder %s17, 1
    %p82 = por %p80, %p81
    %p84 = scmp.ne.s32.totalorder %s69, %s83
    %p85 = scmp.eq.s32.totalorder %s17, 0
    %p86 = por %p84, %p85
    %s87 = ssub.s32 %s11, %s18
    %p88 = scmp.eq.s32.totalorder %s87, 0
    %s90 = sadd.s32 %s89, 1
    %s91 = scalar_select %p88, %s89, %s90
    %p94 = pneg %p88
    %p95 = scmp.eq.s32.totalorder %s11, 1
    %p96 = por %p94, %p95
    %p97 = scmp.ne.s32.totalorder %s89, %s92
    %p98 = scmp.eq.s32.totalorder %s11, 0
    %p99 = por %p97, %p98
    %p100 = scmp.ne.s32.totalorder %s89, %s92
    %p101 = scmp.eq.s32.totalorder %s16, 1
    %p102 = por %p100, %p101
    %p103 = scmp.ne.s32.totalorder %s92, %s93
    %p104 = scmp.eq.s32.totalorder %s16, 0
    %p105 = por %p103, %p104
    %p106 = scmp.ne.s32.totalorder %s92, %s93
    %p107 = scmp.eq.s32.totalorder %s17, 1
    %p108 = por %p106, %p107
    %p110 = scmp.ne.s32.totalorder %s93, %s109
    %p111 = scmp.eq.s32.totalorder %s17, 0
    %p112 = por %p110, %p111
    %p113 = scmp.le.s32.totalorder 1, %s11
    %p114 = scmp.lt.s32.totalorder %s11, 3
    %p115 = pnand %p113, %p114
    %p116 = pneg %p115
    // Predicated region
    $region9: #{perceiver_io_forward.13} parent=5 // pred_check
      _
    $region10: #{perceiver_io_forward.13} parent=5 // pred_check_branch
      %118 = sbr.rel (%p115) target = $region12
    $region11: #{perceiver_io_forward.13} parent=5 // pred_region
      %s119 = ssub.s32 %s11, 1
      // Predicated region
      $region13: #{perceiver_io_forward.13} parent=11 // pred_check
        %p120 = pneg %p58
      $region14: #{perceiver_io_forward.13} parent=11 // pred_check_branch
        %122 = sbr.rel (%p120) target = $region16
      $region15: #{perceiver_io_forward.13} parent=11 // pred_region
        _
      $region16: #{perceiver_io_forward.13} parent=11 // pred_fallthru
        _
      // Predicated region
      $region17: #{perceiver_io_forward.13} parent=11 // pred_check
        %p123 = pneg %p79
      $region18: #{perceiver_io_forward.13} parent=11 // pred_check_branch
        %125 = sbr.rel (%p123) target = $region20
      $region19: #{perceiver_io_forward.13} parent=11 // pred_region
        _
      $region20: #{perceiver_io_forward.13} parent=11 // pred_fallthru
        _
    $region12: #{perceiver_io_forward.13} parent=5 // pred_fallthru
      _
    %p126 = scmp.lt.s32.totalorder %s11, 2
    // Predicated region
    $region21: #{perceiver_io_forward.13} parent=5 // pred_check
      %p127 = pneg %p126
    $region22: #{perceiver_io_forward.13} parent=5 // pred_check_branch
      %129 = sbr.rel (%p127) target = $region24
    $region23: #{perceiver_io_forward.13} parent=5 // pred_region
      // Predicated region
      $region25: #{perceiver_io_forward.13} parent=23 // pred_check
        %p130 = pneg %p31
      $region26: #{perceiver_io_forward.13} parent=23 // pred_check_branch
        %132 = sbr.rel (%p130) target = $region28
      $region27: #{perceiver_io_forward.13} parent=23 // pred_region
        %p133 = scmp.lt.s32.totalorder %s11, 1
        %s134 = scalar_select %p133, %s11, 1
        %s135 = smul.addr %s134, 216
        %s136 = smul.addr %s135, 8
        %s137 = scalar_lea.vmem %s0, %s136
      $region28: #{perceiver_io_forward.13} parent=23 // pred_fallthru
        _
    $region24: #{perceiver_io_forward.13} parent=5 // pred_fallthru
      _
    %p138 = scmp.le.s32.totalorder 1, %s11
    %p139 = scmp.lt.s32.totalorder %s11, 3
    %p140 = pnand %p138, %p139
    %p141 = pneg %p140
    // Predicated region
    $region29: #{perceiver_io_forward.13} parent=5 // pred_check
      _
    $region30: #{perceiver_io_forward.13} parent=5 // pred_check_branch
      %143 = sbr.rel (%p140) target = $region32
    $region31: #{perceiver_io_forward.13} parent=5 // pred_region
      %s144 = ssub.s32 %s11, 1
      %p145 = scmp.lt.s32.totalorder %s16, 1
      %s146 = scalar_select %p145, %s16, 1
      %s147 = smul.addr %s146, 216
      %s148 = smul.addr %s147, 8
      %s149 = scalar_lea.vmem %s0, %s148
      %p150 = pneg %p37
      %p151 = pneg %p34
      %p152 = pneg %p58
      %p153 = pneg %p55
      %p154 = pneg %p79
      %p155 = pneg %p76
      %p156 = pneg %p105
      %p157 = pneg %p102
      %p158 = scmp.lt.s32.totalorder %s16, 1
      %s159 = scalar_select %p158, %s16, 1
      %s160 = smul.addr %s159, 8
      %s161 = scalar_lea.vmem %s3, %s160
      %p162 = scmp.lt.s32.totalorder %s16, 1
      %s163 = scalar_select %p162, %s16, 1
      %s164 = smul.addr %s163, 216
      %s165 = smul.addr %s164, 8
      %s166 = scalar_lea.vmem %s0, %s165
      %p167 = scmp.lt.s32.totalorder %s16, 1
      %s168 = scalar_select %p167, %s16, 1
      %s169 = smul.addr %s168, 8
      %s170 = scalar_lea.vmem %s3, %s169
      %v171 = vld [vmem:[%s1] sm:$0x3]
      %v172 = vld [vmem:[%s166] sm:$0xff]
      %v173 = vld [vmem:[%s166 + $0x8] sm:$0xff]
      %v174 = vld [vmem:[%s166 + $0x10] sm:$0xff]
      %v175 = vld [vmem:[%s166 + $0x18] sm:$0xff]
      %v176 = vld [vmem:[%s166 + $0x20] sm:$0xff]
      %v177 = vld [vmem:[%s166 + $0x28] sm:$0xff]
      %v178 = vld [vmem:[%s166 + $0x30] sm:$0xff]
      %v179 = vld [vmem:[%s166 + $0x38] sm:$0xff]
      %v180 = vld [vmem:[%s166 + $0x40] sm:$0xff]
      %v181 = vld [vmem:[%s166 + $0x48] sm:$0xff]
      %v182 = vld [vmem:[%s166 + $0x50] sm:$0xff]
      %v183 = vld [vmem:[%s166 + $0x58] sm:$0xff]
      %v184 = vld [vmem:[%s166 + $0x60] sm:$0xff]
      %v185 = vld [vmem:[%s166 + $0x68] sm:$0xff]
      %v186 = vld [vmem:[%s166 + $0x70] sm:$0xff]
      %v187 = vld [vmem:[%s166 + $0x78] sm:$0xff]
      %v188 = vld [vmem:[%s166 + $0x80] sm:$0xff]
      %v189 = vld [vmem:[%s166 + $0x88] sm:$0xff]
      %v190 = vld [vmem:[%s166 + $0x90] sm:$0xff]
      %v191 = vld [vmem:[%s166 + $0x98] sm:$0xff]
      %v192 = vld [vmem:[%s166 + $0xa0] sm:$0xff]
      %v193 = vld [vmem:[%s166 + $0xa8] sm:$0xff]
      %v194 = vld [vmem:[%s166 + $0xb0] sm:$0xff]
      %v195 = vld [vmem:[%s166 + $0xb8] sm:$0xff]
      %v196 = vld [vmem:[%s166 + $0xc0] sm:$0xff]
      %v197 = vld [vmem:[%s166 + $0xc8] sm:$0xff]
      %v198 = vld [vmem:[%s166 + $0xd0] sm:$0xff]
      %v199 = vld [vmem:[%s166 + $0xd8] sm:$0xff]
      %v200 = vld [vmem:[%s166 + $0xe0] sm:$0xff]
      %v201 = vld [vmem:[%s166 + $0xe8] sm:$0xff]
      %v202 = vld [vmem:[%s166 + $0xf0] sm:$0xff]
      %v203 = vld [vmem:[%s166 + $0xf8] sm:$0xff]
      %v204 = vld [vmem:[%s166 + $0x100] sm:$0xff]
      %v205 = vld [vmem:[%s166 + $0x108] sm:$0xff]
      %v206 = vld [vmem:[%s166 + $0x110] sm:$0xff]
      %v207 = vld [vmem:[%s166 + $0x118] sm:$0xff]
      %v208 = vld [vmem:[%s166 + $0x120] sm:$0xff]
      %v209 = vld [vmem:[%s166 + $0x128] sm:$0xff]
      %v210 = vld [vmem:[%s166 + $0x130] sm:$0xff]
      %v211 = vld [vmem:[%s166 + $0x138] sm:$0xff]
      %v212 = vld [vmem:[%s166 + $0x140] sm:$0xff]
      %v213 = vld [vmem:[%s166 + $0x148] sm:$0xff]
      %v214 = vld [vmem:[%s166 + $0x150] sm:$0xff]
      %v215 = vld [vmem:[%s166 + $0x158] sm:$0xff]
      %v216 = vld [vmem:[%s166 + $0x160] sm:$0xff]
      %v217 = vld [vmem:[%s166 + $0x168] sm:$0xff]
      %v218 = vld [vmem:[%s166 + $0x170] sm:$0xff]
      %v219 = vld [vmem:[%s166 + $0x178] sm:$0xff]
      %v220 = vld [vmem:[%s166 + $0x180] sm:$0xff]
      %v221 = vld [vmem:[%s166 + $0x188] sm:$0xff]
      %v222 = vld [vmem:[%s166 + $0x190] sm:$0xff]
      %v223 = vld [vmem:[%s166 + $0x198] sm:$0xff]
      %v224 = vld [vmem:[%s166 + $0x1a0] sm:$0xff]
      %v225 = vld [vmem:[%s166 + $0x1a8] sm:$0xff]
      %v226 = vld [vmem:[%s166 + $0x1b0] sm:$0xff]
      %v227 = vld [vmem:[%s166 + $0x1b8] sm:$0xff]
      %v228 = vld [vmem:[%s166 + $0x1c0] sm:$0xff]
      %v229 = vld [vmem:[%s166 + $0x1c8] sm:$0xff]
      %v230 = vld [vmem:[%s166 + $0x1d0] sm:$0xff]
      %v231 = vld [vmem:[%s166 + $0x1d8] sm:$0xff]
      %v232 = vld [vmem:[%s166 + $0x1e0] sm:$0xff]
      %v233 = vld [vmem:[%s166 + $0x1e8] sm:$0xff]
      %v234 = vld [vmem:[%s166 + $0x1f0] sm:$0xff]
      %v235 = vld [vmem:[%s166 + $0x1f8] sm:$0xff]
      %v236 = vld [vmem:[%s166 + $0x200] sm:$0xff]
      %v237 = vld [vmem:[%s166 + $0x208] sm:$0xff]
      %v238 = vld [vmem:[%s166 + $0x210] sm:$0xff]
      %v239 = vld [vmem:[%s166 + $0x218] sm:$0xff]
      %v240 = vld [vmem:[%s166 + $0x220] sm:$0xff]
      %v241 = vld [vmem:[%s166 + $0x228] sm:$0xff]
      %v242 = vld [vmem:[%s166 + $0x230] sm:$0xff]
      %v243 = vld [vmem:[%s166 + $0x238] sm:$0xff]
      %v244 = vld [vmem:[%s166 + $0x240] sm:$0xff]
      %v245 = vld [vmem:[%s166 + $0x248] sm:$0xff]
      %v246 = vld [vmem:[%s166 + $0x250] sm:$0xff]
      %v247 = vld [vmem:[%s166 + $0x258] sm:$0xff]
      %v248 = vld [vmem:[%s166 + $0x260] sm:$0xff]
      %v249 = vld [vmem:[%s166 + $0x268] sm:$0xff]
      %v250 = vld [vmem:[%s166 + $0x270] sm:$0xff]
      %v251 = vld [vmem:[%s166 + $0x278] sm:$0xff]
      %v252 = vld [vmem:[%s166 + $0x280] sm:$0xff]
      %v253 = vld [vmem:[%s166 + $0x288] sm:$0xff]
      %v254 = vld [vmem:[%s166 + $0x290] sm:$0xff]
      %v255 = vld [vmem:[%s166 + $0x298] sm:$0xff]
      %v256 = vld [vmem:[%s166 + $0x2a0] sm:$0xff]
      %v257 = vld [vmem:[%s166 + $0x2a8] sm:$0xff]
      %v258 = vld [vmem:[%s166 + $0x2b0] sm:$0xff]
      %v259 = vld [vmem:[%s166 + $0x2b8] sm:$0xff]
      %v260 = vld [vmem:[%s166 + $0x2c0] sm:$0xff]
      %v261 = vld [vmem:[%s166 + $0x2c8] sm:$0xff]
      %v262 = vld [vmem:[%s166 + $0x2d0] sm:$0xff]
      %v263 = vld [vmem:[%s166 + $0x2d8] sm:$0xff]
      %v264 = vld [vmem:[%s166 + $0x2e0] sm:$0xff]
      %v265 = vld [vmem:[%s166 + $0x2e8] sm:$0xff]
      %v266 = vld [vmem:[%s166 + $0x2f0] sm:$0xff]
      %v267 = vld [vmem:[%s166 + $0x2f8] sm:$0xff]
      %v268 = vld [vmem:[%s166 + $0x300] sm:$0xff]
      %v269 = vld [vmem:[%s166 + $0x308] sm:$0xff]
      %v270 = vld [vmem:[%s166 + $0x310] sm:$0xff]
      %v271 = vld [vmem:[%s166 + $0x318] sm:$0xff]
      %v272 = vld [vmem:[%s166 + $0x320] sm:$0xff]
      %v273 = vld [vmem:[%s166 + $0x328] sm:$0xff]
      %v274 = vld [vmem:[%s166 + $0x330] sm:$0xff]
      %v275 = vld [vmem:[%s166 + $0x338] sm:$0xff]
      %v276 = vld [vmem:[%s166 + $0x340] sm:$0xff]
      %v277 = vld [vmem:[%s166 + $0x348] sm:$0xff]
      %v278 = vld [vmem:[%s166 + $0x350] sm:$0xff]
      %v279 = vld [vmem:[%s166 + $0x358] sm:$0xff]
      %v280 = vld [vmem:[%s166 + $0x360] sm:$0xff]
      %v281 = vld [vmem:[%s166 + $0x368] sm:$0xff]
      %v282 = vld [vmem:[%s166 + $0x370] sm:$0xff]
      %v283 = vld [vmem:[%s166 + $0x378] sm:$0xff]
      %v284 = vld [vmem:[%s166 + $0x380] sm:$0xff]
      %v285 = vld [vmem:[%s166 + $0x388] sm:$0xff]
      %v286 = vld [vmem:[%s166 + $0x390] sm:$0xff]
      %v287 = vld [vmem:[%s166 + $0x398] sm:$0xff]
      %v288 = vld [vmem:[%s166 + $0x3a0] sm:$0xff]
      %v289 = vld [vmem:[%s166 + $0x3a8] sm:$0xff]
      %v290 = vld [vmem:[%s166 + $0x3b0] sm:$0xff]
      %v291 = vld [vmem:[%s166 + $0x3b8] sm:$0xff]
      %v292 = vld [vmem:[%s166 + $0x3c0] sm:$0xff]
      %v293 = vld [vmem:[%s166 + $0x3c8] sm:$0xff]
      %v294 = vld [vmem:[%s166 + $0x3d0] sm:$0xff]
      %v295 = vld [vmem:[%s166 + $0x3d8] sm:$0xff]
      %v296 = vld [vmem:[%s166 + $0x3e0] sm:$0xff]
      %v297 = vld [vmem:[%s166 + $0x3e8] sm:$0xff]
      %v298 = vld [vmem:[%s166 + $0x3f0] sm:$0xff]
      %v299 = vld [vmem:[%s166 + $0x3f8] sm:$0xff]
      %v300 = vld [vmem:[%s166 + $0x400] sm:$0xff]
      %v301 = vld [vmem:[%s166 + $0x408] sm:$0xff]
      %v302 = vld [vmem:[%s166 + $0x410] sm:$0xff]
      %v303 = vld [vmem:[%s166 + $0x418] sm:$0xff]
      %v304 = vld [vmem:[%s166 + $0x420] sm:$0xff]
      %v305 = vld [vmem:[%s166 + $0x428] sm:$0xff]
      %v306 = vld [vmem:[%s166 + $0x430] sm:$0xff]
      %v307 = vld [vmem:[%s166 + $0x438] sm:$0xff]
      %v308 = vld [vmem:[%s166 + $0x440] sm:$0xff]
      %v309 = vld [vmem:[%s166 + $0x448] sm:$0xff]
      %v310 = vld [vmem:[%s166 + $0x450] sm:$0xff]
      %v311 = vld [vmem:[%s166 + $0x458] sm:$0xff]
      %v312 = vld [vmem:[%s166 + $0x460] sm:$0xff]
      %v313 = vld [vmem:[%s166 + $0x468] sm:$0xff]
      %v314 = vld [vmem:[%s166 + $0x470] sm:$0xff]
      %v315 = vld [vmem:[%s166 + $0x478] sm:$0xff]
      %v316 = vld [vmem:[%s166 + $0x480] sm:$0xff]
      %v317 = vld [vmem:[%s166 + $0x488] sm:$0xff]
      %v318 = vld [vmem:[%s166 + $0x490] sm:$0xff]
      %v319 = vld [vmem:[%s166 + $0x498] sm:$0xff]
      %v320 = vld [vmem:[%s166 + $0x4a0] sm:$0xff]
      %v321 = vld [vmem:[%s166 + $0x4a8] sm:$0xff]
      %v322 = vld [vmem:[%s166 + $0x4b0] sm:$0xff]
      %v323 = vld [vmem:[%s166 + $0x4b8] sm:$0xff]
      %v324 = vld [vmem:[%s166 + $0x4c0] sm:$0xff]
      %v325 = vld [vmem:[%s166 + $0x4c8] sm:$0xff]
      %v326 = vld [vmem:[%s166 + $0x4d0] sm:$0xff]
      %v327 = vld [vmem:[%s166 + $0x4d8] sm:$0xff]
      %v328 = vld [vmem:[%s166 + $0x4e0] sm:$0xff]
      %v329 = vld [vmem:[%s166 + $0x4e8] sm:$0xff]
      %v330 = vld [vmem:[%s166 + $0x4f0] sm:$0xff]
      %v331 = vld [vmem:[%s166 + $0x4f8] sm:$0xff]
      %v332 = vld [vmem:[%s166 + $0x500] sm:$0xff]
      %v333 = vld [vmem:[%s166 + $0x508] sm:$0xff]
      %v334 = vld [vmem:[%s166 + $0x510] sm:$0xff]
      %v335 = vld [vmem:[%s166 + $0x518] sm:$0xff]
      %v336 = vld [vmem:[%s166 + $0x520] sm:$0xff]
      %v337 = vld [vmem:[%s166 + $0x528] sm:$0xff]
      %v338 = vld [vmem:[%s166 + $0x530] sm:$0xff]
      %v339 = vld [vmem:[%s166 + $0x538] sm:$0xff]
      %v340 = vld [vmem:[%s166 + $0x540] sm:$0xff]
      %v341 = vld [vmem:[%s166 + $0x548] sm:$0xff]
      %v342 = vld [vmem:[%s166 + $0x550] sm:$0xff]
      %v343 = vld [vmem:[%s166 + $0x558] sm:$0xff]
      %v344 = vld [vmem:[%s166 + $0x560] sm:$0xff]
      %v345 = vld [vmem:[%s166 + $0x568] sm:$0xff]
      %v346 = vld [vmem:[%s166 + $0x570] sm:$0xff]
      %v347 = vld [vmem:[%s166 + $0x578] sm:$0xff]
      %v348 = vld [vmem:[%s166 + $0x580] sm:$0xff]
      %v349 = vld [vmem:[%s166 + $0x588] sm:$0xff]
      %v350 = vld [vmem:[%s166 + $0x590] sm:$0xff]
      %v351 = vld [vmem:[%s166 + $0x598] sm:$0xff]
      %v352 = vld [vmem:[%s166 + $0x5a0] sm:$0xff]
      %v353 = vld [vmem:[%s166 + $0x5a8] sm:$0xff]
      %v354 = vld [vmem:[%s166 + $0x5b0] sm:$0xff]
      %v355 = vld [vmem:[%s166 + $0x5b8] sm:$0xff]
      %v356 = vld [vmem:[%s166 + $0x5c0] sm:$0xff]
      %v357 = vld [vmem:[%s166 + $0x5c8] sm:$0xff]
      %v358 = vld [vmem:[%s166 + $0x5d0] sm:$0xff]
      %v359 = vld [vmem:[%s166 + $0x5d8] sm:$0xff]
      %v360 = vld [vmem:[%s166 + $0x5e0] sm:$0xff]
      %v361 = vld [vmem:[%s166 + $0x5e8] sm:$0xff]
      %v362 = vld [vmem:[%s166 + $0x5f0] sm:$0xff]
      %v363 = vld [vmem:[%s166 + $0x5f8] sm:$0xff]
      %v364 = vld [vmem:[%s166 + $0x600] sm:$0xff]
      %v365 = vld [vmem:[%s166 + $0x608] sm:$0xff]
      %v366 = vld [vmem:[%s166 + $0x610] sm:$0xff]
      %v367 = vld [vmem:[%s166 + $0x618] sm:$0xff]
      %v368 = vld [vmem:[%s166 + $0x620] sm:$0xff]
      %v369 = vld [vmem:[%s166 + $0x628] sm:$0xff]
      %v370 = vld [vmem:[%s166 + $0x630] sm:$0xff]
      %v371 = vld [vmem:[%s166 + $0x638] sm:$0xff]
      %v372 = vld [vmem:[%s166 + $0x640] sm:$0xff]
      %v373 = vld [vmem:[%s166 + $0x648] sm:$0xff]
      %v374 = vld [vmem:[%s166 + $0x650] sm:$0xff]
      %v375 = vld [vmem:[%s166 + $0x658] sm:$0xff]
      %v376 = vld [vmem:[%s166 + $0x660] sm:$0xff]
      %v377 = vld [vmem:[%s166 + $0x668] sm:$0xff]
      %v378 = vld [vmem:[%s166 + $0x670] sm:$0xff]
      %v379 = vld [vmem:[%s166 + $0x678] sm:$0xff]
      %v380 = vld [vmem:[%s166 + $0x680] sm:$0xff]
      %v381 = vld [vmem:[%s166 + $0x688] sm:$0xff]
      %v382 = vld [vmem:[%s166 + $0x690] sm:$0xff]
      %v383 = vld [vmem:[%s166 + $0x698] sm:$0xff]
      %v384 = vld [vmem:[%s166 + $0x6a0] sm:$0xff]
      %v385 = vld [vmem:[%s166 + $0x6a8] sm:$0xff]
      %v386 = vld [vmem:[%s166 + $0x6b0] sm:$0xff]
      %v387 = vld [vmem:[%s166 + $0x6b8] sm:$0xff]
      %v388 = vld [vmem:[#allocation2] sm:$0x1]
      %390 = vset.pattern.permute.xlu0 0
      %391 = vperm.xlu0 %390, %v388
      %v392 = vpop.permute.xlu0 %391
      %v394 = vperm.slane %v392, 0
      %v396 = vperm.slane %v171, 0
      %v397 = vperm.slane %v171, 1
      %vm399 = vcmask 719872
      %v400 = vsel %vm399, %v397, 0
      %402 = vmatpush.msra.mxu0 %v292
      %403 = vmatpush.msra.mxu0 %v284
      %404 = vmatpush.msra.mxu0 %v276
      %405 = vmatpush.msra.mxu0 %v268
      %406 = vmatpush.msra.mxu0 %v260
      %407 = vmatpush.msra.mxu0 %v252
      %408 = vmatpush.msra.mxu0 %v244
      %409 = vmatpush.msra.mxu0 %v236
      %410 = vmatpush.msra.mxu0 %v228
      %411 = vmatpush.msra.mxu0 %v220
      %412 = vmatpush.msra.mxu0 %v212
      %413 = vmatpush.msra.mxu0 %v204
      %414 = vmatpush.msra.mxu0 %v196
      %415 = vmatpush.msra.mxu0 %v188
      %416 = vmatpush.msra.mxu0 %v180
      %417 = vmatpush.msra.mxu0 %v172
      %418 = vmatmul.f32.gmra.mxu0 %v396
      %v419 = vpop.f32.mrf.mxu0
      %v420 = vadd.f32 %v394, %v419
      %421 = vdwg.mxu0
      %422 = vmatpush.msra.mxu0 0.0
      %423 = vmatpush.msra.mxu0 0.0
      %424 = vmatpush.msra.mxu0 0.0
      %425 = vmatpush.msra.mxu0 0.0
      %426 = vmatpush.msra.mxu0 0.0
      %427 = vmatpush.msra.mxu0 %v380
      %428 = vmatpush.msra.mxu0 %v372
      %429 = vmatpush.msra.mxu0 %v364
      %430 = vmatpush.msra.mxu0 %v356
      %431 = vmatpush.msra.mxu0 %v348
      %432 = vmatpush.msra.mxu0 %v340
      %433 = vmatpush.msra.mxu0 %v332
      %434 = vmatpush.msra.mxu0 %v324
      %435 = vmatpush.msra.mxu0 %v316
      %436 = vmatpush.msra.mxu0 %v308
      %437 = vmatpush.msra.mxu0 %v300
      %438 = vmatmul.f32.gmra.mxu0 %v400
      %v439 = vpop.f32.mrf.mxu0
      %v440 = vadd.f32 %v420, %v439
      %441 = vdwg.mxu0
      %442 = vmatpush.msra.mxu0 %v293
      %443 = vmatpush.msra.mxu0 %v285
      %444 = vmatpush.msra.mxu0 %v277
      %445 = vmatpush.msra.mxu0 %v269
      %446 = vmatpush.msra.mxu0 %v261
      %447 = vmatpush.msra.mxu0 %v253
      %448 = vmatpush.msra.mxu0 %v245
      %449 = vmatpush.msra.mxu0 %v237
      %450 = vmatpush.msra.mxu0 %v229
      %451 = vmatpush.msra.mxu0 %v221
      %452 = vmatpush.msra.mxu0 %v213
      %453 = vmatpush.msra.mxu0 %v205
      %454 = vmatpush.msra.mxu0 %v197
      %455 = vmatpush.msra.mxu0 %v189
      %456 = vmatpush.msra.mxu0 %v181
      %457 = vmatpush.msra.mxu0 %v173
      %458 = vmatmul.f32.gmra.mxu0 %v396
      %v459 = vpop.f32.mrf.mxu0
      %v460 = vadd.f32 %v394, %v459
      %461 = vdwg.mxu0
      %462 = vmatpush.msra.mxu0 0.0
      %463 = vmatpush.msra.mxu0 0.0
      %464 = vmatpush.msra.mxu0 0.0
      %465 = vmatpush.msra.mxu0 0.0
      %466 = vmatpush.msra.mxu0 0.0
      %467 = vmatpush.msra.mxu0 %v381
      %468 = vmatpush.msra.mxu0 %v373
      %469 = vmatpush.msra.mxu0 %v365
      %470 = vmatpush.msra.mxu0 %v357
      %471 = vmatpush.msra.mxu0 %v349
      %472 = vmatpush.msra.mxu0 %v341
      %473 = vmatpush.msra.mxu0 %v333
      %474 = vmatpush.msra.mxu0 %v325
      %475 = vmatpush.msra.mxu0 %v317
      %476 = vmatpush.msra.mxu0 %v309
      %477 = vmatpush.msra.mxu0 %v301
      %478 = vmatmul.f32.gmra.mxu0 %v400
      %v479 = vpop.f32.mrf.mxu0
      %v480 = vadd.f32 %v460, %v479
      %481 = vdwg.mxu0
      %482 = vmatpush.msra.mxu0 %v294
      %483 = vmatpush.msra.mxu0 %v286
      %484 = vmatpush.msra.mxu0 %v278
      %485 = vmatpush.msra.mxu0 %v270
      %486 = vmatpush.msra.mxu0 %v262
      %487 = vmatpush.msra.mxu0 %v254
      %488 = vmatpush.msra.mxu0 %v246
      %489 = vmatpush.msra.mxu0 %v238
      %490 = vmatpush.msra.mxu0 %v230
      %491 = vmatpush.msra.mxu0 %v222
      %492 = vmatpush.msra.mxu0 %v214
      %493 = vmatpush.msra.mxu0 %v206
      %494 = vmatpush.msra.mxu0 %v198
      %495 = vmatpush.msra.mxu0 %v190
      %496 = vmatpush.msra.mxu0 %v182
      %497 = vmatpush.msra.mxu0 %v174
      %498 = vmatmul.f32.gmra.mxu0 %v396
      %v499 = vpop.f32.mrf.mxu0
      %v500 = vadd.f32 %v394, %v499
      %501 = vdwg.mxu0
      %502 = vmatpush.msra.mxu0 0.0
      %503 = vmatpush.msra.mxu0 0.0
      %504 = vmatpush.msra.mxu0 0.0
      %505 = vmatpush.msra.mxu0 0.0
      %506 = vmatpush.msra.mxu0 0.0
      %507 = vmatpush.msra.mxu0 %v382
      %508 = vmatpush.msra.mxu0 %v374
      %509 = vmatpush.msra.mxu0 %v366
      %510 = vmatpush.msra.mxu0 %v358
      %511 = vmatpush.msra.mxu0 %v350
      %512 = vmatpush.msra.mxu0 %v342
      %513 = vmatpush.msra.mxu0 %v334
      %514 = vmatpush.msra.mxu0 %v326
      %515 = vmatpush.msra.mxu0 %v318
      %516 = vmatpush.msra.mxu0 %v310
      %517 = vmatpush.msra.mxu0 %v302
      %518 = vmatmul.f32.gmra.mxu0 %v400
      %v519 = vpop.f32.mrf.mxu0
      %v520 = vadd.f32 %v500, %v519
      %521 = vdwg.mxu0
      %522 = vmatpush.msra.mxu0 %v295
      %523 = vmatpush.msra.mxu0 %v287
      %524 = vmatpush.msra.mxu0 %v279
      %525 = vmatpush.msra.mxu0 %v271
      %526 = vmatpush.msra.mxu0 %v263
      %527 = vmatpush.msra.mxu0 %v255
      %528 = vmatpush.msra.mxu0 %v247
      %529 = vmatpush.msra.mxu0 %v239
      %530 = vmatpush.msra.mxu0 %v231
      %531 = vmatpush.msra.mxu0 %v223
      %532 = vmatpush.msra.mxu0 %v215
      %533 = vmatpush.msra.mxu0 %v207
      %534 = vmatpush.msra.mxu0 %v199
      %535 = vmatpush.msra.mxu0 %v191
      %536 = vmatpush.msra.mxu0 %v183
      %537 = vmatpush.msra.mxu0 %v175
      %538 = vmatmul.f32.gmra.mxu0 %v396
      %v539 = vpop.f32.mrf.mxu0
      %v540 = vadd.f32 %v394, %v539
      %541 = vdwg.mxu0
      %542 = vmatpush.msra.mxu0 0.0
      %543 = vmatpush.msra.mxu0 0.0
      %544 = vmatpush.msra.mxu0 0.0
      %545 = vmatpush.msra.mxu0 0.0
      %546 = vmatpush.msra.mxu0 0.0
      %547 = vmatpush.msra.mxu0 %v383
      %548 = vmatpush.msra.mxu0 %v375
      %549 = vmatpush.msra.mxu0 %v367
      %550 = vmatpush.msra.mxu0 %v359
      %551 = vmatpush.msra.mxu0 %v351
      %552 = vmatpush.msra.mxu0 %v343
      %553 = vmatpush.msra.mxu0 %v335
      %554 = vmatpush.msra.mxu0 %v327
      %555 = vmatpush.msra.mxu0 %v319
      %556 = vmatpush.msra.mxu0 %v311
      %557 = vmatpush.msra.mxu0 %v303
      %558 = vmatmul.f32.gmra.mxu0 %v400
      %v559 = vpop.f32.mrf.mxu0
      %v560 = vadd.f32 %v540, %v559
      %561 = vdwg.mxu0
      %562 = vmatpush.msra.mxu0 %v296
      %563 = vmatpush.msra.mxu0 %v288
      %564 = vmatpush.msra.mxu0 %v280
      %565 = vmatpush.msra.mxu0 %v272
      %566 = vmatpush.msra.mxu0 %v264
      %567 = vmatpush.msra.mxu0 %v256
      %568 = vmatpush.msra.mxu0 %v248
      %569 = vmatpush.msra.mxu0 %v240
      %570 = vmatpush.msra.mxu0 %v232
      %571 = vmatpush.msra.mxu0 %v224
      %572 = vmatpush.msra.mxu0 %v216
      %573 = vmatpush.msra.mxu0 %v208
      %574 = vmatpush.msra.mxu0 %v200
      %575 = vmatpush.msra.mxu0 %v192
      %576 = vmatpush.msra.mxu0 %v184
      %577 = vmatpush.msra.mxu0 %v176
      %578 = vmatmul.f32.gmra.mxu0 %v396
      %v579 = vpop.f32.mrf.mxu0
      %v580 = vadd.f32 %v394, %v579
      %581 = vdwg.mxu0
      %582 = vmatpush.msra.mxu0 0.0
      %583 = vmatpush.msra.mxu0 0.0
      %584 = vmatpush.msra.mxu0 0.0
      %585 = vmatpush.msra.mxu0 0.0
      %586 = vmatpush.msra.mxu0 0.0
      %587 = vmatpush.msra.mxu0 %v384
      %588 = vmatpush.msra.mxu0 %v376
      %589 = vmatpush.msra.mxu0 %v368
      %590 = vmatpush.msra.mxu0 %v360
      %591 = vmatpush.msra.mxu0 %v352
      %592 = vmatpush.msra.mxu0 %v344
      %593 = vmatpush.msra.mxu0 %v336
      %594 = vmatpush.msra.mxu0 %v328
      %595 = vmatpush.msra.mxu0 %v320
      %596 = vmatpush.msra.mxu0 %v312
      %597 = vmatpush.msra.mxu0 %v304
      %598 = vmatmul.f32.gmra.mxu0 %v400
      %v599 = vpop.f32.mrf.mxu0
      %v600 = vadd.f32 %v580, %v599
      %601 = vdwg.mxu0
      %602 = vmatpush.msra.mxu0 %v297
      %603 = vmatpush.msra.mxu0 %v289
      %604 = vmatpush.msra.mxu0 %v281
      %605 = vmatpush.msra.mxu0 %v273
      %606 = vmatpush.msra.mxu0 %v265
      %607 = vmatpush.msra.mxu0 %v257
      %608 = vmatpush.msra.mxu0 %v249
      %609 = vmatpush.msra.mxu0 %v241
      %610 = vmatpush.msra.mxu0 %v233
      %611 = vmatpush.msra.mxu0 %v225
      %612 = vmatpush.msra.mxu0 %v217
      %613 = vmatpush.msra.mxu0 %v209
      %614 = vmatpush.msra.mxu0 %v201
      %615 = vmatpush.msra.mxu0 %v193
      %616 = vmatpush.msra.mxu0 %v185
      %617 = vmatpush.msra.mxu0 %v177
      %618 = vmatmul.f32.gmra.mxu0 %v396
      %v619 = vpop.f32.mrf.mxu0
      %v620 = vadd.f32 %v394, %v619
      %621 = vdwg.mxu0
      %622 = vmatpush.msra.mxu0 0.0
      %623 = vmatpush.msra.mxu0 0.0
      %624 = vmatpush.msra.mxu0 0.0
      %625 = vmatpush.msra.mxu0 0.0
      %626 = vmatpush.msra.mxu0 0.0
      %627 = vmatpush.msra.mxu0 %v385
      %628 = vmatpush.msra.mxu0 %v377
      %629 = vmatpush.msra.mxu0 %v369
      %630 = vmatpush.msra.mxu0 %v361
      %631 = vmatpush.msra.mxu0 %v353
      %632 = vmatpush.msra.mxu0 %v345
      %633 = vmatpush.msra.mxu0 %v337
      %634 = vmatpush.msra.mxu0 %v329
      %635 = vmatpush.msra.mxu0 %v321
      %636 = vmatpush.msra.mxu0 %v313
      %637 = vmatpush.msra.mxu0 %v305
      %638 = vmatmul.f32.gmra.mxu0 %v400
      %v639 = vpop.f32.mrf.mxu0
      %v640 = vadd.f32 %v620, %v639
      %641 = vdwg.mxu0
      %642 = vmatpush.msra.mxu0 %v298
      %643 = vmatpush.msra.mxu0 %v290
      %644 = vmatpush.msra.mxu0 %v282
      %645 = vmatpush.msra.mxu0 %v274
      %646 = vmatpush.msra.mxu0 %v266
      %647 = vmatpush.msra.mxu0 %v258
      %648 = vmatpush.msra.mxu0 %v250
      %649 = vmatpush.msra.mxu0 %v242
      %650 = vmatpush.msra.mxu0 %v234
      %651 = vmatpush.msra.mxu0 %v226
      %652 = vmatpush.msra.mxu0 %v218
      %653 = vmatpush.msra.mxu0 %v210
      %654 = vmatpush.msra.mxu0 %v202
      %655 = vmatpush.msra.mxu0 %v194
      %656 = vmatpush.msra.mxu0 %v186
      %657 = vmatpush.msra.mxu0 %v178
      %658 = vmatmul.f32.gmra.mxu0 %v396
      %v659 = vpop.f32.mrf.mxu0
      %v660 = vadd.f32 %v394, %v659
      %661 = vdwg.mxu0
      %662 = vmatpush.msra.mxu0 0.0
      %663 = vmatpush.msra.mxu0 0.0
      %664 = vmatpush.msra.mxu0 0.0
      %665 = vmatpush.msra.mxu0 0.0
      %666 = vmatpush.msra.mxu0 0.0
      %667 = vmatpush.msra.mxu0 %v386
      %668 = vmatpush.msra.mxu0 %v378
      %669 = vmatpush.msra.mxu0 %v370
      %670 = vmatpush.msra.mxu0 %v362
      %671 = vmatpush.msra.mxu0 %v354
      %672 = vmatpush.msra.mxu0 %v346
      %673 = vmatpush.msra.mxu0 %v338
      %674 = vmatpush.msra.mxu0 %v330
      %675 = vmatpush.msra.mxu0 %v322
      %676 = vmatpush.msra.mxu0 %v314
      %677 = vmatpush.msra.mxu0 %v306
      %678 = vmatmul.f32.gmra.mxu0 %v400
      %v679 = vpop.f32.mrf.mxu0
      %v680 = vadd.f32 %v660, %v679
      %681 = vdwg.mxu0
      %682 = vmatpush.msra.mxu0 %v299
      %683 = vmatpush.msra.mxu0 %v291
      %684 = vmatpush.msra.mxu0 %v283
      %685 = vmatpush.msra.mxu0 %v275
      %686 = vmatpush.msra.mxu0 %v267
      %687 = vmatpush.msra.mxu0 %v259
      %688 = vmatpush.msra.mxu0 %v251
      %689 = vmatpush.msra.mxu0 %v243
      %690 = vmatpush.msra.mxu0 %v235
      %691 = vmatpush.msra.mxu0 %v227
      %692 = vmatpush.msra.mxu0 %v219
      %693 = vmatpush.msra.mxu0 %v211
      %694 = vmatpush.msra.mxu0 %v203
      %695 = vmatpush.msra.mxu0 %v195
      %696 = vmatpush.msra.mxu0 %v187
      %697 = vmatpush.msra.mxu0 %v179
      %698 = vmatmul.f32.gmra.mxu0 %v396
      %v699 = vpop.f32.mrf.mxu0
      %v700 = vadd.f32 %v394, %v699
      %701 = vdwg.mxu0
      %702 = vmatpush.msra.mxu0 0.0
      %703 = vmatpush.msra.mxu0 0.0
      %704 = vmatpush.msra.mxu0 0.0
      %705 = vmatpush.msra.mxu0 0.0
      %706 = vmatpush.msra.mxu0 0.0
      %707 = vmatpush.msra.mxu0 %v387
      %708 = vmatpush.msra.mxu0 %v379
      %709 = vmatpush.msra.mxu0 %v371
      %710 = vmatpush.msra.mxu0 %v363
      %711 = vmatpush.msra.mxu0 %v355
      %712 = vmatpush.msra.mxu0 %v347
      %713 = vmatpush.msra.mxu0 %v339
      %714 = vmatpush.msra.mxu0 %v331
      %715 = vmatpush.msra.mxu0 %v323
      %716 = vmatpush.msra.mxu0 %v315
      %717 = vmatpush.msra.mxu0 %v307
      %718 = vmatmul.f32.gmra.mxu0 %v400
      %v719 = vpop.f32.mrf.mxu0
      %v720 = vadd.f32 %v700, %v719
      %721 = vdwg.mxu0
      %v730 = vrot.slane %v480, 7
      %v731 = vrot.slane %v520, 6
      %v732 = vrot.slane %v560, 5
      %v733 = vrot.slane %v600, 4
      %v734 = vrot.slane %v640, 3
      %v735 = vrot.slane %v680, 2
      %v736 = vrot.slane %v720, 1
      %vm737 = vcmask 1040384
      %v738 = vsel %vm737, %v440, %v730
      %vm739 = vcmask 1042434
      %v740 = vsel %vm739, %v731, %v732
      %vm741 = vcmask 1041408
      %v742 = vsel %vm741, %v738, %v740
      %vm743 = vcmask 1044484
      %v744 = vsel %vm743, %v733, %v734
      %vm745 = vcmask 1046534
      %v746 = vsel %vm745, %v735, %v736
      %vm747 = vcmask 1045508
      %v748 = vsel %vm747, %v744, %v746
      %vm749 = vcmask 1043456
      %v750 = vsel %vm749, %v742, %v748
      %v752 = vlaneseq
      %vm753 = vcmp.ge.s32.totalorder %v752, 0
      %vm754 = vcmp.lt.s32.totalorder %v752, 1000
      %vm755 = vmand %vm753, %vm754
      %756 = vst.msk [vmem:[%s170] sm:$0xff] %vm755, %v750
      %p757 = scmp.lt.s32.totalorder %s16, 1
      %s758 = scalar_select %p757, %s16, 1
      %s759 = smul.addr %s758, 8
      %s760 = scalar_lea.vmem %s3, %s759
      // Predicated region
      $region33: #{perceiver_io_forward.13} parent=31 // pred_check
        %p761 = pneg %p102
      $region34: #{perceiver_io_forward.13} parent=31 // pred_check_branch
        %763 = sbr.rel (%p761) target = $region36
      $region35: #{perceiver_io_forward.13} parent=31 // pred_region
        _
      $region36: #{perceiver_io_forward.13} parent=31 // pred_fallthru
        _
    $region32: #{perceiver_io_forward.13} parent=5 // pred_fallthru
      _
    %p764 = scmp.le.s32.totalorder 2, %s11
    // Predicated region
    $region37: #{perceiver_io_forward.13} parent=5 // pred_check
      %p765 = pneg %p764
    $region38: #{perceiver_io_forward.13} parent=5 // pred_check_branch
      %767 = sbr.rel (%p765) target = $region40
    $region39: #{perceiver_io_forward.13} parent=5 // pred_region
      %s768 = ssub.s32 %s11, 2
      // Predicated region
      $region41: #{perceiver_io_forward.13} parent=39 // pred_check
        %p769 = pneg %p108
      $region42: #{perceiver_io_forward.13} parent=39 // pred_check_branch
        %771 = sbr.rel (%p769) target = $region44
      $region43: #{perceiver_io_forward.13} parent=39 // pred_region
        %p772 = scmp.lt.s32.totalorder %s17, 1
        %s773 = scalar_select %p772, %s17, 1
        %s774 = smul.addr %s773, 8
        %s775 = scalar_lea.vmem %s3, %s774
      $region44: #{perceiver_io_forward.13} parent=39 // pred_fallthru
        _
    $region40: #{perceiver_io_forward.13} parent=5 // pred_fallthru
      _
  $region6: #{perceiver_io_forward.13} parent=0 // loop_footer
    %s15 = sadd.s32 1, %s11
  $region7: #{perceiver_io_forward.13} parent=0 // loop_footer_branch
    %10 = sbr.rel target = $region3
  $region8: #{perceiver_io_forward.13} parent=0 // loop_exit
    _

</llo_original>
